<compile_context>
chip_gen: v6e
topology: v6e:2x2x1
jax: 0.10.0
libtpu: 0.0.40
codegen_flags: <defaults>
</compile_context>

<pallas_src>
import jax
import jax.numpy as jnp
from jax.experimental import pallas as pl
from jax.experimental.pallas import tpu as pltpu

_EPS = 1e-3  # InstanceNorm2d eps


def _pick_vmem_limit():
    """Explicit VMEM scoped limit (feedback: defaults are 16/32 MiB, far below physical)."""
    try:
        cap = int(pltpu.get_tpu_info().vmem_capacity_bytes)
    except Exception:
        cap = 128 * 1024 * 1024
    return int(min(max(cap * 3 // 4, 32 * 1024 * 1024), 96 * 1024 * 1024))


# ----------------------------------------------------------------------------
# Fused Pallas kernel: conv1+ReLU -> conv2+ReLU+InstanceNorm -> conv3 (stride 2,1)
# One grid step == one batch image; everything stays in VMEM/vregs.
# ----------------------------------------------------------------------------
def _make_fused_kernel(cin, cout, H, W, Hout):
    f32 = jnp.float32

    def kernel(x_ref,
               wd1_ref, bd1_ref, wp1_ref, bp1_ref,
               wd2_ref, bd2_ref, wp2_ref, bp2_ref,
               wd3_ref, bd3_ref, wp3_ref, bp3_ref,
               o_ref):
        # ---- hoisted border masks / stride-selection matrices (built once) ----
        col_idx = jax.lax.broadcasted_iota(jnp.int32, (H, W), 1)
        row_idx = jax.lax.broadcasted_iota(jnp.int32, (H, W), 0)
        col_ok = {-1: col_idx >= 1, 1: col_idx < (W - 1)}
        row_ok = {-1: row_idx >= 1, 1: row_idx < (H - 1)}

        def cshift(y, d):
            """out[i, j] = y[i, j + d], zero outside.  Lane roll (XLU) + mask."""
            if d == 0:
                return y
            return jnp.where(col_ok[d], pltpu.roll(y, shift=(-d) % W, axis=1), 0.0)

        def rshift(y, d):
            """out[i, j] = y[i + d, j], zero outside.  Sublane roll (XLU) + mask."""
            if d == 0:
                return y
            return jnp.where(row_ok[d], pltpu.roll(y, shift=(-d) % H, axis=0), 0.0)

        # sel[a][r, i] == 1 iff i == 2*r + (a - 1): fuses the pad-1/stride-2 row
        # tap gather into one tiny matmul (applied BEFORE the accumulation).
        r_i = jax.lax.broadcasted_iota(jnp.int32, (Hout, H), 0)
        c_i = jax.lax.broadcasted_iota(jnp.int32, (Hout, H), 1)
        sel = [jnp.where(c_i == 2 * r_i + (a - 1), 1.0, 0.0).astype(f32)
               for a in range(3)]

        def depthwise3x3(y, wd_ref, bd_ref, c):
            """'same' 3x3 depthwise conv of one (H, W) slab, stride 1 (VPU + XLU)."""
            cols = [cshift(y, b - 1) for b in range(3)]          # j-1, j, j+1
            acc = None
            for a in range(3):
                row = (wd_ref[3 * a + 0, c] * cols[0]
                       + wd_ref[3 * a + 1, c] * cols[1]
                       + wd_ref[3 * a + 2, c] * cols[2])
                row = rshift(row, a - 1)
                acc = row if acc is None else acc + row
            return acc + bd_ref[0, c]

        def depthwise3x3_s2(y, wd_ref, bd_ref, c):
            """3x3 depthwise conv, pad 1, stride (2, 1): (H, W) -> (Hout, W)."""
            cols = [cshift(y, b - 1) for b in range(3)]
            acc = None
            for a in range(3):
                row = (wd_ref[3 * a + 0, c] * cols[0]
                       + wd_ref[3 * a + 1, c] * cols[1]
                       + wd_ref[3 * a + 2, c] * cols[2])
                g = jnp.dot(sel[a], row, preferred_element_type=f32)
                acc = g if acc is None else acc + g
            return acc + bd_ref[0, c]

        def pointwise(slabs, wp_ref, bp_ref, n_in, n_out, relu):
            """1x1 conv as n_out x n_in scalar FMAs over full (·, W) slabs (VPU)."""
            outs = []
            for co in range(n_out):
                y = bp_ref[0, co] + wp_ref[0, co] * slabs[0]
                for ci in range(1, n_in):
                    y = y + wp_ref[ci, co] * slabs[ci]
                if relu:
                    y = jnp.maximum(y, 0.0)
                outs.append(y)
            return outs

        def mean2d(v):
            m = jnp.mean(v, axis=1, keepdims=True)
            return jnp.mean(m, axis=0, keepdims=True)

        # -------- stage 1: conv1 (depthwise + pointwise) + ReLU ----------------
        d1 = [depthwise3x3(x_ref[0, ci].astype(f32), wd1_ref, bd1_ref, ci)
              for ci in range(cin)]
        y1 = pointwise(d1, wp1_ref, bp1_ref, cin, cout, relu=True)

        # -------- stage 2: conv2 + ReLU + InstanceNorm (affine=False) ----------
        d2 = [depthwise3x3(y1[c], wd2_ref, bd2_ref, c) for c in range(cout)]
        y2 = pointwise(d2, wp2_ref, bp2_ref, cout, cout, relu=True)
        y2n = []
        for c in range(cout):
            mu = mean2d(y2[c])
            ctr = y2[c] - mu
            var = mean2d(ctr * ctr)
            y2n.append(ctr * jax.lax.rsqrt(var + _EPS))

        # -------- stage 3: conv3, stride (2, 1), no activation -----------------
        d3 = [depthwise3x3_s2(y2n[c], wd3_ref, bd3_ref, c) for c in range(cout)]
        y3 = pointwise(d3, wp3_ref, bp3_ref, cout, cout, relu=False)

        for co in range(cout):
            o_ref[0, co] = y3[co].astype(o_ref.dtype)

    return kernel


# ----------------------------------------------------------------------------
# DSCBlock forward (NCHW in / NCHW out, like the PyTorch module)
# ----------------------------------------------------------------------------
def dsc_block_forward(x_nchw, p):
    x = x_nchw.astype(jnp.float32)           # keep f32 compute (v5e has no bf16 VPU)
    N, cin, H, W = x.shape
    cout = p["pw1"].shape[1]
    Hout = (H - 1) // 2 + 1                   # ceil(H/2): matches Conv2d k=3,p=1,s=2

    # Flatten depthwise weights to (9, C) for SMEM scalar access.
    wd1 = p["dw1"].reshape(9, cin)
    wd2 = p["dw2"].reshape(9, cout)
    wd3 = p["dw3"].reshape(9, cout)

    smem = pl.BlockSpec(memory_space=pltpu.MemorySpace.SMEM)
    kern = _make_fused_kernel(cin, cout, H, W, Hout)

    # NOTE: one whole image per grid step fits VMEM comfortably at these sizes.
    # For very large production images (v7x: 64 MiB VMEM) one would add a second
    # "parallel" row-tile grid axis with a 1-row halo and turn the InstanceNorm
    # statistics into cross-tile scratch accumulators.
    return pl.pallas_call(
        kern,
        out_shape=jax.ShapeDtypeStruct((N, cout, Hout, W), jnp.float32),
        grid_spec=pltpu.PrefetchScalarGridSpec(
            num_scalar_prefetch=0,
            grid=(N,),
            in_specs=[
                pl.BlockSpec((1, cin, H, W), lambda n: (n, 0, 0, 0)),
                smem, smem, smem, smem,     # conv1: wd, bd, wp, bp
                smem, smem, smem, smem,     # conv2
                smem, smem, smem, smem,     # conv3
            ],
            out_specs=pl.BlockSpec((1, cout, Hout, W), lambda n: (n, 0, 0, 0)),
        ),
        compiler_params=pltpu.CompilerParams(
            dimension_semantics=("parallel",),
            vmem_limit_bytes=_pick_vmem_limit(),
        ),
    )(x,
      wd1, p["bd1"], p["pw1"], p["bp1"],
      wd2, p["bd2"], p["pw2"], p["bp2"],
      wd3, p["bd3"], p["pw3"], p["bp3"])


# ----------------------------------------------------------------------------
# Deterministic parameter init (shapes follow the PyTorch module __init__)
# ----------------------------------------------------------------------------
def init_params(key, in_c, out_c):
    ks = jax.random.split(key, 12)

    def u(k, shape, scale=0.3):
        return jax.random.uniform(k, shape, jnp.float32, -scale, scale)

    return dict(
        # conv1: depthwise (3,3,in_c) [== torch (in_c,1,3,3)], pointwise (in_c,out_c)
        dw1=u(ks[0], (3, 3, in_c)), bd1=u(ks[1], (1, in_c)),
        pw1=u(ks[2], (in_c, out_c)), bp1=u(ks[3], (1, out_c)),
        # conv2
        dw2=u(ks[4], (3, 3, out_c)), bd2=u(ks[5], (1, out_c)),
        pw2=u(ks[6], (out_c, out_c)), bp2=u(ks[7], (1, out_c)),
        # conv3 (stride (2,1))
        dw3=u(ks[8], (3, 3, out_c)), bd3=u(ks[9], (1, out_c)),
        pw3=u(ks[10], (out_c, out_c)), bp3=u(ks[11], (1, out_c)),
    )


# ----------------------------------------------------------------------------
# Pure-JAX reference (lax.conv) for correctness checking
# ----------------------------------------------------------------------------
def _ref_dsconv(x_nchw, wd, bd, wp, bp, stride):
    C = x_nchw.shape[1]
    wd_oihw = jnp.transpose(wd, (2, 0, 1))[:, None, :, :]          # (C,1,3,3)
    y = jax.lax.conv_general_dilated(
        x_nchw, wd_oihw, window_strides=stride, padding=((1, 1), (1, 1)),
        feature_group_count=C, dimension_numbers=("NCHW", "OIHW", "NCHW"))
    y = y + bd.reshape(1, -1, 1, 1)
    wp_oihw = jnp.transpose(wp, (1, 0))[:, :, None, None]           # (Cout,Cin,1,1)
    y = jax.lax.conv_general_dilated(
        y, wp_oihw, window_strides=(1, 1), padding="VALID",
        dimension_numbers=("NCHW", "OIHW", "NCHW"))
    return y + bp.reshape(1, -1, 1, 1)


def ref_forward(x_nchw, p):
    y = _ref_dsconv(x_nchw, p["dw1"], p["bd1"], p["pw1"], p["bp1"], (1, 1))
    y = jnp.maximum(y, 0.0)
    y = _ref_dsconv(y, p["dw2"], p["bd2"], p["pw2"], p["bp2"], (1, 1))
    y = jnp.maximum(y, 0.0)
    mean = jnp.mean(y, axis=(2, 3), keepdims=True)
    var = jnp.mean(jnp.square(y - mean), axis=(2, 3), keepdims=True)
    y = (y - mean) * jax.lax.rsqrt(var + _EPS)
    y = _ref_dsconv(y, p["dw3"], p["bd3"], p["pw3"], p["bp3"], (2, 1))
    return y


if __name__ == "__main__":
    key = jax.random.PRNGKey(0)
    kx, kp = jax.random.split(key)

    N, IN_C, OUT_C, H, W = 2, 4, 8, 16, 16
    x = jax.random.normal(kx, (N, IN_C, H, W), jnp.float32)
    params = init_params(kp, IN_C, OUT_C)

    out = jax.jit(dsc_block_forward)(x, params)
    out = jax.block_until_ready(out)

    ref = ref_forward(x, params)
    assert out.shape == (N, OUT_C, H // 2, W), out.shape
    assert jnp.allclose(out, ref, rtol=2e-4, atol=2e-4), "Pallas result mismatch vs reference"

    print("KERNEL_OK")
</pallas_src>

<mosaic_0001>
module attributes {stable_mosaic.version = 11 : i64} {
  func.func @kernel(%arg0: i32, %arg1: memref<1x4x16x16xf32, #tpu.memory_space<vmem>>, %arg2: memref<9x4xf32, #tpu.memory_space<smem>>, %arg3: memref<1x4xf32, #tpu.memory_space<smem>>, %arg4: memref<4x8xf32, #tpu.memory_space<smem>>, %arg5: memref<1x8xf32, #tpu.memory_space<smem>>, %arg6: memref<9x8xf32, #tpu.memory_space<smem>>, %arg7: memref<1x8xf32, #tpu.memory_space<smem>>, %arg8: memref<8x8xf32, #tpu.memory_space<smem>>, %arg9: memref<1x8xf32, #tpu.memory_space<smem>>, %arg10: memref<9x8xf32, #tpu.memory_space<smem>>, %arg11: memref<1x8xf32, #tpu.memory_space<smem>>, %arg12: memref<8x8xf32, #tpu.memory_space<smem>>, %arg13: memref<1x8xf32, #tpu.memory_space<smem>>, %arg14: memref<1x8x8x16xf32, #tpu.memory_space<vmem>>) attributes {dimension_semantics = [#tpu.dimension_semantics<parallel>], iteration_bounds = array<i64: 2>, scalar_prefetch = 0 : i64, scratch_operands = 0 : i64, tpu.core_type = #tpu.core_type<tc>, window_params = [{transform_indices = @transform_0, window_bounds = array<i64: 1, 4, 16, 16>}, {transform_indices = @transform_1, window_bounds = array<i64: 9, 4>}, {transform_indices = @transform_2, window_bounds = array<i64: 1, 4>}, {transform_indices = @transform_3, window_bounds = array<i64: 4, 8>}, {transform_indices = @transform_4, window_bounds = array<i64: 1, 8>}, {transform_indices = @transform_5, window_bounds = array<i64: 9, 8>}, {transform_indices = @transform_6, window_bounds = array<i64: 1, 8>}, {transform_indices = @transform_7, window_bounds = array<i64: 8, 8>}, {transform_indices = @transform_8, window_bounds = array<i64: 1, 8>}, {transform_indices = @transform_9, window_bounds = array<i64: 9, 8>}, {transform_indices = @transform_10, window_bounds = array<i64: 1, 8>}, {transform_indices = @transform_11, window_bounds = array<i64: 8, 8>}, {transform_indices = @transform_12, window_bounds = array<i64: 1, 8>}, {transform_indices = @transform_13, window_bounds = array<i64: 1, 8, 8, 16>}]} {
    %0 = tpu.iota {dimensions = array<i32: 1>} : vector<16x16xi32>
    %1 = tpu.iota {dimensions = array<i32: 0>} : vector<16x16xi32>
    %c1_i32 = arith.constant 1 : i32
    %2 = vector.broadcast %c1_i32 : i32 to vector<16x16xi32>
    %3 = arith.cmpi sge, %0, %2 : vector<16x16xi32>
    %c15_i32 = arith.constant 15 : i32
    %4 = vector.broadcast %c15_i32 : i32 to vector<16x16xi32>
    %5 = arith.cmpi slt, %0, %4 : vector<16x16xi32>
    %c1_i32_0 = arith.constant 1 : i32
    %6 = vector.broadcast %c1_i32_0 : i32 to vector<16x16xi32>
    %7 = arith.cmpi sge, %1, %6 : vector<16x16xi32>
    %c15_i32_1 = arith.constant 15 : i32
    %8 = vector.broadcast %c15_i32_1 : i32 to vector<16x16xi32>
    %9 = arith.cmpi slt, %1, %8 : vector<16x16xi32>
    %10 = tpu.iota {dimensions = array<i32: 0>} : vector<8x16xi32>
    %11 = tpu.iota {dimensions = array<i32: 1>} : vector<8x16xi32>
    %c2_i32 = arith.constant 2 : i32
    %12 = vector.broadcast %c2_i32 : i32 to vector<8x16xi32>
    %13 = arith.muli %12, %10 : vector<8x16xi32>
    %c-1_i32 = arith.constant -1 : i32
    %14 = vector.broadcast %c-1_i32 : i32 to vector<8x16xi32>
    %15 = arith.addi %13, %14 : vector<8x16xi32>
    %16 = arith.cmpi eq, %11, %15 : vector<8x16xi32>
    %cst = arith.constant 1.000000e+00 : f32
    %cst_2 = arith.constant 0.000000e+00 : f32
    %17 = vector.broadcast %cst : f32 to vector<8x16xf32>
    %18 = vector.broadcast %cst_2 : f32 to vector<8x16xf32>
    %19 = arith.select %16, %17, %18 : vector<8x16xi1>, vector<8x16xf32>
    %c2_i32_3 = arith.constant 2 : i32
    %20 = vector.broadcast %c2_i32_3 : i32 to vector<8x16xi32>
    %21 = arith.muli %20, %10 : vector<8x16xi32>
    %c0_i32 = arith.constant 0 : i32
    %22 = vector.broadcast %c0_i32 : i32 to vector<8x16xi32>
    %23 = arith.addi %21, %22 : vector<8x16xi32>
    %24 = arith.cmpi eq, %11, %23 : vector<8x16xi32>
    %cst_4 = arith.constant 1.000000e+00 : f32
    %cst_5 = arith.constant 0.000000e+00 : f32
    %25 = vector.broadcast %cst_4 : f32 to vector<8x16xf32>
    %26 = vector.broadcast %cst_5 : f32 to vector<8x16xf32>
    %27 = arith.select %24, %25, %26 : vector<8x16xi1>, vector<8x16xf32>
    %c2_i32_6 = arith.constant 2 : i32
    %28 = vector.broadcast %c2_i32_6 : i32 to vector<8x16xi32>
    %29 = arith.muli %28, %10 : vector<8x16xi32>
    %c1_i32_7 = arith.constant 1 : i32
    %30 = vector.broadcast %c1_i32_7 : i32 to vector<8x16xi32>
    %31 = arith.addi %29, %30 : vector<8x16xi32>
    %32 = arith.cmpi eq, %11, %31 : vector<8x16xi32>
    %cst_8 = arith.constant 1.000000e+00 : f32
    %cst_9 = arith.constant 0.000000e+00 : f32
    %33 = vector.broadcast %cst_8 : f32 to vector<8x16xf32>
    %34 = vector.broadcast %cst_9 : f32 to vector<8x16xf32>
    %35 = arith.select %32, %33, %34 : vector<8x16xi1>, vector<8x16xf32>
    %c0 = arith.constant 0 : index
    %c0_10 = arith.constant 0 : index
    %c0_11 = arith.constant 0 : index
    %c0_12 = arith.constant 0 : index
    %36 = vector.load %arg1[%c0, %c0_10, %c0_11, %c0_12] : memref<1x4x16x16xf32, #tpu.memory_space<vmem>>, vector<1x1x16x16xf32>
    %37 = vector.shape_cast %36 : vector<1x1x16x16xf32> to vector<16x16xf32>
    %c1_i32_13 = arith.constant 1 : i32
    %38 = tpu.dynamic_rotate %37 by %c1_i32_13 dim 1 : vector<16x16xf32>, i32 -> vector<16x16xf32>
    %cst_14 = arith.constant 0.000000e+00 : f32
    %39 = vector.broadcast %cst_14 : f32 to vector<16x16xf32>
    %40 = arith.select %3, %38, %39 : vector<16x16xi1>, vector<16x16xf32>
    %c15_i32_15 = arith.constant 15 : i32
    %41 = tpu.dynamic_rotate %37 by %c15_i32_15 dim 1 : vector<16x16xf32>, i32 -> vector<16x16xf32>
    %cst_16 = arith.constant 0.000000e+00 : f32
    %42 = vector.broadcast %cst_16 : f32 to vector<16x16xf32>
    %43 = arith.select %5, %41, %42 : vector<16x16xi1>, vector<16x16xf32>
    %c0_17 = arith.constant 0 : index
    %c0_18 = arith.constant 0 : index
    %44 = memref.load %arg2[%c0_17, %c0_18] : memref<9x4xf32, #tpu.memory_space<smem>>
    %45 = vector.broadcast %44 : f32 to vector<16x16xf32>
    %46 = arith.mulf %45, %40 : vector<16x16xf32>
    %c1 = arith.constant 1 : index
    %c0_19 = arith.constant 0 : index
    %47 = memref.load %arg2[%c1, %c0_19] : memref<9x4xf32, #tpu.memory_space<smem>>
    %48 = vector.broadcast %47 : f32 to vector<16x16xf32>
    %49 = arith.mulf %48, %37 : vector<16x16xf32>
    %50 = arith.addf %46, %49 : vector<16x16xf32>
    %c2 = arith.constant 2 : index
    %c0_20 = arith.constant 0 : index
    %51 = memref.load %arg2[%c2, %c0_20] : memref<9x4xf32, #tpu.memory_space<smem>>
    %52 = vector.broadcast %51 : f32 to vector<16x16xf32>
    %53 = arith.mulf %52, %43 : vector<16x16xf32>
    %54 = arith.addf %50, %53 : vector<16x16xf32>
    %c1_i32_21 = arith.constant 1 : i32
    %55 = tpu.dynamic_rotate %54 by %c1_i32_21 dim 0 : vector<16x16xf32>, i32 -> vector<16x16xf32>
    %cst_22 = arith.constant 0.000000e+00 : f32
    %56 = vector.broadcast %cst_22 : f32 to vector<16x16xf32>
    %57 = arith.select %7, %55, %56 : vector<16x16xi1>, vector<16x16xf32>
    %c3 = arith.constant 3 : index
    %c0_23 = arith.constant 0 : index
    %58 = memref.load %arg2[%c3, %c0_23] : memref<9x4xf32, #tpu.memory_space<smem>>
    %59 = vector.broadcast %58 : f32 to vector<16x16xf32>
    %60 = arith.mulf %59, %40 : vector<16x16xf32>
    %c4 = arith.constant 4 : index
    %c0_24 = arith.constant 0 : index
    %61 = memref.load %arg2[%c4, %c0_24] : memref<9x4xf32, #tpu.memory_space<smem>>
    %62 = vector.broadcast %61 : f32 to vector<16x16xf32>
    %63 = arith.mulf %62, %37 : vector<16x16xf32>
    %64 = arith.addf %60, %63 : vector<16x16xf32>
    %c5 = arith.constant 5 : index
    %c0_25 = arith.constant 0 : index
    %65 = memref.load %arg2[%c5, %c0_25] : memref<9x4xf32, #tpu.memory_space<smem>>
    %66 = vector.broadcast %65 : f32 to vector<16x16xf32>
    %67 = arith.mulf %66, %43 : vector<16x16xf32>
    %68 = arith.addf %64, %67 : vector<16x16xf32>
    %69 = arith.addf %57, %68 : vector<16x16xf32>
    %c6 = arith.constant 6 : index
    %c0_26 = arith.constant 0 : index
    %70 = memref.load %arg2[%c6, %c0_26] : memref<9x4xf32, #tpu.memory_space<smem>>
    %71 = vector.broadcast %70 : f32 to vector<16x16xf32>
    %72 = arith.mulf %71, %40 : vector<16x16xf32>
    %c7 = arith.constant 7 : index
    %c0_27 = arith.constant 0 : index
    %73 = memref.load %arg2[%c7, %c0_27] : memref<9x4xf32, #tpu.memory_space<smem>>
    %74 = vector.broadcast %73 : f32 to vector<16x16xf32>
    %75 = arith.mulf %74, %37 : vector<16x16xf32>
    %76 = arith.addf %72, %75 : vector<16x16xf32>
    %c8 = arith.constant 8 : index
    %c0_28 = arith.constant 0 : index
    %77 = memref.load %arg2[%c8, %c0_28] : memref<9x4xf32, #tpu.memory_space<smem>>
    %78 = vector.broadcast %77 : f32 to vector<16x16xf32>
    %79 = arith.mulf %78, %43 : vector<16x16xf32>
    %80 = arith.addf %76, %79 : vector<16x16xf32>
    %c15_i32_29 = arith.constant 15 : i32
    %81 = tpu.dynamic_rotate %80 by %c15_i32_29 dim 0 : vector<16x16xf32>, i32 -> vector<16x16xf32>
    %cst_30 = arith.constant 0.000000e+00 : f32
    %82 = vector.broadcast %cst_30 : f32 to vector<16x16xf32>
    %83 = arith.select %9, %81, %82 : vector<16x16xi1>, vector<16x16xf32>
    %84 = arith.addf %69, %83 : vector<16x16xf32>
    %c0_31 = arith.constant 0 : index
    %c0_32 = arith.constant 0 : index
    %85 = memref.load %arg3[%c0_31, %c0_32] : memref<1x4xf32, #tpu.memory_space<smem>>
    %86 = vector.broadcast %85 : f32 to vector<16x16xf32>
    %87 = arith.addf %84, %86 : vector<16x16xf32>
    %c0_33 = arith.constant 0 : index
    %c1_34 = arith.constant 1 : index
    %c0_35 = arith.constant 0 : index
    %c0_36 = arith.constant 0 : index
    %88 = vector.load %arg1[%c0_33, %c1_34, %c0_35, %c0_36] : memref<1x4x16x16xf32, #tpu.memory_space<vmem>>, vector<1x1x16x16xf32>
    %89 = vector.shape_cast %88 : vector<1x1x16x16xf32> to vector<16x16xf32>
    %c1_i32_37 = arith.constant 1 : i32
    %90 = tpu.dynamic_rotate %89 by %c1_i32_37 dim 1 : vector<16x16xf32>, i32 -> vector<16x16xf32>
    %cst_38 = arith.constant 0.000000e+00 : f32
    %91 = vector.broadcast %cst_38 : f32 to vector<16x16xf32>
    %92 = arith.select %3, %90, %91 : vector<16x16xi1>, vector<16x16xf32>
    %c15_i32_39 = arith.constant 15 : i32
    %93 = tpu.dynamic_rotate %89 by %c15_i32_39 dim 1 : vector<16x16xf32>, i32 -> vector<16x16xf32>
    %cst_40 = arith.constant 0.000000e+00 : f32
    %94 = vector.broadcast %cst_40 : f32 to vector<16x16xf32>
    %95 = arith.select %5, %93, %94 : vector<16x16xi1>, vector<16x16xf32>
    %c0_41 = arith.constant 0 : index
    %c1_42 = arith.constant 1 : index
    %96 = memref.load %arg2[%c0_41, %c1_42] : memref<9x4xf32, #tpu.memory_space<smem>>
    %97 = vector.broadcast %96 : f32 to vector<16x16xf32>
    %98 = arith.mulf %97, %92 : vector<16x16xf32>
    %c1_43 = arith.constant 1 : index
    %c1_44 = arith.constant 1 : index
    %99 = memref.load %arg2[%c1_43, %c1_44] : memref<9x4xf32, #tpu.memory_space<smem>>
    %100 = vector.broadcast %99 : f32 to vector<16x16xf32>
    %101 = arith.mulf %100, %89 : vector<16x16xf32>
    %102 = arith.addf %98, %101 : vector<16x16xf32>
    %c2_45 = arith.constant 2 : index
    %c1_46 = arith.constant 1 : index
    %103 = memref.load %arg2[%c2_45, %c1_46] : memref<9x4xf32, #tpu.memory_space<smem>>
    %104 = vector.broadcast %103 : f32 to vector<16x16xf32>
    %105 = arith.mulf %104, %95 : vector<16x16xf32>
    %106 = arith.addf %102, %105 : vector<16x16xf32>
    %c1_i32_47 = arith.constant 1 : i32
    %107 = tpu.dynamic_rotate %106 by %c1_i32_47 dim 0 : vector<16x16xf32>, i32 -> vector<16x16xf32>
    %cst_48 = arith.constant 0.000000e+00 : f32
    %108 = vector.broadcast %cst_48 : f32 to vector<16x16xf32>
    %109 = arith.select %7, %107, %108 : vector<16x16xi1>, vector<16x16xf32>
    %c3_49 = arith.constant 3 : index
    %c1_50 = arith.constant 1 : index
    %110 = memref.load %arg2[%c3_49, %c1_50] : memref<9x4xf32, #tpu.memory_space<smem>>
    %111 = vector.broadcast %110 : f32 to vector<16x16xf32>
    %112 = arith.mulf %111, %92 : vector<16x16xf32>
    %c4_51 = arith.constant 4 : index
    %c1_52 = arith.constant 1 : index
    %113 = memref.load %arg2[%c4_51, %c1_52] : memref<9x4xf32, #tpu.memory_space<smem>>
    %114 = vector.broadcast %113 : f32 to vector<16x16xf32>
    %115 = arith.mulf %114, %89 : vector<16x16xf32>
    %116 = arith.addf %112, %115 : vector<16x16xf32>
    %c5_53 = arith.constant 5 : index
    %c1_54 = arith.constant 1 : index
    %117 = memref.load %arg2[%c5_53, %c1_54] : memref<9x4xf32, #tpu.memory_space<smem>>
    %118 = vector.broadcast %117 : f32 to vector<16x16xf32>
    %119 = arith.mulf %118, %95 : vector<16x16xf32>
    %120 = arith.addf %116, %119 : vector<16x16xf32>
    %121 = arith.addf %109, %120 : vector<16x16xf32>
    %c6_55 = arith.constant 6 : index
    %c1_56 = arith.constant 1 : index
    %122 = memref.load %arg2[%c6_55, %c1_56] : memref<9x4xf32, #tpu.memory_space<smem>>
    %123 = vector.broadcast %122 : f32 to vector<16x16xf32>
    %124 = arith.mulf %123, %92 : vector<16x16xf32>
    %c7_57 = arith.constant 7 : index
    %c1_58 = arith.constant 1 : index
    %125 = memref.load %arg2[%c7_57, %c1_58] : memref<9x4xf32, #tpu.memory_space<smem>>
    %126 = vector.broadcast %125 : f32 to vector<16x16xf32>
    %127 = arith.mulf %126, %89 : vector<16x16xf32>
    %128 = arith.addf %124, %127 : vector<16x16xf32>
    %c8_59 = arith.constant 8 : index
    %c1_60 = arith.constant 1 : index
    %129 = memref.load %arg2[%c8_59, %c1_60] : memref<9x4xf32, #tpu.memory_space<smem>>
    %130 = vector.broadcast %129 : f32 to vector<16x16xf32>
    %131 = arith.mulf %130, %95 : vector<16x16xf32>
    %132 = arith.addf %128, %131 : vector<16x16xf32>
    %c15_i32_61 = arith.constant 15 : i32
    %133 = tpu.dynamic_rotate %132 by %c15_i32_61 dim 0 : vector<16x16xf32>, i32 -> vector<16x16xf32>
    %cst_62 = arith.constant 0.000000e+00 : f32
    %134 = vector.broadcast %cst_62 : f32 to vector<16x16xf32>
    %135 = arith.select %9, %133, %134 : vector<16x16xi1>, vector<16x16xf32>
    %136 = arith.addf %121, %135 : vector<16x16xf32>
    %c0_63 = arith.constant 0 : index
    %c1_64 = arith.constant 1 : index
    %137 = memref.load %arg3[%c0_63, %c1_64] : memref<1x4xf32, #tpu.memory_space<smem>>
    %138 = vector.broadcast %137 : f32 to vector<16x16xf32>
    %139 = arith.addf %136, %138 : vector<16x16xf32>
    %c0_65 = arith.constant 0 : index
    %c2_66 = arith.constant 2 : index
    %c0_67 = arith.constant 0 : index
    %c0_68 = arith.constant 0 : index
    %140 = vector.load %arg1[%c0_65, %c2_66, %c0_67, %c0_68] : memref<1x4x16x16xf32, #tpu.memory_space<vmem>>, vector<1x1x16x16xf32>
    %141 = vector.shape_cast %140 : vector<1x1x16x16xf32> to vector<16x16xf32>
    %c1_i32_69 = arith.constant 1 : i32
    %142 = tpu.dynamic_rotate %141 by %c1_i32_69 dim 1 : vector<16x16xf32>, i32 -> vector<16x16xf32>
    %cst_70 = arith.constant 0.000000e+00 : f32
    %143 = vector.broadcast %cst_70 : f32 to vector<16x16xf32>
    %144 = arith.select %3, %142, %143 : vector<16x16xi1>, vector<16x16xf32>
    %c15_i32_71 = arith.constant 15 : i32
    %145 = tpu.dynamic_rotate %141 by %c15_i32_71 dim 1 : vector<16x16xf32>, i32 -> vector<16x16xf32>
    %cst_72 = arith.constant 0.000000e+00 : f32
    %146 = vector.broadcast %cst_72 : f32 to vector<16x16xf32>
    %147 = arith.select %5, %145, %146 : vector<16x16xi1>, vector<16x16xf32>
    %c0_73 = arith.constant 0 : index
    %c2_74 = arith.constant 2 : index
    %148 = memref.load %arg2[%c0_73, %c2_74] : memref<9x4xf32, #tpu.memory_space<smem>>
    %149 = vector.broadcast %148 : f32 to vector<16x16xf32>
    %150 = arith.mulf %149, %144 : vector<16x16xf32>
    %c1_75 = arith.constant 1 : index
    %c2_76 = arith.constant 2 : index
    %151 = memref.load %arg2[%c1_75, %c2_76] : memref<9x4xf32, #tpu.memory_space<smem>>
    %152 = vector.broadcast %151 : f32 to vector<16x16xf32>
    %153 = arith.mulf %152, %141 : vector<16x16xf32>
    %154 = arith.addf %150, %153 : vector<16x16xf32>
    %c2_77 = arith.constant 2 : index
    %c2_78 = arith.constant 2 : index
    %155 = memref.load %arg2[%c2_77, %c2_78] : memref<9x4xf32, #tpu.memory_space<smem>>
    %156 = vector.broadcast %155 : f32 to vector<16x16xf32>
    %157 = arith.mulf %156, %147 : vector<16x16xf32>
    %158 = arith.addf %154, %157 : vector<16x16xf32>
    %c1_i32_79 = arith.constant 1 : i32
    %159 = tpu.dynamic_rotate %158 by %c1_i32_79 dim 0 : vector<16x16xf32>, i32 -> vector<16x16xf32>
    %cst_80 = arith.constant 0.000000e+00 : f32
    %160 = vector.broadcast %cst_80 : f32 to vector<16x16xf32>
    %161 = arith.select %7, %159, %160 : vector<16x16xi1>, vector<16x16xf32>
    %c3_81 = arith.constant 3 : index
    %c2_82 = arith.constant 2 : index
    %162 = memref.load %arg2[%c3_81, %c2_82] : memref<9x4xf32, #tpu.memory_space<smem>>
    %163 = vector.broadcast %162 : f32 to vector<16x16xf32>
    %164 = arith.mulf %163, %144 : vector<16x16xf32>
    %c4_83 = arith.constant 4 : index
    %c2_84 = arith.constant 2 : index
    %165 = memref.load %arg2[%c4_83, %c2_84] : memref<9x4xf32, #tpu.memory_space<smem>>
    %166 = vector.broadcast %165 : f32 to vector<16x16xf32>
    %167 = arith.mulf %166, %141 : vector<16x16xf32>
    %168 = arith.addf %164, %167 : vector<16x16xf32>
    %c5_85 = arith.constant 5 : index
    %c2_86 = arith.constant 2 : index
    %169 = memref.load %arg2[%c5_85, %c2_86] : memref<9x4xf32, #tpu.memory_space<smem>>
    %170 = vector.broadcast %169 : f32 to vector<16x16xf32>
    %171 = arith.mulf %170, %147 : vector<16x16xf32>
    %172 = arith.addf %168, %171 : vector<16x16xf32>
    %173 = arith.addf %161, %172 : vector<16x16xf32>
    %c6_87 = arith.constant 6 : index
    %c2_88 = arith.constant 2 : index
    %174 = memref.load %arg2[%c6_87, %c2_88] : memref<9x4xf32, #tpu.memory_space<smem>>
    %175 = vector.broadcast %174 : f32 to vector<16x16xf32>
    %176 = arith.mulf %175, %144 : vector<16x16xf32>
    %c7_89 = arith.constant 7 : index
    %c2_90 = arith.constant 2 : index
    %177 = memref.load %arg2[%c7_89, %c2_90] : memref<9x4xf32, #tpu.memory_space<smem>>
    %178 = vector.broadcast %177 : f32 to vector<16x16xf32>
    %179 = arith.mulf %178, %141 : vector<16x16xf32>
    %180 = arith.addf %176, %179 : vector<16x16xf32>
    %c8_91 = arith.constant 8 : index
    %c2_92 = arith.constant 2 : index
    %181 = memref.load %arg2[%c8_91, %c2_92] : memref<9x4xf32, #tpu.memory_space<smem>>
    %182 = vector.broadcast %181 : f32 to vector<16x16xf32>
    %183 = arith.mulf %182, %147 : vector<16x16xf32>
    %184 = arith.addf %180, %183 : vector<16x16xf32>
    %c15_i32_93 = arith.constant 15 : i32
    %185 = tpu.dynamic_rotate %184 by %c15_i32_93 dim 0 : vector<16x16xf32>, i32 -> vector<16x16xf32>
    %cst_94 = arith.constant 0.000000e+00 : f32
    %186 = vector.broadcast %cst_94 : f32 to vector<16x16xf32>
    %187 = arith.select %9, %185, %186 : vector<16x16xi1>, vector<16x16xf32>
    %188 = arith.addf %173, %187 : vector<16x16xf32>
    %c0_95 = arith.constant 0 : index
    %c2_96 = arith.constant 2 : index
    %189 = memref.load %arg3[%c0_95, %c2_96] : memref<1x4xf32, #tpu.memory_space<smem>>
    %190 = vector.broadcast %189 : f32 to vector<16x16xf32>
    %191 = arith.addf %188, %190 : vector<16x16xf32>
    %c0_97 = arith.constant 0 : index
    %c3_98 = arith.constant 3 : index
    %c0_99 = arith.constant 0 : index
    %c0_100 = arith.constant 0 : index
    %192 = vector.load %arg1[%c0_97, %c3_98, %c0_99, %c0_100] : memref<1x4x16x16xf32, #tpu.memory_space<vmem>>, vector<1x1x16x16xf32>
    %193 = vector.shape_cast %192 : vector<1x1x16x16xf32> to vector<16x16xf32>
    %c1_i32_101 = arith.constant 1 : i32
    %194 = tpu.dynamic_rotate %193 by %c1_i32_101 dim 1 : vector<16x16xf32>, i32 -> vector<16x16xf32>
    %cst_102 = arith.constant 0.000000e+00 : f32
    %195 = vector.broadcast %cst_102 : f32 to vector<16x16xf32>
    %196 = arith.select %3, %194, %195 : vector<16x16xi1>, vector<16x16xf32>
    %c15_i32_103 = arith.constant 15 : i32
    %197 = tpu.dynamic_rotate %193 by %c15_i32_103 dim 1 : vector<16x16xf32>, i32 -> vector<16x16xf32>
    %cst_104 = arith.constant 0.000000e+00 : f32
    %198 = vector.broadcast %cst_104 : f32 to vector<16x16xf32>
    %199 = arith.select %5, %197, %198 : vector<16x16xi1>, vector<16x16xf32>
    %c0_105 = arith.constant 0 : index
    %c3_106 = arith.constant 3 : index
    %200 = memref.load %arg2[%c0_105, %c3_106] : memref<9x4xf32, #tpu.memory_space<smem>>
    %201 = vector.broadcast %200 : f32 to vector<16x16xf32>
    %202 = arith.mulf %201, %196 : vector<16x16xf32>
    %c1_107 = arith.constant 1 : index
    %c3_108 = arith.constant 3 : index
    %203 = memref.load %arg2[%c1_107, %c3_108] : memref<9x4xf32, #tpu.memory_space<smem>>
    %204 = vector.broadcast %203 : f32 to vector<16x16xf32>
    %205 = arith.mulf %204, %193 : vector<16x16xf32>
    %206 = arith.addf %202, %205 : vector<16x16xf32>
    %c2_109 = arith.constant 2 : index
    %c3_110 = arith.constant 3 : index
    %207 = memref.load %arg2[%c2_109, %c3_110] : memref<9x4xf32, #tpu.memory_space<smem>>
    %208 = vector.broadcast %207 : f32 to vector<16x16xf32>
    %209 = arith.mulf %208, %199 : vector<16x16xf32>
    %210 = arith.addf %206, %209 : vector<16x16xf32>
    %c1_i32_111 = arith.constant 1 : i32
    %211 = tpu.dynamic_rotate %210 by %c1_i32_111 dim 0 : vector<16x16xf32>, i32 -> vector<16x16xf32>
    %cst_112 = arith.constant 0.000000e+00 : f32
    %212 = vector.broadcast %cst_112 : f32 to vector<16x16xf32>
    %213 = arith.select %7, %211, %212 : vector<16x16xi1>, vector<16x16xf32>
    %c3_113 = arith.constant 3 : index
    %c3_114 = arith.constant 3 : index
    %214 = memref.load %arg2[%c3_113, %c3_114] : memref<9x4xf32, #tpu.memory_space<smem>>
    %215 = vector.broadcast %214 : f32 to vector<16x16xf32>
    %216 = arith.mulf %215, %196 : vector<16x16xf32>
    %c4_115 = arith.constant 4 : index
    %c3_116 = arith.constant 3 : index
    %217 = memref.load %arg2[%c4_115, %c3_116] : memref<9x4xf32, #tpu.memory_space<smem>>
    %218 = vector.broadcast %217 : f32 to vector<16x16xf32>
    %219 = arith.mulf %218, %193 : vector<16x16xf32>
    %220 = arith.addf %216, %219 : vector<16x16xf32>
    %c5_117 = arith.constant 5 : index
    %c3_118 = arith.constant 3 : index
    %221 = memref.load %arg2[%c5_117, %c3_118] : memref<9x4xf32, #tpu.memory_space<smem>>
    %222 = vector.broadcast %221 : f32 to vector<16x16xf32>
    %223 = arith.mulf %222, %199 : vector<16x16xf32>
    %224 = arith.addf %220, %223 : vector<16x16xf32>
    %225 = arith.addf %213, %224 : vector<16x16xf32>
    %c6_119 = arith.constant 6 : index
    %c3_120 = arith.constant 3 : index
    %226 = memref.load %arg2[%c6_119, %c3_120] : memref<9x4xf32, #tpu.memory_space<smem>>
    %227 = vector.broadcast %226 : f32 to vector<16x16xf32>
    %228 = arith.mulf %227, %196 : vector<16x16xf32>
    %c7_121 = arith.constant 7 : index
    %c3_122 = arith.constant 3 : index
    %229 = memref.load %arg2[%c7_121, %c3_122] : memref<9x4xf32, #tpu.memory_space<smem>>
    %230 = vector.broadcast %229 : f32 to vector<16x16xf32>
    %231 = arith.mulf %230, %193 : vector<16x16xf32>
    %232 = arith.addf %228, %231 : vector<16x16xf32>
    %c8_123 = arith.constant 8 : index
    %c3_124 = arith.constant 3 : index
    %233 = memref.load %arg2[%c8_123, %c3_124] : memref<9x4xf32, #tpu.memory_space<smem>>
    %234 = vector.broadcast %233 : f32 to vector<16x16xf32>
    %235 = arith.mulf %234, %199 : vector<16x16xf32>
    %236 = arith.addf %232, %235 : vector<16x16xf32>
    %c15_i32_125 = arith.constant 15 : i32
    %237 = tpu.dynamic_rotate %236 by %c15_i32_125 dim 0 : vector<16x16xf32>, i32 -> vector<16x16xf32>
    %cst_126 = arith.constant 0.000000e+00 : f32
    %238 = vector.broadcast %cst_126 : f32 to vector<16x16xf32>
    %239 = arith.select %9, %237, %238 : vector<16x16xi1>, vector<16x16xf32>
    %240 = arith.addf %225, %239 : vector<16x16xf32>
    %c0_127 = arith.constant 0 : index
    %c3_128 = arith.constant 3 : index
    %241 = memref.load %arg3[%c0_127, %c3_128] : memref<1x4xf32, #tpu.memory_space<smem>>
    %242 = vector.broadcast %241 : f32 to vector<16x16xf32>
    %243 = arith.addf %240, %242 : vector<16x16xf32>
    %c0_129 = arith.constant 0 : index
    %c0_130 = arith.constant 0 : index
    %244 = memref.load %arg5[%c0_129, %c0_130] : memref<1x8xf32, #tpu.memory_space<smem>>
    %c0_131 = arith.constant 0 : index
    %c0_132 = arith.constant 0 : index
    %245 = memref.load %arg4[%c0_131, %c0_132] : memref<4x8xf32, #tpu.memory_space<smem>>
    %246 = vector.broadcast %245 : f32 to vector<16x16xf32>
    %247 = arith.mulf %246, %87 : vector<16x16xf32>
    %248 = vector.broadcast %244 : f32 to vector<16x16xf32>
    %249 = arith.addf %248, %247 : vector<16x16xf32>
    %c1_133 = arith.constant 1 : index
    %c0_134 = arith.constant 0 : index
    %250 = memref.load %arg4[%c1_133, %c0_134] : memref<4x8xf32, #tpu.memory_space<smem>>
    %251 = vector.broadcast %250 : f32 to vector<16x16xf32>
    %252 = arith.mulf %251, %139 : vector<16x16xf32>
    %253 = arith.addf %249, %252 : vector<16x16xf32>
    %c2_135 = arith.constant 2 : index
    %c0_136 = arith.constant 0 : index
    %254 = memref.load %arg4[%c2_135, %c0_136] : memref<4x8xf32, #tpu.memory_space<smem>>
    %255 = vector.broadcast %254 : f32 to vector<16x16xf32>
    %256 = arith.mulf %255, %191 : vector<16x16xf32>
    %257 = arith.addf %253, %256 : vector<16x16xf32>
    %c3_137 = arith.constant 3 : index
    %c0_138 = arith.constant 0 : index
    %258 = memref.load %arg4[%c3_137, %c0_138] : memref<4x8xf32, #tpu.memory_space<smem>>
    %259 = vector.broadcast %258 : f32 to vector<16x16xf32>
    %260 = arith.mulf %259, %243 : vector<16x16xf32>
    %261 = arith.addf %257, %260 : vector<16x16xf32>
    %cst_139 = arith.constant 0.000000e+00 : f32
    %262 = vector.broadcast %cst_139 : f32 to vector<16x16xf32>
    %263 = arith.maximumf %261, %262 : vector<16x16xf32>
    %c0_140 = arith.constant 0 : index
    %c1_141 = arith.constant 1 : index
    %264 = memref.load %arg5[%c0_140, %c1_141] : memref<1x8xf32, #tpu.memory_space<smem>>
    %c0_142 = arith.constant 0 : index
    %c1_143 = arith.constant 1 : index
    %265 = memref.load %arg4[%c0_142, %c1_143] : memref<4x8xf32, #tpu.memory_space<smem>>
    %266 = vector.broadcast %265 : f32 to vector<16x16xf32>
    %267 = arith.mulf %266, %87 : vector<16x16xf32>
    %268 = vector.broadcast %264 : f32 to vector<16x16xf32>
    %269 = arith.addf %268, %267 : vector<16x16xf32>
    %c1_144 = arith.constant 1 : index
    %c1_145 = arith.constant 1 : index
    %270 = memref.load %arg4[%c1_144, %c1_145] : memref<4x8xf32, #tpu.memory_space<smem>>
    %271 = vector.broadcast %270 : f32 to vector<16x16xf32>
    %272 = arith.mulf %271, %139 : vector<16x16xf32>
    %273 = arith.addf %269, %272 : vector<16x16xf32>
    %c2_146 = arith.constant 2 : index
    %c1_147 = arith.constant 1 : index
    %274 = memref.load %arg4[%c2_146, %c1_147] : memref<4x8xf32, #tpu.memory_space<smem>>
    %275 = vector.broadcast %274 : f32 to vector<16x16xf32>
    %276 = arith.mulf %275, %191 : vector<16x16xf32>
    %277 = arith.addf %273, %276 : vector<16x16xf32>
    %c3_148 = arith.constant 3 : index
    %c1_149 = arith.constant 1 : index
    %278 = memref.load %arg4[%c3_148, %c1_149] : memref<4x8xf32, #tpu.memory_space<smem>>
    %279 = vector.broadcast %278 : f32 to vector<16x16xf32>
    %280 = arith.mulf %279, %243 : vector<16x16xf32>
    %281 = arith.addf %277, %280 : vector<16x16xf32>
    %cst_150 = arith.constant 0.000000e+00 : f32
    %282 = vector.broadcast %cst_150 : f32 to vector<16x16xf32>
    %283 = arith.maximumf %281, %282 : vector<16x16xf32>
    %c0_151 = arith.constant 0 : index
    %c2_152 = arith.constant 2 : index
    %284 = memref.load %arg5[%c0_151, %c2_152] : memref<1x8xf32, #tpu.memory_space<smem>>
    %c0_153 = arith.constant 0 : index
    %c2_154 = arith.constant 2 : index
    %285 = memref.load %arg4[%c0_153, %c2_154] : memref<4x8xf32, #tpu.memory_space<smem>>
    %286 = vector.broadcast %285 : f32 to vector<16x16xf32>
    %287 = arith.mulf %286, %87 : vector<16x16xf32>
    %288 = vector.broadcast %284 : f32 to vector<16x16xf32>
    %289 = arith.addf %288, %287 : vector<16x16xf32>
    %c1_155 = arith.constant 1 : index
    %c2_156 = arith.constant 2 : index
    %290 = memref.load %arg4[%c1_155, %c2_156] : memref<4x8xf32, #tpu.memory_space<smem>>
    %291 = vector.broadcast %290 : f32 to vector<16x16xf32>
    %292 = arith.mulf %291, %139 : vector<16x16xf32>
    %293 = arith.addf %289, %292 : vector<16x16xf32>
    %c2_157 = arith.constant 2 : index
    %c2_158 = arith.constant 2 : index
    %294 = memref.load %arg4[%c2_157, %c2_158] : memref<4x8xf32, #tpu.memory_space<smem>>
    %295 = vector.broadcast %294 : f32 to vector<16x16xf32>
    %296 = arith.mulf %295, %191 : vector<16x16xf32>
    %297 = arith.addf %293, %296 : vector<16x16xf32>
    %c3_159 = arith.constant 3 : index
    %c2_160 = arith.constant 2 : index
    %298 = memref.load %arg4[%c3_159, %c2_160] : memref<4x8xf32, #tpu.memory_space<smem>>
    %299 = vector.broadcast %298 : f32 to vector<16x16xf32>
    %300 = arith.mulf %299, %243 : vector<16x16xf32>
    %301 = arith.addf %297, %300 : vector<16x16xf32>
    %cst_161 = arith.constant 0.000000e+00 : f32
    %302 = vector.broadcast %cst_161 : f32 to vector<16x16xf32>
    %303 = arith.maximumf %301, %302 : vector<16x16xf32>
    %c0_162 = arith.constant 0 : index
    %c3_163 = arith.constant 3 : index
    %304 = memref.load %arg5[%c0_162, %c3_163] : memref<1x8xf32, #tpu.memory_space<smem>>
    %c0_164 = arith.constant 0 : index
    %c3_165 = arith.constant 3 : index
    %305 = memref.load %arg4[%c0_164, %c3_165] : memref<4x8xf32, #tpu.memory_space<smem>>
    %306 = vector.broadcast %305 : f32 to vector<16x16xf32>
    %307 = arith.mulf %306, %87 : vector<16x16xf32>
    %308 = vector.broadcast %304 : f32 to vector<16x16xf32>
    %309 = arith.addf %308, %307 : vector<16x16xf32>
    %c1_166 = arith.constant 1 : index
    %c3_167 = arith.constant 3 : index
    %310 = memref.load %arg4[%c1_166, %c3_167] : memref<4x8xf32, #tpu.memory_space<smem>>
    %311 = vector.broadcast %310 : f32 to vector<16x16xf32>
    %312 = arith.mulf %311, %139 : vector<16x16xf32>
    %313 = arith.addf %309, %312 : vector<16x16xf32>
    %c2_168 = arith.constant 2 : index
    %c3_169 = arith.constant 3 : index
    %314 = memref.load %arg4[%c2_168, %c3_169] : memref<4x8xf32, #tpu.memory_space<smem>>
    %315 = vector.broadcast %314 : f32 to vector<16x16xf32>
    %316 = arith.mulf %315, %191 : vector<16x16xf32>
    %317 = arith.addf %313, %316 : vector<16x16xf32>
    %c3_170 = arith.constant 3 : index
    %c3_171 = arith.constant 3 : index
    %318 = memref.load %arg4[%c3_170, %c3_171] : memref<4x8xf32, #tpu.memory_space<smem>>
    %319 = vector.broadcast %318 : f32 to vector<16x16xf32>
    %320 = arith.mulf %319, %243 : vector<16x16xf32>
    %321 = arith.addf %317, %320 : vector<16x16xf32>
    %cst_172 = arith.constant 0.000000e+00 : f32
    %322 = vector.broadcast %cst_172 : f32 to vector<16x16xf32>
    %323 = arith.maximumf %321, %322 : vector<16x16xf32>
    %c0_173 = arith.constant 0 : index
    %c4_174 = arith.constant 4 : index
    %324 = memref.load %arg5[%c0_173, %c4_174] : memref<1x8xf32, #tpu.memory_space<smem>>
    %c0_175 = arith.constant 0 : index
    %c4_176 = arith.constant 4 : index
    %325 = memref.load %arg4[%c0_175, %c4_176] : memref<4x8xf32, #tpu.memory_space<smem>>
    %326 = vector.broadcast %325 : f32 to vector<16x16xf32>
    %327 = arith.mulf %326, %87 : vector<16x16xf32>
    %328 = vector.broadcast %324 : f32 to vector<16x16xf32>
    %329 = arith.addf %328, %327 : vector<16x16xf32>
    %c1_177 = arith.constant 1 : index
    %c4_178 = arith.constant 4 : index
    %330 = memref.load %arg4[%c1_177, %c4_178] : memref<4x8xf32, #tpu.memory_space<smem>>
    %331 = vector.broadcast %330 : f32 to vector<16x16xf32>
    %332 = arith.mulf %331, %139 : vector<16x16xf32>
    %333 = arith.addf %329, %332 : vector<16x16xf32>
    %c2_179 = arith.constant 2 : index
    %c4_180 = arith.constant 4 : index
    %334 = memref.load %arg4[%c2_179, %c4_180] : memref<4x8xf32, #tpu.memory_space<smem>>
    %335 = vector.broadcast %334 : f32 to vector<16x16xf32>
    %336 = arith.mulf %335, %191 : vector<16x16xf32>
    %337 = arith.addf %333, %336 : vector<16x16xf32>
    %c3_181 = arith.constant 3 : index
    %c4_182 = arith.constant 4 : index
    %338 = memref.load %arg4[%c3_181, %c4_182] : memref<4x8xf32, #tpu.memory_space<smem>>
    %339 = vector.broadcast %338 : f32 to vector<16x16xf32>
    %340 = arith.mulf %339, %243 : vector<16x16xf32>
    %341 = arith.addf %337, %340 : vector<16x16xf32>
    %cst_183 = arith.constant 0.000000e+00 : f32
    %342 = vector.broadcast %cst_183 : f32 to vector<16x16xf32>
    %343 = arith.maximumf %341, %342 : vector<16x16xf32>
    %c0_184 = arith.constant 0 : index
    %c5_185 = arith.constant 5 : index
    %344 = memref.load %arg5[%c0_184, %c5_185] : memref<1x8xf32, #tpu.memory_space<smem>>
    %c0_186 = arith.constant 0 : index
    %c5_187 = arith.constant 5 : index
    %345 = memref.load %arg4[%c0_186, %c5_187] : memref<4x8xf32, #tpu.memory_space<smem>>
    %346 = vector.broadcast %345 : f32 to vector<16x16xf32>
    %347 = arith.mulf %346, %87 : vector<16x16xf32>
    %348 = vector.broadcast %344 : f32 to vector<16x16xf32>
    %349 = arith.addf %348, %347 : vector<16x16xf32>
    %c1_188 = arith.constant 1 : index
    %c5_189 = arith.constant 5 : index
    %350 = memref.load %arg4[%c1_188, %c5_189] : memref<4x8xf32, #tpu.memory_space<smem>>
    %351 = vector.broadcast %350 : f32 to vector<16x16xf32>
    %352 = arith.mulf %351, %139 : vector<16x16xf32>
    %353 = arith.addf %349, %352 : vector<16x16xf32>
    %c2_190 = arith.constant 2 : index
    %c5_191 = arith.constant 5 : index
    %354 = memref.load %arg4[%c2_190, %c5_191] : memref<4x8xf32, #tpu.memory_space<smem>>
    %355 = vector.broadcast %354 : f32 to vector<16x16xf32>
    %356 = arith.mulf %355, %191 : vector<16x16xf32>
    %357 = arith.addf %353, %356 : vector<16x16xf32>
    %c3_192 = arith.constant 3 : index
    %c5_193 = arith.constant 5 : index
    %358 = memref.load %arg4[%c3_192, %c5_193] : memref<4x8xf32, #tpu.memory_space<smem>>
    %359 = vector.broadcast %358 : f32 to vector<16x16xf32>
    %360 = arith.mulf %359, %243 : vector<16x16xf32>
    %361 = arith.addf %357, %360 : vector<16x16xf32>
    %cst_194 = arith.constant 0.000000e+00 : f32
    %362 = vector.broadcast %cst_194 : f32 to vector<16x16xf32>
    %363 = arith.maximumf %361, %362 : vector<16x16xf32>
    %c0_195 = arith.constant 0 : index
    %c6_196 = arith.constant 6 : index
    %364 = memref.load %arg5[%c0_195, %c6_196] : memref<1x8xf32, #tpu.memory_space<smem>>
    %c0_197 = arith.constant 0 : index
    %c6_198 = arith.constant 6 : index
    %365 = memref.load %arg4[%c0_197, %c6_198] : memref<4x8xf32, #tpu.memory_space<smem>>
    %366 = vector.broadcast %365 : f32 to vector<16x16xf32>
    %367 = arith.mulf %366, %87 : vector<16x16xf32>
    %368 = vector.broadcast %364 : f32 to vector<16x16xf32>
    %369 = arith.addf %368, %367 : vector<16x16xf32>
    %c1_199 = arith.constant 1 : index
    %c6_200 = arith.constant 6 : index
    %370 = memref.load %arg4[%c1_199, %c6_200] : memref<4x8xf32, #tpu.memory_space<smem>>
    %371 = vector.broadcast %370 : f32 to vector<16x16xf32>
    %372 = arith.mulf %371, %139 : vector<16x16xf32>
    %373 = arith.addf %369, %372 : vector<16x16xf32>
    %c2_201 = arith.constant 2 : index
    %c6_202 = arith.constant 6 : index
    %374 = memref.load %arg4[%c2_201, %c6_202] : memref<4x8xf32, #tpu.memory_space<smem>>
    %375 = vector.broadcast %374 : f32 to vector<16x16xf32>
    %376 = arith.mulf %375, %191 : vector<16x16xf32>
    %377 = arith.addf %373, %376 : vector<16x16xf32>
    %c3_203 = arith.constant 3 : index
    %c6_204 = arith.constant 6 : index
    %378 = memref.load %arg4[%c3_203, %c6_204] : memref<4x8xf32, #tpu.memory_space<smem>>
    %379 = vector.broadcast %378 : f32 to vector<16x16xf32>
    %380 = arith.mulf %379, %243 : vector<16x16xf32>
    %381 = arith.addf %377, %380 : vector<16x16xf32>
    %cst_205 = arith.constant 0.000000e+00 : f32
    %382 = vector.broadcast %cst_205 : f32 to vector<16x16xf32>
    %383 = arith.maximumf %381, %382 : vector<16x16xf32>
    %c0_206 = arith.constant 0 : index
    %c7_207 = arith.constant 7 : index
    %384 = memref.load %arg5[%c0_206, %c7_207] : memref<1x8xf32, #tpu.memory_space<smem>>
    %c0_208 = arith.constant 0 : index
    %c7_209 = arith.constant 7 : index
    %385 = memref.load %arg4[%c0_208, %c7_209] : memref<4x8xf32, #tpu.memory_space<smem>>
    %386 = vector.broadcast %385 : f32 to vector<16x16xf32>
    %387 = arith.mulf %386, %87 : vector<16x16xf32>
    %388 = vector.broadcast %384 : f32 to vector<16x16xf32>
    %389 = arith.addf %388, %387 : vector<16x16xf32>
    %c1_210 = arith.constant 1 : index
    %c7_211 = arith.constant 7 : index
    %390 = memref.load %arg4[%c1_210, %c7_211] : memref<4x8xf32, #tpu.memory_space<smem>>
    %391 = vector.broadcast %390 : f32 to vector<16x16xf32>
    %392 = arith.mulf %391, %139 : vector<16x16xf32>
    %393 = arith.addf %389, %392 : vector<16x16xf32>
    %c2_212 = arith.constant 2 : index
    %c7_213 = arith.constant 7 : index
    %394 = memref.load %arg4[%c2_212, %c7_213] : memref<4x8xf32, #tpu.memory_space<smem>>
    %395 = vector.broadcast %394 : f32 to vector<16x16xf32>
    %396 = arith.mulf %395, %191 : vector<16x16xf32>
    %397 = arith.addf %393, %396 : vector<16x16xf32>
    %c3_214 = arith.constant 3 : index
    %c7_215 = arith.constant 7 : index
    %398 = memref.load %arg4[%c3_214, %c7_215] : memref<4x8xf32, #tpu.memory_space<smem>>
    %399 = vector.broadcast %398 : f32 to vector<16x16xf32>
    %400 = arith.mulf %399, %243 : vector<16x16xf32>
    %401 = arith.addf %397, %400 : vector<16x16xf32>
    %cst_216 = arith.constant 0.000000e+00 : f32
    %402 = vector.broadcast %cst_216 : f32 to vector<16x16xf32>
    %403 = arith.maximumf %401, %402 : vector<16x16xf32>
    %c1_i32_217 = arith.constant 1 : i32
    %404 = tpu.dynamic_rotate %263 by %c1_i32_217 dim 1 : vector<16x16xf32>, i32 -> vector<16x16xf32>
    %cst_218 = arith.constant 0.000000e+00 : f32
    %405 = vector.broadcast %cst_218 : f32 to vector<16x16xf32>
    %406 = arith.select %3, %404, %405 : vector<16x16xi1>, vector<16x16xf32>
    %c15_i32_219 = arith.constant 15 : i32
    %407 = tpu.dynamic_rotate %263 by %c15_i32_219 dim 1 : vector<16x16xf32>, i32 -> vector<16x16xf32>
    %cst_220 = arith.constant 0.000000e+00 : f32
    %408 = vector.broadcast %cst_220 : f32 to vector<16x16xf32>
    %409 = arith.select %5, %407, %408 : vector<16x16xi1>, vector<16x16xf32>
    %c0_221 = arith.constant 0 : index
    %c0_222 = arith.constant 0 : index
    %410 = memref.load %arg6[%c0_221, %c0_222] : memref<9x8xf32, #tpu.memory_space<smem>>
    %411 = vector.broadcast %410 : f32 to vector<16x16xf32>
    %412 = arith.mulf %411, %406 : vector<16x16xf32>
    %c1_223 = arith.constant 1 : index
    %c0_224 = arith.constant 0 : index
    %413 = memref.load %arg6[%c1_223, %c0_224] : memref<9x8xf32, #tpu.memory_space<smem>>
    %414 = vector.broadcast %413 : f32 to vector<16x16xf32>
    %415 = arith.mulf %414, %263 : vector<16x16xf32>
    %416 = arith.addf %412, %415 : vector<16x16xf32>
    %c2_225 = arith.constant 2 : index
    %c0_226 = arith.constant 0 : index
    %417 = memref.load %arg6[%c2_225, %c0_226] : memref<9x8xf32, #tpu.memory_space<smem>>
    %418 = vector.broadcast %417 : f32 to vector<16x16xf32>
    %419 = arith.mulf %418, %409 : vector<16x16xf32>
    %420 = arith.addf %416, %419 : vector<16x16xf32>
    %c1_i32_227 = arith.constant 1 : i32
    %421 = tpu.dynamic_rotate %420 by %c1_i32_227 dim 0 : vector<16x16xf32>, i32 -> vector<16x16xf32>
    %cst_228 = arith.constant 0.000000e+00 : f32
    %422 = vector.broadcast %cst_228 : f32 to vector<16x16xf32>
    %423 = arith.select %7, %421, %422 : vector<16x16xi1>, vector<16x16xf32>
    %c3_229 = arith.constant 3 : index
    %c0_230 = arith.constant 0 : index
    %424 = memref.load %arg6[%c3_229, %c0_230] : memref<9x8xf32, #tpu.memory_space<smem>>
    %425 = vector.broadcast %424 : f32 to vector<16x16xf32>
    %426 = arith.mulf %425, %406 : vector<16x16xf32>
    %c4_231 = arith.constant 4 : index
    %c0_232 = arith.constant 0 : index
    %427 = memref.load %arg6[%c4_231, %c0_232] : memref<9x8xf32, #tpu.memory_space<smem>>
    %428 = vector.broadcast %427 : f32 to vector<16x16xf32>
    %429 = arith.mulf %428, %263 : vector<16x16xf32>
    %430 = arith.addf %426, %429 : vector<16x16xf32>
    %c5_233 = arith.constant 5 : index
    %c0_234 = arith.constant 0 : index
    %431 = memref.load %arg6[%c5_233, %c0_234] : memref<9x8xf32, #tpu.memory_space<smem>>
    %432 = vector.broadcast %431 : f32 to vector<16x16xf32>
    %433 = arith.mulf %432, %409 : vector<16x16xf32>
    %434 = arith.addf %430, %433 : vector<16x16xf32>
    %435 = arith.addf %423, %434 : vector<16x16xf32>
    %c6_235 = arith.constant 6 : index
    %c0_236 = arith.constant 0 : index
    %436 = memref.load %arg6[%c6_235, %c0_236] : memref<9x8xf32, #tpu.memory_space<smem>>
    %437 = vector.broadcast %436 : f32 to vector<16x16xf32>
    %438 = arith.mulf %437, %406 : vector<16x16xf32>
    %c7_237 = arith.constant 7 : index
    %c0_238 = arith.constant 0 : index
    %439 = memref.load %arg6[%c7_237, %c0_238] : memref<9x8xf32, #tpu.memory_space<smem>>
    %440 = vector.broadcast %439 : f32 to vector<16x16xf32>
    %441 = arith.mulf %440, %263 : vector<16x16xf32>
    %442 = arith.addf %438, %441 : vector<16x16xf32>
    %c8_239 = arith.constant 8 : index
    %c0_240 = arith.constant 0 : index
    %443 = memref.load %arg6[%c8_239, %c0_240] : memref<9x8xf32, #tpu.memory_space<smem>>
    %444 = vector.broadcast %443 : f32 to vector<16x16xf32>
    %445 = arith.mulf %444, %409 : vector<16x16xf32>
    %446 = arith.addf %442, %445 : vector<16x16xf32>
    %c15_i32_241 = arith.constant 15 : i32
    %447 = tpu.dynamic_rotate %446 by %c15_i32_241 dim 0 : vector<16x16xf32>, i32 -> vector<16x16xf32>
    %cst_242 = arith.constant 0.000000e+00 : f32
    %448 = vector.broadcast %cst_242 : f32 to vector<16x16xf32>
    %449 = arith.select %9, %447, %448 : vector<16x16xi1>, vector<16x16xf32>
    %450 = arith.addf %435, %449 : vector<16x16xf32>
    %c0_243 = arith.constant 0 : index
    %c0_244 = arith.constant 0 : index
    %451 = memref.load %arg7[%c0_243, %c0_244] : memref<1x8xf32, #tpu.memory_space<smem>>
    %452 = vector.broadcast %451 : f32 to vector<16x16xf32>
    %453 = arith.addf %450, %452 : vector<16x16xf32>
    %c1_i32_245 = arith.constant 1 : i32
    %454 = tpu.dynamic_rotate %283 by %c1_i32_245 dim 1 : vector<16x16xf32>, i32 -> vector<16x16xf32>
    %cst_246 = arith.constant 0.000000e+00 : f32
    %455 = vector.broadcast %cst_246 : f32 to vector<16x16xf32>
    %456 = arith.select %3, %454, %455 : vector<16x16xi1>, vector<16x16xf32>
    %c15_i32_247 = arith.constant 15 : i32
    %457 = tpu.dynamic_rotate %283 by %c15_i32_247 dim 1 : vector<16x16xf32>, i32 -> vector<16x16xf32>
    %cst_248 = arith.constant 0.000000e+00 : f32
    %458 = vector.broadcast %cst_248 : f32 to vector<16x16xf32>
    %459 = arith.select %5, %457, %458 : vector<16x16xi1>, vector<16x16xf32>
    %c0_249 = arith.constant 0 : index
    %c1_250 = arith.constant 1 : index
    %460 = memref.load %arg6[%c0_249, %c1_250] : memref<9x8xf32, #tpu.memory_space<smem>>
    %461 = vector.broadcast %460 : f32 to vector<16x16xf32>
    %462 = arith.mulf %461, %456 : vector<16x16xf32>
    %c1_251 = arith.constant 1 : index
    %c1_252 = arith.constant 1 : index
    %463 = memref.load %arg6[%c1_251, %c1_252] : memref<9x8xf32, #tpu.memory_space<smem>>
    %464 = vector.broadcast %463 : f32 to vector<16x16xf32>
    %465 = arith.mulf %464, %283 : vector<16x16xf32>
    %466 = arith.addf %462, %465 : vector<16x16xf32>
    %c2_253 = arith.constant 2 : index
    %c1_254 = arith.constant 1 : index
    %467 = memref.load %arg6[%c2_253, %c1_254] : memref<9x8xf32, #tpu.memory_space<smem>>
    %468 = vector.broadcast %467 : f32 to vector<16x16xf32>
    %469 = arith.mulf %468, %459 : vector<16x16xf32>
    %470 = arith.addf %466, %469 : vector<16x16xf32>
    %c1_i32_255 = arith.constant 1 : i32
    %471 = tpu.dynamic_rotate %470 by %c1_i32_255 dim 0 : vector<16x16xf32>, i32 -> vector<16x16xf32>
    %cst_256 = arith.constant 0.000000e+00 : f32
    %472 = vector.broadcast %cst_256 : f32 to vector<16x16xf32>
    %473 = arith.select %7, %471, %472 : vector<16x16xi1>, vector<16x16xf32>
    %c3_257 = arith.constant 3 : index
    %c1_258 = arith.constant 1 : index
    %474 = memref.load %arg6[%c3_257, %c1_258] : memref<9x8xf32, #tpu.memory_space<smem>>
    %475 = vector.broadcast %474 : f32 to vector<16x16xf32>
    %476 = arith.mulf %475, %456 : vector<16x16xf32>
    %c4_259 = arith.constant 4 : index
    %c1_260 = arith.constant 1 : index
    %477 = memref.load %arg6[%c4_259, %c1_260] : memref<9x8xf32, #tpu.memory_space<smem>>
    %478 = vector.broadcast %477 : f32 to vector<16x16xf32>
    %479 = arith.mulf %478, %283 : vector<16x16xf32>
    %480 = arith.addf %476, %479 : vector<16x16xf32>
    %c5_261 = arith.constant 5 : index
    %c1_262 = arith.constant 1 : index
    %481 = memref.load %arg6[%c5_261, %c1_262] : memref<9x8xf32, #tpu.memory_space<smem>>
    %482 = vector.broadcast %481 : f32 to vector<16x16xf32>
    %483 = arith.mulf %482, %459 : vector<16x16xf32>
    %484 = arith.addf %480, %483 : vector<16x16xf32>
    %485 = arith.addf %473, %484 : vector<16x16xf32>
    %c6_263 = arith.constant 6 : index
    %c1_264 = arith.constant 1 : index
    %486 = memref.load %arg6[%c6_263, %c1_264] : memref<9x8xf32, #tpu.memory_space<smem>>
    %487 = vector.broadcast %486 : f32 to vector<16x16xf32>
    %488 = arith.mulf %487, %456 : vector<16x16xf32>
    %c7_265 = arith.constant 7 : index
    %c1_266 = arith.constant 1 : index
    %489 = memref.load %arg6[%c7_265, %c1_266] : memref<9x8xf32, #tpu.memory_space<smem>>
    %490 = vector.broadcast %489 : f32 to vector<16x16xf32>
    %491 = arith.mulf %490, %283 : vector<16x16xf32>
    %492 = arith.addf %488, %491 : vector<16x16xf32>
    %c8_267 = arith.constant 8 : index
    %c1_268 = arith.constant 1 : index
    %493 = memref.load %arg6[%c8_267, %c1_268] : memref<9x8xf32, #tpu.memory_space<smem>>
    %494 = vector.broadcast %493 : f32 to vector<16x16xf32>
    %495 = arith.mulf %494, %459 : vector<16x16xf32>
    %496 = arith.addf %492, %495 : vector<16x16xf32>
    %c15_i32_269 = arith.constant 15 : i32
    %497 = tpu.dynamic_rotate %496 by %c15_i32_269 dim 0 : vector<16x16xf32>, i32 -> vector<16x16xf32>
    %cst_270 = arith.constant 0.000000e+00 : f32
    %498 = vector.broadcast %cst_270 : f32 to vector<16x16xf32>
    %499 = arith.select %9, %497, %498 : vector<16x16xi1>, vector<16x16xf32>
    %500 = arith.addf %485, %499 : vector<16x16xf32>
    %c0_271 = arith.constant 0 : index
    %c1_272 = arith.constant 1 : index
    %501 = memref.load %arg7[%c0_271, %c1_272] : memref<1x8xf32, #tpu.memory_space<smem>>
    %502 = vector.broadcast %501 : f32 to vector<16x16xf32>
    %503 = arith.addf %500, %502 : vector<16x16xf32>
    %c1_i32_273 = arith.constant 1 : i32
    %504 = tpu.dynamic_rotate %303 by %c1_i32_273 dim 1 : vector<16x16xf32>, i32 -> vector<16x16xf32>
    %cst_274 = arith.constant 0.000000e+00 : f32
    %505 = vector.broadcast %cst_274 : f32 to vector<16x16xf32>
    %506 = arith.select %3, %504, %505 : vector<16x16xi1>, vector<16x16xf32>
    %c15_i32_275 = arith.constant 15 : i32
    %507 = tpu.dynamic_rotate %303 by %c15_i32_275 dim 1 : vector<16x16xf32>, i32 -> vector<16x16xf32>
    %cst_276 = arith.constant 0.000000e+00 : f32
    %508 = vector.broadcast %cst_276 : f32 to vector<16x16xf32>
    %509 = arith.select %5, %507, %508 : vector<16x16xi1>, vector<16x16xf32>
    %c0_277 = arith.constant 0 : index
    %c2_278 = arith.constant 2 : index
    %510 = memref.load %arg6[%c0_277, %c2_278] : memref<9x8xf32, #tpu.memory_space<smem>>
    %511 = vector.broadcast %510 : f32 to vector<16x16xf32>
    %512 = arith.mulf %511, %506 : vector<16x16xf32>
    %c1_279 = arith.constant 1 : index
    %c2_280 = arith.constant 2 : index
    %513 = memref.load %arg6[%c1_279, %c2_280] : memref<9x8xf32, #tpu.memory_space<smem>>
    %514 = vector.broadcast %513 : f32 to vector<16x16xf32>
    %515 = arith.mulf %514, %303 : vector<16x16xf32>
    %516 = arith.addf %512, %515 : vector<16x16xf32>
    %c2_281 = arith.constant 2 : index
    %c2_282 = arith.constant 2 : index
    %517 = memref.load %arg6[%c2_281, %c2_282] : memref<9x8xf32, #tpu.memory_space<smem>>
    %518 = vector.broadcast %517 : f32 to vector<16x16xf32>
    %519 = arith.mulf %518, %509 : vector<16x16xf32>
    %520 = arith.addf %516, %519 : vector<16x16xf32>
    %c1_i32_283 = arith.constant 1 : i32
    %521 = tpu.dynamic_rotate %520 by %c1_i32_283 dim 0 : vector<16x16xf32>, i32 -> vector<16x16xf32>
    %cst_284 = arith.constant 0.000000e+00 : f32
    %522 = vector.broadcast %cst_284 : f32 to vector<16x16xf32>
    %523 = arith.select %7, %521, %522 : vector<16x16xi1>, vector<16x16xf32>
    %c3_285 = arith.constant 3 : index
    %c2_286 = arith.constant 2 : index
    %524 = memref.load %arg6[%c3_285, %c2_286] : memref<9x8xf32, #tpu.memory_space<smem>>
    %525 = vector.broadcast %524 : f32 to vector<16x16xf32>
    %526 = arith.mulf %525, %506 : vector<16x16xf32>
    %c4_287 = arith.constant 4 : index
    %c2_288 = arith.constant 2 : index
    %527 = memref.load %arg6[%c4_287, %c2_288] : memref<9x8xf32, #tpu.memory_space<smem>>
    %528 = vector.broadcast %527 : f32 to vector<16x16xf32>
    %529 = arith.mulf %528, %303 : vector<16x16xf32>
    %530 = arith.addf %526, %529 : vector<16x16xf32>
    %c5_289 = arith.constant 5 : index
    %c2_290 = arith.constant 2 : index
    %531 = memref.load %arg6[%c5_289, %c2_290] : memref<9x8xf32, #tpu.memory_space<smem>>
    %532 = vector.broadcast %531 : f32 to vector<16x16xf32>
    %533 = arith.mulf %532, %509 : vector<16x16xf32>
    %534 = arith.addf %530, %533 : vector<16x16xf32>
    %535 = arith.addf %523, %534 : vector<16x16xf32>
    %c6_291 = arith.constant 6 : index
    %c2_292 = arith.constant 2 : index
    %536 = memref.load %arg6[%c6_291, %c2_292] : memref<9x8xf32, #tpu.memory_space<smem>>
    %537 = vector.broadcast %536 : f32 to vector<16x16xf32>
    %538 = arith.mulf %537, %506 : vector<16x16xf32>
    %c7_293 = arith.constant 7 : index
    %c2_294 = arith.constant 2 : index
    %539 = memref.load %arg6[%c7_293, %c2_294] : memref<9x8xf32, #tpu.memory_space<smem>>
    %540 = vector.broadcast %539 : f32 to vector<16x16xf32>
    %541 = arith.mulf %540, %303 : vector<16x16xf32>
    %542 = arith.addf %538, %541 : vector<16x16xf32>
    %c8_295 = arith.constant 8 : index
    %c2_296 = arith.constant 2 : index
    %543 = memref.load %arg6[%c8_295, %c2_296] : memref<9x8xf32, #tpu.memory_space<smem>>
    %544 = vector.broadcast %543 : f32 to vector<16x16xf32>
    %545 = arith.mulf %544, %509 : vector<16x16xf32>
    %546 = arith.addf %542, %545 : vector<16x16xf32>
    %c15_i32_297 = arith.constant 15 : i32
    %547 = tpu.dynamic_rotate %546 by %c15_i32_297 dim 0 : vector<16x16xf32>, i32 -> vector<16x16xf32>
    %cst_298 = arith.constant 0.000000e+00 : f32
    %548 = vector.broadcast %cst_298 : f32 to vector<16x16xf32>
    %549 = arith.select %9, %547, %548 : vector<16x16xi1>, vector<16x16xf32>
    %550 = arith.addf %535, %549 : vector<16x16xf32>
    %c0_299 = arith.constant 0 : index
    %c2_300 = arith.constant 2 : index
    %551 = memref.load %arg7[%c0_299, %c2_300] : memref<1x8xf32, #tpu.memory_space<smem>>
    %552 = vector.broadcast %551 : f32 to vector<16x16xf32>
    %553 = arith.addf %550, %552 : vector<16x16xf32>
    %c1_i32_301 = arith.constant 1 : i32
    %554 = tpu.dynamic_rotate %323 by %c1_i32_301 dim 1 : vector<16x16xf32>, i32 -> vector<16x16xf32>
    %cst_302 = arith.constant 0.000000e+00 : f32
    %555 = vector.broadcast %cst_302 : f32 to vector<16x16xf32>
    %556 = arith.select %3, %554, %555 : vector<16x16xi1>, vector<16x16xf32>
    %c15_i32_303 = arith.constant 15 : i32
    %557 = tpu.dynamic_rotate %323 by %c15_i32_303 dim 1 : vector<16x16xf32>, i32 -> vector<16x16xf32>
    %cst_304 = arith.constant 0.000000e+00 : f32
    %558 = vector.broadcast %cst_304 : f32 to vector<16x16xf32>
    %559 = arith.select %5, %557, %558 : vector<16x16xi1>, vector<16x16xf32>
    %c0_305 = arith.constant 0 : index
    %c3_306 = arith.constant 3 : index
    %560 = memref.load %arg6[%c0_305, %c3_306] : memref<9x8xf32, #tpu.memory_space<smem>>
    %561 = vector.broadcast %560 : f32 to vector<16x16xf32>
    %562 = arith.mulf %561, %556 : vector<16x16xf32>
    %c1_307 = arith.constant 1 : index
    %c3_308 = arith.constant 3 : index
    %563 = memref.load %arg6[%c1_307, %c3_308] : memref<9x8xf32, #tpu.memory_space<smem>>
    %564 = vector.broadcast %563 : f32 to vector<16x16xf32>
    %565 = arith.mulf %564, %323 : vector<16x16xf32>
    %566 = arith.addf %562, %565 : vector<16x16xf32>
    %c2_309 = arith.constant 2 : index
    %c3_310 = arith.constant 3 : index
    %567 = memref.load %arg6[%c2_309, %c3_310] : memref<9x8xf32, #tpu.memory_space<smem>>
    %568 = vector.broadcast %567 : f32 to vector<16x16xf32>
    %569 = arith.mulf %568, %559 : vector<16x16xf32>
    %570 = arith.addf %566, %569 : vector<16x16xf32>
    %c1_i32_311 = arith.constant 1 : i32
    %571 = tpu.dynamic_rotate %570 by %c1_i32_311 dim 0 : vector<16x16xf32>, i32 -> vector<16x16xf32>
    %cst_312 = arith.constant 0.000000e+00 : f32
    %572 = vector.broadcast %cst_312 : f32 to vector<16x16xf32>
    %573 = arith.select %7, %571, %572 : vector<16x16xi1>, vector<16x16xf32>
    %c3_313 = arith.constant 3 : index
    %c3_314 = arith.constant 3 : index
    %574 = memref.load %arg6[%c3_313, %c3_314] : memref<9x8xf32, #tpu.memory_space<smem>>
    %575 = vector.broadcast %574 : f32 to vector<16x16xf32>
    %576 = arith.mulf %575, %556 : vector<16x16xf32>
    %c4_315 = arith.constant 4 : index
    %c3_316 = arith.constant 3 : index
    %577 = memref.load %arg6[%c4_315, %c3_316] : memref<9x8xf32, #tpu.memory_space<smem>>
    %578 = vector.broadcast %577 : f32 to vector<16x16xf32>
    %579 = arith.mulf %578, %323 : vector<16x16xf32>
    %580 = arith.addf %576, %579 : vector<16x16xf32>
    %c5_317 = arith.constant 5 : index
    %c3_318 = arith.constant 3 : index
    %581 = memref.load %arg6[%c5_317, %c3_318] : memref<9x8xf32, #tpu.memory_space<smem>>
    %582 = vector.broadcast %581 : f32 to vector<16x16xf32>
    %583 = arith.mulf %582, %559 : vector<16x16xf32>
    %584 = arith.addf %580, %583 : vector<16x16xf32>
    %585 = arith.addf %573, %584 : vector<16x16xf32>
    %c6_319 = arith.constant 6 : index
    %c3_320 = arith.constant 3 : index
    %586 = memref.load %arg6[%c6_319, %c3_320] : memref<9x8xf32, #tpu.memory_space<smem>>
    %587 = vector.broadcast %586 : f32 to vector<16x16xf32>
    %588 = arith.mulf %587, %556 : vector<16x16xf32>
    %c7_321 = arith.constant 7 : index
    %c3_322 = arith.constant 3 : index
    %589 = memref.load %arg6[%c7_321, %c3_322] : memref<9x8xf32, #tpu.memory_space<smem>>
    %590 = vector.broadcast %589 : f32 to vector<16x16xf32>
    %591 = arith.mulf %590, %323 : vector<16x16xf32>
    %592 = arith.addf %588, %591 : vector<16x16xf32>
    %c8_323 = arith.constant 8 : index
    %c3_324 = arith.constant 3 : index
    %593 = memref.load %arg6[%c8_323, %c3_324] : memref<9x8xf32, #tpu.memory_space<smem>>
    %594 = vector.broadcast %593 : f32 to vector<16x16xf32>
    %595 = arith.mulf %594, %559 : vector<16x16xf32>
    %596 = arith.addf %592, %595 : vector<16x16xf32>
    %c15_i32_325 = arith.constant 15 : i32
    %597 = tpu.dynamic_rotate %596 by %c15_i32_325 dim 0 : vector<16x16xf32>, i32 -> vector<16x16xf32>
    %cst_326 = arith.constant 0.000000e+00 : f32
    %598 = vector.broadcast %cst_326 : f32 to vector<16x16xf32>
    %599 = arith.select %9, %597, %598 : vector<16x16xi1>, vector<16x16xf32>
    %600 = arith.addf %585, %599 : vector<16x16xf32>
    %c0_327 = arith.constant 0 : index
    %c3_328 = arith.constant 3 : index
    %601 = memref.load %arg7[%c0_327, %c3_328] : memref<1x8xf32, #tpu.memory_space<smem>>
    %602 = vector.broadcast %601 : f32 to vector<16x16xf32>
    %603 = arith.addf %600, %602 : vector<16x16xf32>
    %c1_i32_329 = arith.constant 1 : i32
    %604 = tpu.dynamic_rotate %343 by %c1_i32_329 dim 1 : vector<16x16xf32>, i32 -> vector<16x16xf32>
    %cst_330 = arith.constant 0.000000e+00 : f32
    %605 = vector.broadcast %cst_330 : f32 to vector<16x16xf32>
    %606 = arith.select %3, %604, %605 : vector<16x16xi1>, vector<16x16xf32>
    %c15_i32_331 = arith.constant 15 : i32
    %607 = tpu.dynamic_rotate %343 by %c15_i32_331 dim 1 : vector<16x16xf32>, i32 -> vector<16x16xf32>
    %cst_332 = arith.constant 0.000000e+00 : f32
    %608 = vector.broadcast %cst_332 : f32 to vector<16x16xf32>
    %609 = arith.select %5, %607, %608 : vector<16x16xi1>, vector<16x16xf32>
    %c0_333 = arith.constant 0 : index
    %c4_334 = arith.constant 4 : index
    %610 = memref.load %arg6[%c0_333, %c4_334] : memref<9x8xf32, #tpu.memory_space<smem>>
    %611 = vector.broadcast %610 : f32 to vector<16x16xf32>
    %612 = arith.mulf %611, %606 : vector<16x16xf32>
    %c1_335 = arith.constant 1 : index
    %c4_336 = arith.constant 4 : index
    %613 = memref.load %arg6[%c1_335, %c4_336] : memref<9x8xf32, #tpu.memory_space<smem>>
    %614 = vector.broadcast %613 : f32 to vector<16x16xf32>
    %615 = arith.mulf %614, %343 : vector<16x16xf32>
    %616 = arith.addf %612, %615 : vector<16x16xf32>
    %c2_337 = arith.constant 2 : index
    %c4_338 = arith.constant 4 : index
    %617 = memref.load %arg6[%c2_337, %c4_338] : memref<9x8xf32, #tpu.memory_space<smem>>
    %618 = vector.broadcast %617 : f32 to vector<16x16xf32>
    %619 = arith.mulf %618, %609 : vector<16x16xf32>
    %620 = arith.addf %616, %619 : vector<16x16xf32>
    %c1_i32_339 = arith.constant 1 : i32
    %621 = tpu.dynamic_rotate %620 by %c1_i32_339 dim 0 : vector<16x16xf32>, i32 -> vector<16x16xf32>
    %cst_340 = arith.constant 0.000000e+00 : f32
    %622 = vector.broadcast %cst_340 : f32 to vector<16x16xf32>
    %623 = arith.select %7, %621, %622 : vector<16x16xi1>, vector<16x16xf32>
    %c3_341 = arith.constant 3 : index
    %c4_342 = arith.constant 4 : index
    %624 = memref.load %arg6[%c3_341, %c4_342] : memref<9x8xf32, #tpu.memory_space<smem>>
    %625 = vector.broadcast %624 : f32 to vector<16x16xf32>
    %626 = arith.mulf %625, %606 : vector<16x16xf32>
    %c4_343 = arith.constant 4 : index
    %c4_344 = arith.constant 4 : index
    %627 = memref.load %arg6[%c4_343, %c4_344] : memref<9x8xf32, #tpu.memory_space<smem>>
    %628 = vector.broadcast %627 : f32 to vector<16x16xf32>
    %629 = arith.mulf %628, %343 : vector<16x16xf32>
    %630 = arith.addf %626, %629 : vector<16x16xf32>
    %c5_345 = arith.constant 5 : index
    %c4_346 = arith.constant 4 : index
    %631 = memref.load %arg6[%c5_345, %c4_346] : memref<9x8xf32, #tpu.memory_space<smem>>
    %632 = vector.broadcast %631 : f32 to vector<16x16xf32>
    %633 = arith.mulf %632, %609 : vector<16x16xf32>
    %634 = arith.addf %630, %633 : vector<16x16xf32>
    %635 = arith.addf %623, %634 : vector<16x16xf32>
    %c6_347 = arith.constant 6 : index
    %c4_348 = arith.constant 4 : index
    %636 = memref.load %arg6[%c6_347, %c4_348] : memref<9x8xf32, #tpu.memory_space<smem>>
    %637 = vector.broadcast %636 : f32 to vector<16x16xf32>
    %638 = arith.mulf %637, %606 : vector<16x16xf32>
    %c7_349 = arith.constant 7 : index
    %c4_350 = arith.constant 4 : index
    %639 = memref.load %arg6[%c7_349, %c4_350] : memref<9x8xf32, #tpu.memory_space<smem>>
    %640 = vector.broadcast %639 : f32 to vector<16x16xf32>
    %641 = arith.mulf %640, %343 : vector<16x16xf32>
    %642 = arith.addf %638, %641 : vector<16x16xf32>
    %c8_351 = arith.constant 8 : index
    %c4_352 = arith.constant 4 : index
    %643 = memref.load %arg6[%c8_351, %c4_352] : memref<9x8xf32, #tpu.memory_space<smem>>
    %644 = vector.broadcast %643 : f32 to vector<16x16xf32>
    %645 = arith.mulf %644, %609 : vector<16x16xf32>
    %646 = arith.addf %642, %645 : vector<16x16xf32>
    %c15_i32_353 = arith.constant 15 : i32
    %647 = tpu.dynamic_rotate %646 by %c15_i32_353 dim 0 : vector<16x16xf32>, i32 -> vector<16x16xf32>
    %cst_354 = arith.constant 0.000000e+00 : f32
    %648 = vector.broadcast %cst_354 : f32 to vector<16x16xf32>
    %649 = arith.select %9, %647, %648 : vector<16x16xi1>, vector<16x16xf32>
    %650 = arith.addf %635, %649 : vector<16x16xf32>
    %c0_355 = arith.constant 0 : index
    %c4_356 = arith.constant 4 : index
    %651 = memref.load %arg7[%c0_355, %c4_356] : memref<1x8xf32, #tpu.memory_space<smem>>
    %652 = vector.broadcast %651 : f32 to vector<16x16xf32>
    %653 = arith.addf %650, %652 : vector<16x16xf32>
    %c1_i32_357 = arith.constant 1 : i32
    %654 = tpu.dynamic_rotate %363 by %c1_i32_357 dim 1 : vector<16x16xf32>, i32 -> vector<16x16xf32>
    %cst_358 = arith.constant 0.000000e+00 : f32
    %655 = vector.broadcast %cst_358 : f32 to vector<16x16xf32>
    %656 = arith.select %3, %654, %655 : vector<16x16xi1>, vector<16x16xf32>
    %c15_i32_359 = arith.constant 15 : i32
    %657 = tpu.dynamic_rotate %363 by %c15_i32_359 dim 1 : vector<16x16xf32>, i32 -> vector<16x16xf32>
    %cst_360 = arith.constant 0.000000e+00 : f32
    %658 = vector.broadcast %cst_360 : f32 to vector<16x16xf32>
    %659 = arith.select %5, %657, %658 : vector<16x16xi1>, vector<16x16xf32>
    %c0_361 = arith.constant 0 : index
    %c5_362 = arith.constant 5 : index
    %660 = memref.load %arg6[%c0_361, %c5_362] : memref<9x8xf32, #tpu.memory_space<smem>>
    %661 = vector.broadcast %660 : f32 to vector<16x16xf32>
    %662 = arith.mulf %661, %656 : vector<16x16xf32>
    %c1_363 = arith.constant 1 : index
    %c5_364 = arith.constant 5 : index
    %663 = memref.load %arg6[%c1_363, %c5_364] : memref<9x8xf32, #tpu.memory_space<smem>>
    %664 = vector.broadcast %663 : f32 to vector<16x16xf32>
    %665 = arith.mulf %664, %363 : vector<16x16xf32>
    %666 = arith.addf %662, %665 : vector<16x16xf32>
    %c2_365 = arith.constant 2 : index
    %c5_366 = arith.constant 5 : index
    %667 = memref.load %arg6[%c2_365, %c5_366] : memref<9x8xf32, #tpu.memory_space<smem>>
    %668 = vector.broadcast %667 : f32 to vector<16x16xf32>
    %669 = arith.mulf %668, %659 : vector<16x16xf32>
    %670 = arith.addf %666, %669 : vector<16x16xf32>
    %c1_i32_367 = arith.constant 1 : i32
    %671 = tpu.dynamic_rotate %670 by %c1_i32_367 dim 0 : vector<16x16xf32>, i32 -> vector<16x16xf32>
    %cst_368 = arith.constant 0.000000e+00 : f32
    %672 = vector.broadcast %cst_368 : f32 to vector<16x16xf32>
    %673 = arith.select %7, %671, %672 : vector<16x16xi1>, vector<16x16xf32>
    %c3_369 = arith.constant 3 : index
    %c5_370 = arith.constant 5 : index
    %674 = memref.load %arg6[%c3_369, %c5_370] : memref<9x8xf32, #tpu.memory_space<smem>>
    %675 = vector.broadcast %674 : f32 to vector<16x16xf32>
    %676 = arith.mulf %675, %656 : vector<16x16xf32>
    %c4_371 = arith.constant 4 : index
    %c5_372 = arith.constant 5 : index
    %677 = memref.load %arg6[%c4_371, %c5_372] : memref<9x8xf32, #tpu.memory_space<smem>>
    %678 = vector.broadcast %677 : f32 to vector<16x16xf32>
    %679 = arith.mulf %678, %363 : vector<16x16xf32>
    %680 = arith.addf %676, %679 : vector<16x16xf32>
    %c5_373 = arith.constant 5 : index
    %c5_374 = arith.constant 5 : index
    %681 = memref.load %arg6[%c5_373, %c5_374] : memref<9x8xf32, #tpu.memory_space<smem>>
    %682 = vector.broadcast %681 : f32 to vector<16x16xf32>
    %683 = arith.mulf %682, %659 : vector<16x16xf32>
    %684 = arith.addf %680, %683 : vector<16x16xf32>
    %685 = arith.addf %673, %684 : vector<16x16xf32>
    %c6_375 = arith.constant 6 : index
    %c5_376 = arith.constant 5 : index
    %686 = memref.load %arg6[%c6_375, %c5_376] : memref<9x8xf32, #tpu.memory_space<smem>>
    %687 = vector.broadcast %686 : f32 to vector<16x16xf32>
    %688 = arith.mulf %687, %656 : vector<16x16xf32>
    %c7_377 = arith.constant 7 : index
    %c5_378 = arith.constant 5 : index
    %689 = memref.load %arg6[%c7_377, %c5_378] : memref<9x8xf32, #tpu.memory_space<smem>>
    %690 = vector.broadcast %689 : f32 to vector<16x16xf32>
    %691 = arith.mulf %690, %363 : vector<16x16xf32>
    %692 = arith.addf %688, %691 : vector<16x16xf32>
    %c8_379 = arith.constant 8 : index
    %c5_380 = arith.constant 5 : index
    %693 = memref.load %arg6[%c8_379, %c5_380] : memref<9x8xf32, #tpu.memory_space<smem>>
    %694 = vector.broadcast %693 : f32 to vector<16x16xf32>
    %695 = arith.mulf %694, %659 : vector<16x16xf32>
    %696 = arith.addf %692, %695 : vector<16x16xf32>
    %c15_i32_381 = arith.constant 15 : i32
    %697 = tpu.dynamic_rotate %696 by %c15_i32_381 dim 0 : vector<16x16xf32>, i32 -> vector<16x16xf32>
    %cst_382 = arith.constant 0.000000e+00 : f32
    %698 = vector.broadcast %cst_382 : f32 to vector<16x16xf32>
    %699 = arith.select %9, %697, %698 : vector<16x16xi1>, vector<16x16xf32>
    %700 = arith.addf %685, %699 : vector<16x16xf32>
    %c0_383 = arith.constant 0 : index
    %c5_384 = arith.constant 5 : index
    %701 = memref.load %arg7[%c0_383, %c5_384] : memref<1x8xf32, #tpu.memory_space<smem>>
    %702 = vector.broadcast %701 : f32 to vector<16x16xf32>
    %703 = arith.addf %700, %702 : vector<16x16xf32>
    %c1_i32_385 = arith.constant 1 : i32
    %704 = tpu.dynamic_rotate %383 by %c1_i32_385 dim 1 : vector<16x16xf32>, i32 -> vector<16x16xf32>
    %cst_386 = arith.constant 0.000000e+00 : f32
    %705 = vector.broadcast %cst_386 : f32 to vector<16x16xf32>
    %706 = arith.select %3, %704, %705 : vector<16x16xi1>, vector<16x16xf32>
    %c15_i32_387 = arith.constant 15 : i32
    %707 = tpu.dynamic_rotate %383 by %c15_i32_387 dim 1 : vector<16x16xf32>, i32 -> vector<16x16xf32>
    %cst_388 = arith.constant 0.000000e+00 : f32
    %708 = vector.broadcast %cst_388 : f32 to vector<16x16xf32>
    %709 = arith.select %5, %707, %708 : vector<16x16xi1>, vector<16x16xf32>
    %c0_389 = arith.constant 0 : index
    %c6_390 = arith.constant 6 : index
    %710 = memref.load %arg6[%c0_389, %c6_390] : memref<9x8xf32, #tpu.memory_space<smem>>
    %711 = vector.broadcast %710 : f32 to vector<16x16xf32>
    %712 = arith.mulf %711, %706 : vector<16x16xf32>
    %c1_391 = arith.constant 1 : index
    %c6_392 = arith.constant 6 : index
    %713 = memref.load %arg6[%c1_391, %c6_392] : memref<9x8xf32, #tpu.memory_space<smem>>
    %714 = vector.broadcast %713 : f32 to vector<16x16xf32>
    %715 = arith.mulf %714, %383 : vector<16x16xf32>
    %716 = arith.addf %712, %715 : vector<16x16xf32>
    %c2_393 = arith.constant 2 : index
    %c6_394 = arith.constant 6 : index
    %717 = memref.load %arg6[%c2_393, %c6_394] : memref<9x8xf32, #tpu.memory_space<smem>>
    %718 = vector.broadcast %717 : f32 to vector<16x16xf32>
    %719 = arith.mulf %718, %709 : vector<16x16xf32>
    %720 = arith.addf %716, %719 : vector<16x16xf32>
    %c1_i32_395 = arith.constant 1 : i32
    %721 = tpu.dynamic_rotate %720 by %c1_i32_395 dim 0 : vector<16x16xf32>, i32 -> vector<16x16xf32>
    %cst_396 = arith.constant 0.000000e+00 : f32
    %722 = vector.broadcast %cst_396 : f32 to vector<16x16xf32>
    %723 = arith.select %7, %721, %722 : vector<16x16xi1>, vector<16x16xf32>
    %c3_397 = arith.constant 3 : index
    %c6_398 = arith.constant 6 : index
    %724 = memref.load %arg6[%c3_397, %c6_398] : memref<9x8xf32, #tpu.memory_space<smem>>
    %725 = vector.broadcast %724 : f32 to vector<16x16xf32>
    %726 = arith.mulf %725, %706 : vector<16x16xf32>
    %c4_399 = arith.constant 4 : index
    %c6_400 = arith.constant 6 : index
    %727 = memref.load %arg6[%c4_399, %c6_400] : memref<9x8xf32, #tpu.memory_space<smem>>
    %728 = vector.broadcast %727 : f32 to vector<16x16xf32>
    %729 = arith.mulf %728, %383 : vector<16x16xf32>
    %730 = arith.addf %726, %729 : vector<16x16xf32>
    %c5_401 = arith.constant 5 : index
    %c6_402 = arith.constant 6 : index
    %731 = memref.load %arg6[%c5_401, %c6_402] : memref<9x8xf32, #tpu.memory_space<smem>>
    %732 = vector.broadcast %731 : f32 to vector<16x16xf32>
    %733 = arith.mulf %732, %709 : vector<16x16xf32>
    %734 = arith.addf %730, %733 : vector<16x16xf32>
    %735 = arith.addf %723, %734 : vector<16x16xf32>
    %c6_403 = arith.constant 6 : index
    %c6_404 = arith.constant 6 : index
    %736 = memref.load %arg6[%c6_403, %c6_404] : memref<9x8xf32, #tpu.memory_space<smem>>
    %737 = vector.broadcast %736 : f32 to vector<16x16xf32>
    %738 = arith.mulf %737, %706 : vector<16x16xf32>
    %c7_405 = arith.constant 7 : index
    %c6_406 = arith.constant 6 : index
    %739 = memref.load %arg6[%c7_405, %c6_406] : memref<9x8xf32, #tpu.memory_space<smem>>
    %740 = vector.broadcast %739 : f32 to vector<16x16xf32>
    %741 = arith.mulf %740, %383 : vector<16x16xf32>
    %742 = arith.addf %738, %741 : vector<16x16xf32>
    %c8_407 = arith.constant 8 : index
    %c6_408 = arith.constant 6 : index
    %743 = memref.load %arg6[%c8_407, %c6_408] : memref<9x8xf32, #tpu.memory_space<smem>>
    %744 = vector.broadcast %743 : f32 to vector<16x16xf32>
    %745 = arith.mulf %744, %709 : vector<16x16xf32>
    %746 = arith.addf %742, %745 : vector<16x16xf32>
    %c15_i32_409 = arith.constant 15 : i32
    %747 = tpu.dynamic_rotate %746 by %c15_i32_409 dim 0 : vector<16x16xf32>, i32 -> vector<16x16xf32>
    %cst_410 = arith.constant 0.000000e+00 : f32
    %748 = vector.broadcast %cst_410 : f32 to vector<16x16xf32>
    %749 = arith.select %9, %747, %748 : vector<16x16xi1>, vector<16x16xf32>
    %750 = arith.addf %735, %749 : vector<16x16xf32>
    %c0_411 = arith.constant 0 : index
    %c6_412 = arith.constant 6 : index
    %751 = memref.load %arg7[%c0_411, %c6_412] : memref<1x8xf32, #tpu.memory_space<smem>>
    %752 = vector.broadcast %751 : f32 to vector<16x16xf32>
    %753 = arith.addf %750, %752 : vector<16x16xf32>
    %c1_i32_413 = arith.constant 1 : i32
    %754 = tpu.dynamic_rotate %403 by %c1_i32_413 dim 1 : vector<16x16xf32>, i32 -> vector<16x16xf32>
    %cst_414 = arith.constant 0.000000e+00 : f32
    %755 = vector.broadcast %cst_414 : f32 to vector<16x16xf32>
    %756 = arith.select %3, %754, %755 : vector<16x16xi1>, vector<16x16xf32>
    %c15_i32_415 = arith.constant 15 : i32
    %757 = tpu.dynamic_rotate %403 by %c15_i32_415 dim 1 : vector<16x16xf32>, i32 -> vector<16x16xf32>
    %cst_416 = arith.constant 0.000000e+00 : f32
    %758 = vector.broadcast %cst_416 : f32 to vector<16x16xf32>
    %759 = arith.select %5, %757, %758 : vector<16x16xi1>, vector<16x16xf32>
    %c0_417 = arith.constant 0 : index
    %c7_418 = arith.constant 7 : index
    %760 = memref.load %arg6[%c0_417, %c7_418] : memref<9x8xf32, #tpu.memory_space<smem>>
    %761 = vector.broadcast %760 : f32 to vector<16x16xf32>
    %762 = arith.mulf %761, %756 : vector<16x16xf32>
    %c1_419 = arith.constant 1 : index
    %c7_420 = arith.constant 7 : index
    %763 = memref.load %arg6[%c1_419, %c7_420] : memref<9x8xf32, #tpu.memory_space<smem>>
    %764 = vector.broadcast %763 : f32 to vector<16x16xf32>
    %765 = arith.mulf %764, %403 : vector<16x16xf32>
    %766 = arith.addf %762, %765 : vector<16x16xf32>
    %c2_421 = arith.constant 2 : index
    %c7_422 = arith.constant 7 : index
    %767 = memref.load %arg6[%c2_421, %c7_422] : memref<9x8xf32, #tpu.memory_space<smem>>
    %768 = vector.broadcast %767 : f32 to vector<16x16xf32>
    %769 = arith.mulf %768, %759 : vector<16x16xf32>
    %770 = arith.addf %766, %769 : vector<16x16xf32>
    %c1_i32_423 = arith.constant 1 : i32
    %771 = tpu.dynamic_rotate %770 by %c1_i32_423 dim 0 : vector<16x16xf32>, i32 -> vector<16x16xf32>
    %cst_424 = arith.constant 0.000000e+00 : f32
    %772 = vector.broadcast %cst_424 : f32 to vector<16x16xf32>
    %773 = arith.select %7, %771, %772 : vector<16x16xi1>, vector<16x16xf32>
    %c3_425 = arith.constant 3 : index
    %c7_426 = arith.constant 7 : index
    %774 = memref.load %arg6[%c3_425, %c7_426] : memref<9x8xf32, #tpu.memory_space<smem>>
    %775 = vector.broadcast %774 : f32 to vector<16x16xf32>
    %776 = arith.mulf %775, %756 : vector<16x16xf32>
    %c4_427 = arith.constant 4 : index
    %c7_428 = arith.constant 7 : index
    %777 = memref.load %arg6[%c4_427, %c7_428] : memref<9x8xf32, #tpu.memory_space<smem>>
    %778 = vector.broadcast %777 : f32 to vector<16x16xf32>
    %779 = arith.mulf %778, %403 : vector<16x16xf32>
    %780 = arith.addf %776, %779 : vector<16x16xf32>
    %c5_429 = arith.constant 5 : index
    %c7_430 = arith.constant 7 : index
    %781 = memref.load %arg6[%c5_429, %c7_430] : memref<9x8xf32, #tpu.memory_space<smem>>
    %782 = vector.broadcast %781 : f32 to vector<16x16xf32>
    %783 = arith.mulf %782, %759 : vector<16x16xf32>
    %784 = arith.addf %780, %783 : vector<16x16xf32>
    %785 = arith.addf %773, %784 : vector<16x16xf32>
    %c6_431 = arith.constant 6 : index
    %c7_432 = arith.constant 7 : index
    %786 = memref.load %arg6[%c6_431, %c7_432] : memref<9x8xf32, #tpu.memory_space<smem>>
    %787 = vector.broadcast %786 : f32 to vector<16x16xf32>
    %788 = arith.mulf %787, %756 : vector<16x16xf32>
    %c7_433 = arith.constant 7 : index
    %c7_434 = arith.constant 7 : index
    %789 = memref.load %arg6[%c7_433, %c7_434] : memref<9x8xf32, #tpu.memory_space<smem>>
    %790 = vector.broadcast %789 : f32 to vector<16x16xf32>
    %791 = arith.mulf %790, %403 : vector<16x16xf32>
    %792 = arith.addf %788, %791 : vector<16x16xf32>
    %c8_435 = arith.constant 8 : index
    %c7_436 = arith.constant 7 : index
    %793 = memref.load %arg6[%c8_435, %c7_436] : memref<9x8xf32, #tpu.memory_space<smem>>
    %794 = vector.broadcast %793 : f32 to vector<16x16xf32>
    %795 = arith.mulf %794, %759 : vector<16x16xf32>
    %796 = arith.addf %792, %795 : vector<16x16xf32>
    %c15_i32_437 = arith.constant 15 : i32
    %797 = tpu.dynamic_rotate %796 by %c15_i32_437 dim 0 : vector<16x16xf32>, i32 -> vector<16x16xf32>
    %cst_438 = arith.constant 0.000000e+00 : f32
    %798 = vector.broadcast %cst_438 : f32 to vector<16x16xf32>
    %799 = arith.select %9, %797, %798 : vector<16x16xi1>, vector<16x16xf32>
    %800 = arith.addf %785, %799 : vector<16x16xf32>
    %c0_439 = arith.constant 0 : index
    %c7_440 = arith.constant 7 : index
    %801 = memref.load %arg7[%c0_439, %c7_440] : memref<1x8xf32, #tpu.memory_space<smem>>
    %802 = vector.broadcast %801 : f32 to vector<16x16xf32>
    %803 = arith.addf %800, %802 : vector<16x16xf32>
    %c0_441 = arith.constant 0 : index
    %c0_442 = arith.constant 0 : index
    %804 = memref.load %arg9[%c0_441, %c0_442] : memref<1x8xf32, #tpu.memory_space<smem>>
    %c0_443 = arith.constant 0 : index
    %c0_444 = arith.constant 0 : index
    %805 = memref.load %arg8[%c0_443, %c0_444] : memref<8x8xf32, #tpu.memory_space<smem>>
    %806 = vector.broadcast %805 : f32 to vector<16x16xf32>
    %807 = arith.mulf %806, %453 : vector<16x16xf32>
    %808 = vector.broadcast %804 : f32 to vector<16x16xf32>
    %809 = arith.addf %808, %807 : vector<16x16xf32>
    %c1_445 = arith.constant 1 : index
    %c0_446 = arith.constant 0 : index
    %810 = memref.load %arg8[%c1_445, %c0_446] : memref<8x8xf32, #tpu.memory_space<smem>>
    %811 = vector.broadcast %810 : f32 to vector<16x16xf32>
    %812 = arith.mulf %811, %503 : vector<16x16xf32>
    %813 = arith.addf %809, %812 : vector<16x16xf32>
    %c2_447 = arith.constant 2 : index
    %c0_448 = arith.constant 0 : index
    %814 = memref.load %arg8[%c2_447, %c0_448] : memref<8x8xf32, #tpu.memory_space<smem>>
    %815 = vector.broadcast %814 : f32 to vector<16x16xf32>
    %816 = arith.mulf %815, %553 : vector<16x16xf32>
    %817 = arith.addf %813, %816 : vector<16x16xf32>
    %c3_449 = arith.constant 3 : index
    %c0_450 = arith.constant 0 : index
    %818 = memref.load %arg8[%c3_449, %c0_450] : memref<8x8xf32, #tpu.memory_space<smem>>
    %819 = vector.broadcast %818 : f32 to vector<16x16xf32>
    %820 = arith.mulf %819, %603 : vector<16x16xf32>
    %821 = arith.addf %817, %820 : vector<16x16xf32>
    %c4_451 = arith.constant 4 : index
    %c0_452 = arith.constant 0 : index
    %822 = memref.load %arg8[%c4_451, %c0_452] : memref<8x8xf32, #tpu.memory_space<smem>>
    %823 = vector.broadcast %822 : f32 to vector<16x16xf32>
    %824 = arith.mulf %823, %653 : vector<16x16xf32>
    %825 = arith.addf %821, %824 : vector<16x16xf32>
    %c5_453 = arith.constant 5 : index
    %c0_454 = arith.constant 0 : index
    %826 = memref.load %arg8[%c5_453, %c0_454] : memref<8x8xf32, #tpu.memory_space<smem>>
    %827 = vector.broadcast %826 : f32 to vector<16x16xf32>
    %828 = arith.mulf %827, %703 : vector<16x16xf32>
    %829 = arith.addf %825, %828 : vector<16x16xf32>
    %c6_455 = arith.constant 6 : index
    %c0_456 = arith.constant 0 : index
    %830 = memref.load %arg8[%c6_455, %c0_456] : memref<8x8xf32, #tpu.memory_space<smem>>
    %831 = vector.broadcast %830 : f32 to vector<16x16xf32>
    %832 = arith.mulf %831, %753 : vector<16x16xf32>
    %833 = arith.addf %829, %832 : vector<16x16xf32>
    %c7_457 = arith.constant 7 : index
    %c0_458 = arith.constant 0 : index
    %834 = memref.load %arg8[%c7_457, %c0_458] : memref<8x8xf32, #tpu.memory_space<smem>>
    %835 = vector.broadcast %834 : f32 to vector<16x16xf32>
    %836 = arith.mulf %835, %803 : vector<16x16xf32>
    %837 = arith.addf %833, %836 : vector<16x16xf32>
    %cst_459 = arith.constant 0.000000e+00 : f32
    %838 = vector.broadcast %cst_459 : f32 to vector<16x16xf32>
    %839 = arith.maximumf %837, %838 : vector<16x16xf32>
    %c0_460 = arith.constant 0 : index
    %c1_461 = arith.constant 1 : index
    %840 = memref.load %arg9[%c0_460, %c1_461] : memref<1x8xf32, #tpu.memory_space<smem>>
    %c0_462 = arith.constant 0 : index
    %c1_463 = arith.constant 1 : index
    %841 = memref.load %arg8[%c0_462, %c1_463] : memref<8x8xf32, #tpu.memory_space<smem>>
    %842 = vector.broadcast %841 : f32 to vector<16x16xf32>
    %843 = arith.mulf %842, %453 : vector<16x16xf32>
    %844 = vector.broadcast %840 : f32 to vector<16x16xf32>
    %845 = arith.addf %844, %843 : vector<16x16xf32>
    %c1_464 = arith.constant 1 : index
    %c1_465 = arith.constant 1 : index
    %846 = memref.load %arg8[%c1_464, %c1_465] : memref<8x8xf32, #tpu.memory_space<smem>>
    %847 = vector.broadcast %846 : f32 to vector<16x16xf32>
    %848 = arith.mulf %847, %503 : vector<16x16xf32>
    %849 = arith.addf %845, %848 : vector<16x16xf32>
    %c2_466 = arith.constant 2 : index
    %c1_467 = arith.constant 1 : index
    %850 = memref.load %arg8[%c2_466, %c1_467] : memref<8x8xf32, #tpu.memory_space<smem>>
    %851 = vector.broadcast %850 : f32 to vector<16x16xf32>
    %852 = arith.mulf %851, %553 : vector<16x16xf32>
    %853 = arith.addf %849, %852 : vector<16x16xf32>
    %c3_468 = arith.constant 3 : index
    %c1_469 = arith.constant 1 : index
    %854 = memref.load %arg8[%c3_468, %c1_469] : memref<8x8xf32, #tpu.memory_space<smem>>
    %855 = vector.broadcast %854 : f32 to vector<16x16xf32>
    %856 = arith.mulf %855, %603 : vector<16x16xf32>
    %857 = arith.addf %853, %856 : vector<16x16xf32>
    %c4_470 = arith.constant 4 : index
    %c1_471 = arith.constant 1 : index
    %858 = memref.load %arg8[%c4_470, %c1_471] : memref<8x8xf32, #tpu.memory_space<smem>>
    %859 = vector.broadcast %858 : f32 to vector<16x16xf32>
    %860 = arith.mulf %859, %653 : vector<16x16xf32>
    %861 = arith.addf %857, %860 : vector<16x16xf32>
    %c5_472 = arith.constant 5 : index
    %c1_473 = arith.constant 1 : index
    %862 = memref.load %arg8[%c5_472, %c1_473] : memref<8x8xf32, #tpu.memory_space<smem>>
    %863 = vector.broadcast %862 : f32 to vector<16x16xf32>
    %864 = arith.mulf %863, %703 : vector<16x16xf32>
    %865 = arith.addf %861, %864 : vector<16x16xf32>
    %c6_474 = arith.constant 6 : index
    %c1_475 = arith.constant 1 : index
    %866 = memref.load %arg8[%c6_474, %c1_475] : memref<8x8xf32, #tpu.memory_space<smem>>
    %867 = vector.broadcast %866 : f32 to vector<16x16xf32>
    %868 = arith.mulf %867, %753 : vector<16x16xf32>
    %869 = arith.addf %865, %868 : vector<16x16xf32>
    %c7_476 = arith.constant 7 : index
    %c1_477 = arith.constant 1 : index
    %870 = memref.load %arg8[%c7_476, %c1_477] : memref<8x8xf32, #tpu.memory_space<smem>>
    %871 = vector.broadcast %870 : f32 to vector<16x16xf32>
    %872 = arith.mulf %871, %803 : vector<16x16xf32>
    %873 = arith.addf %869, %872 : vector<16x16xf32>
    %cst_478 = arith.constant 0.000000e+00 : f32
    %874 = vector.broadcast %cst_478 : f32 to vector<16x16xf32>
    %875 = arith.maximumf %873, %874 : vector<16x16xf32>
    %c0_479 = arith.constant 0 : index
    %c2_480 = arith.constant 2 : index
    %876 = memref.load %arg9[%c0_479, %c2_480] : memref<1x8xf32, #tpu.memory_space<smem>>
    %c0_481 = arith.constant 0 : index
    %c2_482 = arith.constant 2 : index
    %877 = memref.load %arg8[%c0_481, %c2_482] : memref<8x8xf32, #tpu.memory_space<smem>>
    %878 = vector.broadcast %877 : f32 to vector<16x16xf32>
    %879 = arith.mulf %878, %453 : vector<16x16xf32>
    %880 = vector.broadcast %876 : f32 to vector<16x16xf32>
    %881 = arith.addf %880, %879 : vector<16x16xf32>
    %c1_483 = arith.constant 1 : index
    %c2_484 = arith.constant 2 : index
    %882 = memref.load %arg8[%c1_483, %c2_484] : memref<8x8xf32, #tpu.memory_space<smem>>
    %883 = vector.broadcast %882 : f32 to vector<16x16xf32>
    %884 = arith.mulf %883, %503 : vector<16x16xf32>
    %885 = arith.addf %881, %884 : vector<16x16xf32>
    %c2_485 = arith.constant 2 : index
    %c2_486 = arith.constant 2 : index
    %886 = memref.load %arg8[%c2_485, %c2_486] : memref<8x8xf32, #tpu.memory_space<smem>>
    %887 = vector.broadcast %886 : f32 to vector<16x16xf32>
    %888 = arith.mulf %887, %553 : vector<16x16xf32>
    %889 = arith.addf %885, %888 : vector<16x16xf32>
    %c3_487 = arith.constant 3 : index
    %c2_488 = arith.constant 2 : index
    %890 = memref.load %arg8[%c3_487, %c2_488] : memref<8x8xf32, #tpu.memory_space<smem>>
    %891 = vector.broadcast %890 : f32 to vector<16x16xf32>
    %892 = arith.mulf %891, %603 : vector<16x16xf32>
    %893 = arith.addf %889, %892 : vector<16x16xf32>
    %c4_489 = arith.constant 4 : index
    %c2_490 = arith.constant 2 : index
    %894 = memref.load %arg8[%c4_489, %c2_490] : memref<8x8xf32, #tpu.memory_space<smem>>
    %895 = vector.broadcast %894 : f32 to vector<16x16xf32>
    %896 = arith.mulf %895, %653 : vector<16x16xf32>
    %897 = arith.addf %893, %896 : vector<16x16xf32>
    %c5_491 = arith.constant 5 : index
    %c2_492 = arith.constant 2 : index
    %898 = memref.load %arg8[%c5_491, %c2_492] : memref<8x8xf32, #tpu.memory_space<smem>>
    %899 = vector.broadcast %898 : f32 to vector<16x16xf32>
    %900 = arith.mulf %899, %703 : vector<16x16xf32>
    %901 = arith.addf %897, %900 : vector<16x16xf32>
    %c6_493 = arith.constant 6 : index
    %c2_494 = arith.constant 2 : index
    %902 = memref.load %arg8[%c6_493, %c2_494] : memref<8x8xf32, #tpu.memory_space<smem>>
    %903 = vector.broadcast %902 : f32 to vector<16x16xf32>
    %904 = arith.mulf %903, %753 : vector<16x16xf32>
    %905 = arith.addf %901, %904 : vector<16x16xf32>
    %c7_495 = arith.constant 7 : index
    %c2_496 = arith.constant 2 : index
    %906 = memref.load %arg8[%c7_495, %c2_496] : memref<8x8xf32, #tpu.memory_space<smem>>
    %907 = vector.broadcast %906 : f32 to vector<16x16xf32>
    %908 = arith.mulf %907, %803 : vector<16x16xf32>
    %909 = arith.addf %905, %908 : vector<16x16xf32>
    %cst_497 = arith.constant 0.000000e+00 : f32
    %910 = vector.broadcast %cst_497 : f32 to vector<16x16xf32>
    %911 = arith.maximumf %909, %910 : vector<16x16xf32>
    %c0_498 = arith.constant 0 : index
    %c3_499 = arith.constant 3 : index
    %912 = memref.load %arg9[%c0_498, %c3_499] : memref<1x8xf32, #tpu.memory_space<smem>>
    %c0_500 = arith.constant 0 : index
    %c3_501 = arith.constant 3 : index
    %913 = memref.load %arg8[%c0_500, %c3_501] : memref<8x8xf32, #tpu.memory_space<smem>>
    %914 = vector.broadcast %913 : f32 to vector<16x16xf32>
    %915 = arith.mulf %914, %453 : vector<16x16xf32>
    %916 = vector.broadcast %912 : f32 to vector<16x16xf32>
    %917 = arith.addf %916, %915 : vector<16x16xf32>
    %c1_502 = arith.constant 1 : index
    %c3_503 = arith.constant 3 : index
    %918 = memref.load %arg8[%c1_502, %c3_503] : memref<8x8xf32, #tpu.memory_space<smem>>
    %919 = vector.broadcast %918 : f32 to vector<16x16xf32>
    %920 = arith.mulf %919, %503 : vector<16x16xf32>
    %921 = arith.addf %917, %920 : vector<16x16xf32>
    %c2_504 = arith.constant 2 : index
    %c3_505 = arith.constant 3 : index
    %922 = memref.load %arg8[%c2_504, %c3_505] : memref<8x8xf32, #tpu.memory_space<smem>>
    %923 = vector.broadcast %922 : f32 to vector<16x16xf32>
    %924 = arith.mulf %923, %553 : vector<16x16xf32>
    %925 = arith.addf %921, %924 : vector<16x16xf32>
    %c3_506 = arith.constant 3 : index
    %c3_507 = arith.constant 3 : index
    %926 = memref.load %arg8[%c3_506, %c3_507] : memref<8x8xf32, #tpu.memory_space<smem>>
    %927 = vector.broadcast %926 : f32 to vector<16x16xf32>
    %928 = arith.mulf %927, %603 : vector<16x16xf32>
    %929 = arith.addf %925, %928 : vector<16x16xf32>
    %c4_508 = arith.constant 4 : index
    %c3_509 = arith.constant 3 : index
    %930 = memref.load %arg8[%c4_508, %c3_509] : memref<8x8xf32, #tpu.memory_space<smem>>
    %931 = vector.broadcast %930 : f32 to vector<16x16xf32>
    %932 = arith.mulf %931, %653 : vector<16x16xf32>
    %933 = arith.addf %929, %932 : vector<16x16xf32>
    %c5_510 = arith.constant 5 : index
    %c3_511 = arith.constant 3 : index
    %934 = memref.load %arg8[%c5_510, %c3_511] : memref<8x8xf32, #tpu.memory_space<smem>>
    %935 = vector.broadcast %934 : f32 to vector<16x16xf32>
    %936 = arith.mulf %935, %703 : vector<16x16xf32>
    %937 = arith.addf %933, %936 : vector<16x16xf32>
    %c6_512 = arith.constant 6 : index
    %c3_513 = arith.constant 3 : index
    %938 = memref.load %arg8[%c6_512, %c3_513] : memref<8x8xf32, #tpu.memory_space<smem>>
    %939 = vector.broadcast %938 : f32 to vector<16x16xf32>
    %940 = arith.mulf %939, %753 : vector<16x16xf32>
    %941 = arith.addf %937, %940 : vector<16x16xf32>
    %c7_514 = arith.constant 7 : index
    %c3_515 = arith.constant 3 : index
    %942 = memref.load %arg8[%c7_514, %c3_515] : memref<8x8xf32, #tpu.memory_space<smem>>
    %943 = vector.broadcast %942 : f32 to vector<16x16xf32>
    %944 = arith.mulf %943, %803 : vector<16x16xf32>
    %945 = arith.addf %941, %944 : vector<16x16xf32>
    %cst_516 = arith.constant 0.000000e+00 : f32
    %946 = vector.broadcast %cst_516 : f32 to vector<16x16xf32>
    %947 = arith.maximumf %945, %946 : vector<16x16xf32>
    %c0_517 = arith.constant 0 : index
    %c4_518 = arith.constant 4 : index
    %948 = memref.load %arg9[%c0_517, %c4_518] : memref<1x8xf32, #tpu.memory_space<smem>>
    %c0_519 = arith.constant 0 : index
    %c4_520 = arith.constant 4 : index
    %949 = memref.load %arg8[%c0_519, %c4_520] : memref<8x8xf32, #tpu.memory_space<smem>>
    %950 = vector.broadcast %949 : f32 to vector<16x16xf32>
    %951 = arith.mulf %950, %453 : vector<16x16xf32>
    %952 = vector.broadcast %948 : f32 to vector<16x16xf32>
    %953 = arith.addf %952, %951 : vector<16x16xf32>
    %c1_521 = arith.constant 1 : index
    %c4_522 = arith.constant 4 : index
    %954 = memref.load %arg8[%c1_521, %c4_522] : memref<8x8xf32, #tpu.memory_space<smem>>
    %955 = vector.broadcast %954 : f32 to vector<16x16xf32>
    %956 = arith.mulf %955, %503 : vector<16x16xf32>
    %957 = arith.addf %953, %956 : vector<16x16xf32>
    %c2_523 = arith.constant 2 : index
    %c4_524 = arith.constant 4 : index
    %958 = memref.load %arg8[%c2_523, %c4_524] : memref<8x8xf32, #tpu.memory_space<smem>>
    %959 = vector.broadcast %958 : f32 to vector<16x16xf32>
    %960 = arith.mulf %959, %553 : vector<16x16xf32>
    %961 = arith.addf %957, %960 : vector<16x16xf32>
    %c3_525 = arith.constant 3 : index
    %c4_526 = arith.constant 4 : index
    %962 = memref.load %arg8[%c3_525, %c4_526] : memref<8x8xf32, #tpu.memory_space<smem>>
    %963 = vector.broadcast %962 : f32 to vector<16x16xf32>
    %964 = arith.mulf %963, %603 : vector<16x16xf32>
    %965 = arith.addf %961, %964 : vector<16x16xf32>
    %c4_527 = arith.constant 4 : index
    %c4_528 = arith.constant 4 : index
    %966 = memref.load %arg8[%c4_527, %c4_528] : memref<8x8xf32, #tpu.memory_space<smem>>
    %967 = vector.broadcast %966 : f32 to vector<16x16xf32>
    %968 = arith.mulf %967, %653 : vector<16x16xf32>
    %969 = arith.addf %965, %968 : vector<16x16xf32>
    %c5_529 = arith.constant 5 : index
    %c4_530 = arith.constant 4 : index
    %970 = memref.load %arg8[%c5_529, %c4_530] : memref<8x8xf32, #tpu.memory_space<smem>>
    %971 = vector.broadcast %970 : f32 to vector<16x16xf32>
    %972 = arith.mulf %971, %703 : vector<16x16xf32>
    %973 = arith.addf %969, %972 : vector<16x16xf32>
    %c6_531 = arith.constant 6 : index
    %c4_532 = arith.constant 4 : index
    %974 = memref.load %arg8[%c6_531, %c4_532] : memref<8x8xf32, #tpu.memory_space<smem>>
    %975 = vector.broadcast %974 : f32 to vector<16x16xf32>
    %976 = arith.mulf %975, %753 : vector<16x16xf32>
    %977 = arith.addf %973, %976 : vector<16x16xf32>
    %c7_533 = arith.constant 7 : index
    %c4_534 = arith.constant 4 : index
    %978 = memref.load %arg8[%c7_533, %c4_534] : memref<8x8xf32, #tpu.memory_space<smem>>
    %979 = vector.broadcast %978 : f32 to vector<16x16xf32>
    %980 = arith.mulf %979, %803 : vector<16x16xf32>
    %981 = arith.addf %977, %980 : vector<16x16xf32>
    %cst_535 = arith.constant 0.000000e+00 : f32
    %982 = vector.broadcast %cst_535 : f32 to vector<16x16xf32>
    %983 = arith.maximumf %981, %982 : vector<16x16xf32>
    %c0_536 = arith.constant 0 : index
    %c5_537 = arith.constant 5 : index
    %984 = memref.load %arg9[%c0_536, %c5_537] : memref<1x8xf32, #tpu.memory_space<smem>>
    %c0_538 = arith.constant 0 : index
    %c5_539 = arith.constant 5 : index
    %985 = memref.load %arg8[%c0_538, %c5_539] : memref<8x8xf32, #tpu.memory_space<smem>>
    %986 = vector.broadcast %985 : f32 to vector<16x16xf32>
    %987 = arith.mulf %986, %453 : vector<16x16xf32>
    %988 = vector.broadcast %984 : f32 to vector<16x16xf32>
    %989 = arith.addf %988, %987 : vector<16x16xf32>
    %c1_540 = arith.constant 1 : index
    %c5_541 = arith.constant 5 : index
    %990 = memref.load %arg8[%c1_540, %c5_541] : memref<8x8xf32, #tpu.memory_space<smem>>
    %991 = vector.broadcast %990 : f32 to vector<16x16xf32>
    %992 = arith.mulf %991, %503 : vector<16x16xf32>
    %993 = arith.addf %989, %992 : vector<16x16xf32>
    %c2_542 = arith.constant 2 : index
    %c5_543 = arith.constant 5 : index
    %994 = memref.load %arg8[%c2_542, %c5_543] : memref<8x8xf32, #tpu.memory_space<smem>>
    %995 = vector.broadcast %994 : f32 to vector<16x16xf32>
    %996 = arith.mulf %995, %553 : vector<16x16xf32>
    %997 = arith.addf %993, %996 : vector<16x16xf32>
    %c3_544 = arith.constant 3 : index
    %c5_545 = arith.constant 5 : index
    %998 = memref.load %arg8[%c3_544, %c5_545] : memref<8x8xf32, #tpu.memory_space<smem>>
    %999 = vector.broadcast %998 : f32 to vector<16x16xf32>
    %1000 = arith.mulf %999, %603 : vector<16x16xf32>
    %1001 = arith.addf %997, %1000 : vector<16x16xf32>
    %c4_546 = arith.constant 4 : index
    %c5_547 = arith.constant 5 : index
    %1002 = memref.load %arg8[%c4_546, %c5_547] : memref<8x8xf32, #tpu.memory_space<smem>>
    %1003 = vector.broadcast %1002 : f32 to vector<16x16xf32>
    %1004 = arith.mulf %1003, %653 : vector<16x16xf32>
    %1005 = arith.addf %1001, %1004 : vector<16x16xf32>
    %c5_548 = arith.constant 5 : index
    %c5_549 = arith.constant 5 : index
    %1006 = memref.load %arg8[%c5_548, %c5_549] : memref<8x8xf32, #tpu.memory_space<smem>>
    %1007 = vector.broadcast %1006 : f32 to vector<16x16xf32>
    %1008 = arith.mulf %1007, %703 : vector<16x16xf32>
    %1009 = arith.addf %1005, %1008 : vector<16x16xf32>
    %c6_550 = arith.constant 6 : index
    %c5_551 = arith.constant 5 : index
    %1010 = memref.load %arg8[%c6_550, %c5_551] : memref<8x8xf32, #tpu.memory_space<smem>>
    %1011 = vector.broadcast %1010 : f32 to vector<16x16xf32>
    %1012 = arith.mulf %1011, %753 : vector<16x16xf32>
    %1013 = arith.addf %1009, %1012 : vector<16x16xf32>
    %c7_552 = arith.constant 7 : index
    %c5_553 = arith.constant 5 : index
    %1014 = memref.load %arg8[%c7_552, %c5_553] : memref<8x8xf32, #tpu.memory_space<smem>>
    %1015 = vector.broadcast %1014 : f32 to vector<16x16xf32>
    %1016 = arith.mulf %1015, %803 : vector<16x16xf32>
    %1017 = arith.addf %1013, %1016 : vector<16x16xf32>
    %cst_554 = arith.constant 0.000000e+00 : f32
    %1018 = vector.broadcast %cst_554 : f32 to vector<16x16xf32>
    %1019 = arith.maximumf %1017, %1018 : vector<16x16xf32>
    %c0_555 = arith.constant 0 : index
    %c6_556 = arith.constant 6 : index
    %1020 = memref.load %arg9[%c0_555, %c6_556] : memref<1x8xf32, #tpu.memory_space<smem>>
    %c0_557 = arith.constant 0 : index
    %c6_558 = arith.constant 6 : index
    %1021 = memref.load %arg8[%c0_557, %c6_558] : memref<8x8xf32, #tpu.memory_space<smem>>
    %1022 = vector.broadcast %1021 : f32 to vector<16x16xf32>
    %1023 = arith.mulf %1022, %453 : vector<16x16xf32>
    %1024 = vector.broadcast %1020 : f32 to vector<16x16xf32>
    %1025 = arith.addf %1024, %1023 : vector<16x16xf32>
    %c1_559 = arith.constant 1 : index
    %c6_560 = arith.constant 6 : index
    %1026 = memref.load %arg8[%c1_559, %c6_560] : memref<8x8xf32, #tpu.memory_space<smem>>
    %1027 = vector.broadcast %1026 : f32 to vector<16x16xf32>
    %1028 = arith.mulf %1027, %503 : vector<16x16xf32>
    %1029 = arith.addf %1025, %1028 : vector<16x16xf32>
    %c2_561 = arith.constant 2 : index
    %c6_562 = arith.constant 6 : index
    %1030 = memref.load %arg8[%c2_561, %c6_562] : memref<8x8xf32, #tpu.memory_space<smem>>
    %1031 = vector.broadcast %1030 : f32 to vector<16x16xf32>
    %1032 = arith.mulf %1031, %553 : vector<16x16xf32>
    %1033 = arith.addf %1029, %1032 : vector<16x16xf32>
    %c3_563 = arith.constant 3 : index
    %c6_564 = arith.constant 6 : index
    %1034 = memref.load %arg8[%c3_563, %c6_564] : memref<8x8xf32, #tpu.memory_space<smem>>
    %1035 = vector.broadcast %1034 : f32 to vector<16x16xf32>
    %1036 = arith.mulf %1035, %603 : vector<16x16xf32>
    %1037 = arith.addf %1033, %1036 : vector<16x16xf32>
    %c4_565 = arith.constant 4 : index
    %c6_566 = arith.constant 6 : index
    %1038 = memref.load %arg8[%c4_565, %c6_566] : memref<8x8xf32, #tpu.memory_space<smem>>
    %1039 = vector.broadcast %1038 : f32 to vector<16x16xf32>
    %1040 = arith.mulf %1039, %653 : vector<16x16xf32>
    %1041 = arith.addf %1037, %1040 : vector<16x16xf32>
    %c5_567 = arith.constant 5 : index
    %c6_568 = arith.constant 6 : index
    %1042 = memref.load %arg8[%c5_567, %c6_568] : memref<8x8xf32, #tpu.memory_space<smem>>
    %1043 = vector.broadcast %1042 : f32 to vector<16x16xf32>
    %1044 = arith.mulf %1043, %703 : vector<16x16xf32>
    %1045 = arith.addf %1041, %1044 : vector<16x16xf32>
    %c6_569 = arith.constant 6 : index
    %c6_570 = arith.constant 6 : index
    %1046 = memref.load %arg8[%c6_569, %c6_570] : memref<8x8xf32, #tpu.memory_space<smem>>
    %1047 = vector.broadcast %1046 : f32 to vector<16x16xf32>
    %1048 = arith.mulf %1047, %753 : vector<16x16xf32>
    %1049 = arith.addf %1045, %1048 : vector<16x16xf32>
    %c7_571 = arith.constant 7 : index
    %c6_572 = arith.constant 6 : index
    %1050 = memref.load %arg8[%c7_571, %c6_572] : memref<8x8xf32, #tpu.memory_space<smem>>
    %1051 = vector.broadcast %1050 : f32 to vector<16x16xf32>
    %1052 = arith.mulf %1051, %803 : vector<16x16xf32>
    %1053 = arith.addf %1049, %1052 : vector<16x16xf32>
    %cst_573 = arith.constant 0.000000e+00 : f32
    %1054 = vector.broadcast %cst_573 : f32 to vector<16x16xf32>
    %1055 = arith.maximumf %1053, %1054 : vector<16x16xf32>
    %c0_574 = arith.constant 0 : index
    %c7_575 = arith.constant 7 : index
    %1056 = memref.load %arg9[%c0_574, %c7_575] : memref<1x8xf32, #tpu.memory_space<smem>>
    %c0_576 = arith.constant 0 : index
    %c7_577 = arith.constant 7 : index
    %1057 = memref.load %arg8[%c0_576, %c7_577] : memref<8x8xf32, #tpu.memory_space<smem>>
    %1058 = vector.broadcast %1057 : f32 to vector<16x16xf32>
    %1059 = arith.mulf %1058, %453 : vector<16x16xf32>
    %1060 = vector.broadcast %1056 : f32 to vector<16x16xf32>
    %1061 = arith.addf %1060, %1059 : vector<16x16xf32>
    %c1_578 = arith.constant 1 : index
    %c7_579 = arith.constant 7 : index
    %1062 = memref.load %arg8[%c1_578, %c7_579] : memref<8x8xf32, #tpu.memory_space<smem>>
    %1063 = vector.broadcast %1062 : f32 to vector<16x16xf32>
    %1064 = arith.mulf %1063, %503 : vector<16x16xf32>
    %1065 = arith.addf %1061, %1064 : vector<16x16xf32>
    %c2_580 = arith.constant 2 : index
    %c7_581 = arith.constant 7 : index
    %1066 = memref.load %arg8[%c2_580, %c7_581] : memref<8x8xf32, #tpu.memory_space<smem>>
    %1067 = vector.broadcast %1066 : f32 to vector<16x16xf32>
    %1068 = arith.mulf %1067, %553 : vector<16x16xf32>
    %1069 = arith.addf %1065, %1068 : vector<16x16xf32>
    %c3_582 = arith.constant 3 : index
    %c7_583 = arith.constant 7 : index
    %1070 = memref.load %arg8[%c3_582, %c7_583] : memref<8x8xf32, #tpu.memory_space<smem>>
    %1071 = vector.broadcast %1070 : f32 to vector<16x16xf32>
    %1072 = arith.mulf %1071, %603 : vector<16x16xf32>
    %1073 = arith.addf %1069, %1072 : vector<16x16xf32>
    %c4_584 = arith.constant 4 : index
    %c7_585 = arith.constant 7 : index
    %1074 = memref.load %arg8[%c4_584, %c7_585] : memref<8x8xf32, #tpu.memory_space<smem>>
    %1075 = vector.broadcast %1074 : f32 to vector<16x16xf32>
    %1076 = arith.mulf %1075, %653 : vector<16x16xf32>
    %1077 = arith.addf %1073, %1076 : vector<16x16xf32>
    %c5_586 = arith.constant 5 : index
    %c7_587 = arith.constant 7 : index
    %1078 = memref.load %arg8[%c5_586, %c7_587] : memref<8x8xf32, #tpu.memory_space<smem>>
    %1079 = vector.broadcast %1078 : f32 to vector<16x16xf32>
    %1080 = arith.mulf %1079, %703 : vector<16x16xf32>
    %1081 = arith.addf %1077, %1080 : vector<16x16xf32>
    %c6_588 = arith.constant 6 : index
    %c7_589 = arith.constant 7 : index
    %1082 = memref.load %arg8[%c6_588, %c7_589] : memref<8x8xf32, #tpu.memory_space<smem>>
    %1083 = vector.broadcast %1082 : f32 to vector<16x16xf32>
    %1084 = arith.mulf %1083, %753 : vector<16x16xf32>
    %1085 = arith.addf %1081, %1084 : vector<16x16xf32>
    %c7_590 = arith.constant 7 : index
    %c7_591 = arith.constant 7 : index
    %1086 = memref.load %arg8[%c7_590, %c7_591] : memref<8x8xf32, #tpu.memory_space<smem>>
    %1087 = vector.broadcast %1086 : f32 to vector<16x16xf32>
    %1088 = arith.mulf %1087, %803 : vector<16x16xf32>
    %1089 = arith.addf %1085, %1088 : vector<16x16xf32>
    %cst_592 = arith.constant 0.000000e+00 : f32
    %1090 = vector.broadcast %cst_592 : f32 to vector<16x16xf32>
    %1091 = arith.maximumf %1089, %1090 : vector<16x16xf32>
    %cst_593 = arith.constant dense<0.000000e+00> : vector<16xf32>
    %1092 = vector.multi_reduction <add>, %839, %cst_593 [1] : vector<16x16xf32> to vector<16xf32>
    %1093 = vector.shape_cast %1092 : vector<16xf32> to vector<16x1xf32>
    %cst_594 = arith.constant 1.600000e+01 : f32
    %1094 = vector.broadcast %cst_594 : f32 to vector<16x1xf32>
    %1095 = arith.divf %1093, %1094 : vector<16x1xf32>
    %cst_595 = arith.constant dense<0.000000e+00> : vector<1xf32>
    %1096 = vector.multi_reduction <add>, %1095, %cst_595 [0] : vector<16x1xf32> to vector<1xf32>
    %1097 = vector.shape_cast %1096 : vector<1xf32> to vector<1x1xf32>
    %cst_596 = arith.constant 1.600000e+01 : f32
    %1098 = vector.broadcast %cst_596 : f32 to vector<1x1xf32>
    %1099 = arith.divf %1097, %1098 : vector<1x1xf32>
    %1100 = vector.broadcast %1099 : vector<1x1xf32> to vector<16x16xf32>
    %1101 = arith.subf %839, %1100 : vector<16x16xf32>
    %1102 = arith.mulf %1101, %1101 : vector<16x16xf32>
    %cst_597 = arith.constant dense<0.000000e+00> : vector<16xf32>
    %1103 = vector.multi_reduction <add>, %1102, %cst_597 [1] : vector<16x16xf32> to vector<16xf32>
    %1104 = vector.shape_cast %1103 : vector<16xf32> to vector<16x1xf32>
    %cst_598 = arith.constant 1.600000e+01 : f32
    %1105 = vector.broadcast %cst_598 : f32 to vector<16x1xf32>
    %1106 = arith.divf %1104, %1105 : vector<16x1xf32>
    %cst_599 = arith.constant dense<0.000000e+00> : vector<1xf32>
    %1107 = vector.multi_reduction <add>, %1106, %cst_599 [0] : vector<16x1xf32> to vector<1xf32>
    %1108 = vector.shape_cast %1107 : vector<1xf32> to vector<1x1xf32>
    %cst_600 = arith.constant 1.600000e+01 : f32
    %1109 = vector.broadcast %cst_600 : f32 to vector<1x1xf32>
    %1110 = arith.divf %1108, %1109 : vector<1x1xf32>
    %cst_601 = arith.constant 1.000000e-03 : f32
    %1111 = vector.broadcast %cst_601 : f32 to vector<1x1xf32>
    %1112 = arith.addf %1110, %1111 : vector<1x1xf32>
    %1113 = math.rsqrt %1112 : vector<1x1xf32>
    %1114 = vector.broadcast %1113 : vector<1x1xf32> to vector<16x16xf32>
    %1115 = arith.mulf %1101, %1114 : vector<16x16xf32>
    %cst_602 = arith.constant dense<0.000000e+00> : vector<16xf32>
    %1116 = vector.multi_reduction <add>, %875, %cst_602 [1] : vector<16x16xf32> to vector<16xf32>
    %1117 = vector.shape_cast %1116 : vector<16xf32> to vector<16x1xf32>
    %cst_603 = arith.constant 1.600000e+01 : f32
    %1118 = vector.broadcast %cst_603 : f32 to vector<16x1xf32>
    %1119 = arith.divf %1117, %1118 : vector<16x1xf32>
    %cst_604 = arith.constant dense<0.000000e+00> : vector<1xf32>
    %1120 = vector.multi_reduction <add>, %1119, %cst_604 [0] : vector<16x1xf32> to vector<1xf32>
    %1121 = vector.shape_cast %1120 : vector<1xf32> to vector<1x1xf32>
    %cst_605 = arith.constant 1.600000e+01 : f32
    %1122 = vector.broadcast %cst_605 : f32 to vector<1x1xf32>
    %1123 = arith.divf %1121, %1122 : vector<1x1xf32>
    %1124 = vector.broadcast %1123 : vector<1x1xf32> to vector<16x16xf32>
    %1125 = arith.subf %875, %1124 : vector<16x16xf32>
    %1126 = arith.mulf %1125, %1125 : vector<16x16xf32>
    %cst_606 = arith.constant dense<0.000000e+00> : vector<16xf32>
    %1127 = vector.multi_reduction <add>, %1126, %cst_606 [1] : vector<16x16xf32> to vector<16xf32>
    %1128 = vector.shape_cast %1127 : vector<16xf32> to vector<16x1xf32>
    %cst_607 = arith.constant 1.600000e+01 : f32
    %1129 = vector.broadcast %cst_607 : f32 to vector<16x1xf32>
    %1130 = arith.divf %1128, %1129 : vector<16x1xf32>
    %cst_608 = arith.constant dense<0.000000e+00> : vector<1xf32>
    %1131 = vector.multi_reduction <add>, %1130, %cst_608 [0] : vector<16x1xf32> to vector<1xf32>
    %1132 = vector.shape_cast %1131 : vector<1xf32> to vector<1x1xf32>
    %cst_609 = arith.constant 1.600000e+01 : f32
    %1133 = vector.broadcast %cst_609 : f32 to vector<1x1xf32>
    %1134 = arith.divf %1132, %1133 : vector<1x1xf32>
    %cst_610 = arith.constant 1.000000e-03 : f32
    %1135 = vector.broadcast %cst_610 : f32 to vector<1x1xf32>
    %1136 = arith.addf %1134, %1135 : vector<1x1xf32>
    %1137 = math.rsqrt %1136 : vector<1x1xf32>
    %1138 = vector.broadcast %1137 : vector<1x1xf32> to vector<16x16xf32>
    %1139 = arith.mulf %1125, %1138 : vector<16x16xf32>
    %cst_611 = arith.constant dense<0.000000e+00> : vector<16xf32>
    %1140 = vector.multi_reduction <add>, %911, %cst_611 [1] : vector<16x16xf32> to vector<16xf32>
    %1141 = vector.shape_cast %1140 : vector<16xf32> to vector<16x1xf32>
    %cst_612 = arith.constant 1.600000e+01 : f32
    %1142 = vector.broadcast %cst_612 : f32 to vector<16x1xf32>
    %1143 = arith.divf %1141, %1142 : vector<16x1xf32>
    %cst_613 = arith.constant dense<0.000000e+00> : vector<1xf32>
    %1144 = vector.multi_reduction <add>, %1143, %cst_613 [0] : vector<16x1xf32> to vector<1xf32>
    %1145 = vector.shape_cast %1144 : vector<1xf32> to vector<1x1xf32>
    %cst_614 = arith.constant 1.600000e+01 : f32
    %1146 = vector.broadcast %cst_614 : f32 to vector<1x1xf32>
    %1147 = arith.divf %1145, %1146 : vector<1x1xf32>
    %1148 = vector.broadcast %1147 : vector<1x1xf32> to vector<16x16xf32>
    %1149 = arith.subf %911, %1148 : vector<16x16xf32>
    %1150 = arith.mulf %1149, %1149 : vector<16x16xf32>
    %cst_615 = arith.constant dense<0.000000e+00> : vector<16xf32>
    %1151 = vector.multi_reduction <add>, %1150, %cst_615 [1] : vector<16x16xf32> to vector<16xf32>
    %1152 = vector.shape_cast %1151 : vector<16xf32> to vector<16x1xf32>
    %cst_616 = arith.constant 1.600000e+01 : f32
    %1153 = vector.broadcast %cst_616 : f32 to vector<16x1xf32>
    %1154 = arith.divf %1152, %1153 : vector<16x1xf32>
    %cst_617 = arith.constant dense<0.000000e+00> : vector<1xf32>
    %1155 = vector.multi_reduction <add>, %1154, %cst_617 [0] : vector<16x1xf32> to vector<1xf32>
    %1156 = vector.shape_cast %1155 : vector<1xf32> to vector<1x1xf32>
    %cst_618 = arith.constant 1.600000e+01 : f32
    %1157 = vector.broadcast %cst_618 : f32 to vector<1x1xf32>
    %1158 = arith.divf %1156, %1157 : vector<1x1xf32>
    %cst_619 = arith.constant 1.000000e-03 : f32
    %1159 = vector.broadcast %cst_619 : f32 to vector<1x1xf32>
    %1160 = arith.addf %1158, %1159 : vector<1x1xf32>
    %1161 = math.rsqrt %1160 : vector<1x1xf32>
    %1162 = vector.broadcast %1161 : vector<1x1xf32> to vector<16x16xf32>
    %1163 = arith.mulf %1149, %1162 : vector<16x16xf32>
    %cst_620 = arith.constant dense<0.000000e+00> : vector<16xf32>
    %1164 = vector.multi_reduction <add>, %947, %cst_620 [1] : vector<16x16xf32> to vector<16xf32>
    %1165 = vector.shape_cast %1164 : vector<16xf32> to vector<16x1xf32>
    %cst_621 = arith.constant 1.600000e+01 : f32
    %1166 = vector.broadcast %cst_621 : f32 to vector<16x1xf32>
    %1167 = arith.divf %1165, %1166 : vector<16x1xf32>
    %cst_622 = arith.constant dense<0.000000e+00> : vector<1xf32>
    %1168 = vector.multi_reduction <add>, %1167, %cst_622 [0] : vector<16x1xf32> to vector<1xf32>
    %1169 = vector.shape_cast %1168 : vector<1xf32> to vector<1x1xf32>
    %cst_623 = arith.constant 1.600000e+01 : f32
    %1170 = vector.broadcast %cst_623 : f32 to vector<1x1xf32>
    %1171 = arith.divf %1169, %1170 : vector<1x1xf32>
    %1172 = vector.broadcast %1171 : vector<1x1xf32> to vector<16x16xf32>
    %1173 = arith.subf %947, %1172 : vector<16x16xf32>
    %1174 = arith.mulf %1173, %1173 : vector<16x16xf32>
    %cst_624 = arith.constant dense<0.000000e+00> : vector<16xf32>
    %1175 = vector.multi_reduction <add>, %1174, %cst_624 [1] : vector<16x16xf32> to vector<16xf32>
    %1176 = vector.shape_cast %1175 : vector<16xf32> to vector<16x1xf32>
    %cst_625 = arith.constant 1.600000e+01 : f32
    %1177 = vector.broadcast %cst_625 : f32 to vector<16x1xf32>
    %1178 = arith.divf %1176, %1177 : vector<16x1xf32>
    %cst_626 = arith.constant dense<0.000000e+00> : vector<1xf32>
    %1179 = vector.multi_reduction <add>, %1178, %cst_626 [0] : vector<16x1xf32> to vector<1xf32>
    %1180 = vector.shape_cast %1179 : vector<1xf32> to vector<1x1xf32>
    %cst_627 = arith.constant 1.600000e+01 : f32
    %1181 = vector.broadcast %cst_627 : f32 to vector<1x1xf32>
    %1182 = arith.divf %1180, %1181 : vector<1x1xf32>
    %cst_628 = arith.constant 1.000000e-03 : f32
    %1183 = vector.broadcast %cst_628 : f32 to vector<1x1xf32>
    %1184 = arith.addf %1182, %1183 : vector<1x1xf32>
    %1185 = math.rsqrt %1184 : vector<1x1xf32>
    %1186 = vector.broadcast %1185 : vector<1x1xf32> to vector<16x16xf32>
    %1187 = arith.mulf %1173, %1186 : vector<16x16xf32>
    %cst_629 = arith.constant dense<0.000000e+00> : vector<16xf32>
    %1188 = vector.multi_reduction <add>, %983, %cst_629 [1] : vector<16x16xf32> to vector<16xf32>
    %1189 = vector.shape_cast %1188 : vector<16xf32> to vector<16x1xf32>
    %cst_630 = arith.constant 1.600000e+01 : f32
    %1190 = vector.broadcast %cst_630 : f32 to vector<16x1xf32>
    %1191 = arith.divf %1189, %1190 : vector<16x1xf32>
    %cst_631 = arith.constant dense<0.000000e+00> : vector<1xf32>
    %1192 = vector.multi_reduction <add>, %1191, %cst_631 [0] : vector<16x1xf32> to vector<1xf32>
    %1193 = vector.shape_cast %1192 : vector<1xf32> to vector<1x1xf32>
    %cst_632 = arith.constant 1.600000e+01 : f32
    %1194 = vector.broadcast %cst_632 : f32 to vector<1x1xf32>
    %1195 = arith.divf %1193, %1194 : vector<1x1xf32>
    %1196 = vector.broadcast %1195 : vector<1x1xf32> to vector<16x16xf32>
    %1197 = arith.subf %983, %1196 : vector<16x16xf32>
    %1198 = arith.mulf %1197, %1197 : vector<16x16xf32>
    %cst_633 = arith.constant dense<0.000000e+00> : vector<16xf32>
    %1199 = vector.multi_reduction <add>, %1198, %cst_633 [1] : vector<16x16xf32> to vector<16xf32>
    %1200 = vector.shape_cast %1199 : vector<16xf32> to vector<16x1xf32>
    %cst_634 = arith.constant 1.600000e+01 : f32
    %1201 = vector.broadcast %cst_634 : f32 to vector<16x1xf32>
    %1202 = arith.divf %1200, %1201 : vector<16x1xf32>
    %cst_635 = arith.constant dense<0.000000e+00> : vector<1xf32>
    %1203 = vector.multi_reduction <add>, %1202, %cst_635 [0] : vector<16x1xf32> to vector<1xf32>
    %1204 = vector.shape_cast %1203 : vector<1xf32> to vector<1x1xf32>
    %cst_636 = arith.constant 1.600000e+01 : f32
    %1205 = vector.broadcast %cst_636 : f32 to vector<1x1xf32>
    %1206 = arith.divf %1204, %1205 : vector<1x1xf32>
    %cst_637 = arith.constant 1.000000e-03 : f32
    %1207 = vector.broadcast %cst_637 : f32 to vector<1x1xf32>
    %1208 = arith.addf %1206, %1207 : vector<1x1xf32>
    %1209 = math.rsqrt %1208 : vector<1x1xf32>
    %1210 = vector.broadcast %1209 : vector<1x1xf32> to vector<16x16xf32>
    %1211 = arith.mulf %1197, %1210 : vector<16x16xf32>
    %cst_638 = arith.constant dense<0.000000e+00> : vector<16xf32>
    %1212 = vector.multi_reduction <add>, %1019, %cst_638 [1] : vector<16x16xf32> to vector<16xf32>
    %1213 = vector.shape_cast %1212 : vector<16xf32> to vector<16x1xf32>
    %cst_639 = arith.constant 1.600000e+01 : f32
    %1214 = vector.broadcast %cst_639 : f32 to vector<16x1xf32>
    %1215 = arith.divf %1213, %1214 : vector<16x1xf32>
    %cst_640 = arith.constant dense<0.000000e+00> : vector<1xf32>
    %1216 = vector.multi_reduction <add>, %1215, %cst_640 [0] : vector<16x1xf32> to vector<1xf32>
    %1217 = vector.shape_cast %1216 : vector<1xf32> to vector<1x1xf32>
    %cst_641 = arith.constant 1.600000e+01 : f32
    %1218 = vector.broadcast %cst_641 : f32 to vector<1x1xf32>
    %1219 = arith.divf %1217, %1218 : vector<1x1xf32>
    %1220 = vector.broadcast %1219 : vector<1x1xf32> to vector<16x16xf32>
    %1221 = arith.subf %1019, %1220 : vector<16x16xf32>
    %1222 = arith.mulf %1221, %1221 : vector<16x16xf32>
    %cst_642 = arith.constant dense<0.000000e+00> : vector<16xf32>
    %1223 = vector.multi_reduction <add>, %1222, %cst_642 [1] : vector<16x16xf32> to vector<16xf32>
    %1224 = vector.shape_cast %1223 : vector<16xf32> to vector<16x1xf32>
    %cst_643 = arith.constant 1.600000e+01 : f32
    %1225 = vector.broadcast %cst_643 : f32 to vector<16x1xf32>
    %1226 = arith.divf %1224, %1225 : vector<16x1xf32>
    %cst_644 = arith.constant dense<0.000000e+00> : vector<1xf32>
    %1227 = vector.multi_reduction <add>, %1226, %cst_644 [0] : vector<16x1xf32> to vector<1xf32>
    %1228 = vector.shape_cast %1227 : vector<1xf32> to vector<1x1xf32>
    %cst_645 = arith.constant 1.600000e+01 : f32
    %1229 = vector.broadcast %cst_645 : f32 to vector<1x1xf32>
    %1230 = arith.divf %1228, %1229 : vector<1x1xf32>
    %cst_646 = arith.constant 1.000000e-03 : f32
    %1231 = vector.broadcast %cst_646 : f32 to vector<1x1xf32>
    %1232 = arith.addf %1230, %1231 : vector<1x1xf32>
    %1233 = math.rsqrt %1232 : vector<1x1xf32>
    %1234 = vector.broadcast %1233 : vector<1x1xf32> to vector<16x16xf32>
    %1235 = arith.mulf %1221, %1234 : vector<16x16xf32>
    %cst_647 = arith.constant dense<0.000000e+00> : vector<16xf32>
    %1236 = vector.multi_reduction <add>, %1055, %cst_647 [1] : vector<16x16xf32> to vector<16xf32>
    %1237 = vector.shape_cast %1236 : vector<16xf32> to vector<16x1xf32>
    %cst_648 = arith.constant 1.600000e+01 : f32
    %1238 = vector.broadcast %cst_648 : f32 to vector<16x1xf32>
    %1239 = arith.divf %1237, %1238 : vector<16x1xf32>
    %cst_649 = arith.constant dense<0.000000e+00> : vector<1xf32>
    %1240 = vector.multi_reduction <add>, %1239, %cst_649 [0] : vector<16x1xf32> to vector<1xf32>
    %1241 = vector.shape_cast %1240 : vector<1xf32> to vector<1x1xf32>
    %cst_650 = arith.constant 1.600000e+01 : f32
    %1242 = vector.broadcast %cst_650 : f32 to vector<1x1xf32>
    %1243 = arith.divf %1241, %1242 : vector<1x1xf32>
    %1244 = vector.broadcast %1243 : vector<1x1xf32> to vector<16x16xf32>
    %1245 = arith.subf %1055, %1244 : vector<16x16xf32>
    %1246 = arith.mulf %1245, %1245 : vector<16x16xf32>
    %cst_651 = arith.constant dense<0.000000e+00> : vector<16xf32>
    %1247 = vector.multi_reduction <add>, %1246, %cst_651 [1] : vector<16x16xf32> to vector<16xf32>
    %1248 = vector.shape_cast %1247 : vector<16xf32> to vector<16x1xf32>
    %cst_652 = arith.constant 1.600000e+01 : f32
    %1249 = vector.broadcast %cst_652 : f32 to vector<16x1xf32>
    %1250 = arith.divf %1248, %1249 : vector<16x1xf32>
    %cst_653 = arith.constant dense<0.000000e+00> : vector<1xf32>
    %1251 = vector.multi_reduction <add>, %1250, %cst_653 [0] : vector<16x1xf32> to vector<1xf32>
    %1252 = vector.shape_cast %1251 : vector<1xf32> to vector<1x1xf32>
    %cst_654 = arith.constant 1.600000e+01 : f32
    %1253 = vector.broadcast %cst_654 : f32 to vector<1x1xf32>
    %1254 = arith.divf %1252, %1253 : vector<1x1xf32>
    %cst_655 = arith.constant 1.000000e-03 : f32
    %1255 = vector.broadcast %cst_655 : f32 to vector<1x1xf32>
    %1256 = arith.addf %1254, %1255 : vector<1x1xf32>
    %1257 = math.rsqrt %1256 : vector<1x1xf32>
    %1258 = vector.broadcast %1257 : vector<1x1xf32> to vector<16x16xf32>
    %1259 = arith.mulf %1245, %1258 : vector<16x16xf32>
    %cst_656 = arith.constant dense<0.000000e+00> : vector<16xf32>
    %1260 = vector.multi_reduction <add>, %1091, %cst_656 [1] : vector<16x16xf32> to vector<16xf32>
    %1261 = vector.shape_cast %1260 : vector<16xf32> to vector<16x1xf32>
    %cst_657 = arith.constant 1.600000e+01 : f32
    %1262 = vector.broadcast %cst_657 : f32 to vector<16x1xf32>
    %1263 = arith.divf %1261, %1262 : vector<16x1xf32>
    %cst_658 = arith.constant dense<0.000000e+00> : vector<1xf32>
    %1264 = vector.multi_reduction <add>, %1263, %cst_658 [0] : vector<16x1xf32> to vector<1xf32>
    %1265 = vector.shape_cast %1264 : vector<1xf32> to vector<1x1xf32>
    %cst_659 = arith.constant 1.600000e+01 : f32
    %1266 = vector.broadcast %cst_659 : f32 to vector<1x1xf32>
    %1267 = arith.divf %1265, %1266 : vector<1x1xf32>
    %1268 = vector.broadcast %1267 : vector<1x1xf32> to vector<16x16xf32>
    %1269 = arith.subf %1091, %1268 : vector<16x16xf32>
    %1270 = arith.mulf %1269, %1269 : vector<16x16xf32>
    %cst_660 = arith.constant dense<0.000000e+00> : vector<16xf32>
    %1271 = vector.multi_reduction <add>, %1270, %cst_660 [1] : vector<16x16xf32> to vector<16xf32>
    %1272 = vector.shape_cast %1271 : vector<16xf32> to vector<16x1xf32>
    %cst_661 = arith.constant 1.600000e+01 : f32
    %1273 = vector.broadcast %cst_661 : f32 to vector<16x1xf32>
    %1274 = arith.divf %1272, %1273 : vector<16x1xf32>
    %cst_662 = arith.constant dense<0.000000e+00> : vector<1xf32>
    %1275 = vector.multi_reduction <add>, %1274, %cst_662 [0] : vector<16x1xf32> to vector<1xf32>
    %1276 = vector.shape_cast %1275 : vector<1xf32> to vector<1x1xf32>
    %cst_663 = arith.constant 1.600000e+01 : f32
    %1277 = vector.broadcast %cst_663 : f32 to vector<1x1xf32>
    %1278 = arith.divf %1276, %1277 : vector<1x1xf32>
    %cst_664 = arith.constant 1.000000e-03 : f32
    %1279 = vector.broadcast %cst_664 : f32 to vector<1x1xf32>
    %1280 = arith.addf %1278, %1279 : vector<1x1xf32>
    %1281 = math.rsqrt %1280 : vector<1x1xf32>
    %1282 = vector.broadcast %1281 : vector<1x1xf32> to vector<16x16xf32>
    %1283 = arith.mulf %1269, %1282 : vector<16x16xf32>
    %c1_i32_665 = arith.constant 1 : i32
    %1284 = tpu.dynamic_rotate %1115 by %c1_i32_665 dim 1 : vector<16x16xf32>, i32 -> vector<16x16xf32>
    %cst_666 = arith.constant 0.000000e+00 : f32
    %1285 = vector.broadcast %cst_666 : f32 to vector<16x16xf32>
    %1286 = arith.select %3, %1284, %1285 : vector<16x16xi1>, vector<16x16xf32>
    %c15_i32_667 = arith.constant 15 : i32
    %1287 = tpu.dynamic_rotate %1115 by %c15_i32_667 dim 1 : vector<16x16xf32>, i32 -> vector<16x16xf32>
    %cst_668 = arith.constant 0.000000e+00 : f32
    %1288 = vector.broadcast %cst_668 : f32 to vector<16x16xf32>
    %1289 = arith.select %5, %1287, %1288 : vector<16x16xi1>, vector<16x16xf32>
    %c0_669 = arith.constant 0 : index
    %c0_670 = arith.constant 0 : index
    %1290 = memref.load %arg10[%c0_669, %c0_670] : memref<9x8xf32, #tpu.memory_space<smem>>
    %1291 = vector.broadcast %1290 : f32 to vector<16x16xf32>
    %1292 = arith.mulf %1291, %1286 : vector<16x16xf32>
    %c1_671 = arith.constant 1 : index
    %c0_672 = arith.constant 0 : index
    %1293 = memref.load %arg10[%c1_671, %c0_672] : memref<9x8xf32, #tpu.memory_space<smem>>
    %1294 = vector.broadcast %1293 : f32 to vector<16x16xf32>
    %1295 = arith.mulf %1294, %1115 : vector<16x16xf32>
    %1296 = arith.addf %1292, %1295 : vector<16x16xf32>
    %c2_673 = arith.constant 2 : index
    %c0_674 = arith.constant 0 : index
    %1297 = memref.load %arg10[%c2_673, %c0_674] : memref<9x8xf32, #tpu.memory_space<smem>>
    %1298 = vector.broadcast %1297 : f32 to vector<16x16xf32>
    %1299 = arith.mulf %1298, %1289 : vector<16x16xf32>
    %1300 = arith.addf %1296, %1299 : vector<16x16xf32>
    %cst_675 = arith.constant dense<0.000000e+00> : vector<8x16xf32>
    %1301 = tpu.matmul %19, %1300, %cst_675 {dimension_numbers = #tpu.dot_dimension_numbers<[1], [0], [0], [1], [0, 0, 1, 1], [], []>} : vector<8x16xf32>, vector<16x16xf32>, vector<8x16xf32> -> vector<8x16xf32>
    %c3_676 = arith.constant 3 : index
    %c0_677 = arith.constant 0 : index
    %1302 = memref.load %arg10[%c3_676, %c0_677] : memref<9x8xf32, #tpu.memory_space<smem>>
    %1303 = vector.broadcast %1302 : f32 to vector<16x16xf32>
    %1304 = arith.mulf %1303, %1286 : vector<16x16xf32>
    %c4_678 = arith.constant 4 : index
    %c0_679 = arith.constant 0 : index
    %1305 = memref.load %arg10[%c4_678, %c0_679] : memref<9x8xf32, #tpu.memory_space<smem>>
    %1306 = vector.broadcast %1305 : f32 to vector<16x16xf32>
    %1307 = arith.mulf %1306, %1115 : vector<16x16xf32>
    %1308 = arith.addf %1304, %1307 : vector<16x16xf32>
    %c5_680 = arith.constant 5 : index
    %c0_681 = arith.constant 0 : index
    %1309 = memref.load %arg10[%c5_680, %c0_681] : memref<9x8xf32, #tpu.memory_space<smem>>
    %1310 = vector.broadcast %1309 : f32 to vector<16x16xf32>
    %1311 = arith.mulf %1310, %1289 : vector<16x16xf32>
    %1312 = arith.addf %1308, %1311 : vector<16x16xf32>
    %cst_682 = arith.constant dense<0.000000e+00> : vector<8x16xf32>
    %1313 = tpu.matmul %27, %1312, %cst_682 {dimension_numbers = #tpu.dot_dimension_numbers<[1], [0], [0], [1], [0, 0, 1, 1], [], []>} : vector<8x16xf32>, vector<16x16xf32>, vector<8x16xf32> -> vector<8x16xf32>
    %1314 = arith.addf %1301, %1313 : vector<8x16xf32>
    %c6_683 = arith.constant 6 : index
    %c0_684 = arith.constant 0 : index
    %1315 = memref.load %arg10[%c6_683, %c0_684] : memref<9x8xf32, #tpu.memory_space<smem>>
    %1316 = vector.broadcast %1315 : f32 to vector<16x16xf32>
    %1317 = arith.mulf %1316, %1286 : vector<16x16xf32>
    %c7_685 = arith.constant 7 : index
    %c0_686 = arith.constant 0 : index
    %1318 = memref.load %arg10[%c7_685, %c0_686] : memref<9x8xf32, #tpu.memory_space<smem>>
    %1319 = vector.broadcast %1318 : f32 to vector<16x16xf32>
    %1320 = arith.mulf %1319, %1115 : vector<16x16xf32>
    %1321 = arith.addf %1317, %1320 : vector<16x16xf32>
    %c8_687 = arith.constant 8 : index
    %c0_688 = arith.constant 0 : index
    %1322 = memref.load %arg10[%c8_687, %c0_688] : memref<9x8xf32, #tpu.memory_space<smem>>
    %1323 = vector.broadcast %1322 : f32 to vector<16x16xf32>
    %1324 = arith.mulf %1323, %1289 : vector<16x16xf32>
    %1325 = arith.addf %1321, %1324 : vector<16x16xf32>
    %cst_689 = arith.constant dense<0.000000e+00> : vector<8x16xf32>
    %1326 = tpu.matmul %35, %1325, %cst_689 {dimension_numbers = #tpu.dot_dimension_numbers<[1], [0], [0], [1], [0, 0, 1, 1], [], []>} : vector<8x16xf32>, vector<16x16xf32>, vector<8x16xf32> -> vector<8x16xf32>
    %1327 = arith.addf %1314, %1326 : vector<8x16xf32>
    %c0_690 = arith.constant 0 : index
    %c0_691 = arith.constant 0 : index
    %1328 = memref.load %arg11[%c0_690, %c0_691] : memref<1x8xf32, #tpu.memory_space<smem>>
    %1329 = vector.broadcast %1328 : f32 to vector<8x16xf32>
    %1330 = arith.addf %1327, %1329 : vector<8x16xf32>
    %c1_i32_692 = arith.constant 1 : i32
    %1331 = tpu.dynamic_rotate %1139 by %c1_i32_692 dim 1 : vector<16x16xf32>, i32 -> vector<16x16xf32>
    %cst_693 = arith.constant 0.000000e+00 : f32
    %1332 = vector.broadcast %cst_693 : f32 to vector<16x16xf32>
    %1333 = arith.select %3, %1331, %1332 : vector<16x16xi1>, vector<16x16xf32>
    %c15_i32_694 = arith.constant 15 : i32
    %1334 = tpu.dynamic_rotate %1139 by %c15_i32_694 dim 1 : vector<16x16xf32>, i32 -> vector<16x16xf32>
    %cst_695 = arith.constant 0.000000e+00 : f32
    %1335 = vector.broadcast %cst_695 : f32 to vector<16x16xf32>
    %1336 = arith.select %5, %1334, %1335 : vector<16x16xi1>, vector<16x16xf32>
    %c0_696 = arith.constant 0 : index
    %c1_697 = arith.constant 1 : index
    %1337 = memref.load %arg10[%c0_696, %c1_697] : memref<9x8xf32, #tpu.memory_space<smem>>
    %1338 = vector.broadcast %1337 : f32 to vector<16x16xf32>
    %1339 = arith.mulf %1338, %1333 : vector<16x16xf32>
    %c1_698 = arith.constant 1 : index
    %c1_699 = arith.constant 1 : index
    %1340 = memref.load %arg10[%c1_698, %c1_699] : memref<9x8xf32, #tpu.memory_space<smem>>
    %1341 = vector.broadcast %1340 : f32 to vector<16x16xf32>
    %1342 = arith.mulf %1341, %1139 : vector<16x16xf32>
    %1343 = arith.addf %1339, %1342 : vector<16x16xf32>
    %c2_700 = arith.constant 2 : index
    %c1_701 = arith.constant 1 : index
    %1344 = memref.load %arg10[%c2_700, %c1_701] : memref<9x8xf32, #tpu.memory_space<smem>>
    %1345 = vector.broadcast %1344 : f32 to vector<16x16xf32>
    %1346 = arith.mulf %1345, %1336 : vector<16x16xf32>
    %1347 = arith.addf %1343, %1346 : vector<16x16xf32>
    %cst_702 = arith.constant dense<0.000000e+00> : vector<8x16xf32>
    %1348 = tpu.matmul %19, %1347, %cst_702 {dimension_numbers = #tpu.dot_dimension_numbers<[1], [0], [0], [1], [0, 0, 1, 1], [], []>} : vector<8x16xf32>, vector<16x16xf32>, vector<8x16xf32> -> vector<8x16xf32>
    %c3_703 = arith.constant 3 : index
    %c1_704 = arith.constant 1 : index
    %1349 = memref.load %arg10[%c3_703, %c1_704] : memref<9x8xf32, #tpu.memory_space<smem>>
    %1350 = vector.broadcast %1349 : f32 to vector<16x16xf32>
    %1351 = arith.mulf %1350, %1333 : vector<16x16xf32>
    %c4_705 = arith.constant 4 : index
    %c1_706 = arith.constant 1 : index
    %1352 = memref.load %arg10[%c4_705, %c1_706] : memref<9x8xf32, #tpu.memory_space<smem>>
    %1353 = vector.broadcast %1352 : f32 to vector<16x16xf32>
    %1354 = arith.mulf %1353, %1139 : vector<16x16xf32>
    %1355 = arith.addf %1351, %1354 : vector<16x16xf32>
    %c5_707 = arith.constant 5 : index
    %c1_708 = arith.constant 1 : index
    %1356 = memref.load %arg10[%c5_707, %c1_708] : memref<9x8xf32, #tpu.memory_space<smem>>
    %1357 = vector.broadcast %1356 : f32 to vector<16x16xf32>
    %1358 = arith.mulf %1357, %1336 : vector<16x16xf32>
    %1359 = arith.addf %1355, %1358 : vector<16x16xf32>
    %cst_709 = arith.constant dense<0.000000e+00> : vector<8x16xf32>
    %1360 = tpu.matmul %27, %1359, %cst_709 {dimension_numbers = #tpu.dot_dimension_numbers<[1], [0], [0], [1], [0, 0, 1, 1], [], []>} : vector<8x16xf32>, vector<16x16xf32>, vector<8x16xf32> -> vector<8x16xf32>
    %1361 = arith.addf %1348, %1360 : vector<8x16xf32>
    %c6_710 = arith.constant 6 : index
    %c1_711 = arith.constant 1 : index
    %1362 = memref.load %arg10[%c6_710, %c1_711] : memref<9x8xf32, #tpu.memory_space<smem>>
    %1363 = vector.broadcast %1362 : f32 to vector<16x16xf32>
    %1364 = arith.mulf %1363, %1333 : vector<16x16xf32>
    %c7_712 = arith.constant 7 : index
    %c1_713 = arith.constant 1 : index
    %1365 = memref.load %arg10[%c7_712, %c1_713] : memref<9x8xf32, #tpu.memory_space<smem>>
    %1366 = vector.broadcast %1365 : f32 to vector<16x16xf32>
    %1367 = arith.mulf %1366, %1139 : vector<16x16xf32>
    %1368 = arith.addf %1364, %1367 : vector<16x16xf32>
    %c8_714 = arith.constant 8 : index
    %c1_715 = arith.constant 1 : index
    %1369 = memref.load %arg10[%c8_714, %c1_715] : memref<9x8xf32, #tpu.memory_space<smem>>
    %1370 = vector.broadcast %1369 : f32 to vector<16x16xf32>
    %1371 = arith.mulf %1370, %1336 : vector<16x16xf32>
    %1372 = arith.addf %1368, %1371 : vector<16x16xf32>
    %cst_716 = arith.constant dense<0.000000e+00> : vector<8x16xf32>
    %1373 = tpu.matmul %35, %1372, %cst_716 {dimension_numbers = #tpu.dot_dimension_numbers<[1], [0], [0], [1], [0, 0, 1, 1], [], []>} : vector<8x16xf32>, vector<16x16xf32>, vector<8x16xf32> -> vector<8x16xf32>
    %1374 = arith.addf %1361, %1373 : vector<8x16xf32>
    %c0_717 = arith.constant 0 : index
    %c1_718 = arith.constant 1 : index
    %1375 = memref.load %arg11[%c0_717, %c1_718] : memref<1x8xf32, #tpu.memory_space<smem>>
    %1376 = vector.broadcast %1375 : f32 to vector<8x16xf32>
    %1377 = arith.addf %1374, %1376 : vector<8x16xf32>
    %c1_i32_719 = arith.constant 1 : i32
    %1378 = tpu.dynamic_rotate %1163 by %c1_i32_719 dim 1 : vector<16x16xf32>, i32 -> vector<16x16xf32>
    %cst_720 = arith.constant 0.000000e+00 : f32
    %1379 = vector.broadcast %cst_720 : f32 to vector<16x16xf32>
    %1380 = arith.select %3, %1378, %1379 : vector<16x16xi1>, vector<16x16xf32>
    %c15_i32_721 = arith.constant 15 : i32
    %1381 = tpu.dynamic_rotate %1163 by %c15_i32_721 dim 1 : vector<16x16xf32>, i32 -> vector<16x16xf32>
    %cst_722 = arith.constant 0.000000e+00 : f32
    %1382 = vector.broadcast %cst_722 : f32 to vector<16x16xf32>
    %1383 = arith.select %5, %1381, %1382 : vector<16x16xi1>, vector<16x16xf32>
    %c0_723 = arith.constant 0 : index
    %c2_724 = arith.constant 2 : index
    %1384 = memref.load %arg10[%c0_723, %c2_724] : memref<9x8xf32, #tpu.memory_space<smem>>
    %1385 = vector.broadcast %1384 : f32 to vector<16x16xf32>
    %1386 = arith.mulf %1385, %1380 : vector<16x16xf32>
    %c1_725 = arith.constant 1 : index
    %c2_726 = arith.constant 2 : index
    %1387 = memref.load %arg10[%c1_725, %c2_726] : memref<9x8xf32, #tpu.memory_space<smem>>
    %1388 = vector.broadcast %1387 : f32 to vector<16x16xf32>
    %1389 = arith.mulf %1388, %1163 : vector<16x16xf32>
    %1390 = arith.addf %1386, %1389 : vector<16x16xf32>
    %c2_727 = arith.constant 2 : index
    %c2_728 = arith.constant 2 : index
    %1391 = memref.load %arg10[%c2_727, %c2_728] : memref<9x8xf32, #tpu.memory_space<smem>>
    %1392 = vector.broadcast %1391 : f32 to vector<16x16xf32>
    %1393 = arith.mulf %1392, %1383 : vector<16x16xf32>
    %1394 = arith.addf %1390, %1393 : vector<16x16xf32>
    %cst_729 = arith.constant dense<0.000000e+00> : vector<8x16xf32>
    %1395 = tpu.matmul %19, %1394, %cst_729 {dimension_numbers = #tpu.dot_dimension_numbers<[1], [0], [0], [1], [0, 0, 1, 1], [], []>} : vector<8x16xf32>, vector<16x16xf32>, vector<8x16xf32> -> vector<8x16xf32>
    %c3_730 = arith.constant 3 : index
    %c2_731 = arith.constant 2 : index
    %1396 = memref.load %arg10[%c3_730, %c2_731] : memref<9x8xf32, #tpu.memory_space<smem>>
    %1397 = vector.broadcast %1396 : f32 to vector<16x16xf32>
    %1398 = arith.mulf %1397, %1380 : vector<16x16xf32>
    %c4_732 = arith.constant 4 : index
    %c2_733 = arith.constant 2 : index
    %1399 = memref.load %arg10[%c4_732, %c2_733] : memref<9x8xf32, #tpu.memory_space<smem>>
    %1400 = vector.broadcast %1399 : f32 to vector<16x16xf32>
    %1401 = arith.mulf %1400, %1163 : vector<16x16xf32>
    %1402 = arith.addf %1398, %1401 : vector<16x16xf32>
    %c5_734 = arith.constant 5 : index
    %c2_735 = arith.constant 2 : index
    %1403 = memref.load %arg10[%c5_734, %c2_735] : memref<9x8xf32, #tpu.memory_space<smem>>
    %1404 = vector.broadcast %1403 : f32 to vector<16x16xf32>
    %1405 = arith.mulf %1404, %1383 : vector<16x16xf32>
    %1406 = arith.addf %1402, %1405 : vector<16x16xf32>
    %cst_736 = arith.constant dense<0.000000e+00> : vector<8x16xf32>
    %1407 = tpu.matmul %27, %1406, %cst_736 {dimension_numbers = #tpu.dot_dimension_numbers<[1], [0], [0], [1], [0, 0, 1, 1], [], []>} : vector<8x16xf32>, vector<16x16xf32>, vector<8x16xf32> -> vector<8x16xf32>
    %1408 = arith.addf %1395, %1407 : vector<8x16xf32>
    %c6_737 = arith.constant 6 : index
    %c2_738 = arith.constant 2 : index
    %1409 = memref.load %arg10[%c6_737, %c2_738] : memref<9x8xf32, #tpu.memory_space<smem>>
    %1410 = vector.broadcast %1409 : f32 to vector<16x16xf32>
    %1411 = arith.mulf %1410, %1380 : vector<16x16xf32>
    %c7_739 = arith.constant 7 : index
    %c2_740 = arith.constant 2 : index
    %1412 = memref.load %arg10[%c7_739, %c2_740] : memref<9x8xf32, #tpu.memory_space<smem>>
    %1413 = vector.broadcast %1412 : f32 to vector<16x16xf32>
    %1414 = arith.mulf %1413, %1163 : vector<16x16xf32>
    %1415 = arith.addf %1411, %1414 : vector<16x16xf32>
    %c8_741 = arith.constant 8 : index
    %c2_742 = arith.constant 2 : index
    %1416 = memref.load %arg10[%c8_741, %c2_742] : memref<9x8xf32, #tpu.memory_space<smem>>
    %1417 = vector.broadcast %1416 : f32 to vector<16x16xf32>
    %1418 = arith.mulf %1417, %1383 : vector<16x16xf32>
    %1419 = arith.addf %1415, %1418 : vector<16x16xf32>
    %cst_743 = arith.constant dense<0.000000e+00> : vector<8x16xf32>
    %1420 = tpu.matmul %35, %1419, %cst_743 {dimension_numbers = #tpu.dot_dimension_numbers<[1], [0], [0], [1], [0, 0, 1, 1], [], []>} : vector<8x16xf32>, vector<16x16xf32>, vector<8x16xf32> -> vector<8x16xf32>
    %1421 = arith.addf %1408, %1420 : vector<8x16xf32>
    %c0_744 = arith.constant 0 : index
    %c2_745 = arith.constant 2 : index
    %1422 = memref.load %arg11[%c0_744, %c2_745] : memref<1x8xf32, #tpu.memory_space<smem>>
    %1423 = vector.broadcast %1422 : f32 to vector<8x16xf32>
    %1424 = arith.addf %1421, %1423 : vector<8x16xf32>
    %c1_i32_746 = arith.constant 1 : i32
    %1425 = tpu.dynamic_rotate %1187 by %c1_i32_746 dim 1 : vector<16x16xf32>, i32 -> vector<16x16xf32>
    %cst_747 = arith.constant 0.000000e+00 : f32
    %1426 = vector.broadcast %cst_747 : f32 to vector<16x16xf32>
    %1427 = arith.select %3, %1425, %1426 : vector<16x16xi1>, vector<16x16xf32>
    %c15_i32_748 = arith.constant 15 : i32
    %1428 = tpu.dynamic_rotate %1187 by %c15_i32_748 dim 1 : vector<16x16xf32>, i32 -> vector<16x16xf32>
    %cst_749 = arith.constant 0.000000e+00 : f32
    %1429 = vector.broadcast %cst_749 : f32 to vector<16x16xf32>
    %1430 = arith.select %5, %1428, %1429 : vector<16x16xi1>, vector<16x16xf32>
    %c0_750 = arith.constant 0 : index
    %c3_751 = arith.constant 3 : index
    %1431 = memref.load %arg10[%c0_750, %c3_751] : memref<9x8xf32, #tpu.memory_space<smem>>
    %1432 = vector.broadcast %1431 : f32 to vector<16x16xf32>
    %1433 = arith.mulf %1432, %1427 : vector<16x16xf32>
    %c1_752 = arith.constant 1 : index
    %c3_753 = arith.constant 3 : index
    %1434 = memref.load %arg10[%c1_752, %c3_753] : memref<9x8xf32, #tpu.memory_space<smem>>
    %1435 = vector.broadcast %1434 : f32 to vector<16x16xf32>
    %1436 = arith.mulf %1435, %1187 : vector<16x16xf32>
    %1437 = arith.addf %1433, %1436 : vector<16x16xf32>
    %c2_754 = arith.constant 2 : index
    %c3_755 = arith.constant 3 : index
    %1438 = memref.load %arg10[%c2_754, %c3_755] : memref<9x8xf32, #tpu.memory_space<smem>>
    %1439 = vector.broadcast %1438 : f32 to vector<16x16xf32>
    %1440 = arith.mulf %1439, %1430 : vector<16x16xf32>
    %1441 = arith.addf %1437, %1440 : vector<16x16xf32>
    %cst_756 = arith.constant dense<0.000000e+00> : vector<8x16xf32>
    %1442 = tpu.matmul %19, %1441, %cst_756 {dimension_numbers = #tpu.dot_dimension_numbers<[1], [0], [0], [1], [0, 0, 1, 1], [], []>} : vector<8x16xf32>, vector<16x16xf32>, vector<8x16xf32> -> vector<8x16xf32>
    %c3_757 = arith.constant 3 : index
    %c3_758 = arith.constant 3 : index
    %1443 = memref.load %arg10[%c3_757, %c3_758] : memref<9x8xf32, #tpu.memory_space<smem>>
    %1444 = vector.broadcast %1443 : f32 to vector<16x16xf32>
    %1445 = arith.mulf %1444, %1427 : vector<16x16xf32>
    %c4_759 = arith.constant 4 : index
    %c3_760 = arith.constant 3 : index
    %1446 = memref.load %arg10[%c4_759, %c3_760] : memref<9x8xf32, #tpu.memory_space<smem>>
    %1447 = vector.broadcast %1446 : f32 to vector<16x16xf32>
    %1448 = arith.mulf %1447, %1187 : vector<16x16xf32>
    %1449 = arith.addf %1445, %1448 : vector<16x16xf32>
    %c5_761 = arith.constant 5 : index
    %c3_762 = arith.constant 3 : index
    %1450 = memref.load %arg10[%c5_761, %c3_762] : memref<9x8xf32, #tpu.memory_space<smem>>
    %1451 = vector.broadcast %1450 : f32 to vector<16x16xf32>
    %1452 = arith.mulf %1451, %1430 : vector<16x16xf32>
    %1453 = arith.addf %1449, %1452 : vector<16x16xf32>
    %cst_763 = arith.constant dense<0.000000e+00> : vector<8x16xf32>
    %1454 = tpu.matmul %27, %1453, %cst_763 {dimension_numbers = #tpu.dot_dimension_numbers<[1], [0], [0], [1], [0, 0, 1, 1], [], []>} : vector<8x16xf32>, vector<16x16xf32>, vector<8x16xf32> -> vector<8x16xf32>
    %1455 = arith.addf %1442, %1454 : vector<8x16xf32>
    %c6_764 = arith.constant 6 : index
    %c3_765 = arith.constant 3 : index
    %1456 = memref.load %arg10[%c6_764, %c3_765] : memref<9x8xf32, #tpu.memory_space<smem>>
    %1457 = vector.broadcast %1456 : f32 to vector<16x16xf32>
    %1458 = arith.mulf %1457, %1427 : vector<16x16xf32>
    %c7_766 = arith.constant 7 : index
    %c3_767 = arith.constant 3 : index
    %1459 = memref.load %arg10[%c7_766, %c3_767] : memref<9x8xf32, #tpu.memory_space<smem>>
    %1460 = vector.broadcast %1459 : f32 to vector<16x16xf32>
    %1461 = arith.mulf %1460, %1187 : vector<16x16xf32>
    %1462 = arith.addf %1458, %1461 : vector<16x16xf32>
    %c8_768 = arith.constant 8 : index
    %c3_769 = arith.constant 3 : index
    %1463 = memref.load %arg10[%c8_768, %c3_769] : memref<9x8xf32, #tpu.memory_space<smem>>
    %1464 = vector.broadcast %1463 : f32 to vector<16x16xf32>
    %1465 = arith.mulf %1464, %1430 : vector<16x16xf32>
    %1466 = arith.addf %1462, %1465 : vector<16x16xf32>
    %cst_770 = arith.constant dense<0.000000e+00> : vector<8x16xf32>
    %1467 = tpu.matmul %35, %1466, %cst_770 {dimension_numbers = #tpu.dot_dimension_numbers<[1], [0], [0], [1], [0, 0, 1, 1], [], []>} : vector<8x16xf32>, vector<16x16xf32>, vector<8x16xf32> -> vector<8x16xf32>
    %1468 = arith.addf %1455, %1467 : vector<8x16xf32>
    %c0_771 = arith.constant 0 : index
    %c3_772 = arith.constant 3 : index
    %1469 = memref.load %arg11[%c0_771, %c3_772] : memref<1x8xf32, #tpu.memory_space<smem>>
    %1470 = vector.broadcast %1469 : f32 to vector<8x16xf32>
    %1471 = arith.addf %1468, %1470 : vector<8x16xf32>
    %c1_i32_773 = arith.constant 1 : i32
    %1472 = tpu.dynamic_rotate %1211 by %c1_i32_773 dim 1 : vector<16x16xf32>, i32 -> vector<16x16xf32>
    %cst_774 = arith.constant 0.000000e+00 : f32
    %1473 = vector.broadcast %cst_774 : f32 to vector<16x16xf32>
    %1474 = arith.select %3, %1472, %1473 : vector<16x16xi1>, vector<16x16xf32>
    %c15_i32_775 = arith.constant 15 : i32
    %1475 = tpu.dynamic_rotate %1211 by %c15_i32_775 dim 1 : vector<16x16xf32>, i32 -> vector<16x16xf32>
    %cst_776 = arith.constant 0.000000e+00 : f32
    %1476 = vector.broadcast %cst_776 : f32 to vector<16x16xf32>
    %1477 = arith.select %5, %1475, %1476 : vector<16x16xi1>, vector<16x16xf32>
    %c0_777 = arith.constant 0 : index
    %c4_778 = arith.constant 4 : index
    %1478 = memref.load %arg10[%c0_777, %c4_778] : memref<9x8xf32, #tpu.memory_space<smem>>
    %1479 = vector.broadcast %1478 : f32 to vector<16x16xf32>
    %1480 = arith.mulf %1479, %1474 : vector<16x16xf32>
    %c1_779 = arith.constant 1 : index
    %c4_780 = arith.constant 4 : index
    %1481 = memref.load %arg10[%c1_779, %c4_780] : memref<9x8xf32, #tpu.memory_space<smem>>
    %1482 = vector.broadcast %1481 : f32 to vector<16x16xf32>
    %1483 = arith.mulf %1482, %1211 : vector<16x16xf32>
    %1484 = arith.addf %1480, %1483 : vector<16x16xf32>
    %c2_781 = arith.constant 2 : index
    %c4_782 = arith.constant 4 : index
    %1485 = memref.load %arg10[%c2_781, %c4_782] : memref<9x8xf32, #tpu.memory_space<smem>>
    %1486 = vector.broadcast %1485 : f32 to vector<16x16xf32>
    %1487 = arith.mulf %1486, %1477 : vector<16x16xf32>
    %1488 = arith.addf %1484, %1487 : vector<16x16xf32>
    %cst_783 = arith.constant dense<0.000000e+00> : vector<8x16xf32>
    %1489 = tpu.matmul %19, %1488, %cst_783 {dimension_numbers = #tpu.dot_dimension_numbers<[1], [0], [0], [1], [0, 0, 1, 1], [], []>} : vector<8x16xf32>, vector<16x16xf32>, vector<8x16xf32> -> vector<8x16xf32>
    %c3_784 = arith.constant 3 : index
    %c4_785 = arith.constant 4 : index
    %1490 = memref.load %arg10[%c3_784, %c4_785] : memref<9x8xf32, #tpu.memory_space<smem>>
    %1491 = vector.broadcast %1490 : f32 to vector<16x16xf32>
    %1492 = arith.mulf %1491, %1474 : vector<16x16xf32>
    %c4_786 = arith.constant 4 : index
    %c4_787 = arith.constant 4 : index
    %1493 = memref.load %arg10[%c4_786, %c4_787] : memref<9x8xf32, #tpu.memory_space<smem>>
    %1494 = vector.broadcast %1493 : f32 to vector<16x16xf32>
    %1495 = arith.mulf %1494, %1211 : vector<16x16xf32>
    %1496 = arith.addf %1492, %1495 : vector<16x16xf32>
    %c5_788 = arith.constant 5 : index
    %c4_789 = arith.constant 4 : index
    %1497 = memref.load %arg10[%c5_788, %c4_789] : memref<9x8xf32, #tpu.memory_space<smem>>
    %1498 = vector.broadcast %1497 : f32 to vector<16x16xf32>
    %1499 = arith.mulf %1498, %1477 : vector<16x16xf32>
    %1500 = arith.addf %1496, %1499 : vector<16x16xf32>
    %cst_790 = arith.constant dense<0.000000e+00> : vector<8x16xf32>
    %1501 = tpu.matmul %27, %1500, %cst_790 {dimension_numbers = #tpu.dot_dimension_numbers<[1], [0], [0], [1], [0, 0, 1, 1], [], []>} : vector<8x16xf32>, vector<16x16xf32>, vector<8x16xf32> -> vector<8x16xf32>
    %1502 = arith.addf %1489, %1501 : vector<8x16xf32>
    %c6_791 = arith.constant 6 : index
    %c4_792 = arith.constant 4 : index
    %1503 = memref.load %arg10[%c6_791, %c4_792] : memref<9x8xf32, #tpu.memory_space<smem>>
    %1504 = vector.broadcast %1503 : f32 to vector<16x16xf32>
    %1505 = arith.mulf %1504, %1474 : vector<16x16xf32>
    %c7_793 = arith.constant 7 : index
    %c4_794 = arith.constant 4 : index
    %1506 = memref.load %arg10[%c7_793, %c4_794] : memref<9x8xf32, #tpu.memory_space<smem>>
    %1507 = vector.broadcast %1506 : f32 to vector<16x16xf32>
    %1508 = arith.mulf %1507, %1211 : vector<16x16xf32>
    %1509 = arith.addf %1505, %1508 : vector<16x16xf32>
    %c8_795 = arith.constant 8 : index
    %c4_796 = arith.constant 4 : index
    %1510 = memref.load %arg10[%c8_795, %c4_796] : memref<9x8xf32, #tpu.memory_space<smem>>
    %1511 = vector.broadcast %1510 : f32 to vector<16x16xf32>
    %1512 = arith.mulf %1511, %1477 : vector<16x16xf32>
    %1513 = arith.addf %1509, %1512 : vector<16x16xf32>
    %cst_797 = arith.constant dense<0.000000e+00> : vector<8x16xf32>
    %1514 = tpu.matmul %35, %1513, %cst_797 {dimension_numbers = #tpu.dot_dimension_numbers<[1], [0], [0], [1], [0, 0, 1, 1], [], []>} : vector<8x16xf32>, vector<16x16xf32>, vector<8x16xf32> -> vector<8x16xf32>
    %1515 = arith.addf %1502, %1514 : vector<8x16xf32>
    %c0_798 = arith.constant 0 : index
    %c4_799 = arith.constant 4 : index
    %1516 = memref.load %arg11[%c0_798, %c4_799] : memref<1x8xf32, #tpu.memory_space<smem>>
    %1517 = vector.broadcast %1516 : f32 to vector<8x16xf32>
    %1518 = arith.addf %1515, %1517 : vector<8x16xf32>
    %c1_i32_800 = arith.constant 1 : i32
    %1519 = tpu.dynamic_rotate %1235 by %c1_i32_800 dim 1 : vector<16x16xf32>, i32 -> vector<16x16xf32>
    %cst_801 = arith.constant 0.000000e+00 : f32
    %1520 = vector.broadcast %cst_801 : f32 to vector<16x16xf32>
    %1521 = arith.select %3, %1519, %1520 : vector<16x16xi1>, vector<16x16xf32>
    %c15_i32_802 = arith.constant 15 : i32
    %1522 = tpu.dynamic_rotate %1235 by %c15_i32_802 dim 1 : vector<16x16xf32>, i32 -> vector<16x16xf32>
    %cst_803 = arith.constant 0.000000e+00 : f32
    %1523 = vector.broadcast %cst_803 : f32 to vector<16x16xf32>
    %1524 = arith.select %5, %1522, %1523 : vector<16x16xi1>, vector<16x16xf32>
    %c0_804 = arith.constant 0 : index
    %c5_805 = arith.constant 5 : index
    %1525 = memref.load %arg10[%c0_804, %c5_805] : memref<9x8xf32, #tpu.memory_space<smem>>
    %1526 = vector.broadcast %1525 : f32 to vector<16x16xf32>
    %1527 = arith.mulf %1526, %1521 : vector<16x16xf32>
    %c1_806 = arith.constant 1 : index
    %c5_807 = arith.constant 5 : index
    %1528 = memref.load %arg10[%c1_806, %c5_807] : memref<9x8xf32, #tpu.memory_space<smem>>
    %1529 = vector.broadcast %1528 : f32 to vector<16x16xf32>
    %1530 = arith.mulf %1529, %1235 : vector<16x16xf32>
    %1531 = arith.addf %1527, %1530 : vector<16x16xf32>
    %c2_808 = arith.constant 2 : index
    %c5_809 = arith.constant 5 : index
    %1532 = memref.load %arg10[%c2_808, %c5_809] : memref<9x8xf32, #tpu.memory_space<smem>>
    %1533 = vector.broadcast %1532 : f32 to vector<16x16xf32>
    %1534 = arith.mulf %1533, %1524 : vector<16x16xf32>
    %1535 = arith.addf %1531, %1534 : vector<16x16xf32>
    %cst_810 = arith.constant dense<0.000000e+00> : vector<8x16xf32>
    %1536 = tpu.matmul %19, %1535, %cst_810 {dimension_numbers = #tpu.dot_dimension_numbers<[1], [0], [0], [1], [0, 0, 1, 1], [], []>} : vector<8x16xf32>, vector<16x16xf32>, vector<8x16xf32> -> vector<8x16xf32>
    %c3_811 = arith.constant 3 : index
    %c5_812 = arith.constant 5 : index
    %1537 = memref.load %arg10[%c3_811, %c5_812] : memref<9x8xf32, #tpu.memory_space<smem>>
    %1538 = vector.broadcast %1537 : f32 to vector<16x16xf32>
    %1539 = arith.mulf %1538, %1521 : vector<16x16xf32>
    %c4_813 = arith.constant 4 : index
    %c5_814 = arith.constant 5 : index
    %1540 = memref.load %arg10[%c4_813, %c5_814] : memref<9x8xf32, #tpu.memory_space<smem>>
    %1541 = vector.broadcast %1540 : f32 to vector<16x16xf32>
    %1542 = arith.mulf %1541, %1235 : vector<16x16xf32>
    %1543 = arith.addf %1539, %1542 : vector<16x16xf32>
    %c5_815 = arith.constant 5 : index
    %c5_816 = arith.constant 5 : index
    %1544 = memref.load %arg10[%c5_815, %c5_816] : memref<9x8xf32, #tpu.memory_space<smem>>
    %1545 = vector.broadcast %1544 : f32 to vector<16x16xf32>
    %1546 = arith.mulf %1545, %1524 : vector<16x16xf32>
    %1547 = arith.addf %1543, %1546 : vector<16x16xf32>
    %cst_817 = arith.constant dense<0.000000e+00> : vector<8x16xf32>
    %1548 = tpu.matmul %27, %1547, %cst_817 {dimension_numbers = #tpu.dot_dimension_numbers<[1], [0], [0], [1], [0, 0, 1, 1], [], []>} : vector<8x16xf32>, vector<16x16xf32>, vector<8x16xf32> -> vector<8x16xf32>
    %1549 = arith.addf %1536, %1548 : vector<8x16xf32>
    %c6_818 = arith.constant 6 : index
    %c5_819 = arith.constant 5 : index
    %1550 = memref.load %arg10[%c6_818, %c5_819] : memref<9x8xf32, #tpu.memory_space<smem>>
    %1551 = vector.broadcast %1550 : f32 to vector<16x16xf32>
    %1552 = arith.mulf %1551, %1521 : vector<16x16xf32>
    %c7_820 = arith.constant 7 : index
    %c5_821 = arith.constant 5 : index
    %1553 = memref.load %arg10[%c7_820, %c5_821] : memref<9x8xf32, #tpu.memory_space<smem>>
    %1554 = vector.broadcast %1553 : f32 to vector<16x16xf32>
    %1555 = arith.mulf %1554, %1235 : vector<16x16xf32>
    %1556 = arith.addf %1552, %1555 : vector<16x16xf32>
    %c8_822 = arith.constant 8 : index
    %c5_823 = arith.constant 5 : index
    %1557 = memref.load %arg10[%c8_822, %c5_823] : memref<9x8xf32, #tpu.memory_space<smem>>
    %1558 = vector.broadcast %1557 : f32 to vector<16x16xf32>
    %1559 = arith.mulf %1558, %1524 : vector<16x16xf32>
    %1560 = arith.addf %1556, %1559 : vector<16x16xf32>
    %cst_824 = arith.constant dense<0.000000e+00> : vector<8x16xf32>
    %1561 = tpu.matmul %35, %1560, %cst_824 {dimension_numbers = #tpu.dot_dimension_numbers<[1], [0], [0], [1], [0, 0, 1, 1], [], []>} : vector<8x16xf32>, vector<16x16xf32>, vector<8x16xf32> -> vector<8x16xf32>
    %1562 = arith.addf %1549, %1561 : vector<8x16xf32>
    %c0_825 = arith.constant 0 : index
    %c5_826 = arith.constant 5 : index
    %1563 = memref.load %arg11[%c0_825, %c5_826] : memref<1x8xf32, #tpu.memory_space<smem>>
    %1564 = vector.broadcast %1563 : f32 to vector<8x16xf32>
    %1565 = arith.addf %1562, %1564 : vector<8x16xf32>
    %c1_i32_827 = arith.constant 1 : i32
    %1566 = tpu.dynamic_rotate %1259 by %c1_i32_827 dim 1 : vector<16x16xf32>, i32 -> vector<16x16xf32>
    %cst_828 = arith.constant 0.000000e+00 : f32
    %1567 = vector.broadcast %cst_828 : f32 to vector<16x16xf32>
    %1568 = arith.select %3, %1566, %1567 : vector<16x16xi1>, vector<16x16xf32>
    %c15_i32_829 = arith.constant 15 : i32
    %1569 = tpu.dynamic_rotate %1259 by %c15_i32_829 dim 1 : vector<16x16xf32>, i32 -> vector<16x16xf32>
    %cst_830 = arith.constant 0.000000e+00 : f32
    %1570 = vector.broadcast %cst_830 : f32 to vector<16x16xf32>
    %1571 = arith.select %5, %1569, %1570 : vector<16x16xi1>, vector<16x16xf32>
    %c0_831 = arith.constant 0 : index
    %c6_832 = arith.constant 6 : index
    %1572 = memref.load %arg10[%c0_831, %c6_832] : memref<9x8xf32, #tpu.memory_space<smem>>
    %1573 = vector.broadcast %1572 : f32 to vector<16x16xf32>
    %1574 = arith.mulf %1573, %1568 : vector<16x16xf32>
    %c1_833 = arith.constant 1 : index
    %c6_834 = arith.constant 6 : index
    %1575 = memref.load %arg10[%c1_833, %c6_834] : memref<9x8xf32, #tpu.memory_space<smem>>
    %1576 = vector.broadcast %1575 : f32 to vector<16x16xf32>
    %1577 = arith.mulf %1576, %1259 : vector<16x16xf32>
    %1578 = arith.addf %1574, %1577 : vector<16x16xf32>
    %c2_835 = arith.constant 2 : index
    %c6_836 = arith.constant 6 : index
    %1579 = memref.load %arg10[%c2_835, %c6_836] : memref<9x8xf32, #tpu.memory_space<smem>>
    %1580 = vector.broadcast %1579 : f32 to vector<16x16xf32>
    %1581 = arith.mulf %1580, %1571 : vector<16x16xf32>
    %1582 = arith.addf %1578, %1581 : vector<16x16xf32>
    %cst_837 = arith.constant dense<0.000000e+00> : vector<8x16xf32>
    %1583 = tpu.matmul %19, %1582, %cst_837 {dimension_numbers = #tpu.dot_dimension_numbers<[1], [0], [0], [1], [0, 0, 1, 1], [], []>} : vector<8x16xf32>, vector<16x16xf32>, vector<8x16xf32> -> vector<8x16xf32>
    %c3_838 = arith.constant 3 : index
    %c6_839 = arith.constant 6 : index
    %1584 = memref.load %arg10[%c3_838, %c6_839] : memref<9x8xf32, #tpu.memory_space<smem>>
    %1585 = vector.broadcast %1584 : f32 to vector<16x16xf32>
    %1586 = arith.mulf %1585, %1568 : vector<16x16xf32>
    %c4_840 = arith.constant 4 : index
    %c6_841 = arith.constant 6 : index
    %1587 = memref.load %arg10[%c4_840, %c6_841] : memref<9x8xf32, #tpu.memory_space<smem>>
    %1588 = vector.broadcast %1587 : f32 to vector<16x16xf32>
    %1589 = arith.mulf %1588, %1259 : vector<16x16xf32>
    %1590 = arith.addf %1586, %1589 : vector<16x16xf32>
    %c5_842 = arith.constant 5 : index
    %c6_843 = arith.constant 6 : index
    %1591 = memref.load %arg10[%c5_842, %c6_843] : memref<9x8xf32, #tpu.memory_space<smem>>
    %1592 = vector.broadcast %1591 : f32 to vector<16x16xf32>
    %1593 = arith.mulf %1592, %1571 : vector<16x16xf32>
    %1594 = arith.addf %1590, %1593 : vector<16x16xf32>
    %cst_844 = arith.constant dense<0.000000e+00> : vector<8x16xf32>
    %1595 = tpu.matmul %27, %1594, %cst_844 {dimension_numbers = #tpu.dot_dimension_numbers<[1], [0], [0], [1], [0, 0, 1, 1], [], []>} : vector<8x16xf32>, vector<16x16xf32>, vector<8x16xf32> -> vector<8x16xf32>
    %1596 = arith.addf %1583, %1595 : vector<8x16xf32>
    %c6_845 = arith.constant 6 : index
    %c6_846 = arith.constant 6 : index
    %1597 = memref.load %arg10[%c6_845, %c6_846] : memref<9x8xf32, #tpu.memory_space<smem>>
    %1598 = vector.broadcast %1597 : f32 to vector<16x16xf32>
    %1599 = arith.mulf %1598, %1568 : vector<16x16xf32>
    %c7_847 = arith.constant 7 : index
    %c6_848 = arith.constant 6 : index
    %1600 = memref.load %arg10[%c7_847, %c6_848] : memref<9x8xf32, #tpu.memory_space<smem>>
    %1601 = vector.broadcast %1600 : f32 to vector<16x16xf32>
    %1602 = arith.mulf %1601, %1259 : vector<16x16xf32>
    %1603 = arith.addf %1599, %1602 : vector<16x16xf32>
    %c8_849 = arith.constant 8 : index
    %c6_850 = arith.constant 6 : index
    %1604 = memref.load %arg10[%c8_849, %c6_850] : memref<9x8xf32, #tpu.memory_space<smem>>
    %1605 = vector.broadcast %1604 : f32 to vector<16x16xf32>
    %1606 = arith.mulf %1605, %1571 : vector<16x16xf32>
    %1607 = arith.addf %1603, %1606 : vector<16x16xf32>
    %cst_851 = arith.constant dense<0.000000e+00> : vector<8x16xf32>
    %1608 = tpu.matmul %35, %1607, %cst_851 {dimension_numbers = #tpu.dot_dimension_numbers<[1], [0], [0], [1], [0, 0, 1, 1], [], []>} : vector<8x16xf32>, vector<16x16xf32>, vector<8x16xf32> -> vector<8x16xf32>
    %1609 = arith.addf %1596, %1608 : vector<8x16xf32>
    %c0_852 = arith.constant 0 : index
    %c6_853 = arith.constant 6 : index
    %1610 = memref.load %arg11[%c0_852, %c6_853] : memref<1x8xf32, #tpu.memory_space<smem>>
    %1611 = vector.broadcast %1610 : f32 to vector<8x16xf32>
    %1612 = arith.addf %1609, %1611 : vector<8x16xf32>
    %c1_i32_854 = arith.constant 1 : i32
    %1613 = tpu.dynamic_rotate %1283 by %c1_i32_854 dim 1 : vector<16x16xf32>, i32 -> vector<16x16xf32>
    %cst_855 = arith.constant 0.000000e+00 : f32
    %1614 = vector.broadcast %cst_855 : f32 to vector<16x16xf32>
    %1615 = arith.select %3, %1613, %1614 : vector<16x16xi1>, vector<16x16xf32>
    %c15_i32_856 = arith.constant 15 : i32
    %1616 = tpu.dynamic_rotate %1283 by %c15_i32_856 dim 1 : vector<16x16xf32>, i32 -> vector<16x16xf32>
    %cst_857 = arith.constant 0.000000e+00 : f32
    %1617 = vector.broadcast %cst_857 : f32 to vector<16x16xf32>
    %1618 = arith.select %5, %1616, %1617 : vector<16x16xi1>, vector<16x16xf32>
    %c0_858 = arith.constant 0 : index
    %c7_859 = arith.constant 7 : index
    %1619 = memref.load %arg10[%c0_858, %c7_859] : memref<9x8xf32, #tpu.memory_space<smem>>
    %1620 = vector.broadcast %1619 : f32 to vector<16x16xf32>
    %1621 = arith.mulf %1620, %1615 : vector<16x16xf32>
    %c1_860 = arith.constant 1 : index
    %c7_861 = arith.constant 7 : index
    %1622 = memref.load %arg10[%c1_860, %c7_861] : memref<9x8xf32, #tpu.memory_space<smem>>
    %1623 = vector.broadcast %1622 : f32 to vector<16x16xf32>
    %1624 = arith.mulf %1623, %1283 : vector<16x16xf32>
    %1625 = arith.addf %1621, %1624 : vector<16x16xf32>
    %c2_862 = arith.constant 2 : index
    %c7_863 = arith.constant 7 : index
    %1626 = memref.load %arg10[%c2_862, %c7_863] : memref<9x8xf32, #tpu.memory_space<smem>>
    %1627 = vector.broadcast %1626 : f32 to vector<16x16xf32>
    %1628 = arith.mulf %1627, %1618 : vector<16x16xf32>
    %1629 = arith.addf %1625, %1628 : vector<16x16xf32>
    %cst_864 = arith.constant dense<0.000000e+00> : vector<8x16xf32>
    %1630 = tpu.matmul %19, %1629, %cst_864 {dimension_numbers = #tpu.dot_dimension_numbers<[1], [0], [0], [1], [0, 0, 1, 1], [], []>} : vector<8x16xf32>, vector<16x16xf32>, vector<8x16xf32> -> vector<8x16xf32>
    %c3_865 = arith.constant 3 : index
    %c7_866 = arith.constant 7 : index
    %1631 = memref.load %arg10[%c3_865, %c7_866] : memref<9x8xf32, #tpu.memory_space<smem>>
    %1632 = vector.broadcast %1631 : f32 to vector<16x16xf32>
    %1633 = arith.mulf %1632, %1615 : vector<16x16xf32>
    %c4_867 = arith.constant 4 : index
    %c7_868 = arith.constant 7 : index
    %1634 = memref.load %arg10[%c4_867, %c7_868] : memref<9x8xf32, #tpu.memory_space<smem>>
    %1635 = vector.broadcast %1634 : f32 to vector<16x16xf32>
    %1636 = arith.mulf %1635, %1283 : vector<16x16xf32>
    %1637 = arith.addf %1633, %1636 : vector<16x16xf32>
    %c5_869 = arith.constant 5 : index
    %c7_870 = arith.constant 7 : index
    %1638 = memref.load %arg10[%c5_869, %c7_870] : memref<9x8xf32, #tpu.memory_space<smem>>
    %1639 = vector.broadcast %1638 : f32 to vector<16x16xf32>
    %1640 = arith.mulf %1639, %1618 : vector<16x16xf32>
    %1641 = arith.addf %1637, %1640 : vector<16x16xf32>
    %cst_871 = arith.constant dense<0.000000e+00> : vector<8x16xf32>
    %1642 = tpu.matmul %27, %1641, %cst_871 {dimension_numbers = #tpu.dot_dimension_numbers<[1], [0], [0], [1], [0, 0, 1, 1], [], []>} : vector<8x16xf32>, vector<16x16xf32>, vector<8x16xf32> -> vector<8x16xf32>
    %1643 = arith.addf %1630, %1642 : vector<8x16xf32>
    %c6_872 = arith.constant 6 : index
    %c7_873 = arith.constant 7 : index
    %1644 = memref.load %arg10[%c6_872, %c7_873] : memref<9x8xf32, #tpu.memory_space<smem>>
    %1645 = vector.broadcast %1644 : f32 to vector<16x16xf32>
    %1646 = arith.mulf %1645, %1615 : vector<16x16xf32>
    %c7_874 = arith.constant 7 : index
    %c7_875 = arith.constant 7 : index
    %1647 = memref.load %arg10[%c7_874, %c7_875] : memref<9x8xf32, #tpu.memory_space<smem>>
    %1648 = vector.broadcast %1647 : f32 to vector<16x16xf32>
    %1649 = arith.mulf %1648, %1283 : vector<16x16xf32>
    %1650 = arith.addf %1646, %1649 : vector<16x16xf32>
    %c8_876 = arith.constant 8 : index
    %c7_877 = arith.constant 7 : index
    %1651 = memref.load %arg10[%c8_876, %c7_877] : memref<9x8xf32, #tpu.memory_space<smem>>
    %1652 = vector.broadcast %1651 : f32 to vector<16x16xf32>
    %1653 = arith.mulf %1652, %1618 : vector<16x16xf32>
    %1654 = arith.addf %1650, %1653 : vector<16x16xf32>
    %cst_878 = arith.constant dense<0.000000e+00> : vector<8x16xf32>
    %1655 = tpu.matmul %35, %1654, %cst_878 {dimension_numbers = #tpu.dot_dimension_numbers<[1], [0], [0], [1], [0, 0, 1, 1], [], []>} : vector<8x16xf32>, vector<16x16xf32>, vector<8x16xf32> -> vector<8x16xf32>
    %1656 = arith.addf %1643, %1655 : vector<8x16xf32>
    %c0_879 = arith.constant 0 : index
    %c7_880 = arith.constant 7 : index
    %1657 = memref.load %arg11[%c0_879, %c7_880] : memref<1x8xf32, #tpu.memory_space<smem>>
    %1658 = vector.broadcast %1657 : f32 to vector<8x16xf32>
    %1659 = arith.addf %1656, %1658 : vector<8x16xf32>
    %c0_881 = arith.constant 0 : index
    %c0_882 = arith.constant 0 : index
    %1660 = memref.load %arg13[%c0_881, %c0_882] : memref<1x8xf32, #tpu.memory_space<smem>>
    %c0_883 = arith.constant 0 : index
    %c0_884 = arith.constant 0 : index
    %1661 = memref.load %arg12[%c0_883, %c0_884] : memref<8x8xf32, #tpu.memory_space<smem>>
    %1662 = vector.broadcast %1661 : f32 to vector<8x16xf32>
    %1663 = arith.mulf %1662, %1330 : vector<8x16xf32>
    %1664 = vector.broadcast %1660 : f32 to vector<8x16xf32>
    %1665 = arith.addf %1664, %1663 : vector<8x16xf32>
    %c1_885 = arith.constant 1 : index
    %c0_886 = arith.constant 0 : index
    %1666 = memref.load %arg12[%c1_885, %c0_886] : memref<8x8xf32, #tpu.memory_space<smem>>
    %1667 = vector.broadcast %1666 : f32 to vector<8x16xf32>
    %1668 = arith.mulf %1667, %1377 : vector<8x16xf32>
    %1669 = arith.addf %1665, %1668 : vector<8x16xf32>
    %c2_887 = arith.constant 2 : index
    %c0_888 = arith.constant 0 : index
    %1670 = memref.load %arg12[%c2_887, %c0_888] : memref<8x8xf32, #tpu.memory_space<smem>>
    %1671 = vector.broadcast %1670 : f32 to vector<8x16xf32>
    %1672 = arith.mulf %1671, %1424 : vector<8x16xf32>
    %1673 = arith.addf %1669, %1672 : vector<8x16xf32>
    %c3_889 = arith.constant 3 : index
    %c0_890 = arith.constant 0 : index
    %1674 = memref.load %arg12[%c3_889, %c0_890] : memref<8x8xf32, #tpu.memory_space<smem>>
    %1675 = vector.broadcast %1674 : f32 to vector<8x16xf32>
    %1676 = arith.mulf %1675, %1471 : vector<8x16xf32>
    %1677 = arith.addf %1673, %1676 : vector<8x16xf32>
    %c4_891 = arith.constant 4 : index
    %c0_892 = arith.constant 0 : index
    %1678 = memref.load %arg12[%c4_891, %c0_892] : memref<8x8xf32, #tpu.memory_space<smem>>
    %1679 = vector.broadcast %1678 : f32 to vector<8x16xf32>
    %1680 = arith.mulf %1679, %1518 : vector<8x16xf32>
    %1681 = arith.addf %1677, %1680 : vector<8x16xf32>
    %c5_893 = arith.constant 5 : index
    %c0_894 = arith.constant 0 : index
    %1682 = memref.load %arg12[%c5_893, %c0_894] : memref<8x8xf32, #tpu.memory_space<smem>>
    %1683 = vector.broadcast %1682 : f32 to vector<8x16xf32>
    %1684 = arith.mulf %1683, %1565 : vector<8x16xf32>
    %1685 = arith.addf %1681, %1684 : vector<8x16xf32>
    %c6_895 = arith.constant 6 : index
    %c0_896 = arith.constant 0 : index
    %1686 = memref.load %arg12[%c6_895, %c0_896] : memref<8x8xf32, #tpu.memory_space<smem>>
    %1687 = vector.broadcast %1686 : f32 to vector<8x16xf32>
    %1688 = arith.mulf %1687, %1612 : vector<8x16xf32>
    %1689 = arith.addf %1685, %1688 : vector<8x16xf32>
    %c7_897 = arith.constant 7 : index
    %c0_898 = arith.constant 0 : index
    %1690 = memref.load %arg12[%c7_897, %c0_898] : memref<8x8xf32, #tpu.memory_space<smem>>
    %1691 = vector.broadcast %1690 : f32 to vector<8x16xf32>
    %1692 = arith.mulf %1691, %1659 : vector<8x16xf32>
    %1693 = arith.addf %1689, %1692 : vector<8x16xf32>
    %c0_899 = arith.constant 0 : index
    %c1_900 = arith.constant 1 : index
    %1694 = memref.load %arg13[%c0_899, %c1_900] : memref<1x8xf32, #tpu.memory_space<smem>>
    %c0_901 = arith.constant 0 : index
    %c1_902 = arith.constant 1 : index
    %1695 = memref.load %arg12[%c0_901, %c1_902] : memref<8x8xf32, #tpu.memory_space<smem>>
    %1696 = vector.broadcast %1695 : f32 to vector<8x16xf32>
    %1697 = arith.mulf %1696, %1330 : vector<8x16xf32>
    %1698 = vector.broadcast %1694 : f32 to vector<8x16xf32>
    %1699 = arith.addf %1698, %1697 : vector<8x16xf32>
    %c1_903 = arith.constant 1 : index
    %c1_904 = arith.constant 1 : index
    %1700 = memref.load %arg12[%c1_903, %c1_904] : memref<8x8xf32, #tpu.memory_space<smem>>
    %1701 = vector.broadcast %1700 : f32 to vector<8x16xf32>
    %1702 = arith.mulf %1701, %1377 : vector<8x16xf32>
    %1703 = arith.addf %1699, %1702 : vector<8x16xf32>
    %c2_905 = arith.constant 2 : index
    %c1_906 = arith.constant 1 : index
    %1704 = memref.load %arg12[%c2_905, %c1_906] : memref<8x8xf32, #tpu.memory_space<smem>>
    %1705 = vector.broadcast %1704 : f32 to vector<8x16xf32>
    %1706 = arith.mulf %1705, %1424 : vector<8x16xf32>
    %1707 = arith.addf %1703, %1706 : vector<8x16xf32>
    %c3_907 = arith.constant 3 : index
    %c1_908 = arith.constant 1 : index
    %1708 = memref.load %arg12[%c3_907, %c1_908] : memref<8x8xf32, #tpu.memory_space<smem>>
    %1709 = vector.broadcast %1708 : f32 to vector<8x16xf32>
    %1710 = arith.mulf %1709, %1471 : vector<8x16xf32>
    %1711 = arith.addf %1707, %1710 : vector<8x16xf32>
    %c4_909 = arith.constant 4 : index
    %c1_910 = arith.constant 1 : index
    %1712 = memref.load %arg12[%c4_909, %c1_910] : memref<8x8xf32, #tpu.memory_space<smem>>
    %1713 = vector.broadcast %1712 : f32 to vector<8x16xf32>
    %1714 = arith.mulf %1713, %1518 : vector<8x16xf32>
    %1715 = arith.addf %1711, %1714 : vector<8x16xf32>
    %c5_911 = arith.constant 5 : index
    %c1_912 = arith.constant 1 : index
    %1716 = memref.load %arg12[%c5_911, %c1_912] : memref<8x8xf32, #tpu.memory_space<smem>>
    %1717 = vector.broadcast %1716 : f32 to vector<8x16xf32>
    %1718 = arith.mulf %1717, %1565 : vector<8x16xf32>
    %1719 = arith.addf %1715, %1718 : vector<8x16xf32>
    %c6_913 = arith.constant 6 : index
    %c1_914 = arith.constant 1 : index
    %1720 = memref.load %arg12[%c6_913, %c1_914] : memref<8x8xf32, #tpu.memory_space<smem>>
    %1721 = vector.broadcast %1720 : f32 to vector<8x16xf32>
    %1722 = arith.mulf %1721, %1612 : vector<8x16xf32>
    %1723 = arith.addf %1719, %1722 : vector<8x16xf32>
    %c7_915 = arith.constant 7 : index
    %c1_916 = arith.constant 1 : index
    %1724 = memref.load %arg12[%c7_915, %c1_916] : memref<8x8xf32, #tpu.memory_space<smem>>
    %1725 = vector.broadcast %1724 : f32 to vector<8x16xf32>
    %1726 = arith.mulf %1725, %1659 : vector<8x16xf32>
    %1727 = arith.addf %1723, %1726 : vector<8x16xf32>
    %c0_917 = arith.constant 0 : index
    %c2_918 = arith.constant 2 : index
    %1728 = memref.load %arg13[%c0_917, %c2_918] : memref<1x8xf32, #tpu.memory_space<smem>>
    %c0_919 = arith.constant 0 : index
    %c2_920 = arith.constant 2 : index
    %1729 = memref.load %arg12[%c0_919, %c2_920] : memref<8x8xf32, #tpu.memory_space<smem>>
    %1730 = vector.broadcast %1729 : f32 to vector<8x16xf32>
    %1731 = arith.mulf %1730, %1330 : vector<8x16xf32>
    %1732 = vector.broadcast %1728 : f32 to vector<8x16xf32>
    %1733 = arith.addf %1732, %1731 : vector<8x16xf32>
    %c1_921 = arith.constant 1 : index
    %c2_922 = arith.constant 2 : index
    %1734 = memref.load %arg12[%c1_921, %c2_922] : memref<8x8xf32, #tpu.memory_space<smem>>
    %1735 = vector.broadcast %1734 : f32 to vector<8x16xf32>
    %1736 = arith.mulf %1735, %1377 : vector<8x16xf32>
    %1737 = arith.addf %1733, %1736 : vector<8x16xf32>
    %c2_923 = arith.constant 2 : index
    %c2_924 = arith.constant 2 : index
    %1738 = memref.load %arg12[%c2_923, %c2_924] : memref<8x8xf32, #tpu.memory_space<smem>>
    %1739 = vector.broadcast %1738 : f32 to vector<8x16xf32>
    %1740 = arith.mulf %1739, %1424 : vector<8x16xf32>
    %1741 = arith.addf %1737, %1740 : vector<8x16xf32>
    %c3_925 = arith.constant 3 : index
    %c2_926 = arith.constant 2 : index
    %1742 = memref.load %arg12[%c3_925, %c2_926] : memref<8x8xf32, #tpu.memory_space<smem>>
    %1743 = vector.broadcast %1742 : f32 to vector<8x16xf32>
    %1744 = arith.mulf %1743, %1471 : vector<8x16xf32>
    %1745 = arith.addf %1741, %1744 : vector<8x16xf32>
    %c4_927 = arith.constant 4 : index
    %c2_928 = arith.constant 2 : index
    %1746 = memref.load %arg12[%c4_927, %c2_928] : memref<8x8xf32, #tpu.memory_space<smem>>
    %1747 = vector.broadcast %1746 : f32 to vector<8x16xf32>
    %1748 = arith.mulf %1747, %1518 : vector<8x16xf32>
    %1749 = arith.addf %1745, %1748 : vector<8x16xf32>
    %c5_929 = arith.constant 5 : index
    %c2_930 = arith.constant 2 : index
    %1750 = memref.load %arg12[%c5_929, %c2_930] : memref<8x8xf32, #tpu.memory_space<smem>>
    %1751 = vector.broadcast %1750 : f32 to vector<8x16xf32>
    %1752 = arith.mulf %1751, %1565 : vector<8x16xf32>
    %1753 = arith.addf %1749, %1752 : vector<8x16xf32>
    %c6_931 = arith.constant 6 : index
    %c2_932 = arith.constant 2 : index
    %1754 = memref.load %arg12[%c6_931, %c2_932] : memref<8x8xf32, #tpu.memory_space<smem>>
    %1755 = vector.broadcast %1754 : f32 to vector<8x16xf32>
    %1756 = arith.mulf %1755, %1612 : vector<8x16xf32>
    %1757 = arith.addf %1753, %1756 : vector<8x16xf32>
    %c7_933 = arith.constant 7 : index
    %c2_934 = arith.constant 2 : index
    %1758 = memref.load %arg12[%c7_933, %c2_934] : memref<8x8xf32, #tpu.memory_space<smem>>
    %1759 = vector.broadcast %1758 : f32 to vector<8x16xf32>
    %1760 = arith.mulf %1759, %1659 : vector<8x16xf32>
    %1761 = arith.addf %1757, %1760 : vector<8x16xf32>
    %c0_935 = arith.constant 0 : index
    %c3_936 = arith.constant 3 : index
    %1762 = memref.load %arg13[%c0_935, %c3_936] : memref<1x8xf32, #tpu.memory_space<smem>>
    %c0_937 = arith.constant 0 : index
    %c3_938 = arith.constant 3 : index
    %1763 = memref.load %arg12[%c0_937, %c3_938] : memref<8x8xf32, #tpu.memory_space<smem>>
    %1764 = vector.broadcast %1763 : f32 to vector<8x16xf32>
    %1765 = arith.mulf %1764, %1330 : vector<8x16xf32>
    %1766 = vector.broadcast %1762 : f32 to vector<8x16xf32>
    %1767 = arith.addf %1766, %1765 : vector<8x16xf32>
    %c1_939 = arith.constant 1 : index
    %c3_940 = arith.constant 3 : index
    %1768 = memref.load %arg12[%c1_939, %c3_940] : memref<8x8xf32, #tpu.memory_space<smem>>
    %1769 = vector.broadcast %1768 : f32 to vector<8x16xf32>
    %1770 = arith.mulf %1769, %1377 : vector<8x16xf32>
    %1771 = arith.addf %1767, %1770 : vector<8x16xf32>
    %c2_941 = arith.constant 2 : index
    %c3_942 = arith.constant 3 : index
    %1772 = memref.load %arg12[%c2_941, %c3_942] : memref<8x8xf32, #tpu.memory_space<smem>>
    %1773 = vector.broadcast %1772 : f32 to vector<8x16xf32>
    %1774 = arith.mulf %1773, %1424 : vector<8x16xf32>
    %1775 = arith.addf %1771, %1774 : vector<8x16xf32>
    %c3_943 = arith.constant 3 : index
    %c3_944 = arith.constant 3 : index
    %1776 = memref.load %arg12[%c3_943, %c3_944] : memref<8x8xf32, #tpu.memory_space<smem>>
    %1777 = vector.broadcast %1776 : f32 to vector<8x16xf32>
    %1778 = arith.mulf %1777, %1471 : vector<8x16xf32>
    %1779 = arith.addf %1775, %1778 : vector<8x16xf32>
    %c4_945 = arith.constant 4 : index
    %c3_946 = arith.constant 3 : index
    %1780 = memref.load %arg12[%c4_945, %c3_946] : memref<8x8xf32, #tpu.memory_space<smem>>
    %1781 = vector.broadcast %1780 : f32 to vector<8x16xf32>
    %1782 = arith.mulf %1781, %1518 : vector<8x16xf32>
    %1783 = arith.addf %1779, %1782 : vector<8x16xf32>
    %c5_947 = arith.constant 5 : index
    %c3_948 = arith.constant 3 : index
    %1784 = memref.load %arg12[%c5_947, %c3_948] : memref<8x8xf32, #tpu.memory_space<smem>>
    %1785 = vector.broadcast %1784 : f32 to vector<8x16xf32>
    %1786 = arith.mulf %1785, %1565 : vector<8x16xf32>
    %1787 = arith.addf %1783, %1786 : vector<8x16xf32>
    %c6_949 = arith.constant 6 : index
    %c3_950 = arith.constant 3 : index
    %1788 = memref.load %arg12[%c6_949, %c3_950] : memref<8x8xf32, #tpu.memory_space<smem>>
    %1789 = vector.broadcast %1788 : f32 to vector<8x16xf32>
    %1790 = arith.mulf %1789, %1612 : vector<8x16xf32>
    %1791 = arith.addf %1787, %1790 : vector<8x16xf32>
    %c7_951 = arith.constant 7 : index
    %c3_952 = arith.constant 3 : index
    %1792 = memref.load %arg12[%c7_951, %c3_952] : memref<8x8xf32, #tpu.memory_space<smem>>
    %1793 = vector.broadcast %1792 : f32 to vector<8x16xf32>
    %1794 = arith.mulf %1793, %1659 : vector<8x16xf32>
    %1795 = arith.addf %1791, %1794 : vector<8x16xf32>
    %c0_953 = arith.constant 0 : index
    %c4_954 = arith.constant 4 : index
    %1796 = memref.load %arg13[%c0_953, %c4_954] : memref<1x8xf32, #tpu.memory_space<smem>>
    %c0_955 = arith.constant 0 : index
    %c4_956 = arith.constant 4 : index
    %1797 = memref.load %arg12[%c0_955, %c4_956] : memref<8x8xf32, #tpu.memory_space<smem>>
    %1798 = vector.broadcast %1797 : f32 to vector<8x16xf32>
    %1799 = arith.mulf %1798, %1330 : vector<8x16xf32>
    %1800 = vector.broadcast %1796 : f32 to vector<8x16xf32>
    %1801 = arith.addf %1800, %1799 : vector<8x16xf32>
    %c1_957 = arith.constant 1 : index
    %c4_958 = arith.constant 4 : index
    %1802 = memref.load %arg12[%c1_957, %c4_958] : memref<8x8xf32, #tpu.memory_space<smem>>
    %1803 = vector.broadcast %1802 : f32 to vector<8x16xf32>
    %1804 = arith.mulf %1803, %1377 : vector<8x16xf32>
    %1805 = arith.addf %1801, %1804 : vector<8x16xf32>
    %c2_959 = arith.constant 2 : index
    %c4_960 = arith.constant 4 : index
    %1806 = memref.load %arg12[%c2_959, %c4_960] : memref<8x8xf32, #tpu.memory_space<smem>>
    %1807 = vector.broadcast %1806 : f32 to vector<8x16xf32>
    %1808 = arith.mulf %1807, %1424 : vector<8x16xf32>
    %1809 = arith.addf %1805, %1808 : vector<8x16xf32>
    %c3_961 = arith.constant 3 : index
    %c4_962 = arith.constant 4 : index
    %1810 = memref.load %arg12[%c3_961, %c4_962] : memref<8x8xf32, #tpu.memory_space<smem>>
    %1811 = vector.broadcast %1810 : f32 to vector<8x16xf32>
    %1812 = arith.mulf %1811, %1471 : vector<8x16xf32>
    %1813 = arith.addf %1809, %1812 : vector<8x16xf32>
    %c4_963 = arith.constant 4 : index
    %c4_964 = arith.constant 4 : index
    %1814 = memref.load %arg12[%c4_963, %c4_964] : memref<8x8xf32, #tpu.memory_space<smem>>
    %1815 = vector.broadcast %1814 : f32 to vector<8x16xf32>
    %1816 = arith.mulf %1815, %1518 : vector<8x16xf32>
    %1817 = arith.addf %1813, %1816 : vector<8x16xf32>
    %c5_965 = arith.constant 5 : index
    %c4_966 = arith.constant 4 : index
    %1818 = memref.load %arg12[%c5_965, %c4_966] : memref<8x8xf32, #tpu.memory_space<smem>>
    %1819 = vector.broadcast %1818 : f32 to vector<8x16xf32>
    %1820 = arith.mulf %1819, %1565 : vector<8x16xf32>
    %1821 = arith.addf %1817, %1820 : vector<8x16xf32>
    %c6_967 = arith.constant 6 : index
    %c4_968 = arith.constant 4 : index
    %1822 = memref.load %arg12[%c6_967, %c4_968] : memref<8x8xf32, #tpu.memory_space<smem>>
    %1823 = vector.broadcast %1822 : f32 to vector<8x16xf32>
    %1824 = arith.mulf %1823, %1612 : vector<8x16xf32>
    %1825 = arith.addf %1821, %1824 : vector<8x16xf32>
    %c7_969 = arith.constant 7 : index
    %c4_970 = arith.constant 4 : index
    %1826 = memref.load %arg12[%c7_969, %c4_970] : memref<8x8xf32, #tpu.memory_space<smem>>
    %1827 = vector.broadcast %1826 : f32 to vector<8x16xf32>
    %1828 = arith.mulf %1827, %1659 : vector<8x16xf32>
    %1829 = arith.addf %1825, %1828 : vector<8x16xf32>
    %c0_971 = arith.constant 0 : index
    %c5_972 = arith.constant 5 : index
    %1830 = memref.load %arg13[%c0_971, %c5_972] : memref<1x8xf32, #tpu.memory_space<smem>>
    %c0_973 = arith.constant 0 : index
    %c5_974 = arith.constant 5 : index
    %1831 = memref.load %arg12[%c0_973, %c5_974] : memref<8x8xf32, #tpu.memory_space<smem>>
    %1832 = vector.broadcast %1831 : f32 to vector<8x16xf32>
    %1833 = arith.mulf %1832, %1330 : vector<8x16xf32>
    %1834 = vector.broadcast %1830 : f32 to vector<8x16xf32>
    %1835 = arith.addf %1834, %1833 : vector<8x16xf32>
    %c1_975 = arith.constant 1 : index
    %c5_976 = arith.constant 5 : index
    %1836 = memref.load %arg12[%c1_975, %c5_976] : memref<8x8xf32, #tpu.memory_space<smem>>
    %1837 = vector.broadcast %1836 : f32 to vector<8x16xf32>
    %1838 = arith.mulf %1837, %1377 : vector<8x16xf32>
    %1839 = arith.addf %1835, %1838 : vector<8x16xf32>
    %c2_977 = arith.constant 2 : index
    %c5_978 = arith.constant 5 : index
    %1840 = memref.load %arg12[%c2_977, %c5_978] : memref<8x8xf32, #tpu.memory_space<smem>>
    %1841 = vector.broadcast %1840 : f32 to vector<8x16xf32>
    %1842 = arith.mulf %1841, %1424 : vector<8x16xf32>
    %1843 = arith.addf %1839, %1842 : vector<8x16xf32>
    %c3_979 = arith.constant 3 : index
    %c5_980 = arith.constant 5 : index
    %1844 = memref.load %arg12[%c3_979, %c5_980] : memref<8x8xf32, #tpu.memory_space<smem>>
    %1845 = vector.broadcast %1844 : f32 to vector<8x16xf32>
    %1846 = arith.mulf %1845, %1471 : vector<8x16xf32>
    %1847 = arith.addf %1843, %1846 : vector<8x16xf32>
    %c4_981 = arith.constant 4 : index
    %c5_982 = arith.constant 5 : index
    %1848 = memref.load %arg12[%c4_981, %c5_982] : memref<8x8xf32, #tpu.memory_space<smem>>
    %1849 = vector.broadcast %1848 : f32 to vector<8x16xf32>
    %1850 = arith.mulf %1849, %1518 : vector<8x16xf32>
    %1851 = arith.addf %1847, %1850 : vector<8x16xf32>
    %c5_983 = arith.constant 5 : index
    %c5_984 = arith.constant 5 : index
    %1852 = memref.load %arg12[%c5_983, %c5_984] : memref<8x8xf32, #tpu.memory_space<smem>>
    %1853 = vector.broadcast %1852 : f32 to vector<8x16xf32>
    %1854 = arith.mulf %1853, %1565 : vector<8x16xf32>
    %1855 = arith.addf %1851, %1854 : vector<8x16xf32>
    %c6_985 = arith.constant 6 : index
    %c5_986 = arith.constant 5 : index
    %1856 = memref.load %arg12[%c6_985, %c5_986] : memref<8x8xf32, #tpu.memory_space<smem>>
    %1857 = vector.broadcast %1856 : f32 to vector<8x16xf32>
    %1858 = arith.mulf %1857, %1612 : vector<8x16xf32>
    %1859 = arith.addf %1855, %1858 : vector<8x16xf32>
    %c7_987 = arith.constant 7 : index
    %c5_988 = arith.constant 5 : index
    %1860 = memref.load %arg12[%c7_987, %c5_988] : memref<8x8xf32, #tpu.memory_space<smem>>
    %1861 = vector.broadcast %1860 : f32 to vector<8x16xf32>
    %1862 = arith.mulf %1861, %1659 : vector<8x16xf32>
    %1863 = arith.addf %1859, %1862 : vector<8x16xf32>
    %c0_989 = arith.constant 0 : index
    %c6_990 = arith.constant 6 : index
    %1864 = memref.load %arg13[%c0_989, %c6_990] : memref<1x8xf32, #tpu.memory_space<smem>>
    %c0_991 = arith.constant 0 : index
    %c6_992 = arith.constant 6 : index
    %1865 = memref.load %arg12[%c0_991, %c6_992] : memref<8x8xf32, #tpu.memory_space<smem>>
    %1866 = vector.broadcast %1865 : f32 to vector<8x16xf32>
    %1867 = arith.mulf %1866, %1330 : vector<8x16xf32>
    %1868 = vector.broadcast %1864 : f32 to vector<8x16xf32>
    %1869 = arith.addf %1868, %1867 : vector<8x16xf32>
    %c1_993 = arith.constant 1 : index
    %c6_994 = arith.constant 6 : index
    %1870 = memref.load %arg12[%c1_993, %c6_994] : memref<8x8xf32, #tpu.memory_space<smem>>
    %1871 = vector.broadcast %1870 : f32 to vector<8x16xf32>
    %1872 = arith.mulf %1871, %1377 : vector<8x16xf32>
    %1873 = arith.addf %1869, %1872 : vector<8x16xf32>
    %c2_995 = arith.constant 2 : index
    %c6_996 = arith.constant 6 : index
    %1874 = memref.load %arg12[%c2_995, %c6_996] : memref<8x8xf32, #tpu.memory_space<smem>>
    %1875 = vector.broadcast %1874 : f32 to vector<8x16xf32>
    %1876 = arith.mulf %1875, %1424 : vector<8x16xf32>
    %1877 = arith.addf %1873, %1876 : vector<8x16xf32>
    %c3_997 = arith.constant 3 : index
    %c6_998 = arith.constant 6 : index
    %1878 = memref.load %arg12[%c3_997, %c6_998] : memref<8x8xf32, #tpu.memory_space<smem>>
    %1879 = vector.broadcast %1878 : f32 to vector<8x16xf32>
    %1880 = arith.mulf %1879, %1471 : vector<8x16xf32>
    %1881 = arith.addf %1877, %1880 : vector<8x16xf32>
    %c4_999 = arith.constant 4 : index
    %c6_1000 = arith.constant 6 : index
    %1882 = memref.load %arg12[%c4_999, %c6_1000] : memref<8x8xf32, #tpu.memory_space<smem>>
    %1883 = vector.broadcast %1882 : f32 to vector<8x16xf32>
    %1884 = arith.mulf %1883, %1518 : vector<8x16xf32>
    %1885 = arith.addf %1881, %1884 : vector<8x16xf32>
    %c5_1001 = arith.constant 5 : index
    %c6_1002 = arith.constant 6 : index
    %1886 = memref.load %arg12[%c5_1001, %c6_1002] : memref<8x8xf32, #tpu.memory_space<smem>>
    %1887 = vector.broadcast %1886 : f32 to vector<8x16xf32>
    %1888 = arith.mulf %1887, %1565 : vector<8x16xf32>
    %1889 = arith.addf %1885, %1888 : vector<8x16xf32>
    %c6_1003 = arith.constant 6 : index
    %c6_1004 = arith.constant 6 : index
    %1890 = memref.load %arg12[%c6_1003, %c6_1004] : memref<8x8xf32, #tpu.memory_space<smem>>
    %1891 = vector.broadcast %1890 : f32 to vector<8x16xf32>
    %1892 = arith.mulf %1891, %1612 : vector<8x16xf32>
    %1893 = arith.addf %1889, %1892 : vector<8x16xf32>
    %c7_1005 = arith.constant 7 : index
    %c6_1006 = arith.constant 6 : index
    %1894 = memref.load %arg12[%c7_1005, %c6_1006] : memref<8x8xf32, #tpu.memory_space<smem>>
    %1895 = vector.broadcast %1894 : f32 to vector<8x16xf32>
    %1896 = arith.mulf %1895, %1659 : vector<8x16xf32>
    %1897 = arith.addf %1893, %1896 : vector<8x16xf32>
    %c0_1007 = arith.constant 0 : index
    %c7_1008 = arith.constant 7 : index
    %1898 = memref.load %arg13[%c0_1007, %c7_1008] : memref<1x8xf32, #tpu.memory_space<smem>>
    %c0_1009 = arith.constant 0 : index
    %c7_1010 = arith.constant 7 : index
    %1899 = memref.load %arg12[%c0_1009, %c7_1010] : memref<8x8xf32, #tpu.memory_space<smem>>
    %1900 = vector.broadcast %1899 : f32 to vector<8x16xf32>
    %1901 = arith.mulf %1900, %1330 : vector<8x16xf32>
    %1902 = vector.broadcast %1898 : f32 to vector<8x16xf32>
    %1903 = arith.addf %1902, %1901 : vector<8x16xf32>
    %c1_1011 = arith.constant 1 : index
    %c7_1012 = arith.constant 7 : index
    %1904 = memref.load %arg12[%c1_1011, %c7_1012] : memref<8x8xf32, #tpu.memory_space<smem>>
    %1905 = vector.broadcast %1904 : f32 to vector<8x16xf32>
    %1906 = arith.mulf %1905, %1377 : vector<8x16xf32>
    %1907 = arith.addf %1903, %1906 : vector<8x16xf32>
    %c2_1013 = arith.constant 2 : index
    %c7_1014 = arith.constant 7 : index
    %1908 = memref.load %arg12[%c2_1013, %c7_1014] : memref<8x8xf32, #tpu.memory_space<smem>>
    %1909 = vector.broadcast %1908 : f32 to vector<8x16xf32>
    %1910 = arith.mulf %1909, %1424 : vector<8x16xf32>
    %1911 = arith.addf %1907, %1910 : vector<8x16xf32>
    %c3_1015 = arith.constant 3 : index
    %c7_1016 = arith.constant 7 : index
    %1912 = memref.load %arg12[%c3_1015, %c7_1016] : memref<8x8xf32, #tpu.memory_space<smem>>
    %1913 = vector.broadcast %1912 : f32 to vector<8x16xf32>
    %1914 = arith.mulf %1913, %1471 : vector<8x16xf32>
    %1915 = arith.addf %1911, %1914 : vector<8x16xf32>
    %c4_1017 = arith.constant 4 : index
    %c7_1018 = arith.constant 7 : index
    %1916 = memref.load %arg12[%c4_1017, %c7_1018] : memref<8x8xf32, #tpu.memory_space<smem>>
    %1917 = vector.broadcast %1916 : f32 to vector<8x16xf32>
    %1918 = arith.mulf %1917, %1518 : vector<8x16xf32>
    %1919 = arith.addf %1915, %1918 : vector<8x16xf32>
    %c5_1019 = arith.constant 5 : index
    %c7_1020 = arith.constant 7 : index
    %1920 = memref.load %arg12[%c5_1019, %c7_1020] : memref<8x8xf32, #tpu.memory_space<smem>>
    %1921 = vector.broadcast %1920 : f32 to vector<8x16xf32>
    %1922 = arith.mulf %1921, %1565 : vector<8x16xf32>
    %1923 = arith.addf %1919, %1922 : vector<8x16xf32>
    %c6_1021 = arith.constant 6 : index
    %c7_1022 = arith.constant 7 : index
    %1924 = memref.load %arg12[%c6_1021, %c7_1022] : memref<8x8xf32, #tpu.memory_space<smem>>
    %1925 = vector.broadcast %1924 : f32 to vector<8x16xf32>
    %1926 = arith.mulf %1925, %1612 : vector<8x16xf32>
    %1927 = arith.addf %1923, %1926 : vector<8x16xf32>
    %c7_1023 = arith.constant 7 : index
    %c7_1024 = arith.constant 7 : index
    %1928 = memref.load %arg12[%c7_1023, %c7_1024] : memref<8x8xf32, #tpu.memory_space<smem>>
    %1929 = vector.broadcast %1928 : f32 to vector<8x16xf32>
    %1930 = arith.mulf %1929, %1659 : vector<8x16xf32>
    %1931 = arith.addf %1927, %1930 : vector<8x16xf32>
    %c0_1025 = arith.constant 0 : index
    %c0_1026 = arith.constant 0 : index
    %c0_1027 = arith.constant 0 : index
    %c0_1028 = arith.constant 0 : index
    %1932 = vector.load %arg14[%c0_1025, %c0_1026, %c0_1027, %c0_1028] : memref<1x8x8x16xf32, #tpu.memory_space<vmem>>, vector<1x1x8x16xf32>
    %1933 = vector.shape_cast %1932 : vector<1x1x8x16xf32> to vector<8x16xf32>
    %1934 = vector.shape_cast %1693 : vector<8x16xf32> to vector<1x1x8x16xf32>
    tpu.vector_store %arg14[%c0_1025, %c0_1026, %c0_1027, %c0_1028], %1934 {strides = array<i32>} : memref<1x8x8x16xf32, #tpu.memory_space<vmem>>, vector<1x1x8x16xf32>,
    %c0_1029 = arith.constant 0 : index
    %c1_1030 = arith.constant 1 : index
    %c0_1031 = arith.constant 0 : index
    %c0_1032 = arith.constant 0 : index
    %1935 = vector.load %arg14[%c0_1029, %c1_1030, %c0_1031, %c0_1032] : memref<1x8x8x16xf32, #tpu.memory_space<vmem>>, vector<1x1x8x16xf32>
    %1936 = vector.shape_cast %1935 : vector<1x1x8x16xf32> to vector<8x16xf32>
    %1937 = vector.shape_cast %1727 : vector<8x16xf32> to vector<1x1x8x16xf32>
    tpu.vector_store %arg14[%c0_1029, %c1_1030, %c0_1031, %c0_1032], %1937 {strides = array<i32>} : memref<1x8x8x16xf32, #tpu.memory_space<vmem>>, vector<1x1x8x16xf32>,
    %c0_1033 = arith.constant 0 : index
    %c2_1034 = arith.constant 2 : index
    %c0_1035 = arith.constant 0 : index
    %c0_1036 = arith.constant 0 : index
    %1938 = vector.load %arg14[%c0_1033, %c2_1034, %c0_1035, %c0_1036] : memref<1x8x8x16xf32, #tpu.memory_space<vmem>>, vector<1x1x8x16xf32>
    %1939 = vector.shape_cast %1938 : vector<1x1x8x16xf32> to vector<8x16xf32>
    %1940 = vector.shape_cast %1761 : vector<8x16xf32> to vector<1x1x8x16xf32>
    tpu.vector_store %arg14[%c0_1033, %c2_1034, %c0_1035, %c0_1036], %1940 {strides = array<i32>} : memref<1x8x8x16xf32, #tpu.memory_space<vmem>>, vector<1x1x8x16xf32>,
    %c0_1037 = arith.constant 0 : index
    %c3_1038 = arith.constant 3 : index
    %c0_1039 = arith.constant 0 : index
    %c0_1040 = arith.constant 0 : index
    %1941 = vector.load %arg14[%c0_1037, %c3_1038, %c0_1039, %c0_1040] : memref<1x8x8x16xf32, #tpu.memory_space<vmem>>, vector<1x1x8x16xf32>
    %1942 = vector.shape_cast %1941 : vector<1x1x8x16xf32> to vector<8x16xf32>
    %1943 = vector.shape_cast %1795 : vector<8x16xf32> to vector<1x1x8x16xf32>
    tpu.vector_store %arg14[%c0_1037, %c3_1038, %c0_1039, %c0_1040], %1943 {strides = array<i32>} : memref<1x8x8x16xf32, #tpu.memory_space<vmem>>, vector<1x1x8x16xf32>,
    %c0_1041 = arith.constant 0 : index
    %c4_1042 = arith.constant 4 : index
    %c0_1043 = arith.constant 0 : index
    %c0_1044 = arith.constant 0 : index
    %1944 = vector.load %arg14[%c0_1041, %c4_1042, %c0_1043, %c0_1044] : memref<1x8x8x16xf32, #tpu.memory_space<vmem>>, vector<1x1x8x16xf32>
    %1945 = vector.shape_cast %1944 : vector<1x1x8x16xf32> to vector<8x16xf32>
    %1946 = vector.shape_cast %1829 : vector<8x16xf32> to vector<1x1x8x16xf32>
    tpu.vector_store %arg14[%c0_1041, %c4_1042, %c0_1043, %c0_1044], %1946 {strides = array<i32>} : memref<1x8x8x16xf32, #tpu.memory_space<vmem>>, vector<1x1x8x16xf32>,
    %c0_1045 = arith.constant 0 : index
    %c5_1046 = arith.constant 5 : index
    %c0_1047 = arith.constant 0 : index
    %c0_1048 = arith.constant 0 : index
    %1947 = vector.load %arg14[%c0_1045, %c5_1046, %c0_1047, %c0_1048] : memref<1x8x8x16xf32, #tpu.memory_space<vmem>>, vector<1x1x8x16xf32>
    %1948 = vector.shape_cast %1947 : vector<1x1x8x16xf32> to vector<8x16xf32>
    %1949 = vector.shape_cast %1863 : vector<8x16xf32> to vector<1x1x8x16xf32>
    tpu.vector_store %arg14[%c0_1045, %c5_1046, %c0_1047, %c0_1048], %1949 {strides = array<i32>} : memref<1x8x8x16xf32, #tpu.memory_space<vmem>>, vector<1x1x8x16xf32>,
    %c0_1049 = arith.constant 0 : index
    %c6_1050 = arith.constant 6 : index
    %c0_1051 = arith.constant 0 : index
    %c0_1052 = arith.constant 0 : index
    %1950 = vector.load %arg14[%c0_1049, %c6_1050, %c0_1051, %c0_1052] : memref<1x8x8x16xf32, #tpu.memory_space<vmem>>, vector<1x1x8x16xf32>
    %1951 = vector.shape_cast %1950 : vector<1x1x8x16xf32> to vector<8x16xf32>
    %1952 = vector.shape_cast %1897 : vector<8x16xf32> to vector<1x1x8x16xf32>
    tpu.vector_store %arg14[%c0_1049, %c6_1050, %c0_1051, %c0_1052], %1952 {strides = array<i32>} : memref<1x8x8x16xf32, #tpu.memory_space<vmem>>, vector<1x1x8x16xf32>,
    %c0_1053 = arith.constant 0 : index
    %c7_1054 = arith.constant 7 : index
    %c0_1055 = arith.constant 0 : index
    %c0_1056 = arith.constant 0 : index
    %1953 = vector.load %arg14[%c0_1053, %c7_1054, %c0_1055, %c0_1056] : memref<1x8x8x16xf32, #tpu.memory_space<vmem>>, vector<1x1x8x16xf32>
    %1954 = vector.shape_cast %1953 : vector<1x1x8x16xf32> to vector<8x16xf32>
    %1955 = vector.shape_cast %1931 : vector<8x16xf32> to vector<1x1x8x16xf32>
    tpu.vector_store %arg14[%c0_1053, %c7_1054, %c0_1055, %c0_1056], %1955 {strides = array<i32>} : memref<1x8x8x16xf32, #tpu.memory_space<vmem>>, vector<1x1x8x16xf32>,
    return
  }
  func.func @transform_0(%arg0: i32) -> (i32, i32, i32, i32) {
    %c0_i32 = arith.constant 0 : i32
    %c0_i32_0 = arith.constant 0 : i32
    %c0_i32_1 = arith.constant 0 : i32
    %c0_i32_2 = arith.constant 0 : i32
    return %arg0, %c0_i32, %c0_i32_0, %c0_i32_1 : i32, i32, i32, i32
  }
  func.func @transform_1(%arg0: i32) -> (i32, i32) {
    %c0_i32 = arith.constant 0 : i32
    %c0_i32_0 = arith.constant 0 : i32
    %c0_i32_1 = arith.constant 0 : i32
    return %c0_i32, %c0_i32_0 : i32, i32
  }
  func.func @transform_2(%arg0: i32) -> (i32, i32) {
    %c0_i32 = arith.constant 0 : i32
    %c0_i32_0 = arith.constant 0 : i32
    %c0_i32_1 = arith.constant 0 : i32
    return %c0_i32, %c0_i32_0 : i32, i32
  }
  func.func @transform_3(%arg0: i32) -> (i32, i32) {
    %c0_i32 = arith.constant 0 : i32
    %c0_i32_0 = arith.constant 0 : i32
    %c0_i32_1 = arith.constant 0 : i32
    return %c0_i32, %c0_i32_0 : i32, i32
  }
  func.func @transform_4(%arg0: i32) -> (i32, i32) {
    %c0_i32 = arith.constant 0 : i32
    %c0_i32_0 = arith.constant 0 : i32
    %c0_i32_1 = arith.constant 0 : i32
    return %c0_i32, %c0_i32_0 : i32, i32
  }
  func.func @transform_5(%arg0: i32) -> (i32, i32) {
    %c0_i32 = arith.constant 0 : i32
    %c0_i32_0 = arith.constant 0 : i32
    %c0_i32_1 = arith.constant 0 : i32
    return %c0_i32, %c0_i32_0 : i32, i32
  }
  func.func @transform_6(%arg0: i32) -> (i32, i32) {
    %c0_i32 = arith.constant 0 : i32
    %c0_i32_0 = arith.constant 0 : i32
    %c0_i32_1 = arith.constant 0 : i32
    return %c0_i32, %c0_i32_0 : i32, i32
  }
  func.func @transform_7(%arg0: i32) -> (i32, i32) {
    %c0_i32 = arith.constant 0 : i32
    %c0_i32_0 = arith.constant 0 : i32
    %c0_i32_1 = arith.constant 0 : i32
    return %c0_i32, %c0_i32_0 : i32, i32
  }
  func.func @transform_8(%arg0: i32) -> (i32, i32) {
    %c0_i32 = arith.constant 0 : i32
    %c0_i32_0 = arith.constant 0 : i32
    %c0_i32_1 = arith.constant 0 : i32
    return %c0_i32, %c0_i32_0 : i32, i32
  }
  func.func @transform_9(%arg0: i32) -> (i32, i32) {
    %c0_i32 = arith.constant 0 : i32
    %c0_i32_0 = arith.constant 0 : i32
    %c0_i32_1 = arith.constant 0 : i32
    return %c0_i32, %c0_i32_0 : i32, i32
  }
  func.func @transform_10(%arg0: i32) -> (i32, i32) {
    %c0_i32 = arith.constant 0 : i32
    %c0_i32_0 = arith.constant 0 : i32
    %c0_i32_1 = arith.constant 0 : i32
    return %c0_i32, %c0_i32_0 : i32, i32
  }
  func.func @transform_11(%arg0: i32) -> (i32, i32) {
    %c0_i32 = arith.constant 0 : i32
    %c0_i32_0 = arith.constant 0 : i32
    %c0_i32_1 = arith.constant 0 : i32
    return %c0_i32, %c0_i32_0 : i32, i32
  }
  func.func @transform_12(%arg0: i32) -> (i32, i32) {
    %c0_i32 = arith.constant 0 : i32
    %c0_i32_0 = arith.constant 0 : i32
    %c0_i32_1 = arith.constant 0 : i32
    return %c0_i32, %c0_i32_0 : i32, i32
  }
  func.func @transform_13(%arg0: i32) -> (i32, i32, i32, i32) {
    %c0_i32 = arith.constant 0 : i32
    %c0_i32_0 = arith.constant 0 : i32
    %c0_i32_1 = arith.constant 0 : i32
    %c0_i32_2 = arith.constant 0 : i32
    return %arg0, %c0_i32, %c0_i32_0, %c0_i32_1 : i32, i32, i32, i32
  }
}

</mosaic_0001>

<llo_original>
// kernel: dsc_block_forward.1
$region0: #{dsc_block_forward.1}
  #allocation0 [shape = 'u32[]', space=smem, size = 0x4, offset = 0x4, fixed_abs, tag = 'smem constant byte address 0x4 - core index']
  #allocation1 [shape = 'u32[144,128]{1,0:T(1,128)}', space=vmem, size = 0x12000, scoped, tag = 'internal scratch']
  %s0 = inlined_call_operand.hbm [shape: f32[2,4,16,16], index: 0, kind: input, shape index: {}]
  %s1 = inlined_call_operand.vmem [shape: f32[9,4], index: 1, kind: input, shape index: {}]
  %s2 = inlined_call_operand.vmem [shape: f32[1,4], index: 2, kind: input, shape index: {}]
  %s3 = inlined_call_operand.vmem [shape: f32[4,8], index: 3, kind: input, shape index: {}]
  %s4 = inlined_call_operand.vmem [shape: f32[1,8], index: 4, kind: input, shape index: {}]
  %s5 = inlined_call_operand.vmem [shape: f32[9,8], index: 5, kind: input, shape index: {}]
  %s6 = inlined_call_operand.vmem [shape: f32[1,8], index: 6, kind: input, shape index: {}]
  %s7 = inlined_call_operand.vmem [shape: f32[8,8], index: 7, kind: input, shape index: {}]
  %s8 = inlined_call_operand.vmem [shape: f32[1,8], index: 8, kind: input, shape index: {}]
  %s9 = inlined_call_operand.vmem [shape: f32[9,8], index: 9, kind: input, shape index: {}]
  %s10 = inlined_call_operand.vmem [shape: f32[1,8], index: 10, kind: input, shape index: {}]
  %s11 = inlined_call_operand.vmem [shape: f32[8,8], index: 11, kind: input, shape index: {}]
  %s12 = inlined_call_operand.vmem [shape: f32[1,8], index: 12, kind: input, shape index: {}]
  %s13 = inlined_call_operand.hbm [shape: f32[2,8,8,16], index: 13, kind: output, shape index: {}]
  %s14 = sld [smem:[#allocation0]]
  $region137: #{dsc_block_forward.1} parent=0
    _
  %s16 = ssub.s32 1, %s14
  %s17 = scalar_select 0, %s16, %s14
  $region1: #{dsc_block_forward.1} parent=0
    #allocation2 [shape = 'u8[65536]{0}', space=vmem, size = 0x10000, scoped, tag = 'input window, operand 0']
    #allocation3 [shape = 's32[2]{0}', space=sflag, size = 0x8, scoped, tag = 'scoped memory for dsc_block_forward.1']
    #allocation4 [shape = 's32[2]{0}', space=sflag, size = 0x8, scoped, tag = 'scoped memory for dsc_block_forward.1']
    #allocation5 [shape = 's32[2]{0}', space=sflag, size = 0x8, scoped, tag = 'scoped memory for dsc_block_forward.1']
    #allocation6 [shape = 'u8[8192]{0}', space=smem, size = 0x2000, scoped, tag = 'input window, operand 1, single buffered']
    #allocation7 [shape = 'u8[512]{0}', space=smem, size = 0x200, scoped, tag = 'input window, operand 2, single buffered']
    #allocation8 [shape = 's32[1]{0}', space=sflag, size = 0x4, scoped, tag = 'scoped memory for dsc_block_forward.1']
    #allocation9 [shape = 'u8[2048]{0}', space=smem, size = 0x800, scoped, tag = 'input window, operand 3, single buffered']
    #allocation10 [shape = 'u8[512]{0}', space=smem, size = 0x200, scoped, tag = 'input window, operand 4, single buffered']
    #allocation11 [shape = 's32[1]{0}', space=sflag, size = 0x4, scoped, tag = 'scoped memory for dsc_block_forward.1']
    #allocation12 [shape = 'u8[8192]{0}', space=smem, size = 0x2000, scoped, tag = 'input window, operand 5, single buffered']
    #allocation13 [shape = 'u8[512]{0}', space=smem, size = 0x200, scoped, tag = 'input window, operand 6, single buffered']
    #allocation14 [shape = 's32[1]{0}', space=sflag, size = 0x4, scoped, tag = 'scoped memory for dsc_block_forward.1']
    #allocation15 [shape = 'u8[4096]{0}', space=smem, size = 0x1000, scoped, tag = 'input window, operand 7, single buffered']
    #allocation16 [shape = 'u8[512]{0}', space=smem, size = 0x200, scoped, tag = 'input window, operand 8, single buffered']
    #allocation17 [shape = 's32[1]{0}', space=sflag, size = 0x4, scoped, tag = 'scoped memory for dsc_block_forward.1']
    #allocation18 [shape = 'u8[8192]{0}', space=smem, size = 0x2000, scoped, tag = 'input window, operand 9, single buffered']
    #allocation19 [shape = 'u8[512]{0}', space=smem, size = 0x200, scoped, tag = 'input window, operand 10, single buffered']
    #allocation20 [shape = 's32[1]{0}', space=sflag, size = 0x4, scoped, tag = 'scoped memory for dsc_block_forward.1']
    #allocation21 [shape = 'u8[4096]{0}', space=smem, size = 0x1000, scoped, tag = 'input window, operand 11, single buffered']
    #allocation22 [shape = 'u8[512]{0}', space=smem, size = 0x200, scoped, tag = 'input window, operand 12, single buffered']
    #allocation23 [shape = 's32[1]{0}', space=sflag, size = 0x4, scoped, tag = 'scoped memory for dsc_block_forward.1']
    #allocation24 [shape = 'u8[65536]{0}', space=vmem, size = 0x10000, scoped, tag = 'output window, operand 0']
    %18 = vsyncpa [#allocation3], 0
    %s19 = scalar_lea.sflag [#allocation3], 1
    %20 = vsyncpa %s19, 0
    %21 = vsyncpa [#allocation5], 0
    %22 = vsyncpa [#allocation8], 0
    %23 = vsyncpa [#allocation11], 0
    %24 = vsyncpa [#allocation14], 0
    %25 = vsyncpa [#allocation17], 0
    %26 = vsyncpa [#allocation20], 0
    %27 = vsyncpa [#allocation23], 0
    %28 = vsyncpa [#allocation4], 0
    %s29 = scalar_lea.sflag [#allocation4], 1
    %30 = vsyncpa %s29, 0
    loop: start=0, step=1, limit=4
    $region2: #{dsc_block_forward.1} parent=1 // loop_pre_header
      _
    $region3: #{dsc_block_forward.1} parent=1 // loop_header
      %s32 = sphi 0, %s36
      %p33 = scmp.ge.s32.totalorder %s32, 4
      %s42 = sphi 0, %s44
      %s45 = sphi 0, %s42
      %s46 = sphi 0, %s45
      %s62 = sphi 0, %s46
      %s66 = sphi 0, %s66
      %s68 = sphi 0, %s66
      %s69 = sphi 0, %s68
      %s83 = sphi 0, %s69
      %s87 = sphi 0, %s87
      %s89 = sphi 0, %s87
      %s90 = sphi 0, %s89
      %s104 = sphi 0, %s90
      %s108 = sphi 0, %s108
      %s110 = sphi 0, %s108
      %s111 = sphi 0, %s110
      %s125 = sphi 0, %s111
      %s129 = sphi 0, %s129
      %s131 = sphi 0, %s129
      %s132 = sphi 0, %s131
      %s146 = sphi 0, %s132
      %s150 = sphi 0, %s150
      %s152 = sphi 0, %s150
      %s153 = sphi 0, %s152
      %s167 = sphi 0, %s153
      %s171 = sphi 0, %s171
      %s173 = sphi 0, %s171
      %s174 = sphi 0, %s173
      %s188 = sphi 0, %s174
      %s192 = sphi 0, %s192
      %s194 = sphi 0, %s192
      %s195 = sphi 0, %s194
      %s209 = sphi 0, %s195
      %s213 = sphi 0, %s213
      %s215 = sphi 0, %s213
      %s216 = sphi 0, %s215
      %s230 = sphi 0, %s216
      %s234 = sphi 0, %s234
      %s236 = sphi 0, %s234
      %s237 = sphi 0, %s236
      %s251 = sphi 0, %s237
      %s255 = sphi 0, %s255
      %s257 = sphi 0, %s255
      %s258 = sphi 0, %s257
      %s272 = sphi 0, %s258
      %s276 = sphi 0, %s276
      %s278 = sphi 0, %s276
      %s279 = sphi 0, %s278
      %s293 = sphi 0, %s279
      %s297 = sphi 0, %s297
      %s299 = sphi 0, %s297
      %s300 = sphi 0, %s299
      %s314 = sphi 0, %s300
      %s320 = sphi 0, %s322
      %s323 = sphi 0, %s320
      %s324 = sphi 0, %s323
      %s340 = sphi 0, %s324
    $region4: #{dsc_block_forward.1} parent=1 // loop_header_branch
      %35 = sbr.rel (%p33) target = $region8
    $region5: #{dsc_block_forward.1} parent=1 // loop_body
      %s37 = ssub.s32 %s32, 1
      %s38 = ssub.s32 %s32, 2
      %s39 = sadd.s32 %s32, 1
      %s40 = ssub.s32 %s32, %s39
      %p41 = scmp.eq.s32.totalorder %s40, 0
      %s43 = sadd.s32 %s42, 1
      %s44 = scalar_select %p41, %s42, %s43
      %p47 = pneg %p41
      %p48 = scmp.eq.s32.totalorder %s32, 1
      %p49 = por %p47, %p48
      %p50 = scmp.ne.s32.totalorder %s42, %s45
      %p51 = scmp.eq.s32.totalorder %s32, 0
      %p52 = por %p50, %p51
      %p53 = scmp.ne.s32.totalorder %s42, %s45
      %p54 = scmp.eq.s32.totalorder %s37, 1
      %p55 = por %p53, %p54
      %p56 = scmp.ne.s32.totalorder %s45, %s46
      %p57 = scmp.eq.s32.totalorder %s37, 0
      %p58 = por %p56, %p57
      %p59 = scmp.ne.s32.totalorder %s45, %s46
      %p60 = scmp.eq.s32.totalorder %s38, 1
      %p61 = por %p59, %p60
      %p63 = scmp.ne.s32.totalorder %s46, %s62
      %p64 = scmp.eq.s32.totalorder %s38, 0
      %p65 = por %p63, %p64
      %s67 = sadd.s32 %s66, 1
      %p70 = scmp.eq.s32.totalorder %s32, 1
      %p71 = scmp.ne.s32.totalorder %s66, %s68
      %p72 = scmp.eq.s32.totalorder %s32, 0
      %p73 = por %p71, %p72
      %p74 = scmp.ne.s32.totalorder %s66, %s68
      %p75 = scmp.eq.s32.totalorder %s37, 1
      %p76 = por %p74, %p75
      %p77 = scmp.ne.s32.totalorder %s68, %s69
      %p78 = scmp.eq.s32.totalorder %s37, 0
      %p79 = por %p77, %p78
      %p80 = scmp.ne.s32.totalorder %s68, %s69
      %p81 = scmp.eq.s32.totalorder %s38, 1
      %p82 = por %p80, %p81
      %p84 = scmp.ne.s32.totalorder %s69, %s83
      %p85 = scmp.eq.s32.totalorder %s38, 0
      %p86 = por %p84, %p85
      %s88 = sadd.s32 %s87, 1
      %p91 = scmp.eq.s32.totalorder %s32, 1
      %p92 = scmp.ne.s32.totalorder %s87, %s89
      %p93 = scmp.eq.s32.totalorder %s32, 0
      %p94 = por %p92, %p93
      %p95 = scmp.ne.s32.totalorder %s87, %s89
      %p96 = scmp.eq.s32.totalorder %s37, 1
      %p97 = por %p95, %p96
      %p98 = scmp.ne.s32.totalorder %s89, %s90
      %p99 = scmp.eq.s32.totalorder %s37, 0
      %p100 = por %p98, %p99
      %p101 = scmp.ne.s32.totalorder %s89, %s90
      %p102 = scmp.eq.s32.totalorder %s38, 1
      %p103 = por %p101, %p102
      %p105 = scmp.ne.s32.totalorder %s90, %s104
      %p106 = scmp.eq.s32.totalorder %s38, 0
      %p107 = por %p105, %p106
      %s109 = sadd.s32 %s108, 1
      %p112 = scmp.eq.s32.totalorder %s32, 1
      %p113 = scmp.ne.s32.totalorder %s108, %s110
      %p114 = scmp.eq.s32.totalorder %s32, 0
      %p115 = por %p113, %p114
      %p116 = scmp.ne.s32.totalorder %s108, %s110
      %p117 = scmp.eq.s32.totalorder %s37, 1
      %p118 = por %p116, %p117
      %p119 = scmp.ne.s32.totalorder %s110, %s111
      %p120 = scmp.eq.s32.totalorder %s37, 0
      %p121 = por %p119, %p120
      %p122 = scmp.ne.s32.totalorder %s110, %s111
      %p123 = scmp.eq.s32.totalorder %s38, 1
      %p124 = por %p122, %p123
      %p126 = scmp.ne.s32.totalorder %s111, %s125
      %p127 = scmp.eq.s32.totalorder %s38, 0
      %p128 = por %p126, %p127
      %s130 = sadd.s32 %s129, 1
      %p133 = scmp.eq.s32.totalorder %s32, 1
      %p134 = scmp.ne.s32.totalorder %s129, %s131
      %p135 = scmp.eq.s32.totalorder %s32, 0
      %p136 = por %p134, %p135
      %p137 = scmp.ne.s32.totalorder %s129, %s131
      %p138 = scmp.eq.s32.totalorder %s37, 1
      %p139 = por %p137, %p138
      %p140 = scmp.ne.s32.totalorder %s131, %s132
      %p141 = scmp.eq.s32.totalorder %s37, 0
      %p142 = por %p140, %p141
      %p143 = scmp.ne.s32.totalorder %s131, %s132
      %p144 = scmp.eq.s32.totalorder %s38, 1
      %p145 = por %p143, %p144
      %p147 = scmp.ne.s32.totalorder %s132, %s146
      %p148 = scmp.eq.s32.totalorder %s38, 0
      %p149 = por %p147, %p148
      %s151 = sadd.s32 %s150, 1
      %p154 = scmp.eq.s32.totalorder %s32, 1
      %p155 = scmp.ne.s32.totalorder %s150, %s152
      %p156 = scmp.eq.s32.totalorder %s32, 0
      %p157 = por %p155, %p156
      %p158 = scmp.ne.s32.totalorder %s150, %s152
      %p159 = scmp.eq.s32.totalorder %s37, 1
      %p160 = por %p158, %p159
      %p161 = scmp.ne.s32.totalorder %s152, %s153
      %p162 = scmp.eq.s32.totalorder %s37, 0
      %p163 = por %p161, %p162
      %p164 = scmp.ne.s32.totalorder %s152, %s153
      %p165 = scmp.eq.s32.totalorder %s38, 1
      %p166 = por %p164, %p165
      %p168 = scmp.ne.s32.totalorder %s153, %s167
      %p169 = scmp.eq.s32.totalorder %s38, 0
      %p170 = por %p168, %p169
      %s172 = sadd.s32 %s171, 1
      %p175 = scmp.eq.s32.totalorder %s32, 1
      %p176 = scmp.ne.s32.totalorder %s171, %s173
      %p177 = scmp.eq.s32.totalorder %s32, 0
      %p178 = por %p176, %p177
      %p179 = scmp.ne.s32.totalorder %s171, %s173
      %p180 = scmp.eq.s32.totalorder %s37, 1
      %p181 = por %p179, %p180
      %p182 = scmp.ne.s32.totalorder %s173, %s174
      %p183 = scmp.eq.s32.totalorder %s37, 0
      %p184 = por %p182, %p183
      %p185 = scmp.ne.s32.totalorder %s173, %s174
      %p186 = scmp.eq.s32.totalorder %s38, 1
      %p187 = por %p185, %p186
      %p189 = scmp.ne.s32.totalorder %s174, %s188
      %p190 = scmp.eq.s32.totalorder %s38, 0
      %p191 = por %p189, %p190
      %s193 = sadd.s32 %s192, 1
      %p196 = scmp.eq.s32.totalorder %s32, 1
      %p197 = scmp.ne.s32.totalorder %s192, %s194
      %p198 = scmp.eq.s32.totalorder %s32, 0
      %p199 = por %p197, %p198
      %p200 = scmp.ne.s32.totalorder %s192, %s194
      %p201 = scmp.eq.s32.totalorder %s37, 1
      %p202 = por %p200, %p201
      %p203 = scmp.ne.s32.totalorder %s194, %s195
      %p204 = scmp.eq.s32.totalorder %s37, 0
      %p205 = por %p203, %p204
      %p206 = scmp.ne.s32.totalorder %s194, %s195
      %p207 = scmp.eq.s32.totalorder %s38, 1
      %p208 = por %p206, %p207
      %p210 = scmp.ne.s32.totalorder %s195, %s209
      %p211 = scmp.eq.s32.totalorder %s38, 0
      %p212 = por %p210, %p211
      %s214 = sadd.s32 %s213, 1
      %p217 = scmp.eq.s32.totalorder %s32, 1
      %p218 = scmp.ne.s32.totalorder %s213, %s215
      %p219 = scmp.eq.s32.totalorder %s32, 0
      %p220 = por %p218, %p219
      %p221 = scmp.ne.s32.totalorder %s213, %s215
      %p222 = scmp.eq.s32.totalorder %s37, 1
      %p223 = por %p221, %p222
      %p224 = scmp.ne.s32.totalorder %s215, %s216
      %p225 = scmp.eq.s32.totalorder %s37, 0
      %p226 = por %p224, %p225
      %p227 = scmp.ne.s32.totalorder %s215, %s216
      %p228 = scmp.eq.s32.totalorder %s38, 1
      %p229 = por %p227, %p228
      %p231 = scmp.ne.s32.totalorder %s216, %s230
      %p232 = scmp.eq.s32.totalorder %s38, 0
      %p233 = por %p231, %p232
      %s235 = sadd.s32 %s234, 1
      %p238 = scmp.eq.s32.totalorder %s32, 1
      %p239 = scmp.ne.s32.totalorder %s234, %s236
      %p240 = scmp.eq.s32.totalorder %s32, 0
      %p241 = por %p239, %p240
      %p242 = scmp.ne.s32.totalorder %s234, %s236
      %p243 = scmp.eq.s32.totalorder %s37, 1
      %p244 = por %p242, %p243
      %p245 = scmp.ne.s32.totalorder %s236, %s237
      %p246 = scmp.eq.s32.totalorder %s37, 0
      %p247 = por %p245, %p246
      %p248 = scmp.ne.s32.totalorder %s236, %s237
      %p249 = scmp.eq.s32.totalorder %s38, 1
      %p250 = por %p248, %p249
      %p252 = scmp.ne.s32.totalorder %s237, %s251
      %p253 = scmp.eq.s32.totalorder %s38, 0
      %p254 = por %p252, %p253
      %s256 = sadd.s32 %s255, 1
      %p259 = scmp.eq.s32.totalorder %s32, 1
      %p260 = scmp.ne.s32.totalorder %s255, %s257
      %p261 = scmp.eq.s32.totalorder %s32, 0
      %p262 = por %p260, %p261
      %p263 = scmp.ne.s32.totalorder %s255, %s257
      %p264 = scmp.eq.s32.totalorder %s37, 1
      %p265 = por %p263, %p264
      %p266 = scmp.ne.s32.totalorder %s257, %s258
      %p267 = scmp.eq.s32.totalorder %s37, 0
      %p268 = por %p266, %p267
      %p269 = scmp.ne.s32.totalorder %s257, %s258
      %p270 = scmp.eq.s32.totalorder %s38, 1
      %p271 = por %p269, %p270
      %p273 = scmp.ne.s32.totalorder %s258, %s272
      %p274 = scmp.eq.s32.totalorder %s38, 0
      %p275 = por %p273, %p274
      %s277 = sadd.s32 %s276, 1
      %p280 = scmp.eq.s32.totalorder %s32, 1
      %p281 = scmp.ne.s32.totalorder %s276, %s278
      %p282 = scmp.eq.s32.totalorder %s32, 0
      %p283 = por %p281, %p282
      %p284 = scmp.ne.s32.totalorder %s276, %s278
      %p285 = scmp.eq.s32.totalorder %s37, 1
      %p286 = por %p284, %p285
      %p287 = scmp.ne.s32.totalorder %s278, %s279
      %p288 = scmp.eq.s32.totalorder %s37, 0
      %p289 = por %p287, %p288
      %p290 = scmp.ne.s32.totalorder %s278, %s279
      %p291 = scmp.eq.s32.totalorder %s38, 1
      %p292 = por %p290, %p291
      %p294 = scmp.ne.s32.totalorder %s279, %s293
      %p295 = scmp.eq.s32.totalorder %s38, 0
      %p296 = por %p294, %p295
      %s298 = sadd.s32 %s297, 1
      %p301 = scmp.eq.s32.totalorder %s32, 1
      %p302 = scmp.ne.s32.totalorder %s297, %s299
      %p303 = scmp.eq.s32.totalorder %s32, 0
      %p304 = por %p302, %p303
      %p305 = scmp.ne.s32.totalorder %s297, %s299
      %p306 = scmp.eq.s32.totalorder %s37, 1
      %p307 = por %p305, %p306
      %p308 = scmp.ne.s32.totalorder %s299, %s300
      %p309 = scmp.eq.s32.totalorder %s37, 0
      %p310 = por %p308, %p309
      %p311 = scmp.ne.s32.totalorder %s299, %s300
      %p312 = scmp.eq.s32.totalorder %s38, 1
      %p313 = por %p311, %p312
      %p315 = scmp.ne.s32.totalorder %s300, %s314
      %p316 = scmp.eq.s32.totalorder %s38, 0
      %p317 = por %p315, %p316
      %s318 = ssub.s32 %s32, %s39
      %p319 = scmp.eq.s32.totalorder %s318, 0
      %s321 = sadd.s32 %s320, 1
      %s322 = scalar_select %p319, %s320, %s321
      %p325 = pneg %p319
      %p326 = scmp.eq.s32.totalorder %s32, 1
      %p327 = por %p325, %p326
      %p328 = scmp.ne.s32.totalorder %s320, %s323
      %p329 = scmp.eq.s32.totalorder %s32, 0
      %p330 = por %p328, %p329
      %p331 = scmp.ne.s32.totalorder %s320, %s323
      %p332 = scmp.eq.s32.totalorder %s37, 1
      %p333 = por %p331, %p332
      %p334 = scmp.ne.s32.totalorder %s323, %s324
      %p335 = scmp.eq.s32.totalorder %s37, 0
      %p336 = por %p334, %p335
      %p337 = scmp.ne.s32.totalorder %s323, %s324
      %p338 = scmp.eq.s32.totalorder %s38, 1
      %p339 = por %p337, %p338
      %p341 = scmp.ne.s32.totalorder %s324, %s340
      %p342 = scmp.eq.s32.totalorder %s38, 0
      %p343 = por %p341, %p342
      %p344 = scmp.le.s32.totalorder 1, %s32
      %p345 = scmp.lt.s32.totalorder %s32, 3
      %p346 = pnand %p344, %p345
      %p347 = pneg %p346
      // Predicated region
      $region9: #{dsc_block_forward.1} parent=5 // pred_check
        _
      $region10: #{dsc_block_forward.1} parent=5 // pred_check_branch
        %349 = sbr.rel (%p346) target = $region12
      $region11: #{dsc_block_forward.1} parent=5 // pred_region
        %s350 = ssub.s32 %s32, 1
        // Predicated region
        $region13: #{dsc_block_forward.1} parent=11 // pred_check
          %p351 = pneg %p79
        $region14: #{dsc_block_forward.1} parent=11 // pred_check_branch
          %353 = sbr.rel (%p351) target = $region16
        $region15: #{dsc_block_forward.1} parent=11 // pred_region
          %s355 = ssub.s32 256, 256
          %356 = vsyncadd [#allocation5], %s355
          %s357 = sshll.u32 %s1, 4
          %s358 = int_to_ptr.vmem [resolvable:$true] %s357
          %363 = dma.vmem_to_smem %s358, 256, [#allocation6], [#allocation5], 128, 128, 8
        $region16: #{dsc_block_forward.1} parent=11 // pred_fallthru
          _
        // Predicated region
        $region17: #{dsc_block_forward.1} parent=11 // pred_check
          %p364 = pneg %p100
        $region18: #{dsc_block_forward.1} parent=11 // pred_check_branch
          %366 = sbr.rel (%p364) target = $region20
        $region19: #{dsc_block_forward.1} parent=11 // pred_region
          %s368 = ssub.s32 16, 16
          %369 = vsyncadd [#allocation8], %s368
          %s371 = sshll.u32 %s2, 4
          %s372 = int_to_ptr.vmem [resolvable:$true] %s371
          %374 = dma.vmem_to_smem %s372, 16, [#allocation7], [#allocation8]
        $region20: #{dsc_block_forward.1} parent=11 // pred_fallthru
          _
        // Predicated region
        $region21: #{dsc_block_forward.1} parent=11 // pred_check
          %p375 = pneg %p121
        $region22: #{dsc_block_forward.1} parent=11 // pred_check_branch
          %377 = sbr.rel (%p375) target = $region24
        $region23: #{dsc_block_forward.1} parent=11 // pred_region
          %s379 = ssub.s32 64, 64
          %380 = vsyncadd [#allocation8], %s379
          %s382 = sshll.u32 %s3, 4
          %s383 = int_to_ptr.vmem [resolvable:$true] %s382
          %385 = dma.vmem_to_smem %s383, 64, [#allocation9], [#allocation8]
        $region24: #{dsc_block_forward.1} parent=11 // pred_fallthru
          _
        // Predicated region
        $region25: #{dsc_block_forward.1} parent=11 // pred_check
          %p386 = pneg %p142
        $region26: #{dsc_block_forward.1} parent=11 // pred_check_branch
          %388 = sbr.rel (%p386) target = $region28
        $region27: #{dsc_block_forward.1} parent=11 // pred_region
          %s390 = ssub.s32 16, 16
          %391 = vsyncadd [#allocation11], %s390
          %s393 = sshll.u32 %s4, 4
          %s394 = int_to_ptr.vmem [resolvable:$true] %s393
          %396 = dma.vmem_to_smem %s394, 16, [#allocation10], [#allocation11]
        $region28: #{dsc_block_forward.1} parent=11 // pred_fallthru
          _
        // Predicated region
        $region29: #{dsc_block_forward.1} parent=11 // pred_check
          %p397 = pneg %p163
        $region30: #{dsc_block_forward.1} parent=11 // pred_check_branch
          %399 = sbr.rel (%p397) target = $region32
        $region31: #{dsc_block_forward.1} parent=11 // pred_region
          %s401 = ssub.s32 256, 256
          %402 = vsyncadd [#allocation11], %s401
          %s403 = sshll.u32 %s5, 4
          %s404 = int_to_ptr.vmem [resolvable:$true] %s403
          %409 = dma.vmem_to_smem %s404, 256, [#allocation12], [#allocation11], 128, 128, 8
        $region32: #{dsc_block_forward.1} parent=11 // pred_fallthru
          _
        // Predicated region
        $region33: #{dsc_block_forward.1} parent=11 // pred_check
          %p410 = pneg %p184
        $region34: #{dsc_block_forward.1} parent=11 // pred_check_branch
          %412 = sbr.rel (%p410) target = $region36
        $region35: #{dsc_block_forward.1} parent=11 // pred_region
          %s414 = ssub.s32 16, 16
          %415 = vsyncadd [#allocation14], %s414
          %s417 = sshll.u32 %s6, 4
          %s418 = int_to_ptr.vmem [resolvable:$true] %s417
          %420 = dma.vmem_to_smem %s418, 16, [#allocation13], [#allocation14]
        $region36: #{dsc_block_forward.1} parent=11 // pred_fallthru
          _
        // Predicated region
        $region37: #{dsc_block_forward.1} parent=11 // pred_check
          %p421 = pneg %p205
        $region38: #{dsc_block_forward.1} parent=11 // pred_check_branch
          %423 = sbr.rel (%p421) target = $region40
        $region39: #{dsc_block_forward.1} parent=11 // pred_region
          %s425 = ssub.s32 128, 128
          %426 = vsyncadd [#allocation14], %s425
          %s428 = sshll.u32 %s7, 4
          %s429 = int_to_ptr.vmem [resolvable:$true] %s428
          %431 = dma.vmem_to_smem %s429, 128, [#allocation15], [#allocation14]
        $region40: #{dsc_block_forward.1} parent=11 // pred_fallthru
          _
        // Predicated region
        $region41: #{dsc_block_forward.1} parent=11 // pred_check
          %p432 = pneg %p226
        $region42: #{dsc_block_forward.1} parent=11 // pred_check_branch
          %434 = sbr.rel (%p432) target = $region44
        $region43: #{dsc_block_forward.1} parent=11 // pred_region
          %s436 = ssub.s32 16, 16
          %437 = vsyncadd [#allocation17], %s436
          %s439 = sshll.u32 %s8, 4
          %s440 = int_to_ptr.vmem [resolvable:$true] %s439
          %442 = dma.vmem_to_smem %s440, 16, [#allocation16], [#allocation17]
        $region44: #{dsc_block_forward.1} parent=11 // pred_fallthru
          _
        // Predicated region
        $region45: #{dsc_block_forward.1} parent=11 // pred_check
          %p443 = pneg %p247
        $region46: #{dsc_block_forward.1} parent=11 // pred_check_branch
          %445 = sbr.rel (%p443) target = $region48
        $region47: #{dsc_block_forward.1} parent=11 // pred_region
          %s447 = ssub.s32 256, 256
          %448 = vsyncadd [#allocation17], %s447
          %s449 = sshll.u32 %s9, 4
          %s450 = int_to_ptr.vmem [resolvable:$true] %s449
          %455 = dma.vmem_to_smem %s450, 256, [#allocation18], [#allocation17], 128, 128, 8
        $region48: #{dsc_block_forward.1} parent=11 // pred_fallthru
          _
        // Predicated region
        $region49: #{dsc_block_forward.1} parent=11 // pred_check
          %p456 = pneg %p268
        $region50: #{dsc_block_forward.1} parent=11 // pred_check_branch
          %458 = sbr.rel (%p456) target = $region52
        $region51: #{dsc_block_forward.1} parent=11 // pred_region
          %s460 = ssub.s32 16, 16
          %461 = vsyncadd [#allocation20], %s460
          %s463 = sshll.u32 %s10, 4
          %s464 = int_to_ptr.vmem [resolvable:$true] %s463
          %466 = dma.vmem_to_smem %s464, 16, [#allocation19], [#allocation20]
        $region52: #{dsc_block_forward.1} parent=11 // pred_fallthru
          _
        // Predicated region
        $region53: #{dsc_block_forward.1} parent=11 // pred_check
          %p467 = pneg %p289
        $region54: #{dsc_block_forward.1} parent=11 // pred_check_branch
          %469 = sbr.rel (%p467) target = $region56
        $region55: #{dsc_block_forward.1} parent=11 // pred_region
          %s471 = ssub.s32 128, 128
          %472 = vsyncadd [#allocation20], %s471
          %s474 = sshll.u32 %s11, 4
          %s475 = int_to_ptr.vmem [resolvable:$true] %s474
          %477 = dma.vmem_to_smem %s475, 128, [#allocation21], [#allocation20]
        $region56: #{dsc_block_forward.1} parent=11 // pred_fallthru
          _
        // Predicated region
        $region57: #{dsc_block_forward.1} parent=11 // pred_check
          %p478 = pneg %p310
        $region58: #{dsc_block_forward.1} parent=11 // pred_check_branch
          %480 = sbr.rel (%p478) target = $region60
        $region59: #{dsc_block_forward.1} parent=11 // pred_region
          %s482 = ssub.s32 16, 16
          %483 = vsyncadd [#allocation23], %s482
          %s485 = sshll.u32 %s12, 4
          %s486 = int_to_ptr.vmem [resolvable:$true] %s485
          %488 = dma.vmem_to_smem %s486, 16, [#allocation22], [#allocation23]
        $region60: #{dsc_block_forward.1} parent=11 // pred_fallthru
          _
      $region12: #{dsc_block_forward.1} parent=5 // pred_fallthru
        _
      %p489 = scmp.lt.s32.totalorder %s32, 2
      // Predicated region
      $region61: #{dsc_block_forward.1} parent=5 // pred_check
        %p490 = pneg %p489
      $region62: #{dsc_block_forward.1} parent=5 // pred_check_branch
        %492 = sbr.rel (%p490) target = $region64
      $region63: #{dsc_block_forward.1} parent=5 // pred_region
        // Predicated region
        $region65: #{dsc_block_forward.1} parent=63 // pred_check
          %p493 = pneg %p52
        $region66: #{dsc_block_forward.1} parent=63 // pred_check_branch
          %495 = sbr.rel (%p493) target = $region68
        $region67: #{dsc_block_forward.1} parent=63 // pred_region
          %s496 = sand.u32 %s42, 1
          %s497 = scalar_lea.sflag [#allocation3], %s496
          %s498 = sand.u32 %s42, 1
          %s499 = smul.addr %s498, 64
          %s500 = scalar_lea.vmem [#allocation2], %s499
          %s502 = ssub.s32 1024, 1024
          %503 = vsyncadd %s497, %s502
          %s504 = smul.addr %s32, 8
          %s505 = smul.addr %s504, 128
          %s506 = scalar_lea.hbm %s0, %s505
          %s507 = sshll.u32 %s500, 4
          %s508 = int_to_ptr.vmem [resolvable:$true] %s507
          %513 = dma.hbm_to_vmem [thread:$0]  %s506, 1024, %s508, %s497, 128, 128, 8
        $region68: #{dsc_block_forward.1} parent=63 // pred_fallthru
          _
      $region64: #{dsc_block_forward.1} parent=5 // pred_fallthru
        _
      %p514 = scmp.le.s32.totalorder 1, %s32
      %p515 = scmp.lt.s32.totalorder %s32, 3
      %p516 = pnand %p514, %p515
      %p517 = pneg %p516
      // Predicated region
      $region69: #{dsc_block_forward.1} parent=5 // pred_check
        _
      $region70: #{dsc_block_forward.1} parent=5 // pred_check_branch
        %519 = sbr.rel (%p516) target = $region72
      $region71: #{dsc_block_forward.1} parent=5 // pred_region
        %s520 = ssub.s32 %s32, 1
        %s521 = sand.u32 %s45, 1
        %s522 = scalar_lea.sflag [#allocation3], %s521
        %s523 = sand.u32 %s45, 1
        %s524 = smul.addr %s523, 64
        %s525 = scalar_lea.vmem [#allocation2], %s524
        // Predicated region
        $region73: #{dsc_block_forward.1} parent=71 // pred_check
          %p526 = pneg %p58
        $region74: #{dsc_block_forward.1} parent=71 // pred_check_branch
          %528 = sbr.rel (%p526) target = $region76
        $region75: #{dsc_block_forward.1} parent=71 // pred_region
          %529 = dma.done %s522, 1024
        $region76: #{dsc_block_forward.1} parent=71 // pred_fallthru
          _
        // Predicated region
        $region77: #{dsc_block_forward.1} parent=71 // pred_check
          %p530 = pneg %p79
        $region78: #{dsc_block_forward.1} parent=71 // pred_check_branch
          %532 = sbr.rel (%p530) target = $region80
        $region79: #{dsc_block_forward.1} parent=71 // pred_region
          %533 = dma.done [#allocation5], 256
        $region80: #{dsc_block_forward.1} parent=71 // pred_fallthru
          _
        // Predicated region
        $region81: #{dsc_block_forward.1} parent=71 // pred_check
          %p534 = pneg %p100
        $region82: #{dsc_block_forward.1} parent=71 // pred_check_branch
          %536 = sbr.rel (%p534) target = $region84
        $region83: #{dsc_block_forward.1} parent=71 // pred_region
          %537 = dma.done [#allocation8], 16
        $region84: #{dsc_block_forward.1} parent=71 // pred_fallthru
          _
        // Predicated region
        $region85: #{dsc_block_forward.1} parent=71 // pred_check
          %p538 = pneg %p121
        $region86: #{dsc_block_forward.1} parent=71 // pred_check_branch
          %540 = sbr.rel (%p538) target = $region88
        $region87: #{dsc_block_forward.1} parent=71 // pred_region
          %541 = dma.done [#allocation8], 64
        $region88: #{dsc_block_forward.1} parent=71 // pred_fallthru
          _
        // Predicated region
        $region89: #{dsc_block_forward.1} parent=71 // pred_check
          %p542 = pneg %p142
        $region90: #{dsc_block_forward.1} parent=71 // pred_check_branch
          %544 = sbr.rel (%p542) target = $region92
        $region91: #{dsc_block_forward.1} parent=71 // pred_region
          %545 = dma.done [#allocation11], 16
        $region92: #{dsc_block_forward.1} parent=71 // pred_fallthru
          _
        // Predicated region
        $region93: #{dsc_block_forward.1} parent=71 // pred_check
          %p546 = pneg %p163
        $region94: #{dsc_block_forward.1} parent=71 // pred_check_branch
          %548 = sbr.rel (%p546) target = $region96
        $region95: #{dsc_block_forward.1} parent=71 // pred_region
          %549 = dma.done [#allocation11], 256
        $region96: #{dsc_block_forward.1} parent=71 // pred_fallthru
          _
        // Predicated region
        $region97: #{dsc_block_forward.1} parent=71 // pred_check
          %p550 = pneg %p184
        $region98: #{dsc_block_forward.1} parent=71 // pred_check_branch
          %552 = sbr.rel (%p550) target = $region100
        $region99: #{dsc_block_forward.1} parent=71 // pred_region
          %553 = dma.done [#allocation14], 16
        $region100: #{dsc_block_forward.1} parent=71 // pred_fallthru
          _
        // Predicated region
        $region101: #{dsc_block_forward.1} parent=71 // pred_check
          %p554 = pneg %p205
        $region102: #{dsc_block_forward.1} parent=71 // pred_check_branch
          %556 = sbr.rel (%p554) target = $region104
        $region103: #{dsc_block_forward.1} parent=71 // pred_region
          %557 = dma.done [#allocation14], 128
        $region104: #{dsc_block_forward.1} parent=71 // pred_fallthru
          _
        // Predicated region
        $region105: #{dsc_block_forward.1} parent=71 // pred_check
          %p558 = pneg %p226
        $region106: #{dsc_block_forward.1} parent=71 // pred_check_branch
          %560 = sbr.rel (%p558) target = $region108
        $region107: #{dsc_block_forward.1} parent=71 // pred_region
          %561 = dma.done [#allocation17], 16
        $region108: #{dsc_block_forward.1} parent=71 // pred_fallthru
          _
        // Predicated region
        $region109: #{dsc_block_forward.1} parent=71 // pred_check
          %p562 = pneg %p247
        $region110: #{dsc_block_forward.1} parent=71 // pred_check_branch
          %564 = sbr.rel (%p562) target = $region112
        $region111: #{dsc_block_forward.1} parent=71 // pred_region
          %565 = dma.done [#allocation17], 256
        $region112: #{dsc_block_forward.1} parent=71 // pred_fallthru
          _
        // Predicated region
        $region113: #{dsc_block_forward.1} parent=71 // pred_check
          %p566 = pneg %p268
        $region114: #{dsc_block_forward.1} parent=71 // pred_check_branch
          %568 = sbr.rel (%p566) target = $region116
        $region115: #{dsc_block_forward.1} parent=71 // pred_region
          %569 = dma.done [#allocation20], 16
        $region116: #{dsc_block_forward.1} parent=71 // pred_fallthru
          _
        // Predicated region
        $region117: #{dsc_block_forward.1} parent=71 // pred_check
          %p570 = pneg %p289
        $region118: #{dsc_block_forward.1} parent=71 // pred_check_branch
          %572 = sbr.rel (%p570) target = $region120
        $region119: #{dsc_block_forward.1} parent=71 // pred_region
          %573 = dma.done [#allocation20], 128
        $region120: #{dsc_block_forward.1} parent=71 // pred_fallthru
          _
        // Predicated region
        $region121: #{dsc_block_forward.1} parent=71 // pred_check
          %p574 = pneg %p310
        $region122: #{dsc_block_forward.1} parent=71 // pred_check_branch
          %576 = sbr.rel (%p574) target = $region124
        $region123: #{dsc_block_forward.1} parent=71 // pred_region
          %577 = dma.done [#allocation23], 16
        $region124: #{dsc_block_forward.1} parent=71 // pred_fallthru
          _
        %578 = sfence
        %s579 = sand.u32 %s45, 1
        %s580 = scalar_lea.sflag [#allocation3], %s579
        %s581 = sand.u32 %s45, 1
        %s582 = smul.addr %s581, 64
        %s583 = scalar_lea.vmem [#allocation2], %s582
        %p584 = pneg %p58
        %p585 = pneg %p55
        %p586 = pneg %p79
        %p587 = pneg %p76
        %p588 = pneg %p100
        %p589 = pneg %p97
        %p590 = pneg %p121
        %p591 = pneg %p118
        %p592 = pneg %p142
        %p593 = pneg %p139
        %p594 = pneg %p163
        %p595 = pneg %p160
        %p596 = pneg %p184
        %p597 = pneg %p181
        %p598 = pneg %p205
        %p599 = pneg %p202
        %p600 = pneg %p226
        %p601 = pneg %p223
        %p602 = pneg %p247
        %p603 = pneg %p244
        %p604 = pneg %p268
        %p605 = pneg %p265
        %p606 = pneg %p289
        %p607 = pneg %p286
        %p608 = pneg %p310
        %p609 = pneg %p307
        %p610 = pneg %p336
        %p611 = pneg %p333
        %s612 = sand.u32 %s323, 1
        %s613 = scalar_lea.sflag [#allocation4], %s612
        %s614 = sand.u32 %s323, 1
        %s615 = smul.addr %s614, 64
        %s616 = scalar_lea.vmem [#allocation24], %s615
        %v617 = vlaneseq
        %v618 = vand.u32 %v617, 127
        %v619 = vlaneseq
        %v620 = vshrl.u32 %v619, 7
        %v621 = vadd.s32 %v620, 8
        %vm622 = vcmp.ge.s32.totalorder %v618, 1
        %vm623 = vcmp.lt.s32.totalorder %v618, 15
        %vm624 = vcmp.ge.s32.totalorder %v620, 1
        %vm625 = vcmp.ge.s32.totalorder %v621, 1
        %vm626 = vcmp.lt.s32.totalorder %v620, 15
        %vm627 = vcmp.lt.s32.totalorder %v621, 15
        %v628 = vmul.u32 %v620, 2
        %v629 = vadd.s32 %v628, 4294967295
        %vm630 = vcmp.eq.s32.totalorder %v618, %v629
        %v631 = vsel %vm630, 1.0, 0.0
        %vm632 = vcmp.eq.s32.totalorder %v618, %v628
        %v633 = vsel %vm632, 1.0, 0.0
        %v634 = vadd.s32 %v628, 1
        %vm635 = vcmp.eq.s32.totalorder %v618, %v634
        %v636 = vsel %vm635, 1.0, 0.0
        %v637 = vld [vmem:[%s525] sm:$0xff]
        %v638 = vld [vmem:[%s525 + $0x8] sm:$0xff]
        %vm639 = vcmask 1047680
        %640 = vrot.lane.b32.xlu0 %v637, 16
        %v641 = vpop.permute.xlu0 %640
        %v642 = vsel %vm639, %v641, %v637
        %643 = vrot.lane.b32.xlu0 %v638, 16
        %v644 = vpop.permute.xlu0 %643
        %v645 = vsel %vm639, %v644, %v638
        %646 = vrot.lane.b32.xlu0 %v642, 16
        %v647 = vpop.permute.xlu0 %646
        %648 = vrot.lane.b32.xlu0 %v645, 16
        %v649 = vpop.permute.xlu0 %648
        %v650 = vsel %vm639, %v647, %v637
        %v651 = vsel %vm639, %v649, %v638
        %654 = vrot.lane.b32.xlu0 %v650, 113
        %v655 = vpop.permute.xlu0 %654
        %656 = vrot.lane.b32.xlu0 %v651, 113
        %v657 = vpop.permute.xlu0 %656
        %v660 = vsel %vm622, %v655, 0.0
        %v661 = vsel %vm622, %v657, 0.0
        %662 = vrot.lane.b32.xlu0 %v650, 127
        %v663 = vpop.permute.xlu0 %662
        %664 = vrot.lane.b32.xlu0 %v651, 127
        %v665 = vpop.permute.xlu0 %664
        %v668 = vsel %vm623, %v663, 0.0
        %v669 = vsel %vm623, %v665, 0.0
        %s670 = sld [smem:[#allocation6]]
        %v671 = vstv %s670
        %v672 = vmul.f32 %v671, %v660
        %v673 = vmul.f32 %v671, %v661
        %s674 = sld [smem:[#allocation6 + $0x80]]
        %v675 = vstv %s674
        %v676 = vmul.f32 %v675, %v637
        %v677 = vmul.f32 %v675, %v638
        %v678 = vadd.f32 %v672, %v676
        %v679 = vadd.f32 %v673, %v677
        %s680 = sld [smem:[#allocation6 + $0x100]]
        %v681 = vstv %s680
        %v682 = vmul.f32 %v681, %v668
        %v683 = vmul.f32 %v681, %v669
        %v684 = vadd.f32 %v678, %v682
        %v685 = vadd.f32 %v679, %v683
        %v686 = vrot.slane %v684, 7
        %v687 = vrot.slane %v685, 7
        %vm688 = vcmp.lt.s32.totalorder %v620, 1
        %v689 = vsel %vm688, %v686, %v687
        %v690 = vsel %vm688, %v687, %v686
        %v691 = vsel %vm624, %v690, 0.0
        %v692 = vsel %vm625, %v689, 0.0
        %s693 = sld [smem:[#allocation6 + $0x180]]
        %v694 = vstv %s693
        %v695 = vmul.f32 %v694, %v660
        %v696 = vmul.f32 %v694, %v661
        %s697 = sld [smem:[#allocation6 + $0x200]]
        %v698 = vstv %s697
        %v699 = vmul.f32 %v698, %v637
        %v700 = vmul.f32 %v698, %v638
        %v701 = vadd.f32 %v695, %v699
        %v702 = vadd.f32 %v696, %v700
        %s703 = sld [smem:[#allocation6 + $0x280]]
        %v704 = vstv %s703
        %v705 = vmul.f32 %v704, %v668
        %v706 = vmul.f32 %v704, %v669
        %v707 = vadd.f32 %v701, %v705
        %v708 = vadd.f32 %v702, %v706
        %v709 = vadd.f32 %v691, %v707
        %v710 = vadd.f32 %v692, %v708
        %s711 = sld [smem:[#allocation6 + $0x300]]
        %v712 = vstv %s711
        %v713 = vmul.f32 %v712, %v660
        %v714 = vmul.f32 %v712, %v661
        %s715 = sld [smem:[#allocation6 + $0x380]]
        %v716 = vstv %s715
        %v717 = vmul.f32 %v716, %v637
        %v718 = vmul.f32 %v716, %v638
        %v719 = vadd.f32 %v713, %v717
        %v720 = vadd.f32 %v714, %v718
        %s721 = sld [smem:[#allocation6 + $0x400]]
        %v722 = vstv %s721
        %v723 = vmul.f32 %v722, %v668
        %v724 = vmul.f32 %v722, %v669
        %v725 = vadd.f32 %v719, %v723
        %v726 = vadd.f32 %v720, %v724
        %v727 = vrot.slane %v725, 1
        %v728 = vrot.slane %v726, 1
        %vm729 = vcmp.lt.s32.totalorder %v620, 7
        %v730 = vsel %vm729, %v727, %v728
        %v731 = vsel %vm729, %v728, %v727
        %v732 = vsel %vm626, %v730, 0.0
        %v733 = vsel %vm627, %v731, 0.0
        %v734 = vadd.f32 %v709, %v732
        %v735 = vadd.f32 %v710, %v733
        %s736 = sld [smem:[#allocation7]]
        %v737 = vstv %s736
        %v738 = vadd.f32 %v734, %v737
        %v739 = vadd.f32 %v735, %v737
        %s740 = scalar_lea.vmem %s525, 16 [#allocation2]
        %v741 = vld [vmem:[%s740] sm:$0xff]
        %v742 = vld [vmem:[%s740 + $0x8] sm:$0xff]
        %743 = vrot.lane.b32.xlu0 %v741, 16
        %v744 = vpop.permute.xlu0 %743
        %v745 = vsel %vm639, %v744, %v741
        %746 = vrot.lane.b32.xlu0 %v742, 16
        %v747 = vpop.permute.xlu0 %746
        %v748 = vsel %vm639, %v747, %v742
        %749 = vrot.lane.b32.xlu0 %v745, 16
        %v750 = vpop.permute.xlu0 %749
        %751 = vrot.lane.b32.xlu0 %v748, 16
        %v752 = vpop.permute.xlu0 %751
        %v753 = vsel %vm639, %v750, %v741
        %v754 = vsel %vm639, %v752, %v742
        %757 = vrot.lane.b32.xlu0 %v753, 113
        %v758 = vpop.permute.xlu0 %757
        %759 = vrot.lane.b32.xlu0 %v754, 113
        %v760 = vpop.permute.xlu0 %759
        %v763 = vsel %vm622, %v758, 0.0
        %v764 = vsel %vm622, %v760, 0.0
        %765 = vrot.lane.b32.xlu0 %v753, 127
        %v766 = vpop.permute.xlu0 %765
        %767 = vrot.lane.b32.xlu0 %v754, 127
        %v768 = vpop.permute.xlu0 %767
        %v771 = vsel %vm623, %v766, 0.0
        %v772 = vsel %vm623, %v768, 0.0
        %s773 = sld [smem:[#allocation6 + $0x1]]
        %v774 = vstv %s773
        %v775 = vmul.f32 %v774, %v763
        %v776 = vmul.f32 %v774, %v764
        %s777 = sld [smem:[#allocation6 + $0x81]]
        %v778 = vstv %s777
        %v779 = vmul.f32 %v778, %v741
        %v780 = vmul.f32 %v778, %v742
        %v781 = vadd.f32 %v775, %v779
        %v782 = vadd.f32 %v776, %v780
        %s783 = sld [smem:[#allocation6 + $0x101]]
        %v784 = vstv %s783
        %v785 = vmul.f32 %v784, %v771
        %v786 = vmul.f32 %v784, %v772
        %v787 = vadd.f32 %v781, %v785
        %v788 = vadd.f32 %v782, %v786
        %v789 = vrot.slane %v787, 7
        %v790 = vrot.slane %v788, 7
        %v791 = vsel %vm688, %v789, %v790
        %v792 = vsel %vm688, %v790, %v789
        %v793 = vsel %vm624, %v792, 0.0
        %v794 = vsel %vm625, %v791, 0.0
        %s795 = sld [smem:[#allocation6 + $0x181]]
        %v796 = vstv %s795
        %v797 = vmul.f32 %v796, %v763
        %v798 = vmul.f32 %v796, %v764
        %s799 = sld [smem:[#allocation6 + $0x201]]
        %v800 = vstv %s799
        %v801 = vmul.f32 %v800, %v741
        %v802 = vmul.f32 %v800, %v742
        %v803 = vadd.f32 %v797, %v801
        %v804 = vadd.f32 %v798, %v802
        %s805 = sld [smem:[#allocation6 + $0x281]]
        %v806 = vstv %s805
        %v807 = vmul.f32 %v806, %v771
        %v808 = vmul.f32 %v806, %v772
        %v809 = vadd.f32 %v803, %v807
        %v810 = vadd.f32 %v804, %v808
        %v811 = vadd.f32 %v793, %v809
        %v812 = vadd.f32 %v794, %v810
        %s813 = sld [smem:[#allocation6 + $0x301]]
        %v814 = vstv %s813
        %v815 = vmul.f32 %v814, %v763
        %v816 = vmul.f32 %v814, %v764
        %s817 = sld [smem:[#allocation6 + $0x381]]
        %v818 = vstv %s817
        %v819 = vmul.f32 %v818, %v741
        %v820 = vmul.f32 %v818, %v742
        %v821 = vadd.f32 %v815, %v819
        %v822 = vadd.f32 %v816, %v820
        %s823 = sld [smem:[#allocation6 + $0x401]]
        %v824 = vstv %s823
        %v825 = vmul.f32 %v824, %v771
        %v826 = vmul.f32 %v824, %v772
        %v827 = vadd.f32 %v821, %v825
        %v828 = vadd.f32 %v822, %v826
        %v829 = vrot.slane %v827, 1
        %v830 = vrot.slane %v828, 1
        %v831 = vsel %vm729, %v829, %v830
        %v832 = vsel %vm729, %v830, %v829
        %v833 = vsel %vm626, %v831, 0.0
        %v834 = vsel %vm627, %v832, 0.0
        %v835 = vadd.f32 %v811, %v833
        %v836 = vadd.f32 %v812, %v834
        %s837 = sld [smem:[#allocation7 + $0x1]]
        %v838 = vstv %s837
        %v839 = vadd.f32 %v835, %v838
        %v840 = vadd.f32 %v836, %v838
        %s841 = scalar_lea.vmem %s525, 32 [#allocation2]
        %v842 = vld [vmem:[%s841] sm:$0xff]
        %v843 = vld [vmem:[%s841 + $0x8] sm:$0xff]
        %844 = vrot.lane.b32.xlu0 %v842, 16
        %v845 = vpop.permute.xlu0 %844
        %v846 = vsel %vm639, %v845, %v842
        %847 = vrot.lane.b32.xlu0 %v843, 16
        %v848 = vpop.permute.xlu0 %847
        %v849 = vsel %vm639, %v848, %v843
        %850 = vrot.lane.b32.xlu0 %v846, 16
        %v851 = vpop.permute.xlu0 %850
        %852 = vrot.lane.b32.xlu0 %v849, 16
        %v853 = vpop.permute.xlu0 %852
        %v854 = vsel %vm639, %v851, %v842
        %v855 = vsel %vm639, %v853, %v843
        %858 = vrot.lane.b32.xlu0 %v854, 113
        %v859 = vpop.permute.xlu0 %858
        %860 = vrot.lane.b32.xlu0 %v855, 113
        %v861 = vpop.permute.xlu0 %860
        %v864 = vsel %vm622, %v859, 0.0
        %v865 = vsel %vm622, %v861, 0.0
        %866 = vrot.lane.b32.xlu0 %v854, 127
        %v867 = vpop.permute.xlu0 %866
        %868 = vrot.lane.b32.xlu0 %v855, 127
        %v869 = vpop.permute.xlu0 %868
        %v872 = vsel %vm623, %v867, 0.0
        %v873 = vsel %vm623, %v869, 0.0
        %s874 = sld [smem:[#allocation6 + $0x2]]
        %v875 = vstv %s874
        %v876 = vmul.f32 %v875, %v864
        %v877 = vmul.f32 %v875, %v865
        %s878 = sld [smem:[#allocation6 + $0x82]]
        %v879 = vstv %s878
        %v880 = vmul.f32 %v879, %v842
        %v881 = vmul.f32 %v879, %v843
        %v882 = vadd.f32 %v876, %v880
        %v883 = vadd.f32 %v877, %v881
        %s884 = sld [smem:[#allocation6 + $0x102]]
        %v885 = vstv %s884
        %v886 = vmul.f32 %v885, %v872
        %v887 = vmul.f32 %v885, %v873
        %v888 = vadd.f32 %v882, %v886
        %v889 = vadd.f32 %v883, %v887
        %v890 = vrot.slane %v888, 7
        %v891 = vrot.slane %v889, 7
        %v892 = vsel %vm688, %v890, %v891
        %v893 = vsel %vm688, %v891, %v890
        %v894 = vsel %vm624, %v893, 0.0
        %v895 = vsel %vm625, %v892, 0.0
        %s896 = sld [smem:[#allocation6 + $0x182]]
        %v897 = vstv %s896
        %v898 = vmul.f32 %v897, %v864
        %v899 = vmul.f32 %v897, %v865
        %s900 = sld [smem:[#allocation6 + $0x202]]
        %v901 = vstv %s900
        %v902 = vmul.f32 %v901, %v842
        %v903 = vmul.f32 %v901, %v843
        %v904 = vadd.f32 %v898, %v902
        %v905 = vadd.f32 %v899, %v903
        %s906 = sld [smem:[#allocation6 + $0x282]]
        %v907 = vstv %s906
        %v908 = vmul.f32 %v907, %v872
        %v909 = vmul.f32 %v907, %v873
        %v910 = vadd.f32 %v904, %v908
        %v911 = vadd.f32 %v905, %v909
        %v912 = vadd.f32 %v894, %v910
        %v913 = vadd.f32 %v895, %v911
        %s914 = sld [smem:[#allocation6 + $0x302]]
        %v915 = vstv %s914
        %v916 = vmul.f32 %v915, %v864
        %v917 = vmul.f32 %v915, %v865
        %s918 = sld [smem:[#allocation6 + $0x382]]
        %v919 = vstv %s918
        %v920 = vmul.f32 %v919, %v842
        %v921 = vmul.f32 %v919, %v843
        %v922 = vadd.f32 %v916, %v920
        %v923 = vadd.f32 %v917, %v921
        %s924 = sld [smem:[#allocation6 + $0x402]]
        %v925 = vstv %s924
        %v926 = vmul.f32 %v925, %v872
        %v927 = vmul.f32 %v925, %v873
        %v928 = vadd.f32 %v922, %v926
        %v929 = vadd.f32 %v923, %v927
        %v930 = vrot.slane %v928, 1
        %v931 = vrot.slane %v929, 1
        %v932 = vsel %vm729, %v930, %v931
        %v933 = vsel %vm729, %v931, %v930
        %v934 = vsel %vm626, %v932, 0.0
        %v935 = vsel %vm627, %v933, 0.0
        %v936 = vadd.f32 %v912, %v934
        %v937 = vadd.f32 %v913, %v935
        %s938 = sld [smem:[#allocation7 + $0x2]]
        %v939 = vstv %s938
        %v940 = vadd.f32 %v936, %v939
        %v941 = vadd.f32 %v937, %v939
        %s942 = scalar_lea.vmem %s525, 48 [#allocation2]
        %v943 = vld [vmem:[%s942] sm:$0xff]
        %v944 = vld [vmem:[%s942 + $0x8] sm:$0xff]
        %945 = vrot.lane.b32.xlu0 %v943, 16
        %v946 = vpop.permute.xlu0 %945
        %v947 = vsel %vm639, %v946, %v943
        %948 = vrot.lane.b32.xlu0 %v944, 16
        %v949 = vpop.permute.xlu0 %948
        %v950 = vsel %vm639, %v949, %v944
        %951 = vrot.lane.b32.xlu0 %v947, 16
        %v952 = vpop.permute.xlu0 %951
        %953 = vrot.lane.b32.xlu0 %v950, 16
        %v954 = vpop.permute.xlu0 %953
        %v955 = vsel %vm639, %v952, %v943
        %v956 = vsel %vm639, %v954, %v944
        %959 = vrot.lane.b32.xlu0 %v955, 113
        %v960 = vpop.permute.xlu0 %959
        %961 = vrot.lane.b32.xlu0 %v956, 113
        %v962 = vpop.permute.xlu0 %961
        %v965 = vsel %vm622, %v960, 0.0
        %v966 = vsel %vm622, %v962, 0.0
        %967 = vrot.lane.b32.xlu0 %v955, 127
        %v968 = vpop.permute.xlu0 %967
        %969 = vrot.lane.b32.xlu0 %v956, 127
        %v970 = vpop.permute.xlu0 %969
        %v973 = vsel %vm623, %v968, 0.0
        %v974 = vsel %vm623, %v970, 0.0
        %s975 = sld [smem:[#allocation6 + $0x3]]
        %v976 = vstv %s975
        %v977 = vmul.f32 %v976, %v965
        %v978 = vmul.f32 %v976, %v966
        %s979 = sld [smem:[#allocation6 + $0x83]]
        %v980 = vstv %s979
        %v981 = vmul.f32 %v980, %v943
        %v982 = vmul.f32 %v980, %v944
        %v983 = vadd.f32 %v977, %v981
        %v984 = vadd.f32 %v978, %v982
        %s985 = sld [smem:[#allocation6 + $0x103]]
        %v986 = vstv %s985
        %v987 = vmul.f32 %v986, %v973
        %v988 = vmul.f32 %v986, %v974
        %v989 = vadd.f32 %v983, %v987
        %v990 = vadd.f32 %v984, %v988
        %v991 = vrot.slane %v989, 7
        %v992 = vrot.slane %v990, 7
        %v993 = vsel %vm688, %v991, %v992
        %v994 = vsel %vm688, %v992, %v991
        %v995 = vsel %vm624, %v994, 0.0
        %v996 = vsel %vm625, %v993, 0.0
        %s997 = sld [smem:[#allocation6 + $0x183]]
        %v998 = vstv %s997
        %v999 = vmul.f32 %v998, %v965
        %v1000 = vmul.f32 %v998, %v966
        %s1001 = sld [smem:[#allocation6 + $0x203]]
        %v1002 = vstv %s1001
        %v1003 = vmul.f32 %v1002, %v943
        %v1004 = vmul.f32 %v1002, %v944
        %v1005 = vadd.f32 %v999, %v1003
        %v1006 = vadd.f32 %v1000, %v1004
        %s1007 = sld [smem:[#allocation6 + $0x283]]
        %v1008 = vstv %s1007
        %v1009 = vmul.f32 %v1008, %v973
        %v1010 = vmul.f32 %v1008, %v974
        %v1011 = vadd.f32 %v1005, %v1009
        %v1012 = vadd.f32 %v1006, %v1010
        %v1013 = vadd.f32 %v995, %v1011
        %v1014 = vadd.f32 %v996, %v1012
        %s1015 = sld [smem:[#allocation6 + $0x303]]
        %v1016 = vstv %s1015
        %v1017 = vmul.f32 %v1016, %v965
        %v1018 = vmul.f32 %v1016, %v966
        %s1019 = sld [smem:[#allocation6 + $0x383]]
        %v1020 = vstv %s1019
        %v1021 = vmul.f32 %v1020, %v943
        %v1022 = vmul.f32 %v1020, %v944
        %v1023 = vadd.f32 %v1017, %v1021
        %v1024 = vadd.f32 %v1018, %v1022
        %s1025 = sld [smem:[#allocation6 + $0x403]]
        %v1026 = vstv %s1025
        %v1027 = vmul.f32 %v1026, %v973
        %v1028 = vmul.f32 %v1026, %v974
        %v1029 = vadd.f32 %v1023, %v1027
        %v1030 = vadd.f32 %v1024, %v1028
        %v1031 = vrot.slane %v1029, 1
        %v1032 = vrot.slane %v1030, 1
        %v1033 = vsel %vm729, %v1031, %v1032
        %v1034 = vsel %vm729, %v1032, %v1031
        %v1035 = vsel %vm626, %v1033, 0.0
        %v1036 = vsel %vm627, %v1034, 0.0
        %v1037 = vadd.f32 %v1013, %v1035
        %v1038 = vadd.f32 %v1014, %v1036
        %s1039 = sld [smem:[#allocation7 + $0x3]]
        %v1040 = vstv %s1039
        %v1041 = vadd.f32 %v1037, %v1040
        %v1042 = vadd.f32 %v1038, %v1040
        %s1043 = sld [smem:[#allocation10]]
        %s1044 = sld [smem:[#allocation9]]
        %v1045 = vstv %s1044
        %v1046 = vmul.f32 %v1045, %v738
        %v1047 = vmul.f32 %v1045, %v739
        %v1048 = vstv %s1043
        %v1049 = vadd.f32 %v1048, %v1046
        %v1050 = vadd.f32 %v1048, %v1047
        %s1051 = sld [smem:[#allocation9 + $0x80]]
        %v1052 = vstv %s1051
        %v1053 = vmul.f32 %v1052, %v839
        %v1054 = vmul.f32 %v1052, %v840
        %v1055 = vadd.f32 %v1049, %v1053
        %v1056 = vadd.f32 %v1050, %v1054
        %s1057 = sld [smem:[#allocation9 + $0x100]]
        %v1058 = vstv %s1057
        %v1059 = vmul.f32 %v1058, %v940
        %v1060 = vmul.f32 %v1058, %v941
        %v1061 = vadd.f32 %v1055, %v1059
        %v1062 = vadd.f32 %v1056, %v1060
        %s1063 = sld [smem:[#allocation9 + $0x180]]
        %v1064 = vstv %s1063
        %v1065 = vmul.f32 %v1064, %v1041
        %v1066 = vmul.f32 %v1064, %v1042
        %v1067 = vadd.f32 %v1061, %v1065
        %v1068 = vadd.f32 %v1062, %v1066
        %v1069 = vmax.f32 %v1067, 0.0
        %v1070 = vmax.f32 %v1068, 0.0
        %s1071 = sld [smem:[#allocation10 + $0x1]]
        %s1072 = sld [smem:[#allocation9 + $0x1]]
        %v1073 = vstv %s1072
        %v1074 = vmul.f32 %v1073, %v738
        %v1075 = vmul.f32 %v1073, %v739
        %v1076 = vstv %s1071
        %v1077 = vadd.f32 %v1076, %v1074
        %v1078 = vadd.f32 %v1076, %v1075
        %s1079 = sld [smem:[#allocation9 + $0x81]]
        %v1080 = vstv %s1079
        %v1081 = vmul.f32 %v1080, %v839
        %v1082 = vmul.f32 %v1080, %v840
        %v1083 = vadd.f32 %v1077, %v1081
        %v1084 = vadd.f32 %v1078, %v1082
        %s1085 = sld [smem:[#allocation9 + $0x101]]
        %v1086 = vstv %s1085
        %v1087 = vmul.f32 %v1086, %v940
        %v1088 = vmul.f32 %v1086, %v941
        %v1089 = vadd.f32 %v1083, %v1087
        %v1090 = vadd.f32 %v1084, %v1088
        %s1091 = sld [smem:[#allocation9 + $0x181]]
        %v1092 = vstv %s1091
        %v1093 = vmul.f32 %v1092, %v1041
        %v1094 = vmul.f32 %v1092, %v1042
        %v1095 = vadd.f32 %v1089, %v1093
        %v1096 = vadd.f32 %v1090, %v1094
        %v1097 = vmax.f32 %v1095, 0.0
        %v1098 = vmax.f32 %v1096, 0.0
        %s1099 = sld [smem:[#allocation10 + $0x2]]
        %s1100 = sld [smem:[#allocation9 + $0x2]]
        %v1101 = vstv %s1100
        %v1102 = vmul.f32 %v1101, %v738
        %v1103 = vmul.f32 %v1101, %v739
        %v1104 = vstv %s1099
        %v1105 = vadd.f32 %v1104, %v1102
        %v1106 = vadd.f32 %v1104, %v1103
        %s1107 = sld [smem:[#allocation9 + $0x82]]
        %v1108 = vstv %s1107
        %v1109 = vmul.f32 %v1108, %v839
        %v1110 = vmul.f32 %v1108, %v840
        %v1111 = vadd.f32 %v1105, %v1109
        %v1112 = vadd.f32 %v1106, %v1110
        %s1113 = sld [smem:[#allocation9 + $0x102]]
        %v1114 = vstv %s1113
        %v1115 = vmul.f32 %v1114, %v940
        %v1116 = vmul.f32 %v1114, %v941
        %v1117 = vadd.f32 %v1111, %v1115
        %v1118 = vadd.f32 %v1112, %v1116
        %s1119 = sld [smem:[#allocation9 + $0x182]]
        %v1120 = vstv %s1119
        %v1121 = vmul.f32 %v1120, %v1041
        %v1122 = vmul.f32 %v1120, %v1042
        %v1123 = vadd.f32 %v1117, %v1121
        %v1124 = vadd.f32 %v1118, %v1122
        %v1125 = vmax.f32 %v1123, 0.0
        %v1126 = vmax.f32 %v1124, 0.0
        %s1127 = sld [smem:[#allocation10 + $0x3]]
        %s1128 = sld [smem:[#allocation9 + $0x3]]
        %v1129 = vstv %s1128
        %v1130 = vmul.f32 %v1129, %v738
        %v1131 = vmul.f32 %v1129, %v739
        %v1132 = vstv %s1127
        %v1133 = vadd.f32 %v1132, %v1130
        %v1134 = vadd.f32 %v1132, %v1131
        %s1135 = sld [smem:[#allocation9 + $0x83]]
        %v1136 = vstv %s1135
        %v1137 = vmul.f32 %v1136, %v839
        %v1138 = vmul.f32 %v1136, %v840
        %v1139 = vadd.f32 %v1133, %v1137
        %v1140 = vadd.f32 %v1134, %v1138
        %s1141 = sld [smem:[#allocation9 + $0x103]]
        %v1142 = vstv %s1141
        %v1143 = vmul.f32 %v1142, %v940
        %v1144 = vmul.f32 %v1142, %v941
        %v1145 = vadd.f32 %v1139, %v1143
        %v1146 = vadd.f32 %v1140, %v1144
        %s1147 = sld [smem:[#allocation9 + $0x183]]
        %v1148 = vstv %s1147
        %v1149 = vmul.f32 %v1148, %v1041
        %v1150 = vmul.f32 %v1148, %v1042
        %v1151 = vadd.f32 %v1145, %v1149
        %v1152 = vadd.f32 %v1146, %v1150
        %v1153 = vmax.f32 %v1151, 0.0
        %v1154 = vmax.f32 %v1152, 0.0
        %s1155 = sld [smem:[#allocation10 + $0x4]]
        %s1156 = sld [smem:[#allocation9 + $0x4]]
        %v1157 = vstv %s1156
        %v1158 = vmul.f32 %v1157, %v738
        %v1159 = vmul.f32 %v1157, %v739
        %v1160 = vstv %s1155
        %v1161 = vadd.f32 %v1160, %v1158
        %v1162 = vadd.f32 %v1160, %v1159
        %s1163 = sld [smem:[#allocation9 + $0x84]]
        %v1164 = vstv %s1163
        %v1165 = vmul.f32 %v1164, %v839
        %v1166 = vmul.f32 %v1164, %v840
        %v1167 = vadd.f32 %v1161, %v1165
        %v1168 = vadd.f32 %v1162, %v1166
        %s1169 = sld [smem:[#allocation9 + $0x104]]
        %v1170 = vstv %s1169
        %v1171 = vmul.f32 %v1170, %v940
        %v1172 = vmul.f32 %v1170, %v941
        %v1173 = vadd.f32 %v1167, %v1171
        %v1174 = vadd.f32 %v1168, %v1172
        %s1175 = sld [smem:[#allocation9 + $0x184]]
        %v1176 = vstv %s1175
        %v1177 = vmul.f32 %v1176, %v1041
        %v1178 = vmul.f32 %v1176, %v1042
        %v1179 = vadd.f32 %v1173, %v1177
        %v1180 = vadd.f32 %v1174, %v1178
        %v1181 = vmax.f32 %v1179, 0.0
        %v1182 = vmax.f32 %v1180, 0.0
        %s1183 = sld [smem:[#allocation10 + $0x5]]
        %s1184 = sld [smem:[#allocation9 + $0x5]]
        %v1185 = vstv %s1184
        %v1186 = vmul.f32 %v1185, %v738
        %v1187 = vmul.f32 %v1185, %v739
        %v1188 = vstv %s1183
        %v1189 = vadd.f32 %v1188, %v1186
        %v1190 = vadd.f32 %v1188, %v1187
        %s1191 = sld [smem:[#allocation9 + $0x85]]
        %v1192 = vstv %s1191
        %v1193 = vmul.f32 %v1192, %v839
        %v1194 = vmul.f32 %v1192, %v840
        %v1195 = vadd.f32 %v1189, %v1193
        %v1196 = vadd.f32 %v1190, %v1194
        %s1197 = sld [smem:[#allocation9 + $0x105]]
        %v1198 = vstv %s1197
        %v1199 = vmul.f32 %v1198, %v940
        %v1200 = vmul.f32 %v1198, %v941
        %v1201 = vadd.f32 %v1195, %v1199
        %v1202 = vadd.f32 %v1196, %v1200
        %s1203 = sld [smem:[#allocation9 + $0x185]]
        %v1204 = vstv %s1203
        %v1205 = vmul.f32 %v1204, %v1041
        %v1206 = vmul.f32 %v1204, %v1042
        %v1207 = vadd.f32 %v1201, %v1205
        %v1208 = vadd.f32 %v1202, %v1206
        %v1209 = vmax.f32 %v1207, 0.0
        %v1210 = vmax.f32 %v1208, 0.0
        %s1211 = sld [smem:[#allocation10 + $0x6]]
        %s1212 = sld [smem:[#allocation9 + $0x6]]
        %v1213 = vstv %s1212
        %v1214 = vmul.f32 %v1213, %v738
        %v1215 = vmul.f32 %v1213, %v739
        %v1216 = vstv %s1211
        %v1217 = vadd.f32 %v1216, %v1214
        %v1218 = vadd.f32 %v1216, %v1215
        %s1219 = sld [smem:[#allocation9 + $0x86]]
        %v1220 = vstv %s1219
        %v1221 = vmul.f32 %v1220, %v839
        %v1222 = vmul.f32 %v1220, %v840
        %v1223 = vadd.f32 %v1217, %v1221
        %v1224 = vadd.f32 %v1218, %v1222
        %s1225 = sld [smem:[#allocation9 + $0x106]]
        %v1226 = vstv %s1225
        %v1227 = vmul.f32 %v1226, %v940
        %v1228 = vmul.f32 %v1226, %v941
        %v1229 = vadd.f32 %v1223, %v1227
        %v1230 = vadd.f32 %v1224, %v1228
        %s1231 = sld [smem:[#allocation9 + $0x186]]
        %v1232 = vstv %s1231
        %v1233 = vmul.f32 %v1232, %v1041
        %v1234 = vmul.f32 %v1232, %v1042
        %v1235 = vadd.f32 %v1229, %v1233
        %v1236 = vadd.f32 %v1230, %v1234
        %v1237 = vmax.f32 %v1235, 0.0
        %v1238 = vmax.f32 %v1236, 0.0
        %s1239 = sld [smem:[#allocation10 + $0x7]]
        %s1240 = sld [smem:[#allocation9 + $0x7]]
        %v1241 = vstv %s1240
        %v1242 = vmul.f32 %v1241, %v738
        %v1243 = vmul.f32 %v1241, %v739
        %v1244 = vstv %s1239
        %v1245 = vadd.f32 %v1244, %v1242
        %v1246 = vadd.f32 %v1244, %v1243
        %s1247 = sld [smem:[#allocation9 + $0x87]]
        %v1248 = vstv %s1247
        %v1249 = vmul.f32 %v1248, %v839
        %v1250 = vmul.f32 %v1248, %v840
        %v1251 = vadd.f32 %v1245, %v1249
        %v1252 = vadd.f32 %v1246, %v1250
        %s1253 = sld [smem:[#allocation9 + $0x107]]
        %v1254 = vstv %s1253
        %v1255 = vmul.f32 %v1254, %v940
        %v1256 = vmul.f32 %v1254, %v941
        %v1257 = vadd.f32 %v1251, %v1255
        %v1258 = vadd.f32 %v1252, %v1256
        %s1259 = sld [smem:[#allocation9 + $0x187]]
        %v1260 = vstv %s1259
        %v1261 = vmul.f32 %v1260, %v1041
        %v1262 = vmul.f32 %v1260, %v1042
        %v1263 = vadd.f32 %v1257, %v1261
        %v1264 = vadd.f32 %v1258, %v1262
        %v1265 = vmax.f32 %v1263, 0.0
        %v1266 = vmax.f32 %v1264, 0.0
        %1267 = vrot.lane.b32.xlu0 %v1069, 16
        %v1268 = vpop.permute.xlu0 %1267
        %v1269 = vsel %vm639, %v1268, %v1069
        %1270 = vrot.lane.b32.xlu0 %v1070, 16
        %v1271 = vpop.permute.xlu0 %1270
        %v1272 = vsel %vm639, %v1271, %v1070
        %1273 = vrot.lane.b32.xlu0 %v1269, 16
        %v1274 = vpop.permute.xlu0 %1273
        %1275 = vrot.lane.b32.xlu0 %v1272, 16
        %v1276 = vpop.permute.xlu0 %1275
        %v1277 = vsel %vm639, %v1274, %v1069
        %v1278 = vsel %vm639, %v1276, %v1070
        %1281 = vrot.lane.b32.xlu0 %v1277, 113
        %v1282 = vpop.permute.xlu0 %1281
        %1283 = vrot.lane.b32.xlu0 %v1278, 113
        %v1284 = vpop.permute.xlu0 %1283
        %v1287 = vsel %vm622, %v1282, 0.0
        %v1288 = vsel %vm622, %v1284, 0.0
        %1289 = vrot.lane.b32.xlu0 %v1277, 127
        %v1290 = vpop.permute.xlu0 %1289
        %1291 = vrot.lane.b32.xlu0 %v1278, 127
        %v1292 = vpop.permute.xlu0 %1291
        %v1295 = vsel %vm623, %v1290, 0.0
        %v1296 = vsel %vm623, %v1292, 0.0
        %s1297 = sld [smem:[#allocation12]]
        %v1298 = vstv %s1297
        %v1299 = vmul.f32 %v1298, %v1287
        %v1300 = vmul.f32 %v1298, %v1288
        %s1301 = sld [smem:[#allocation12 + $0x80]]
        %v1302 = vstv %s1301
        %v1303 = vmul.f32 %v1302, %v1069
        %v1304 = vmul.f32 %v1302, %v1070
        %v1305 = vadd.f32 %v1299, %v1303
        %v1306 = vadd.f32 %v1300, %v1304
        %s1307 = sld [smem:[#allocation12 + $0x100]]
        %v1308 = vstv %s1307
        %v1309 = vmul.f32 %v1308, %v1295
        %v1310 = vmul.f32 %v1308, %v1296
        %v1311 = vadd.f32 %v1305, %v1309
        %v1312 = vadd.f32 %v1306, %v1310
        %v1313 = vrot.slane %v1311, 7
        %v1314 = vrot.slane %v1312, 7
        %v1315 = vsel %vm688, %v1313, %v1314
        %v1316 = vsel %vm688, %v1314, %v1313
        %v1317 = vsel %vm624, %v1316, 0.0
        %v1318 = vsel %vm625, %v1315, 0.0
        %s1319 = sld [smem:[#allocation12 + $0x180]]
        %v1320 = vstv %s1319
        %v1321 = vmul.f32 %v1320, %v1287
        %v1322 = vmul.f32 %v1320, %v1288
        %s1323 = sld [smem:[#allocation12 + $0x200]]
        %v1324 = vstv %s1323
        %v1325 = vmul.f32 %v1324, %v1069
        %v1326 = vmul.f32 %v1324, %v1070
        %v1327 = vadd.f32 %v1321, %v1325
        %v1328 = vadd.f32 %v1322, %v1326
        %s1329 = sld [smem:[#allocation12 + $0x280]]
        %v1330 = vstv %s1329
        %v1331 = vmul.f32 %v1330, %v1295
        %v1332 = vmul.f32 %v1330, %v1296
        %v1333 = vadd.f32 %v1327, %v1331
        %v1334 = vadd.f32 %v1328, %v1332
        %v1335 = vadd.f32 %v1317, %v1333
        %v1336 = vadd.f32 %v1318, %v1334
        %s1337 = sld [smem:[#allocation12 + $0x300]]
        %v1338 = vstv %s1337
        %v1339 = vmul.f32 %v1338, %v1287
        %v1340 = vmul.f32 %v1338, %v1288
        %s1341 = sld [smem:[#allocation12 + $0x380]]
        %v1342 = vstv %s1341
        %v1343 = vmul.f32 %v1342, %v1069
        %v1344 = vmul.f32 %v1342, %v1070
        %v1345 = vadd.f32 %v1339, %v1343
        %v1346 = vadd.f32 %v1340, %v1344
        %s1347 = sld [smem:[#allocation12 + $0x400]]
        %v1348 = vstv %s1347
        %v1349 = vmul.f32 %v1348, %v1295
        %v1350 = vmul.f32 %v1348, %v1296
        %v1351 = vadd.f32 %v1345, %v1349
        %v1352 = vadd.f32 %v1346, %v1350
        %v1353 = vrot.slane %v1351, 1
        %v1354 = vrot.slane %v1352, 1
        %v1355 = vsel %vm729, %v1353, %v1354
        %v1356 = vsel %vm729, %v1354, %v1353
        %v1357 = vsel %vm626, %v1355, 0.0
        %v1358 = vsel %vm627, %v1356, 0.0
        %v1359 = vadd.f32 %v1335, %v1357
        %v1360 = vadd.f32 %v1336, %v1358
        %s1361 = sld [smem:[#allocation13]]
        %v1362 = vstv %s1361
        %v1363 = vadd.f32 %v1359, %v1362
        %v1364 = vadd.f32 %v1360, %v1362
        %1365 = vrot.lane.b32.xlu0 %v1097, 16
        %v1366 = vpop.permute.xlu0 %1365
        %v1367 = vsel %vm639, %v1366, %v1097
        %1368 = vrot.lane.b32.xlu0 %v1098, 16
        %v1369 = vpop.permute.xlu0 %1368
        %v1370 = vsel %vm639, %v1369, %v1098
        %1371 = vrot.lane.b32.xlu0 %v1367, 16
        %v1372 = vpop.permute.xlu0 %1371
        %1373 = vrot.lane.b32.xlu0 %v1370, 16
        %v1374 = vpop.permute.xlu0 %1373
        %v1375 = vsel %vm639, %v1372, %v1097
        %v1376 = vsel %vm639, %v1374, %v1098
        %1379 = vrot.lane.b32.xlu0 %v1375, 113
        %v1380 = vpop.permute.xlu0 %1379
        %1381 = vrot.lane.b32.xlu0 %v1376, 113
        %v1382 = vpop.permute.xlu0 %1381
        %v1385 = vsel %vm622, %v1380, 0.0
        %v1386 = vsel %vm622, %v1382, 0.0
        %1387 = vrot.lane.b32.xlu0 %v1375, 127
        %v1388 = vpop.permute.xlu0 %1387
        %1389 = vrot.lane.b32.xlu0 %v1376, 127
        %v1390 = vpop.permute.xlu0 %1389
        %v1393 = vsel %vm623, %v1388, 0.0
        %v1394 = vsel %vm623, %v1390, 0.0
        %s1395 = sld [smem:[#allocation12 + $0x1]]
        %v1396 = vstv %s1395
        %v1397 = vmul.f32 %v1396, %v1385
        %v1398 = vmul.f32 %v1396, %v1386
        %s1399 = sld [smem:[#allocation12 + $0x81]]
        %v1400 = vstv %s1399
        %v1401 = vmul.f32 %v1400, %v1097
        %v1402 = vmul.f32 %v1400, %v1098
        %v1403 = vadd.f32 %v1397, %v1401
        %v1404 = vadd.f32 %v1398, %v1402
        %s1405 = sld [smem:[#allocation12 + $0x101]]
        %v1406 = vstv %s1405
        %v1407 = vmul.f32 %v1406, %v1393
        %v1408 = vmul.f32 %v1406, %v1394
        %v1409 = vadd.f32 %v1403, %v1407
        %v1410 = vadd.f32 %v1404, %v1408
        %v1411 = vrot.slane %v1409, 7
        %v1412 = vrot.slane %v1410, 7
        %v1413 = vsel %vm688, %v1411, %v1412
        %v1414 = vsel %vm688, %v1412, %v1411
        %v1415 = vsel %vm624, %v1414, 0.0
        %v1416 = vsel %vm625, %v1413, 0.0
        %s1417 = sld [smem:[#allocation12 + $0x181]]
        %v1418 = vstv %s1417
        %v1419 = vmul.f32 %v1418, %v1385
        %v1420 = vmul.f32 %v1418, %v1386
        %s1421 = sld [smem:[#allocation12 + $0x201]]
        %v1422 = vstv %s1421
        %v1423 = vmul.f32 %v1422, %v1097
        %v1424 = vmul.f32 %v1422, %v1098
        %v1425 = vadd.f32 %v1419, %v1423
        %v1426 = vadd.f32 %v1420, %v1424
        %s1427 = sld [smem:[#allocation12 + $0x281]]
        %v1428 = vstv %s1427
        %v1429 = vmul.f32 %v1428, %v1393
        %v1430 = vmul.f32 %v1428, %v1394
        %v1431 = vadd.f32 %v1425, %v1429
        %v1432 = vadd.f32 %v1426, %v1430
        %v1433 = vadd.f32 %v1415, %v1431
        %v1434 = vadd.f32 %v1416, %v1432
        %s1435 = sld [smem:[#allocation12 + $0x301]]
        %v1436 = vstv %s1435
        %v1437 = vmul.f32 %v1436, %v1385
        %v1438 = vmul.f32 %v1436, %v1386
        %s1439 = sld [smem:[#allocation12 + $0x381]]
        %v1440 = vstv %s1439
        %v1441 = vmul.f32 %v1440, %v1097
        %v1442 = vmul.f32 %v1440, %v1098
        %v1443 = vadd.f32 %v1437, %v1441
        %v1444 = vadd.f32 %v1438, %v1442
        %s1445 = sld [smem:[#allocation12 + $0x401]]
        %v1446 = vstv %s1445
        %v1447 = vmul.f32 %v1446, %v1393
        %v1448 = vmul.f32 %v1446, %v1394
        %v1449 = vadd.f32 %v1443, %v1447
        %v1450 = vadd.f32 %v1444, %v1448
        %v1451 = vrot.slane %v1449, 1
        %v1452 = vrot.slane %v1450, 1
        %v1453 = vsel %vm729, %v1451, %v1452
        %v1454 = vsel %vm729, %v1452, %v1451
        %v1455 = vsel %vm626, %v1453, 0.0
        %v1456 = vsel %vm627, %v1454, 0.0
        %v1457 = vadd.f32 %v1433, %v1455
        %v1458 = vadd.f32 %v1434, %v1456
        %s1459 = sld [smem:[#allocation13 + $0x1]]
        %v1460 = vstv %s1459
        %v1461 = vadd.f32 %v1457, %v1460
        %v1462 = vadd.f32 %v1458, %v1460
        %1463 = vrot.lane.b32.xlu0 %v1125, 16
        %v1464 = vpop.permute.xlu0 %1463
        %v1465 = vsel %vm639, %v1464, %v1125
        %1466 = vrot.lane.b32.xlu0 %v1126, 16
        %v1467 = vpop.permute.xlu0 %1466
        %v1468 = vsel %vm639, %v1467, %v1126
        %1469 = vrot.lane.b32.xlu0 %v1465, 16
        %v1470 = vpop.permute.xlu0 %1469
        %1471 = vrot.lane.b32.xlu0 %v1468, 16
        %v1472 = vpop.permute.xlu0 %1471
        %v1473 = vsel %vm639, %v1470, %v1125
        %v1474 = vsel %vm639, %v1472, %v1126
        %1477 = vrot.lane.b32.xlu0 %v1473, 113
        %v1478 = vpop.permute.xlu0 %1477
        %1479 = vrot.lane.b32.xlu0 %v1474, 113
        %v1480 = vpop.permute.xlu0 %1479
        %v1483 = vsel %vm622, %v1478, 0.0
        %v1484 = vsel %vm622, %v1480, 0.0
        %1485 = vrot.lane.b32.xlu0 %v1473, 127
        %v1486 = vpop.permute.xlu0 %1485
        %1487 = vrot.lane.b32.xlu0 %v1474, 127
        %v1488 = vpop.permute.xlu0 %1487
        %v1491 = vsel %vm623, %v1486, 0.0
        %v1492 = vsel %vm623, %v1488, 0.0
        %s1493 = sld [smem:[#allocation12 + $0x2]]
        %v1494 = vstv %s1493
        %v1495 = vmul.f32 %v1494, %v1483
        %v1496 = vmul.f32 %v1494, %v1484
        %s1497 = sld [smem:[#allocation12 + $0x82]]
        %v1498 = vstv %s1497
        %v1499 = vmul.f32 %v1498, %v1125
        %v1500 = vmul.f32 %v1498, %v1126
        %v1501 = vadd.f32 %v1495, %v1499
        %v1502 = vadd.f32 %v1496, %v1500
        %s1503 = sld [smem:[#allocation12 + $0x102]]
        %v1504 = vstv %s1503
        %v1505 = vmul.f32 %v1504, %v1491
        %v1506 = vmul.f32 %v1504, %v1492
        %v1507 = vadd.f32 %v1501, %v1505
        %v1508 = vadd.f32 %v1502, %v1506
        %v1509 = vrot.slane %v1507, 7
        %v1510 = vrot.slane %v1508, 7
        %v1511 = vsel %vm688, %v1509, %v1510
        %v1512 = vsel %vm688, %v1510, %v1509
        %v1513 = vsel %vm624, %v1512, 0.0
        %v1514 = vsel %vm625, %v1511, 0.0
        %s1515 = sld [smem:[#allocation12 + $0x182]]
        %v1516 = vstv %s1515
        %v1517 = vmul.f32 %v1516, %v1483
        %v1518 = vmul.f32 %v1516, %v1484
        %s1519 = sld [smem:[#allocation12 + $0x202]]
        %v1520 = vstv %s1519
        %v1521 = vmul.f32 %v1520, %v1125
        %v1522 = vmul.f32 %v1520, %v1126
        %v1523 = vadd.f32 %v1517, %v1521
        %v1524 = vadd.f32 %v1518, %v1522
        %s1525 = sld [smem:[#allocation12 + $0x282]]
        %v1526 = vstv %s1525
        %v1527 = vmul.f32 %v1526, %v1491
        %v1528 = vmul.f32 %v1526, %v1492
        %v1529 = vadd.f32 %v1523, %v1527
        %v1530 = vadd.f32 %v1524, %v1528
        %v1531 = vadd.f32 %v1513, %v1529
        %v1532 = vadd.f32 %v1514, %v1530
        %s1533 = sld [smem:[#allocation12 + $0x302]]
        %v1534 = vstv %s1533
        %v1535 = vmul.f32 %v1534, %v1483
        %v1536 = vmul.f32 %v1534, %v1484
        %s1537 = sld [smem:[#allocation12 + $0x382]]
        %v1538 = vstv %s1537
        %v1539 = vmul.f32 %v1538, %v1125
        %v1540 = vmul.f32 %v1538, %v1126
        %v1541 = vadd.f32 %v1535, %v1539
        %v1542 = vadd.f32 %v1536, %v1540
        %s1543 = sld [smem:[#allocation12 + $0x402]]
        %v1544 = vstv %s1543
        %v1545 = vmul.f32 %v1544, %v1491
        %v1546 = vmul.f32 %v1544, %v1492
        %v1547 = vadd.f32 %v1541, %v1545
        %v1548 = vadd.f32 %v1542, %v1546
        %v1549 = vrot.slane %v1547, 1
        %v1550 = vrot.slane %v1548, 1
        %v1551 = vsel %vm729, %v1549, %v1550
        %v1552 = vsel %vm729, %v1550, %v1549
        %v1553 = vsel %vm626, %v1551, 0.0
        %v1554 = vsel %vm627, %v1552, 0.0
        %v1555 = vadd.f32 %v1531, %v1553
        %v1556 = vadd.f32 %v1532, %v1554
        %s1557 = sld [smem:[#allocation13 + $0x2]]
        %v1558 = vstv %s1557
        %v1559 = vadd.f32 %v1555, %v1558
        %v1560 = vadd.f32 %v1556, %v1558
        %1561 = vrot.lane.b32.xlu0 %v1153, 16
        %v1562 = vpop.permute.xlu0 %1561
        %v1563 = vsel %vm639, %v1562, %v1153
        %1564 = vrot.lane.b32.xlu0 %v1154, 16
        %v1565 = vpop.permute.xlu0 %1564
        %v1566 = vsel %vm639, %v1565, %v1154
        %1567 = vrot.lane.b32.xlu0 %v1563, 16
        %v1568 = vpop.permute.xlu0 %1567
        %1569 = vrot.lane.b32.xlu0 %v1566, 16
        %v1570 = vpop.permute.xlu0 %1569
        %v1571 = vsel %vm639, %v1568, %v1153
        %v1572 = vsel %vm639, %v1570, %v1154
        %1575 = vrot.lane.b32.xlu0 %v1571, 113
        %v1576 = vpop.permute.xlu0 %1575
        %1577 = vrot.lane.b32.xlu0 %v1572, 113
        %v1578 = vpop.permute.xlu0 %1577
        %v1581 = vsel %vm622, %v1576, 0.0
        %v1582 = vsel %vm622, %v1578, 0.0
        %1583 = vrot.lane.b32.xlu0 %v1571, 127
        %v1584 = vpop.permute.xlu0 %1583
        %1585 = vrot.lane.b32.xlu0 %v1572, 127
        %v1586 = vpop.permute.xlu0 %1585
        %v1589 = vsel %vm623, %v1584, 0.0
        %v1590 = vsel %vm623, %v1586, 0.0
        %s1591 = sld [smem:[#allocation12 + $0x3]]
        %v1592 = vstv %s1591
        %v1593 = vmul.f32 %v1592, %v1581
        %v1594 = vmul.f32 %v1592, %v1582
        %s1595 = sld [smem:[#allocation12 + $0x83]]
        %v1596 = vstv %s1595
        %v1597 = vmul.f32 %v1596, %v1153
        %v1598 = vmul.f32 %v1596, %v1154
        %v1599 = vadd.f32 %v1593, %v1597
        %v1600 = vadd.f32 %v1594, %v1598
        %s1601 = sld [smem:[#allocation12 + $0x103]]
        %v1602 = vstv %s1601
        %v1603 = vmul.f32 %v1602, %v1589
        %v1604 = vmul.f32 %v1602, %v1590
        %v1605 = vadd.f32 %v1599, %v1603
        %v1606 = vadd.f32 %v1600, %v1604
        %v1607 = vrot.slane %v1605, 7
        %v1608 = vrot.slane %v1606, 7
        %v1609 = vsel %vm688, %v1607, %v1608
        %v1610 = vsel %vm688, %v1608, %v1607
        %v1611 = vsel %vm624, %v1610, 0.0
        %v1612 = vsel %vm625, %v1609, 0.0
        %s1613 = sld [smem:[#allocation12 + $0x183]]
        %v1614 = vstv %s1613
        %v1615 = vmul.f32 %v1614, %v1581
        %v1616 = vmul.f32 %v1614, %v1582
        %s1617 = sld [smem:[#allocation12 + $0x203]]
        %v1618 = vstv %s1617
        %v1619 = vmul.f32 %v1618, %v1153
        %v1620 = vmul.f32 %v1618, %v1154
        %v1621 = vadd.f32 %v1615, %v1619
        %v1622 = vadd.f32 %v1616, %v1620
        %s1623 = sld [smem:[#allocation12 + $0x283]]
        %v1624 = vstv %s1623
        %v1625 = vmul.f32 %v1624, %v1589
        %v1626 = vmul.f32 %v1624, %v1590
        %v1627 = vadd.f32 %v1621, %v1625
        %v1628 = vadd.f32 %v1622, %v1626
        %v1629 = vadd.f32 %v1611, %v1627
        %v1630 = vadd.f32 %v1612, %v1628
        %s1631 = sld [smem:[#allocation12 + $0x303]]
        %v1632 = vstv %s1631
        %v1633 = vmul.f32 %v1632, %v1581
        %v1634 = vmul.f32 %v1632, %v1582
        %s1635 = sld [smem:[#allocation12 + $0x383]]
        %v1636 = vstv %s1635
        %v1637 = vmul.f32 %v1636, %v1153
        %v1638 = vmul.f32 %v1636, %v1154
        %v1639 = vadd.f32 %v1633, %v1637
        %v1640 = vadd.f32 %v1634, %v1638
        %s1641 = sld [smem:[#allocation12 + $0x403]]
        %v1642 = vstv %s1641
        %v1643 = vmul.f32 %v1642, %v1589
        %v1644 = vmul.f32 %v1642, %v1590
        %v1645 = vadd.f32 %v1639, %v1643
        %v1646 = vadd.f32 %v1640, %v1644
        %v1647 = vrot.slane %v1645, 1
        %v1648 = vrot.slane %v1646, 1
        %v1649 = vsel %vm729, %v1647, %v1648
        %v1650 = vsel %vm729, %v1648, %v1647
        %v1651 = vsel %vm626, %v1649, 0.0
        %v1652 = vsel %vm627, %v1650, 0.0
        %v1653 = vadd.f32 %v1629, %v1651
        %v1654 = vadd.f32 %v1630, %v1652
        %s1655 = sld [smem:[#allocation13 + $0x3]]
        %v1656 = vstv %s1655
        %v1657 = vadd.f32 %v1653, %v1656
        %v1658 = vadd.f32 %v1654, %v1656
        %1659 = vrot.lane.b32.xlu0 %v1181, 16
        %v1660 = vpop.permute.xlu0 %1659
        %v1661 = vsel %vm639, %v1660, %v1181
        %1662 = vrot.lane.b32.xlu0 %v1182, 16
        %v1663 = vpop.permute.xlu0 %1662
        %v1664 = vsel %vm639, %v1663, %v1182
        %1665 = vrot.lane.b32.xlu0 %v1661, 16
        %v1666 = vpop.permute.xlu0 %1665
        %1667 = vrot.lane.b32.xlu0 %v1664, 16
        %v1668 = vpop.permute.xlu0 %1667
        %v1669 = vsel %vm639, %v1666, %v1181
        %v1670 = vsel %vm639, %v1668, %v1182
        %1673 = vrot.lane.b32.xlu0 %v1669, 113
        %v1674 = vpop.permute.xlu0 %1673
        %1675 = vrot.lane.b32.xlu0 %v1670, 113
        %v1676 = vpop.permute.xlu0 %1675
        %v1679 = vsel %vm622, %v1674, 0.0
        %v1680 = vsel %vm622, %v1676, 0.0
        %1681 = vrot.lane.b32.xlu0 %v1669, 127
        %v1682 = vpop.permute.xlu0 %1681
        %1683 = vrot.lane.b32.xlu0 %v1670, 127
        %v1684 = vpop.permute.xlu0 %1683
        %v1687 = vsel %vm623, %v1682, 0.0
        %v1688 = vsel %vm623, %v1684, 0.0
        %s1689 = sld [smem:[#allocation12 + $0x4]]
        %v1690 = vstv %s1689
        %v1691 = vmul.f32 %v1690, %v1679
        %v1692 = vmul.f32 %v1690, %v1680
        %s1693 = sld [smem:[#allocation12 + $0x84]]
        %v1694 = vstv %s1693
        %v1695 = vmul.f32 %v1694, %v1181
        %v1696 = vmul.f32 %v1694, %v1182
        %v1697 = vadd.f32 %v1691, %v1695
        %v1698 = vadd.f32 %v1692, %v1696
        %s1699 = sld [smem:[#allocation12 + $0x104]]
        %v1700 = vstv %s1699
        %v1701 = vmul.f32 %v1700, %v1687
        %v1702 = vmul.f32 %v1700, %v1688
        %v1703 = vadd.f32 %v1697, %v1701
        %v1704 = vadd.f32 %v1698, %v1702
        %v1705 = vrot.slane %v1703, 7
        %v1706 = vrot.slane %v1704, 7
        %v1707 = vsel %vm688, %v1705, %v1706
        %v1708 = vsel %vm688, %v1706, %v1705
        %v1709 = vsel %vm624, %v1708, 0.0
        %v1710 = vsel %vm625, %v1707, 0.0
        %s1711 = sld [smem:[#allocation12 + $0x184]]
        %v1712 = vstv %s1711
        %v1713 = vmul.f32 %v1712, %v1679
        %v1714 = vmul.f32 %v1712, %v1680
        %s1715 = sld [smem:[#allocation12 + $0x204]]
        %v1716 = vstv %s1715
        %v1717 = vmul.f32 %v1716, %v1181
        %v1718 = vmul.f32 %v1716, %v1182
        %v1719 = vadd.f32 %v1713, %v1717
        %v1720 = vadd.f32 %v1714, %v1718
        %s1721 = sld [smem:[#allocation12 + $0x284]]
        %v1722 = vstv %s1721
        %v1723 = vmul.f32 %v1722, %v1687
        %v1724 = vmul.f32 %v1722, %v1688
        %v1725 = vadd.f32 %v1719, %v1723
        %v1726 = vadd.f32 %v1720, %v1724
        %v1727 = vadd.f32 %v1709, %v1725
        %v1728 = vadd.f32 %v1710, %v1726
        %s1729 = sld [smem:[#allocation12 + $0x304]]
        %v1730 = vstv %s1729
        %v1731 = vmul.f32 %v1730, %v1679
        %v1732 = vmul.f32 %v1730, %v1680
        %s1733 = sld [smem:[#allocation12 + $0x384]]
        %v1734 = vstv %s1733
        %v1735 = vmul.f32 %v1734, %v1181
        %v1736 = vmul.f32 %v1734, %v1182
        %v1737 = vadd.f32 %v1731, %v1735
        %v1738 = vadd.f32 %v1732, %v1736
        %s1739 = sld [smem:[#allocation12 + $0x404]]
        %v1740 = vstv %s1739
        %v1741 = vmul.f32 %v1740, %v1687
        %v1742 = vmul.f32 %v1740, %v1688
        %v1743 = vadd.f32 %v1737, %v1741
        %v1744 = vadd.f32 %v1738, %v1742
        %v1745 = vrot.slane %v1743, 1
        %v1746 = vrot.slane %v1744, 1
        %v1747 = vsel %vm729, %v1745, %v1746
        %v1748 = vsel %vm729, %v1746, %v1745
        %v1749 = vsel %vm626, %v1747, 0.0
        %v1750 = vsel %vm627, %v1748, 0.0
        %v1751 = vadd.f32 %v1727, %v1749
        %v1752 = vadd.f32 %v1728, %v1750
        %s1753 = sld [smem:[#allocation13 + $0x4]]
        %v1754 = vstv %s1753
        %v1755 = vadd.f32 %v1751, %v1754
        %v1756 = vadd.f32 %v1752, %v1754
        %1757 = vrot.lane.b32.xlu0 %v1209, 16
        %v1758 = vpop.permute.xlu0 %1757
        %v1759 = vsel %vm639, %v1758, %v1209
        %1760 = vrot.lane.b32.xlu0 %v1210, 16
        %v1761 = vpop.permute.xlu0 %1760
        %v1762 = vsel %vm639, %v1761, %v1210
        %1763 = vrot.lane.b32.xlu0 %v1759, 16
        %v1764 = vpop.permute.xlu0 %1763
        %1765 = vrot.lane.b32.xlu0 %v1762, 16
        %v1766 = vpop.permute.xlu0 %1765
        %v1767 = vsel %vm639, %v1764, %v1209
        %v1768 = vsel %vm639, %v1766, %v1210
        %1771 = vrot.lane.b32.xlu0 %v1767, 113
        %v1772 = vpop.permute.xlu0 %1771
        %1773 = vrot.lane.b32.xlu0 %v1768, 113
        %v1774 = vpop.permute.xlu0 %1773
        %v1777 = vsel %vm622, %v1772, 0.0
        %v1778 = vsel %vm622, %v1774, 0.0
        %1779 = vrot.lane.b32.xlu0 %v1767, 127
        %v1780 = vpop.permute.xlu0 %1779
        %1781 = vrot.lane.b32.xlu0 %v1768, 127
        %v1782 = vpop.permute.xlu0 %1781
        %v1785 = vsel %vm623, %v1780, 0.0
        %v1786 = vsel %vm623, %v1782, 0.0
        %s1787 = sld [smem:[#allocation12 + $0x5]]
        %v1788 = vstv %s1787
        %v1789 = vmul.f32 %v1788, %v1777
        %v1790 = vmul.f32 %v1788, %v1778
        %s1791 = sld [smem:[#allocation12 + $0x85]]
        %v1792 = vstv %s1791
        %v1793 = vmul.f32 %v1792, %v1209
        %v1794 = vmul.f32 %v1792, %v1210
        %v1795 = vadd.f32 %v1789, %v1793
        %v1796 = vadd.f32 %v1790, %v1794
        %s1797 = sld [smem:[#allocation12 + $0x105]]
        %v1798 = vstv %s1797
        %v1799 = vmul.f32 %v1798, %v1785
        %v1800 = vmul.f32 %v1798, %v1786
        %v1801 = vadd.f32 %v1795, %v1799
        %v1802 = vadd.f32 %v1796, %v1800
        %v1803 = vrot.slane %v1801, 7
        %v1804 = vrot.slane %v1802, 7
        %v1805 = vsel %vm688, %v1803, %v1804
        %v1806 = vsel %vm688, %v1804, %v1803
        %v1807 = vsel %vm624, %v1806, 0.0
        %v1808 = vsel %vm625, %v1805, 0.0
        %s1809 = sld [smem:[#allocation12 + $0x185]]
        %v1810 = vstv %s1809
        %v1811 = vmul.f32 %v1810, %v1777
        %v1812 = vmul.f32 %v1810, %v1778
        %s1813 = sld [smem:[#allocation12 + $0x205]]
        %v1814 = vstv %s1813
        %v1815 = vmul.f32 %v1814, %v1209
        %v1816 = vmul.f32 %v1814, %v1210
        %v1817 = vadd.f32 %v1811, %v1815
        %v1818 = vadd.f32 %v1812, %v1816
        %s1819 = sld [smem:[#allocation12 + $0x285]]
        %v1820 = vstv %s1819
        %v1821 = vmul.f32 %v1820, %v1785
        %v1822 = vmul.f32 %v1820, %v1786
        %v1823 = vadd.f32 %v1817, %v1821
        %v1824 = vadd.f32 %v1818, %v1822
        %v1825 = vadd.f32 %v1807, %v1823
        %v1826 = vadd.f32 %v1808, %v1824
        %s1827 = sld [smem:[#allocation12 + $0x305]]
        %v1828 = vstv %s1827
        %v1829 = vmul.f32 %v1828, %v1777
        %v1830 = vmul.f32 %v1828, %v1778
        %s1831 = sld [smem:[#allocation12 + $0x385]]
        %v1832 = vstv %s1831
        %v1833 = vmul.f32 %v1832, %v1209
        %v1834 = vmul.f32 %v1832, %v1210
        %v1835 = vadd.f32 %v1829, %v1833
        %v1836 = vadd.f32 %v1830, %v1834
        %s1837 = sld [smem:[#allocation12 + $0x405]]
        %v1838 = vstv %s1837
        %v1839 = vmul.f32 %v1838, %v1785
        %v1840 = vmul.f32 %v1838, %v1786
        %v1841 = vadd.f32 %v1835, %v1839
        %v1842 = vadd.f32 %v1836, %v1840
        %v1843 = vrot.slane %v1841, 1
        %v1844 = vrot.slane %v1842, 1
        %v1845 = vsel %vm729, %v1843, %v1844
        %v1846 = vsel %vm729, %v1844, %v1843
        %v1847 = vsel %vm626, %v1845, 0.0
        %v1848 = vsel %vm627, %v1846, 0.0
        %v1849 = vadd.f32 %v1825, %v1847
        %v1850 = vadd.f32 %v1826, %v1848
        %s1851 = sld [smem:[#allocation13 + $0x5]]
        %v1852 = vstv %s1851
        %v1853 = vadd.f32 %v1849, %v1852
        %v1854 = vadd.f32 %v1850, %v1852
        %1855 = vrot.lane.b32.xlu0 %v1237, 16
        %v1856 = vpop.permute.xlu0 %1855
        %v1857 = vsel %vm639, %v1856, %v1237
        %1858 = vrot.lane.b32.xlu0 %v1238, 16
        %v1859 = vpop.permute.xlu0 %1858
        %v1860 = vsel %vm639, %v1859, %v1238
        %1861 = vrot.lane.b32.xlu0 %v1857, 16
        %v1862 = vpop.permute.xlu0 %1861
        %1863 = vrot.lane.b32.xlu0 %v1860, 16
        %v1864 = vpop.permute.xlu0 %1863
        %v1865 = vsel %vm639, %v1862, %v1237
        %v1866 = vsel %vm639, %v1864, %v1238
        %1869 = vrot.lane.b32.xlu0 %v1865, 113
        %v1870 = vpop.permute.xlu0 %1869
        %1871 = vrot.lane.b32.xlu0 %v1866, 113
        %v1872 = vpop.permute.xlu0 %1871
        %v1875 = vsel %vm622, %v1870, 0.0
        %v1876 = vsel %vm622, %v1872, 0.0
        %1877 = vrot.lane.b32.xlu0 %v1865, 127
        %v1878 = vpop.permute.xlu0 %1877
        %1879 = vrot.lane.b32.xlu0 %v1866, 127
        %v1880 = vpop.permute.xlu0 %1879
        %v1883 = vsel %vm623, %v1878, 0.0
        %v1884 = vsel %vm623, %v1880, 0.0
        %s1885 = sld [smem:[#allocation12 + $0x6]]
        %v1886 = vstv %s1885
        %v1887 = vmul.f32 %v1886, %v1875
        %v1888 = vmul.f32 %v1886, %v1876
        %s1889 = sld [smem:[#allocation12 + $0x86]]
        %v1890 = vstv %s1889
        %v1891 = vmul.f32 %v1890, %v1237
        %v1892 = vmul.f32 %v1890, %v1238
        %v1893 = vadd.f32 %v1887, %v1891
        %v1894 = vadd.f32 %v1888, %v1892
        %s1895 = sld [smem:[#allocation12 + $0x106]]
        %v1896 = vstv %s1895
        %v1897 = vmul.f32 %v1896, %v1883
        %v1898 = vmul.f32 %v1896, %v1884
        %v1899 = vadd.f32 %v1893, %v1897
        %v1900 = vadd.f32 %v1894, %v1898
        %v1901 = vrot.slane %v1899, 7
        %v1902 = vrot.slane %v1900, 7
        %v1903 = vsel %vm688, %v1901, %v1902
        %v1904 = vsel %vm688, %v1902, %v1901
        %v1905 = vsel %vm624, %v1904, 0.0
        %v1906 = vsel %vm625, %v1903, 0.0
        %s1907 = sld [smem:[#allocation12 + $0x186]]
        %v1908 = vstv %s1907
        %v1909 = vmul.f32 %v1908, %v1875
        %v1910 = vmul.f32 %v1908, %v1876
        %s1911 = sld [smem:[#allocation12 + $0x206]]
        %v1912 = vstv %s1911
        %v1913 = vmul.f32 %v1912, %v1237
        %v1914 = vmul.f32 %v1912, %v1238
        %v1915 = vadd.f32 %v1909, %v1913
        %v1916 = vadd.f32 %v1910, %v1914
        %s1917 = sld [smem:[#allocation12 + $0x286]]
        %v1918 = vstv %s1917
        %v1919 = vmul.f32 %v1918, %v1883
        %v1920 = vmul.f32 %v1918, %v1884
        %v1921 = vadd.f32 %v1915, %v1919
        %v1922 = vadd.f32 %v1916, %v1920
        %v1923 = vadd.f32 %v1905, %v1921
        %v1924 = vadd.f32 %v1906, %v1922
        %s1925 = sld [smem:[#allocation12 + $0x306]]
        %v1926 = vstv %s1925
        %v1927 = vmul.f32 %v1926, %v1875
        %v1928 = vmul.f32 %v1926, %v1876
        %s1929 = sld [smem:[#allocation12 + $0x386]]
        %v1930 = vstv %s1929
        %v1931 = vmul.f32 %v1930, %v1237
        %v1932 = vmul.f32 %v1930, %v1238
        %v1933 = vadd.f32 %v1927, %v1931
        %v1934 = vadd.f32 %v1928, %v1932
        %s1935 = sld [smem:[#allocation12 + $0x406]]
        %v1936 = vstv %s1935
        %v1937 = vmul.f32 %v1936, %v1883
        %v1938 = vmul.f32 %v1936, %v1884
        %v1939 = vadd.f32 %v1933, %v1937
        %v1940 = vadd.f32 %v1934, %v1938
        %v1941 = vrot.slane %v1939, 1
        %v1942 = vrot.slane %v1940, 1
        %v1943 = vsel %vm729, %v1941, %v1942
        %v1944 = vsel %vm729, %v1942, %v1941
        %v1945 = vsel %vm626, %v1943, 0.0
        %v1946 = vsel %vm627, %v1944, 0.0
        %v1947 = vadd.f32 %v1923, %v1945
        %v1948 = vadd.f32 %v1924, %v1946
        %s1949 = sld [smem:[#allocation13 + $0x6]]
        %v1950 = vstv %s1949
        %v1951 = vadd.f32 %v1947, %v1950
        %v1952 = vadd.f32 %v1948, %v1950
        %1953 = vrot.lane.b32.xlu0 %v1265, 16
        %v1954 = vpop.permute.xlu0 %1953
        %v1955 = vsel %vm639, %v1954, %v1265
        %1956 = vrot.lane.b32.xlu0 %v1266, 16
        %v1957 = vpop.permute.xlu0 %1956
        %v1958 = vsel %vm639, %v1957, %v1266
        %1959 = vrot.lane.b32.xlu0 %v1955, 16
        %v1960 = vpop.permute.xlu0 %1959
        %1961 = vrot.lane.b32.xlu0 %v1958, 16
        %v1962 = vpop.permute.xlu0 %1961
        %v1963 = vsel %vm639, %v1960, %v1265
        %v1964 = vsel %vm639, %v1962, %v1266
        %1967 = vrot.lane.b32.xlu0 %v1963, 113
        %v1968 = vpop.permute.xlu0 %1967
        %1969 = vrot.lane.b32.xlu0 %v1964, 113
        %v1970 = vpop.permute.xlu0 %1969
        %v1973 = vsel %vm622, %v1968, 0.0
        %v1974 = vsel %vm622, %v1970, 0.0
        %1975 = vrot.lane.b32.xlu0 %v1963, 127
        %v1976 = vpop.permute.xlu0 %1975
        %1977 = vrot.lane.b32.xlu0 %v1964, 127
        %v1978 = vpop.permute.xlu0 %1977
        %v1981 = vsel %vm623, %v1976, 0.0
        %v1982 = vsel %vm623, %v1978, 0.0
        %s1983 = sld [smem:[#allocation12 + $0x7]]
        %v1984 = vstv %s1983
        %v1985 = vmul.f32 %v1984, %v1973
        %v1986 = vmul.f32 %v1984, %v1974
        %s1987 = sld [smem:[#allocation12 + $0x87]]
        %v1988 = vstv %s1987
        %v1989 = vmul.f32 %v1988, %v1265
        %v1990 = vmul.f32 %v1988, %v1266
        %v1991 = vadd.f32 %v1985, %v1989
        %v1992 = vadd.f32 %v1986, %v1990
        %s1993 = sld [smem:[#allocation12 + $0x107]]
        %v1994 = vstv %s1993
        %v1995 = vmul.f32 %v1994, %v1981
        %v1996 = vmul.f32 %v1994, %v1982
        %v1997 = vadd.f32 %v1991, %v1995
        %v1998 = vadd.f32 %v1992, %v1996
        %v1999 = vrot.slane %v1997, 7
        %v2000 = vrot.slane %v1998, 7
        %v2001 = vsel %vm688, %v1999, %v2000
        %v2002 = vsel %vm688, %v2000, %v1999
        %v2003 = vsel %vm624, %v2002, 0.0
        %v2004 = vsel %vm625, %v2001, 0.0
        %s2005 = sld [smem:[#allocation12 + $0x187]]
        %v2006 = vstv %s2005
        %v2007 = vmul.f32 %v2006, %v1973
        %v2008 = vmul.f32 %v2006, %v1974
        %s2009 = sld [smem:[#allocation12 + $0x207]]
        %v2010 = vstv %s2009
        %v2011 = vmul.f32 %v2010, %v1265
        %v2012 = vmul.f32 %v2010, %v1266
        %v2013 = vadd.f32 %v2007, %v2011
        %v2014 = vadd.f32 %v2008, %v2012
        %s2015 = sld [smem:[#allocation12 + $0x287]]
        %v2016 = vstv %s2015
        %v2017 = vmul.f32 %v2016, %v1981
        %v2018 = vmul.f32 %v2016, %v1982
        %v2019 = vadd.f32 %v2013, %v2017
        %v2020 = vadd.f32 %v2014, %v2018
        %v2021 = vadd.f32 %v2003, %v2019
        %v2022 = vadd.f32 %v2004, %v2020
        %s2023 = sld [smem:[#allocation12 + $0x307]]
        %v2024 = vstv %s2023
        %v2025 = vmul.f32 %v2024, %v1973
        %v2026 = vmul.f32 %v2024, %v1974
        %s2027 = sld [smem:[#allocation12 + $0x387]]
        %v2028 = vstv %s2027
        %v2029 = vmul.f32 %v2028, %v1265
        %v2030 = vmul.f32 %v2028, %v1266
        %v2031 = vadd.f32 %v2025, %v2029
        %v2032 = vadd.f32 %v2026, %v2030
        %s2033 = sld [smem:[#allocation12 + $0x407]]
        %v2034 = vstv %s2033
        %v2035 = vmul.f32 %v2034, %v1981
        %v2036 = vmul.f32 %v2034, %v1982
        %v2037 = vadd.f32 %v2031, %v2035
        %v2038 = vadd.f32 %v2032, %v2036
        %v2039 = vrot.slane %v2037, 1
        %v2040 = vrot.slane %v2038, 1
        %v2041 = vsel %vm729, %v2039, %v2040
        %v2042 = vsel %vm729, %v2040, %v2039
        %v2043 = vsel %vm626, %v2041, 0.0
        %v2044 = vsel %vm627, %v2042, 0.0
        %v2045 = vadd.f32 %v2021, %v2043
        %v2046 = vadd.f32 %v2022, %v2044
        %s2047 = sld [smem:[#allocation13 + $0x7]]
        %v2048 = vstv %s2047
        %v2049 = vadd.f32 %v2045, %v2048
        %v2050 = vadd.f32 %v2046, %v2048
        %s2051 = sld [smem:[#allocation16]]
        %s2052 = sld [smem:[#allocation15]]
        %v2053 = vstv %s2052
        %v2054 = vmul.f32 %v2053, %v1363
        %v2055 = vmul.f32 %v2053, %v1364
        %v2056 = vstv %s2051
        %v2057 = vadd.f32 %v2056, %v2054
        %v2058 = vadd.f32 %v2056, %v2055
        %s2059 = sld [smem:[#allocation15 + $0x80]]
        %v2060 = vstv %s2059
        %v2061 = vmul.f32 %v2060, %v1461
        %v2062 = vmul.f32 %v2060, %v1462
        %v2063 = vadd.f32 %v2057, %v2061
        %v2064 = vadd.f32 %v2058, %v2062
        %s2065 = sld [smem:[#allocation15 + $0x100]]
        %v2066 = vstv %s2065
        %v2067 = vmul.f32 %v2066, %v1559
        %v2068 = vmul.f32 %v2066, %v1560
        %v2069 = vadd.f32 %v2063, %v2067
        %v2070 = vadd.f32 %v2064, %v2068
        %s2071 = sld [smem:[#allocation15 + $0x180]]
        %v2072 = vstv %s2071
        %v2073 = vmul.f32 %v2072, %v1657
        %v2074 = vmul.f32 %v2072, %v1658
        %v2075 = vadd.f32 %v2069, %v2073
        %v2076 = vadd.f32 %v2070, %v2074
        %s2077 = sld [smem:[#allocation15 + $0x200]]
        %v2078 = vstv %s2077
        %v2079 = vmul.f32 %v2078, %v1755
        %v2080 = vmul.f32 %v2078, %v1756
        %v2081 = vadd.f32 %v2075, %v2079
        %v2082 = vadd.f32 %v2076, %v2080
        %s2083 = sld [smem:[#allocation15 + $0x280]]
        %v2084 = vstv %s2083
        %v2085 = vmul.f32 %v2084, %v1853
        %v2086 = vmul.f32 %v2084, %v1854
        %v2087 = vadd.f32 %v2081, %v2085
        %v2088 = vadd.f32 %v2082, %v2086
        %s2089 = sld [smem:[#allocation15 + $0x300]]
        %v2090 = vstv %s2089
        %v2091 = vmul.f32 %v2090, %v1951
        %v2092 = vmul.f32 %v2090, %v1952
        %v2093 = vadd.f32 %v2087, %v2091
        %v2094 = vadd.f32 %v2088, %v2092
        %s2095 = sld [smem:[#allocation15 + $0x380]]
        %v2096 = vstv %s2095
        %v2097 = vmul.f32 %v2096, %v2049
        %v2098 = vmul.f32 %v2096, %v2050
        %v2099 = vadd.f32 %v2093, %v2097
        %v2100 = vadd.f32 %v2094, %v2098
        %v2101 = vmax.f32 %v2099, 0.0
        %v2102 = vmax.f32 %v2100, 0.0
        %s2103 = sld [smem:[#allocation16 + $0x1]]
        %s2104 = sld [smem:[#allocation15 + $0x1]]
        %v2105 = vstv %s2104
        %v2106 = vmul.f32 %v2105, %v1363
        %v2107 = vmul.f32 %v2105, %v1364
        %v2108 = vstv %s2103
        %v2109 = vadd.f32 %v2108, %v2106
        %v2110 = vadd.f32 %v2108, %v2107
        %s2111 = sld [smem:[#allocation15 + $0x81]]
        %v2112 = vstv %s2111
        %v2113 = vmul.f32 %v2112, %v1461
        %v2114 = vmul.f32 %v2112, %v1462
        %v2115 = vadd.f32 %v2109, %v2113
        %v2116 = vadd.f32 %v2110, %v2114
        %s2117 = sld [smem:[#allocation15 + $0x101]]
        %v2118 = vstv %s2117
        %v2119 = vmul.f32 %v2118, %v1559
        %v2120 = vmul.f32 %v2118, %v1560
        %v2121 = vadd.f32 %v2115, %v2119
        %v2122 = vadd.f32 %v2116, %v2120
        %s2123 = sld [smem:[#allocation15 + $0x181]]
        %v2124 = vstv %s2123
        %v2125 = vmul.f32 %v2124, %v1657
        %v2126 = vmul.f32 %v2124, %v1658
        %v2127 = vadd.f32 %v2121, %v2125
        %v2128 = vadd.f32 %v2122, %v2126
        %s2129 = sld [smem:[#allocation15 + $0x201]]
        %v2130 = vstv %s2129
        %v2131 = vmul.f32 %v2130, %v1755
        %v2132 = vmul.f32 %v2130, %v1756
        %v2133 = vadd.f32 %v2127, %v2131
        %v2134 = vadd.f32 %v2128, %v2132
        %s2135 = sld [smem:[#allocation15 + $0x281]]
        %v2136 = vstv %s2135
        %v2137 = vmul.f32 %v2136, %v1853
        %v2138 = vmul.f32 %v2136, %v1854
        %v2139 = vadd.f32 %v2133, %v2137
        %v2140 = vadd.f32 %v2134, %v2138
        %s2141 = sld [smem:[#allocation15 + $0x301]]
        %v2142 = vstv %s2141
        %v2143 = vmul.f32 %v2142, %v1951
        %v2144 = vmul.f32 %v2142, %v1952
        %v2145 = vadd.f32 %v2139, %v2143
        %v2146 = vadd.f32 %v2140, %v2144
        %s2147 = sld [smem:[#allocation15 + $0x381]]
        %v2148 = vstv %s2147
        %v2149 = vmul.f32 %v2148, %v2049
        %v2150 = vmul.f32 %v2148, %v2050
        %v2151 = vadd.f32 %v2145, %v2149
        %v2152 = vadd.f32 %v2146, %v2150
        %v2153 = vmax.f32 %v2151, 0.0
        %v2154 = vmax.f32 %v2152, 0.0
        %s2155 = sld [smem:[#allocation16 + $0x2]]
        %s2156 = sld [smem:[#allocation15 + $0x2]]
        %v2157 = vstv %s2156
        %v2158 = vmul.f32 %v2157, %v1363
        %v2159 = vmul.f32 %v2157, %v1364
        %v2160 = vstv %s2155
        %v2161 = vadd.f32 %v2160, %v2158
        %v2162 = vadd.f32 %v2160, %v2159
        %s2163 = sld [smem:[#allocation15 + $0x82]]
        %v2164 = vstv %s2163
        %v2165 = vmul.f32 %v2164, %v1461
        %v2166 = vmul.f32 %v2164, %v1462
        %v2167 = vadd.f32 %v2161, %v2165
        %v2168 = vadd.f32 %v2162, %v2166
        %s2169 = sld [smem:[#allocation15 + $0x102]]
        %v2170 = vstv %s2169
        %v2171 = vmul.f32 %v2170, %v1559
        %v2172 = vmul.f32 %v2170, %v1560
        %v2173 = vadd.f32 %v2167, %v2171
        %v2174 = vadd.f32 %v2168, %v2172
        %s2175 = sld [smem:[#allocation15 + $0x182]]
        %v2176 = vstv %s2175
        %v2177 = vmul.f32 %v2176, %v1657
        %v2178 = vmul.f32 %v2176, %v1658
        %v2179 = vadd.f32 %v2173, %v2177
        %v2180 = vadd.f32 %v2174, %v2178
        %s2181 = sld [smem:[#allocation15 + $0x202]]
        %v2182 = vstv %s2181
        %v2183 = vmul.f32 %v2182, %v1755
        %v2184 = vmul.f32 %v2182, %v1756
        %v2185 = vadd.f32 %v2179, %v2183
        %v2186 = vadd.f32 %v2180, %v2184
        %s2187 = sld [smem:[#allocation15 + $0x282]]
        %v2188 = vstv %s2187
        %v2189 = vmul.f32 %v2188, %v1853
        %v2190 = vmul.f32 %v2188, %v1854
        %v2191 = vadd.f32 %v2185, %v2189
        %v2192 = vadd.f32 %v2186, %v2190
        %s2193 = sld [smem:[#allocation15 + $0x302]]
        %v2194 = vstv %s2193
        %v2195 = vmul.f32 %v2194, %v1951
        %v2196 = vmul.f32 %v2194, %v1952
        %v2197 = vadd.f32 %v2191, %v2195
        %v2198 = vadd.f32 %v2192, %v2196
        %s2199 = sld [smem:[#allocation15 + $0x382]]
        %v2200 = vstv %s2199
        %v2201 = vmul.f32 %v2200, %v2049
        %v2202 = vmul.f32 %v2200, %v2050
        %v2203 = vadd.f32 %v2197, %v2201
        %v2204 = vadd.f32 %v2198, %v2202
        %v2205 = vmax.f32 %v2203, 0.0
        %v2206 = vmax.f32 %v2204, 0.0
        %s2207 = sld [smem:[#allocation16 + $0x3]]
        %s2208 = sld [smem:[#allocation15 + $0x3]]
        %v2209 = vstv %s2208
        %v2210 = vmul.f32 %v2209, %v1363
        %v2211 = vmul.f32 %v2209, %v1364
        %v2212 = vstv %s2207
        %v2213 = vadd.f32 %v2212, %v2210
        %v2214 = vadd.f32 %v2212, %v2211
        %s2215 = sld [smem:[#allocation15 + $0x83]]
        %v2216 = vstv %s2215
        %v2217 = vmul.f32 %v2216, %v1461
        %v2218 = vmul.f32 %v2216, %v1462
        %v2219 = vadd.f32 %v2213, %v2217
        %v2220 = vadd.f32 %v2214, %v2218
        %s2221 = sld [smem:[#allocation15 + $0x103]]
        %v2222 = vstv %s2221
        %v2223 = vmul.f32 %v2222, %v1559
        %v2224 = vmul.f32 %v2222, %v1560
        %v2225 = vadd.f32 %v2219, %v2223
        %v2226 = vadd.f32 %v2220, %v2224
        %s2227 = sld [smem:[#allocation15 + $0x183]]
        %v2228 = vstv %s2227
        %v2229 = vmul.f32 %v2228, %v1657
        %v2230 = vmul.f32 %v2228, %v1658
        %v2231 = vadd.f32 %v2225, %v2229
        %v2232 = vadd.f32 %v2226, %v2230
        %s2233 = sld [smem:[#allocation15 + $0x203]]
        %v2234 = vstv %s2233
        %v2235 = vmul.f32 %v2234, %v1755
        %v2236 = vmul.f32 %v2234, %v1756
        %v2237 = vadd.f32 %v2231, %v2235
        %v2238 = vadd.f32 %v2232, %v2236
        %s2239 = sld [smem:[#allocation15 + $0x283]]
        %v2240 = vstv %s2239
        %v2241 = vmul.f32 %v2240, %v1853
        %v2242 = vmul.f32 %v2240, %v1854
        %v2243 = vadd.f32 %v2237, %v2241
        %v2244 = vadd.f32 %v2238, %v2242
        %s2245 = sld [smem:[#allocation15 + $0x303]]
        %v2246 = vstv %s2245
        %v2247 = vmul.f32 %v2246, %v1951
        %v2248 = vmul.f32 %v2246, %v1952
        %v2249 = vadd.f32 %v2243, %v2247
        %v2250 = vadd.f32 %v2244, %v2248
        %s2251 = sld [smem:[#allocation15 + $0x383]]
        %v2252 = vstv %s2251
        %v2253 = vmul.f32 %v2252, %v2049
        %v2254 = vmul.f32 %v2252, %v2050
        %v2255 = vadd.f32 %v2249, %v2253
        %v2256 = vadd.f32 %v2250, %v2254
        %v2257 = vmax.f32 %v2255, 0.0
        %v2258 = vmax.f32 %v2256, 0.0
        %s2259 = sld [smem:[#allocation16 + $0x4]]
        %s2260 = sld [smem:[#allocation15 + $0x4]]
        %v2261 = vstv %s2260
        %v2262 = vmul.f32 %v2261, %v1363
        %v2263 = vmul.f32 %v2261, %v1364
        %v2264 = vstv %s2259
        %v2265 = vadd.f32 %v2264, %v2262
        %v2266 = vadd.f32 %v2264, %v2263
        %s2267 = sld [smem:[#allocation15 + $0x84]]
        %v2268 = vstv %s2267
        %v2269 = vmul.f32 %v2268, %v1461
        %v2270 = vmul.f32 %v2268, %v1462
        %v2271 = vadd.f32 %v2265, %v2269
        %v2272 = vadd.f32 %v2266, %v2270
        %s2273 = sld [smem:[#allocation15 + $0x104]]
        %v2274 = vstv %s2273
        %v2275 = vmul.f32 %v2274, %v1559
        %v2276 = vmul.f32 %v2274, %v1560
        %v2277 = vadd.f32 %v2271, %v2275
        %v2278 = vadd.f32 %v2272, %v2276
        %s2279 = sld [smem:[#allocation15 + $0x184]]
        %v2280 = vstv %s2279
        %v2281 = vmul.f32 %v2280, %v1657
        %v2282 = vmul.f32 %v2280, %v1658
        %v2283 = vadd.f32 %v2277, %v2281
        %v2284 = vadd.f32 %v2278, %v2282
        %s2285 = sld [smem:[#allocation15 + $0x204]]
        %v2286 = vstv %s2285
        %v2287 = vmul.f32 %v2286, %v1755
        %v2288 = vmul.f32 %v2286, %v1756
        %v2289 = vadd.f32 %v2283, %v2287
        %v2290 = vadd.f32 %v2284, %v2288
        %s2291 = sld [smem:[#allocation15 + $0x284]]
        %v2292 = vstv %s2291
        %v2293 = vmul.f32 %v2292, %v1853
        %v2294 = vmul.f32 %v2292, %v1854
        %v2295 = vadd.f32 %v2289, %v2293
        %v2296 = vadd.f32 %v2290, %v2294
        %s2297 = sld [smem:[#allocation15 + $0x304]]
        %v2298 = vstv %s2297
        %v2299 = vmul.f32 %v2298, %v1951
        %v2300 = vmul.f32 %v2298, %v1952
        %v2301 = vadd.f32 %v2295, %v2299
        %v2302 = vadd.f32 %v2296, %v2300
        %s2303 = sld [smem:[#allocation15 + $0x384]]
        %v2304 = vstv %s2303
        %v2305 = vmul.f32 %v2304, %v2049
        %v2306 = vmul.f32 %v2304, %v2050
        %v2307 = vadd.f32 %v2301, %v2305
        %v2308 = vadd.f32 %v2302, %v2306
        %v2309 = vmax.f32 %v2307, 0.0
        %v2310 = vmax.f32 %v2308, 0.0
        %s2311 = sld [smem:[#allocation16 + $0x5]]
        %s2312 = sld [smem:[#allocation15 + $0x5]]
        %v2313 = vstv %s2312
        %v2314 = vmul.f32 %v2313, %v1363
        %v2315 = vmul.f32 %v2313, %v1364
        %v2316 = vstv %s2311
        %v2317 = vadd.f32 %v2316, %v2314
        %v2318 = vadd.f32 %v2316, %v2315
        %s2319 = sld [smem:[#allocation15 + $0x85]]
        %v2320 = vstv %s2319
        %v2321 = vmul.f32 %v2320, %v1461
        %v2322 = vmul.f32 %v2320, %v1462
        %v2323 = vadd.f32 %v2317, %v2321
        %v2324 = vadd.f32 %v2318, %v2322
        %s2325 = sld [smem:[#allocation15 + $0x105]]
        %v2326 = vstv %s2325
        %v2327 = vmul.f32 %v2326, %v1559
        %v2328 = vmul.f32 %v2326, %v1560
        %v2329 = vadd.f32 %v2323, %v2327
        %v2330 = vadd.f32 %v2324, %v2328
        %s2331 = sld [smem:[#allocation15 + $0x185]]
        %v2332 = vstv %s2331
        %v2333 = vmul.f32 %v2332, %v1657
        %v2334 = vmul.f32 %v2332, %v1658
        %v2335 = vadd.f32 %v2329, %v2333
        %v2336 = vadd.f32 %v2330, %v2334
        %s2337 = sld [smem:[#allocation15 + $0x205]]
        %v2338 = vstv %s2337
        %v2339 = vmul.f32 %v2338, %v1755
        %v2340 = vmul.f32 %v2338, %v1756
        %v2341 = vadd.f32 %v2335, %v2339
        %v2342 = vadd.f32 %v2336, %v2340
        %s2343 = sld [smem:[#allocation15 + $0x285]]
        %v2344 = vstv %s2343
        %v2345 = vmul.f32 %v2344, %v1853
        %v2346 = vmul.f32 %v2344, %v1854
        %v2347 = vadd.f32 %v2341, %v2345
        %v2348 = vadd.f32 %v2342, %v2346
        %s2349 = sld [smem:[#allocation15 + $0x305]]
        %v2350 = vstv %s2349
        %v2351 = vmul.f32 %v2350, %v1951
        %v2352 = vmul.f32 %v2350, %v1952
        %v2353 = vadd.f32 %v2347, %v2351
        %v2354 = vadd.f32 %v2348, %v2352
        %s2355 = sld [smem:[#allocation15 + $0x385]]
        %v2356 = vstv %s2355
        %v2357 = vmul.f32 %v2356, %v2049
        %v2358 = vmul.f32 %v2356, %v2050
        %v2359 = vadd.f32 %v2353, %v2357
        %v2360 = vadd.f32 %v2354, %v2358
        %v2361 = vmax.f32 %v2359, 0.0
        %v2362 = vmax.f32 %v2360, 0.0
        %s2363 = sld [smem:[#allocation16 + $0x6]]
        %s2364 = sld [smem:[#allocation15 + $0x6]]
        %v2365 = vstv %s2364
        %v2366 = vmul.f32 %v2365, %v1363
        %v2367 = vmul.f32 %v2365, %v1364
        %v2368 = vstv %s2363
        %v2369 = vadd.f32 %v2368, %v2366
        %v2370 = vadd.f32 %v2368, %v2367
        %s2371 = sld [smem:[#allocation15 + $0x86]]
        %v2372 = vstv %s2371
        %v2373 = vmul.f32 %v2372, %v1461
        %v2374 = vmul.f32 %v2372, %v1462
        %v2375 = vadd.f32 %v2369, %v2373
        %v2376 = vadd.f32 %v2370, %v2374
        %s2377 = sld [smem:[#allocation15 + $0x106]]
        %v2378 = vstv %s2377
        %v2379 = vmul.f32 %v2378, %v1559
        %v2380 = vmul.f32 %v2378, %v1560
        %v2381 = vadd.f32 %v2375, %v2379
        %v2382 = vadd.f32 %v2376, %v2380
        %s2383 = sld [smem:[#allocation15 + $0x186]]
        %v2384 = vstv %s2383
        %v2385 = vmul.f32 %v2384, %v1657
        %v2386 = vmul.f32 %v2384, %v1658
        %v2387 = vadd.f32 %v2381, %v2385
        %v2388 = vadd.f32 %v2382, %v2386
        %s2389 = sld [smem:[#allocation15 + $0x206]]
        %v2390 = vstv %s2389
        %v2391 = vmul.f32 %v2390, %v1755
        %v2392 = vmul.f32 %v2390, %v1756
        %v2393 = vadd.f32 %v2387, %v2391
        %v2394 = vadd.f32 %v2388, %v2392
        %s2395 = sld [smem:[#allocation15 + $0x286]]
        %v2396 = vstv %s2395
        %v2397 = vmul.f32 %v2396, %v1853
        %v2398 = vmul.f32 %v2396, %v1854
        %v2399 = vadd.f32 %v2393, %v2397
        %v2400 = vadd.f32 %v2394, %v2398
        %s2401 = sld [smem:[#allocation15 + $0x306]]
        %v2402 = vstv %s2401
        %v2403 = vmul.f32 %v2402, %v1951
        %v2404 = vmul.f32 %v2402, %v1952
        %v2405 = vadd.f32 %v2399, %v2403
        %v2406 = vadd.f32 %v2400, %v2404
        %s2407 = sld [smem:[#allocation15 + $0x386]]
        %v2408 = vstv %s2407
        %v2409 = vmul.f32 %v2408, %v2049
        %v2410 = vmul.f32 %v2408, %v2050
        %v2411 = vadd.f32 %v2405, %v2409
        %v2412 = vadd.f32 %v2406, %v2410
        %v2413 = vmax.f32 %v2411, 0.0
        %v2414 = vmax.f32 %v2412, 0.0
        %s2415 = sld [smem:[#allocation16 + $0x7]]
        %s2416 = sld [smem:[#allocation15 + $0x7]]
        %v2417 = vstv %s2416
        %v2418 = vmul.f32 %v2417, %v1363
        %v2419 = vmul.f32 %v2417, %v1364
        %v2420 = vstv %s2415
        %v2421 = vadd.f32 %v2420, %v2418
        %v2422 = vadd.f32 %v2420, %v2419
        %s2423 = sld [smem:[#allocation15 + $0x87]]
        %v2424 = vstv %s2423
        %v2425 = vmul.f32 %v2424, %v1461
        %v2426 = vmul.f32 %v2424, %v1462
        %v2427 = vadd.f32 %v2421, %v2425
        %v2428 = vadd.f32 %v2422, %v2426
        %s2429 = sld [smem:[#allocation15 + $0x107]]
        %v2430 = vstv %s2429
        %v2431 = vmul.f32 %v2430, %v1559
        %v2432 = vmul.f32 %v2430, %v1560
        %v2433 = vadd.f32 %v2427, %v2431
        %v2434 = vadd.f32 %v2428, %v2432
        %s2435 = sld [smem:[#allocation15 + $0x187]]
        %v2436 = vstv %s2435
        %v2437 = vmul.f32 %v2436, %v1657
        %v2438 = vmul.f32 %v2436, %v1658
        %v2439 = vadd.f32 %v2433, %v2437
        %v2440 = vadd.f32 %v2434, %v2438
        %s2441 = sld [smem:[#allocation15 + $0x207]]
        %v2442 = vstv %s2441
        %v2443 = vmul.f32 %v2442, %v1755
        %v2444 = vmul.f32 %v2442, %v1756
        %v2445 = vadd.f32 %v2439, %v2443
        %v2446 = vadd.f32 %v2440, %v2444
        %s2447 = sld [smem:[#allocation15 + $0x287]]
        %v2448 = vstv %s2447
        %v2449 = vmul.f32 %v2448, %v1853
        %v2450 = vmul.f32 %v2448, %v1854
        %v2451 = vadd.f32 %v2445, %v2449
        %v2452 = vadd.f32 %v2446, %v2450
        %s2453 = sld [smem:[#allocation15 + $0x307]]
        %v2454 = vstv %s2453
        %v2455 = vmul.f32 %v2454, %v1951
        %v2456 = vmul.f32 %v2454, %v1952
        %v2457 = vadd.f32 %v2451, %v2455
        %v2458 = vadd.f32 %v2452, %v2456
        %s2459 = sld [smem:[#allocation15 + $0x387]]
        %v2460 = vstv %s2459
        %v2461 = vmul.f32 %v2460, %v2049
        %v2462 = vmul.f32 %v2460, %v2050
        %v2463 = vadd.f32 %v2457, %v2461
        %v2464 = vadd.f32 %v2458, %v2462
        %v2465 = vmax.f32 %v2463, 0.0
        %v2466 = vmax.f32 %v2464, 0.0
        %vm2467 = vcmask 130048
        %v2468 = vsel %vm2467, %v2101, 0.0
        %2469 = vadd.xlane.f32.xlu0 %v2468
        %v2470 = vpop.xlane.xlu0 %2469
        %v2471 = vsel %vm2467, %v2102, 0.0
        %2472 = vadd.xlane.f32.xlu0 %v2471
        %v2473 = vpop.xlane.xlu0 %2472
        %v2474 = vrcp.pop 16.0
        %v2475 = vmul.f32 %v2470, %v2474
        %v2476 = vmul.f32 %v2473, %v2474
        %v2477 = vadd.f32 %v2475, %v2476
        %v2478 = vrot.slane %v2477, 4
        %v2479 = vadd.f32 %v2477, %v2478
        %v2480 = vrot.slane %v2479, 2
        %v2481 = vadd.f32 %v2479, %v2480
        %v2482 = vrot.slane %v2481, 1
        %v2483 = vadd.f32 %v2481, %v2482
        %v2484 = vmul.f32 %v2483, %v2474
        %v2485 = vsub.f32 %v2101, %v2484
        %v2486 = vsub.f32 %v2102, %v2484
        %v2487 = vmul.f32 %v2485, %v2485
        %v2488 = vmul.f32 %v2486, %v2486
        %v2489 = vsel %vm2467, %v2487, 0.0
        %2490 = vadd.xlane.f32.xlu0 %v2489
        %v2491 = vpop.xlane.xlu0 %2490
        %v2492 = vsel %vm2467, %v2488, 0.0
        %2493 = vadd.xlane.f32.xlu0 %v2492
        %v2494 = vpop.xlane.xlu0 %2493
        %v2495 = vmul.f32 %v2491, %v2474
        %v2496 = vmul.f32 %v2494, %v2474
        %v2497 = vadd.f32 %v2495, %v2496
        %v2498 = vrot.slane %v2497, 4
        %v2499 = vadd.f32 %v2497, %v2498
        %v2500 = vrot.slane %v2499, 2
        %v2501 = vadd.f32 %v2499, %v2500
        %v2502 = vrot.slane %v2501, 1
        %v2503 = vadd.f32 %v2501, %v2502
        %v2504 = vmul.f32 %v2503, %v2474
        %v2505 = vadd.f32 %v2504, 0.001
        %v2506 = vrsqrt.pop %v2505
        %v2507 = vmul.f32 %v2485, %v2506
        %v2508 = vmul.f32 %v2486, %v2506
        %v2509 = vsel %vm2467, %v2153, 0.0
        %2510 = vadd.xlane.f32.xlu0 %v2509
        %v2511 = vpop.xlane.xlu0 %2510
        %v2512 = vsel %vm2467, %v2154, 0.0
        %2513 = vadd.xlane.f32.xlu0 %v2512
        %v2514 = vpop.xlane.xlu0 %2513
        %v2515 = vmul.f32 %v2511, %v2474
        %v2516 = vmul.f32 %v2514, %v2474
        %v2517 = vadd.f32 %v2515, %v2516
        %v2518 = vrot.slane %v2517, 4
        %v2519 = vadd.f32 %v2517, %v2518
        %v2520 = vrot.slane %v2519, 2
        %v2521 = vadd.f32 %v2519, %v2520
        %v2522 = vrot.slane %v2521, 1
        %v2523 = vadd.f32 %v2521, %v2522
        %v2524 = vmul.f32 %v2523, %v2474
        %v2525 = vsub.f32 %v2153, %v2524
        %v2526 = vsub.f32 %v2154, %v2524
        %v2527 = vmul.f32 %v2525, %v2525
        %v2528 = vmul.f32 %v2526, %v2526
        %v2529 = vsel %vm2467, %v2527, 0.0
        %2530 = vadd.xlane.f32.xlu0 %v2529
        %v2531 = vpop.xlane.xlu0 %2530
        %v2532 = vsel %vm2467, %v2528, 0.0
        %2533 = vadd.xlane.f32.xlu0 %v2532
        %v2534 = vpop.xlane.xlu0 %2533
        %v2535 = vmul.f32 %v2531, %v2474
        %v2536 = vmul.f32 %v2534, %v2474
        %v2537 = vadd.f32 %v2535, %v2536
        %v2538 = vrot.slane %v2537, 4
        %v2539 = vadd.f32 %v2537, %v2538
        %v2540 = vrot.slane %v2539, 2
        %v2541 = vadd.f32 %v2539, %v2540
        %v2542 = vrot.slane %v2541, 1
        %v2543 = vadd.f32 %v2541, %v2542
        %v2544 = vmul.f32 %v2543, %v2474
        %v2545 = vadd.f32 %v2544, 0.001
        %v2546 = vrsqrt.pop %v2545
        %v2547 = vmul.f32 %v2525, %v2546
        %v2548 = vmul.f32 %v2526, %v2546
        %v2549 = vsel %vm2467, %v2205, 0.0
        %2550 = vadd.xlane.f32.xlu0 %v2549
        %v2551 = vpop.xlane.xlu0 %2550
        %v2552 = vsel %vm2467, %v2206, 0.0
        %2553 = vadd.xlane.f32.xlu0 %v2552
        %v2554 = vpop.xlane.xlu0 %2553
        %v2555 = vmul.f32 %v2551, %v2474
        %v2556 = vmul.f32 %v2554, %v2474
        %v2557 = vadd.f32 %v2555, %v2556
        %v2558 = vrot.slane %v2557, 4
        %v2559 = vadd.f32 %v2557, %v2558
        %v2560 = vrot.slane %v2559, 2
        %v2561 = vadd.f32 %v2559, %v2560
        %v2562 = vrot.slane %v2561, 1
        %v2563 = vadd.f32 %v2561, %v2562
        %v2564 = vmul.f32 %v2563, %v2474
        %v2565 = vsub.f32 %v2205, %v2564
        %v2566 = vsub.f32 %v2206, %v2564
        %v2567 = vmul.f32 %v2565, %v2565
        %v2568 = vmul.f32 %v2566, %v2566
        %v2569 = vsel %vm2467, %v2567, 0.0
        %2570 = vadd.xlane.f32.xlu0 %v2569
        %v2571 = vpop.xlane.xlu0 %2570
        %v2572 = vsel %vm2467, %v2568, 0.0
        %2573 = vadd.xlane.f32.xlu0 %v2572
        %v2574 = vpop.xlane.xlu0 %2573
        %v2575 = vmul.f32 %v2571, %v2474
        %v2576 = vmul.f32 %v2574, %v2474
        %v2577 = vadd.f32 %v2575, %v2576
        %v2578 = vrot.slane %v2577, 4
        %v2579 = vadd.f32 %v2577, %v2578
        %v2580 = vrot.slane %v2579, 2
        %v2581 = vadd.f32 %v2579, %v2580
        %v2582 = vrot.slane %v2581, 1
        %v2583 = vadd.f32 %v2581, %v2582
        %v2584 = vmul.f32 %v2583, %v2474
        %v2585 = vadd.f32 %v2584, 0.001
        %v2586 = vrsqrt.pop %v2585
        %v2587 = vmul.f32 %v2565, %v2586
        %v2588 = vmul.f32 %v2566, %v2586
        %v2589 = vsel %vm2467, %v2257, 0.0
        %2590 = vadd.xlane.f32.xlu0 %v2589
        %v2591 = vpop.xlane.xlu0 %2590
        %v2592 = vsel %vm2467, %v2258, 0.0
        %2593 = vadd.xlane.f32.xlu0 %v2592
        %v2594 = vpop.xlane.xlu0 %2593
        %v2595 = vmul.f32 %v2591, %v2474
        %v2596 = vmul.f32 %v2594, %v2474
        %v2597 = vadd.f32 %v2595, %v2596
        %v2598 = vrot.slane %v2597, 4
        %v2599 = vadd.f32 %v2597, %v2598
        %v2600 = vrot.slane %v2599, 2
        %v2601 = vadd.f32 %v2599, %v2600
        %v2602 = vrot.slane %v2601, 1
        %v2603 = vadd.f32 %v2601, %v2602
        %v2604 = vmul.f32 %v2603, %v2474
        %v2605 = vsub.f32 %v2257, %v2604
        %v2606 = vsub.f32 %v2258, %v2604
        %v2607 = vmul.f32 %v2605, %v2605
        %v2608 = vmul.f32 %v2606, %v2606
        %v2609 = vsel %vm2467, %v2607, 0.0
        %2610 = vadd.xlane.f32.xlu0 %v2609
        %v2611 = vpop.xlane.xlu0 %2610
        %v2612 = vsel %vm2467, %v2608, 0.0
        %2613 = vadd.xlane.f32.xlu0 %v2612
        %v2614 = vpop.xlane.xlu0 %2613
        %v2615 = vmul.f32 %v2611, %v2474
        %v2616 = vmul.f32 %v2614, %v2474
        %v2617 = vadd.f32 %v2615, %v2616
        %v2618 = vrot.slane %v2617, 4
        %v2619 = vadd.f32 %v2617, %v2618
        %v2620 = vrot.slane %v2619, 2
        %v2621 = vadd.f32 %v2619, %v2620
        %v2622 = vrot.slane %v2621, 1
        %v2623 = vadd.f32 %v2621, %v2622
        %v2624 = vmul.f32 %v2623, %v2474
        %v2625 = vadd.f32 %v2624, 0.001
        %v2626 = vrsqrt.pop %v2625
        %v2627 = vmul.f32 %v2605, %v2626
        %v2628 = vmul.f32 %v2606, %v2626
        %v2629 = vsel %vm2467, %v2309, 0.0
        %2630 = vadd.xlane.f32.xlu0 %v2629
        %v2631 = vpop.xlane.xlu0 %2630
        %v2632 = vsel %vm2467, %v2310, 0.0
        %2633 = vadd.xlane.f32.xlu0 %v2632
        %v2634 = vpop.xlane.xlu0 %2633
        %v2635 = vmul.f32 %v2631, %v2474
        %v2636 = vmul.f32 %v2634, %v2474
        %v2637 = vadd.f32 %v2635, %v2636
        %v2638 = vrot.slane %v2637, 4
        %v2639 = vadd.f32 %v2637, %v2638
        %v2640 = vrot.slane %v2639, 2
        %v2641 = vadd.f32 %v2639, %v2640
        %v2642 = vrot.slane %v2641, 1
        %v2643 = vadd.f32 %v2641, %v2642
        %v2644 = vmul.f32 %v2643, %v2474
        %v2645 = vsub.f32 %v2309, %v2644
        %v2646 = vsub.f32 %v2310, %v2644
        %v2647 = vmul.f32 %v2645, %v2645
        %v2648 = vmul.f32 %v2646, %v2646
        %v2649 = vsel %vm2467, %v2647, 0.0
        %2650 = vadd.xlane.f32.xlu0 %v2649
        %v2651 = vpop.xlane.xlu0 %2650
        %v2652 = vsel %vm2467, %v2648, 0.0
        %2653 = vadd.xlane.f32.xlu0 %v2652
        %v2654 = vpop.xlane.xlu0 %2653
        %v2655 = vmul.f32 %v2651, %v2474
        %v2656 = vmul.f32 %v2654, %v2474
        %v2657 = vadd.f32 %v2655, %v2656
        %v2658 = vrot.slane %v2657, 4
        %v2659 = vadd.f32 %v2657, %v2658
        %v2660 = vrot.slane %v2659, 2
        %v2661 = vadd.f32 %v2659, %v2660
        %v2662 = vrot.slane %v2661, 1
        %v2663 = vadd.f32 %v2661, %v2662
        %v2664 = vmul.f32 %v2663, %v2474
        %v2665 = vadd.f32 %v2664, 0.001
        %v2666 = vrsqrt.pop %v2665
        %v2667 = vmul.f32 %v2645, %v2666
        %v2668 = vmul.f32 %v2646, %v2666
        %v2669 = vsel %vm2467, %v2361, 0.0
        %2670 = vadd.xlane.f32.xlu0 %v2669
        %v2671 = vpop.xlane.xlu0 %2670
        %v2672 = vsel %vm2467, %v2362, 0.0
        %2673 = vadd.xlane.f32.xlu0 %v2672
        %v2674 = vpop.xlane.xlu0 %2673
        %v2675 = vmul.f32 %v2671, %v2474
        %v2676 = vmul.f32 %v2674, %v2474
        %v2677 = vadd.f32 %v2675, %v2676
        %v2678 = vrot.slane %v2677, 4
        %v2679 = vadd.f32 %v2677, %v2678
        %v2680 = vrot.slane %v2679, 2
        %v2681 = vadd.f32 %v2679, %v2680
        %v2682 = vrot.slane %v2681, 1
        %v2683 = vadd.f32 %v2681, %v2682
        %v2684 = vmul.f32 %v2683, %v2474
        %v2685 = vsub.f32 %v2361, %v2684
        %v2686 = vsub.f32 %v2362, %v2684
        %v2687 = vmul.f32 %v2685, %v2685
        %v2688 = vmul.f32 %v2686, %v2686
        %v2689 = vsel %vm2467, %v2687, 0.0
        %2690 = vadd.xlane.f32.xlu0 %v2689
        %v2691 = vpop.xlane.xlu0 %2690
        %v2692 = vsel %vm2467, %v2688, 0.0
        %2693 = vadd.xlane.f32.xlu0 %v2692
        %v2694 = vpop.xlane.xlu0 %2693
        %v2695 = vmul.f32 %v2691, %v2474
        %v2696 = vmul.f32 %v2694, %v2474
        %v2697 = vadd.f32 %v2695, %v2696
        %v2698 = vrot.slane %v2697, 4
        %v2699 = vadd.f32 %v2697, %v2698
        %v2700 = vrot.slane %v2699, 2
        %v2701 = vadd.f32 %v2699, %v2700
        %v2702 = vrot.slane %v2701, 1
        %v2703 = vadd.f32 %v2701, %v2702
        %v2704 = vmul.f32 %v2703, %v2474
        %v2705 = vadd.f32 %v2704, 0.001
        %v2706 = vrsqrt.pop %v2705
        %v2707 = vmul.f32 %v2685, %v2706
        %v2708 = vmul.f32 %v2686, %v2706
        %v2709 = vsel %vm2467, %v2413, 0.0
        %2710 = vadd.xlane.f32.xlu0 %v2709
        %v2711 = vpop.xlane.xlu0 %2710
        %v2712 = vsel %vm2467, %v2414, 0.0
        %2713 = vadd.xlane.f32.xlu0 %v2712
        %v2714 = vpop.xlane.xlu0 %2713
        %v2715 = vmul.f32 %v2711, %v2474
        %v2716 = vmul.f32 %v2714, %v2474
        %v2717 = vadd.f32 %v2715, %v2716
        %v2718 = vrot.slane %v2717, 4
        %v2719 = vadd.f32 %v2717, %v2718
        %v2720 = vrot.slane %v2719, 2
        %v2721 = vadd.f32 %v2719, %v2720
        %v2722 = vrot.slane %v2721, 1
        %v2723 = vadd.f32 %v2721, %v2722
        %v2724 = vmul.f32 %v2723, %v2474
        %v2725 = vsub.f32 %v2413, %v2724
        %v2726 = vsub.f32 %v2414, %v2724
        %v2727 = vmul.f32 %v2725, %v2725
        %v2728 = vmul.f32 %v2726, %v2726
        %v2729 = vsel %vm2467, %v2727, 0.0
        %2730 = vadd.xlane.f32.xlu0 %v2729
        %v2731 = vpop.xlane.xlu0 %2730
        %v2732 = vsel %vm2467, %v2728, 0.0
        %2733 = vadd.xlane.f32.xlu0 %v2732
        %v2734 = vpop.xlane.xlu0 %2733
        %v2735 = vmul.f32 %v2731, %v2474
        %v2736 = vmul.f32 %v2734, %v2474
        %v2737 = vadd.f32 %v2735, %v2736
        %v2738 = vrot.slane %v2737, 4
        %v2739 = vadd.f32 %v2737, %v2738
        %v2740 = vrot.slane %v2739, 2
        %v2741 = vadd.f32 %v2739, %v2740
        %v2742 = vrot.slane %v2741, 1
        %v2743 = vadd.f32 %v2741, %v2742
        %v2744 = vmul.f32 %v2743, %v2474
        %v2745 = vadd.f32 %v2744, 0.001
        %v2746 = vrsqrt.pop %v2745
        %v2747 = vmul.f32 %v2725, %v2746
        %v2748 = vmul.f32 %v2726, %v2746
        %v2749 = vsel %vm2467, %v2465, 0.0
        %2750 = vadd.xlane.f32.xlu0 %v2749
        %v2751 = vpop.xlane.xlu0 %2750
        %v2752 = vsel %vm2467, %v2466, 0.0
        %2753 = vadd.xlane.f32.xlu0 %v2752
        %v2754 = vpop.xlane.xlu0 %2753
        %v2755 = vmul.f32 %v2751, %v2474
        %v2756 = vmul.f32 %v2754, %v2474
        %v2757 = vadd.f32 %v2755, %v2756
        %v2758 = vrot.slane %v2757, 4
        %v2759 = vadd.f32 %v2757, %v2758
        %v2760 = vrot.slane %v2759, 2
        %v2761 = vadd.f32 %v2759, %v2760
        %v2762 = vrot.slane %v2761, 1
        %v2763 = vadd.f32 %v2761, %v2762
        %v2764 = vmul.f32 %v2763, %v2474
        %v2765 = vsub.f32 %v2465, %v2764
        %v2766 = vsub.f32 %v2466, %v2764
        %v2767 = vmul.f32 %v2765, %v2765
        %v2768 = vmul.f32 %v2766, %v2766
        %v2769 = vsel %vm2467, %v2767, 0.0
        %2770 = vadd.xlane.f32.xlu0 %v2769
        %v2771 = vpop.xlane.xlu0 %2770
        %v2772 = vsel %vm2467, %v2768, 0.0
        %2773 = vadd.xlane.f32.xlu0 %v2772
        %v2774 = vpop.xlane.xlu0 %2773
        %v2775 = vmul.f32 %v2771, %v2474
        %v2776 = vmul.f32 %v2774, %v2474
        %v2777 = vadd.f32 %v2775, %v2776
        %v2778 = vrot.slane %v2777, 4
        %v2779 = vadd.f32 %v2777, %v2778
        %v2780 = vrot.slane %v2779, 2
        %v2781 = vadd.f32 %v2779, %v2780
        %v2782 = vrot.slane %v2781, 1
        %v2783 = vadd.f32 %v2781, %v2782
        %v2784 = vmul.f32 %v2783, %v2474
        %v2785 = vadd.f32 %v2784, 0.001
        %v2786 = vrsqrt.pop %v2785
        %v2787 = vmul.f32 %v2765, %v2786
        %v2788 = vmul.f32 %v2766, %v2786
        %2789 = vrot.lane.b32.xlu0 %v2507, 16
        %v2790 = vpop.permute.xlu0 %2789
        %v2791 = vsel %vm639, %v2790, %v2507
        %2792 = vrot.lane.b32.xlu0 %v2508, 16
        %v2793 = vpop.permute.xlu0 %2792
        %v2794 = vsel %vm639, %v2793, %v2508
        %2795 = vrot.lane.b32.xlu0 %v2791, 16
        %v2796 = vpop.permute.xlu0 %2795
        %2797 = vrot.lane.b32.xlu0 %v2794, 16
        %v2798 = vpop.permute.xlu0 %2797
        %v2799 = vsel %vm639, %v2796, %v2507
        %v2800 = vsel %vm639, %v2798, %v2508
        %2803 = vrot.lane.b32.xlu0 %v2799, 113
        %v2804 = vpop.permute.xlu0 %2803
        %2805 = vrot.lane.b32.xlu0 %v2800, 113
        %v2806 = vpop.permute.xlu0 %2805
        %v2809 = vsel %vm622, %v2804, 0.0
        %v2810 = vsel %vm622, %v2806, 0.0
        %2811 = vrot.lane.b32.xlu0 %v2799, 127
        %v2812 = vpop.permute.xlu0 %2811
        %2813 = vrot.lane.b32.xlu0 %v2800, 127
        %v2814 = vpop.permute.xlu0 %2813
        %v2817 = vsel %vm623, %v2812, 0.0
        %v2818 = vsel %vm623, %v2814, 0.0
        %s2819 = sld [smem:[#allocation18]]
        %v2820 = vstv %s2819
        %v2821 = vmul.f32 %v2820, %v2809
        %v2822 = vmul.f32 %v2820, %v2810
        %s2823 = sld [smem:[#allocation18 + $0x80]]
        %v2824 = vstv %s2823
        %v2825 = vmul.f32 %v2824, %v2507
        %v2826 = vmul.f32 %v2824, %v2508
        %v2827 = vadd.f32 %v2821, %v2825
        %v2828 = vadd.f32 %v2822, %v2826
        %s2829 = sld [smem:[#allocation18 + $0x100]]
        %v2830 = vstv %s2829
        %v2831 = vmul.f32 %v2830, %v2817
        %v2832 = vmul.f32 %v2830, %v2818
        %v2833 = vadd.f32 %v2827, %v2831
        %v2834 = vadd.f32 %v2828, %v2832
        %s2835 = sld [smem:[#allocation18 + $0x180]]
        %v2836 = vstv %s2835
        %v2837 = vmul.f32 %v2836, %v2809
        %v2838 = vmul.f32 %v2836, %v2810
        %s2839 = sld [smem:[#allocation18 + $0x200]]
        %v2840 = vstv %s2839
        %v2841 = vmul.f32 %v2840, %v2507
        %v2842 = vmul.f32 %v2840, %v2508
        %v2843 = vadd.f32 %v2837, %v2841
        %v2844 = vadd.f32 %v2838, %v2842
        %s2845 = sld [smem:[#allocation18 + $0x280]]
        %v2846 = vstv %s2845
        %v2847 = vmul.f32 %v2846, %v2817
        %v2848 = vmul.f32 %v2846, %v2818
        %v2849 = vadd.f32 %v2843, %v2847
        %v2850 = vadd.f32 %v2844, %v2848
        %v2852 = vsel %vm2467, %v633, 0
        %2854 = vmatprep.subr.mxu0 0.0
        %2855 = vmatpush1.msra.mxu0 0.0
        %2856 = vmatprep.subr.mxu0 0.0
        %2857 = vmatpush1.msra.mxu0 0.0
        %2858 = vmatprep.subr.mxu0 0.0
        %2859 = vmatpush1.msra.mxu0 0.0
        %2860 = vmatprep.subr.mxu0 0.0
        %2861 = vmatpush1.msra.mxu0 0.0
        %2862 = vmatprep.subr.mxu0 0.0
        %2863 = vmatpush1.msra.mxu0 0.0
        %2864 = vmatprep.subr.mxu0 0.0
        %2865 = vmatpush1.msra.mxu0 0.0
        %2866 = vmatprep.subr.mxu0 0.0
        %2867 = vmatpush1.msra.mxu0 0.0
        %2868 = vmatprep.subr.mxu0 0.0
        %2869 = vmatpush1.msra.mxu0 0.0
        %2870 = vmatprep.subr.mxu0 0.0
        %2871 = vmatpush1.msra.mxu0 0.0
        %2872 = vmatprep.subr.mxu0 0.0
        %2873 = vmatpush1.msra.mxu0 0.0
        %2874 = vmatprep.subr.mxu0 0.0
        %2875 = vmatpush1.msra.mxu0 0.0
        %2876 = vmatprep.subr.mxu0 0.0
        %2877 = vmatpush1.msra.mxu0 0.0
        %2878 = vmatprep.subr.mxu0 0.0
        %2879 = vmatpush1.msra.mxu0 0.0
        %2880 = vmatprep.subr.mxu0 0.0
        %2881 = vmatpush1.msra.mxu0 0.0
        %2882 = vmatprep.subr.mxu0 0.0
        %2883 = vmatpush1.msra.mxu0 %v2850
        %2884 = vmatprep.subr.mxu0 0.0
        %2885 = vmatpush1.msra.mxu0 %v2849
        %2886 = vmatprep.subr.mxu0 0.0
        %2887 = vmatpush2.msra.mxu0 0.0
        %2888 = vmatprep.subr.mxu0 0.0
        %2889 = vmatpush2.msra.mxu0 0.0
        %2890 = vmatprep.subr.mxu0 0.0
        %2891 = vmatpush2.msra.mxu0 0.0
        %2892 = vmatprep.subr.mxu0 0.0
        %2893 = vmatpush2.msra.mxu0 0.0
        %2894 = vmatprep.subr.mxu0 0.0
        %2895 = vmatpush2.msra.mxu0 0.0
        %2896 = vmatprep.subr.mxu0 0.0
        %2897 = vmatpush2.msra.mxu0 0.0
        %2898 = vmatprep.subr.mxu0 0.0
        %2899 = vmatpush2.msra.mxu0 0.0
        %2900 = vmatprep.subr.mxu0 0.0
        %2901 = vmatpush2.msra.mxu0 0.0
        %2902 = vmatprep.subr.mxu0 0.0
        %2903 = vmatpush2.msra.mxu0 0.0
        %2904 = vmatprep.subr.mxu0 0.0
        %2905 = vmatpush2.msra.mxu0 0.0
        %2906 = vmatprep.subr.mxu0 0.0
        %2907 = vmatpush2.msra.mxu0 0.0
        %2908 = vmatprep.subr.mxu0 0.0
        %2909 = vmatpush2.msra.mxu0 0.0
        %2910 = vmatprep.subr.mxu0 0.0
        %2911 = vmatpush2.msra.mxu0 0.0
        %2912 = vmatprep.subr.mxu0 0.0
        %2913 = vmatpush2.msra.mxu0 0.0
        %2914 = vmatprep.subr.mxu0 0.0
        %2915 = vmatpush2.msra.mxu0 0.0
        %2916 = vmatprep.subr.mxu0 0.0
        %2917 = vmatpush2.msra.mxu0 0.0
        %2918 = vmatprep.mubr.f32.mxu0 0.0
        %2919 = vmatmul.mubr.f32.gmra.mxu0 %v2852
        %v2920 = vpop.f32.mrf.mxu0
        %v2921 = vadd.f32 0.0, %v2920
        %v2922 = vpop.f32.mrf.mxu0
        %2923 = vdwg.mxu0
        %v2925 = vsel %vm2467, %v631, 0
        %2927 = vmatprep.subr.mxu0 0.0
        %2928 = vmatpush1.msra.mxu0 0.0
        %2929 = vmatprep.subr.mxu0 0.0
        %2930 = vmatpush1.msra.mxu0 0.0
        %2931 = vmatprep.subr.mxu0 0.0
        %2932 = vmatpush1.msra.mxu0 0.0
        %2933 = vmatprep.subr.mxu0 0.0
        %2934 = vmatpush1.msra.mxu0 0.0
        %2935 = vmatprep.subr.mxu0 0.0
        %2936 = vmatpush1.msra.mxu0 0.0
        %2937 = vmatprep.subr.mxu0 0.0
        %2938 = vmatpush1.msra.mxu0 0.0
        %2939 = vmatprep.subr.mxu0 0.0
        %2940 = vmatpush1.msra.mxu0 0.0
        %2941 = vmatprep.subr.mxu0 0.0
        %2942 = vmatpush1.msra.mxu0 0.0
        %2943 = vmatprep.subr.mxu0 0.0
        %2944 = vmatpush1.msra.mxu0 0.0
        %2945 = vmatprep.subr.mxu0 0.0
        %2946 = vmatpush1.msra.mxu0 0.0
        %2947 = vmatprep.subr.mxu0 0.0
        %2948 = vmatpush1.msra.mxu0 0.0
        %2949 = vmatprep.subr.mxu0 0.0
        %2950 = vmatpush1.msra.mxu0 0.0
        %2951 = vmatprep.subr.mxu0 0.0
        %2952 = vmatpush1.msra.mxu0 0.0
        %2953 = vmatprep.subr.mxu0 0.0
        %2954 = vmatpush1.msra.mxu0 0.0
        %2955 = vmatprep.subr.mxu0 0.0
        %2956 = vmatpush1.msra.mxu0 %v2834
        %2957 = vmatprep.subr.mxu0 0.0
        %2958 = vmatpush1.msra.mxu0 %v2833
        %2959 = vmatprep.subr.mxu0 0.0
        %2960 = vmatpush2.msra.mxu0 0.0
        %2961 = vmatprep.subr.mxu0 0.0
        %2962 = vmatpush2.msra.mxu0 0.0
        %2963 = vmatprep.subr.mxu0 0.0
        %2964 = vmatpush2.msra.mxu0 0.0
        %2965 = vmatprep.subr.mxu0 0.0
        %2966 = vmatpush2.msra.mxu0 0.0
        %2967 = vmatprep.subr.mxu0 0.0
        %2968 = vmatpush2.msra.mxu0 0.0
        %2969 = vmatprep.subr.mxu0 0.0
        %2970 = vmatpush2.msra.mxu0 0.0
        %2971 = vmatprep.subr.mxu0 0.0
        %2972 = vmatpush2.msra.mxu0 0.0
        %2973 = vmatprep.subr.mxu0 0.0
        %2974 = vmatpush2.msra.mxu0 0.0
        %2975 = vmatprep.subr.mxu0 0.0
        %2976 = vmatpush2.msra.mxu0 0.0
        %2977 = vmatprep.subr.mxu0 0.0
        %2978 = vmatpush2.msra.mxu0 0.0
        %2979 = vmatprep.subr.mxu0 0.0
        %2980 = vmatpush2.msra.mxu0 0.0
        %2981 = vmatprep.subr.mxu0 0.0
        %2982 = vmatpush2.msra.mxu0 0.0
        %2983 = vmatprep.subr.mxu0 0.0
        %2984 = vmatpush2.msra.mxu0 0.0
        %2985 = vmatprep.subr.mxu0 0.0
        %2986 = vmatpush2.msra.mxu0 0.0
        %2987 = vmatprep.subr.mxu0 0.0
        %2988 = vmatpush2.msra.mxu0 0.0
        %2989 = vmatprep.subr.mxu0 0.0
        %2990 = vmatpush2.msra.mxu0 0.0
        %2991 = vmatprep.mubr.f32.mxu0 0.0
        %2992 = vmatmul.mubr.f32.gmra.mxu0 %v2925
        %v2993 = vpop.f32.mrf.mxu0
        %v2994 = vadd.f32 %v2921, %v2993
        %v2995 = vpop.f32.mrf.mxu0
        %2996 = vdwg.mxu0
        %s2997 = sld [smem:[#allocation18 + $0x300]]
        %v2998 = vstv %s2997
        %v2999 = vmul.f32 %v2998, %v2809
        %v3000 = vmul.f32 %v2998, %v2810
        %s3001 = sld [smem:[#allocation18 + $0x380]]
        %v3002 = vstv %s3001
        %v3003 = vmul.f32 %v3002, %v2507
        %v3004 = vmul.f32 %v3002, %v2508
        %v3005 = vadd.f32 %v2999, %v3003
        %v3006 = vadd.f32 %v3000, %v3004
        %s3007 = sld [smem:[#allocation18 + $0x400]]
        %v3008 = vstv %s3007
        %v3009 = vmul.f32 %v3008, %v2817
        %v3010 = vmul.f32 %v3008, %v2818
        %v3011 = vadd.f32 %v3005, %v3009
        %v3012 = vadd.f32 %v3006, %v3010
        %v3014 = vsel %vm2467, %v636, 0
        %3016 = vmatprep.subr.mxu0 0.0
        %3017 = vmatpush1.msra.mxu0 0.0
        %3018 = vmatprep.subr.mxu0 0.0
        %3019 = vmatpush1.msra.mxu0 0.0
        %3020 = vmatprep.subr.mxu0 0.0
        %3021 = vmatpush1.msra.mxu0 0.0
        %3022 = vmatprep.subr.mxu0 0.0
        %3023 = vmatpush1.msra.mxu0 0.0
        %3024 = vmatprep.subr.mxu0 0.0
        %3025 = vmatpush1.msra.mxu0 0.0
        %3026 = vmatprep.subr.mxu0 0.0
        %3027 = vmatpush1.msra.mxu0 0.0
        %3028 = vmatprep.subr.mxu0 0.0
        %3029 = vmatpush1.msra.mxu0 0.0
        %3030 = vmatprep.subr.mxu0 0.0
        %3031 = vmatpush1.msra.mxu0 0.0
        %3032 = vmatprep.subr.mxu0 0.0
        %3033 = vmatpush1.msra.mxu0 0.0
        %3034 = vmatprep.subr.mxu0 0.0
        %3035 = vmatpush1.msra.mxu0 0.0
        %3036 = vmatprep.subr.mxu0 0.0
        %3037 = vmatpush1.msra.mxu0 0.0
        %3038 = vmatprep.subr.mxu0 0.0
        %3039 = vmatpush1.msra.mxu0 0.0
        %3040 = vmatprep.subr.mxu0 0.0
        %3041 = vmatpush1.msra.mxu0 0.0
        %3042 = vmatprep.subr.mxu0 0.0
        %3043 = vmatpush1.msra.mxu0 0.0
        %3044 = vmatprep.subr.mxu0 0.0
        %3045 = vmatpush1.msra.mxu0 %v3012
        %3046 = vmatprep.subr.mxu0 0.0
        %3047 = vmatpush1.msra.mxu0 %v3011
        %3048 = vmatprep.subr.mxu0 0.0
        %3049 = vmatpush2.msra.mxu0 0.0
        %3050 = vmatprep.subr.mxu0 0.0
        %3051 = vmatpush2.msra.mxu0 0.0
        %3052 = vmatprep.subr.mxu0 0.0
        %3053 = vmatpush2.msra.mxu0 0.0
        %3054 = vmatprep.subr.mxu0 0.0
        %3055 = vmatpush2.msra.mxu0 0.0
        %3056 = vmatprep.subr.mxu0 0.0
        %3057 = vmatpush2.msra.mxu0 0.0
        %3058 = vmatprep.subr.mxu0 0.0
        %3059 = vmatpush2.msra.mxu0 0.0
        %3060 = vmatprep.subr.mxu0 0.0
        %3061 = vmatpush2.msra.mxu0 0.0
        %3062 = vmatprep.subr.mxu0 0.0
        %3063 = vmatpush2.msra.mxu0 0.0
        %3064 = vmatprep.subr.mxu0 0.0
        %3065 = vmatpush2.msra.mxu0 0.0
        %3066 = vmatprep.subr.mxu0 0.0
        %3067 = vmatpush2.msra.mxu0 0.0
        %3068 = vmatprep.subr.mxu0 0.0
        %3069 = vmatpush2.msra.mxu0 0.0
        %3070 = vmatprep.subr.mxu0 0.0
        %3071 = vmatpush2.msra.mxu0 0.0
        %3072 = vmatprep.subr.mxu0 0.0
        %3073 = vmatpush2.msra.mxu0 0.0
        %3074 = vmatprep.subr.mxu0 0.0
        %3075 = vmatpush2.msra.mxu0 0.0
        %3076 = vmatprep.subr.mxu0 0.0
        %3077 = vmatpush2.msra.mxu0 0.0
        %3078 = vmatprep.subr.mxu0 0.0
        %3079 = vmatpush2.msra.mxu0 0.0
        %3080 = vmatprep.mubr.f32.mxu0 0.0
        %3081 = vmatmul.mubr.f32.gmra.mxu0 %v3014
        %v3082 = vpop.f32.mrf.mxu0
        %v3083 = vadd.f32 0.0, %v3082
        %v3084 = vpop.f32.mrf.mxu0
        %3085 = vdwg.mxu0
        %v3086 = vadd.f32 %v2994, %v3083
        %s3087 = sld [smem:[#allocation19]]
        %v3088 = vstv %s3087
        %v3089 = vadd.f32 %v3086, %v3088
        %3090 = vrot.lane.b32.xlu0 %v2547, 16
        %v3091 = vpop.permute.xlu0 %3090
        %v3092 = vsel %vm639, %v3091, %v2547
        %3093 = vrot.lane.b32.xlu0 %v2548, 16
        %v3094 = vpop.permute.xlu0 %3093
        %v3095 = vsel %vm639, %v3094, %v2548
        %3096 = vrot.lane.b32.xlu0 %v3092, 16
        %v3097 = vpop.permute.xlu0 %3096
        %3098 = vrot.lane.b32.xlu0 %v3095, 16
        %v3099 = vpop.permute.xlu0 %3098
        %v3100 = vsel %vm639, %v3097, %v2547
        %v3101 = vsel %vm639, %v3099, %v2548
        %3104 = vrot.lane.b32.xlu0 %v3100, 113
        %v3105 = vpop.permute.xlu0 %3104
        %3106 = vrot.lane.b32.xlu0 %v3101, 113
        %v3107 = vpop.permute.xlu0 %3106
        %v3110 = vsel %vm622, %v3105, 0.0
        %v3111 = vsel %vm622, %v3107, 0.0
        %3112 = vrot.lane.b32.xlu0 %v3100, 127
        %v3113 = vpop.permute.xlu0 %3112
        %3114 = vrot.lane.b32.xlu0 %v3101, 127
        %v3115 = vpop.permute.xlu0 %3114
        %v3118 = vsel %vm623, %v3113, 0.0
        %v3119 = vsel %vm623, %v3115, 0.0
        %s3120 = sld [smem:[#allocation18 + $0x1]]
        %v3121 = vstv %s3120
        %v3122 = vmul.f32 %v3121, %v3110
        %v3123 = vmul.f32 %v3121, %v3111
        %s3124 = sld [smem:[#allocation18 + $0x81]]
        %v3125 = vstv %s3124
        %v3126 = vmul.f32 %v3125, %v2547
        %v3127 = vmul.f32 %v3125, %v2548
        %v3128 = vadd.f32 %v3122, %v3126
        %v3129 = vadd.f32 %v3123, %v3127
        %s3130 = sld [smem:[#allocation18 + $0x101]]
        %v3131 = vstv %s3130
        %v3132 = vmul.f32 %v3131, %v3118
        %v3133 = vmul.f32 %v3131, %v3119
        %v3134 = vadd.f32 %v3128, %v3132
        %v3135 = vadd.f32 %v3129, %v3133
        %s3136 = sld [smem:[#allocation18 + $0x181]]
        %v3137 = vstv %s3136
        %v3138 = vmul.f32 %v3137, %v3110
        %v3139 = vmul.f32 %v3137, %v3111
        %s3140 = sld [smem:[#allocation18 + $0x201]]
        %v3141 = vstv %s3140
        %v3142 = vmul.f32 %v3141, %v2547
        %v3143 = vmul.f32 %v3141, %v2548
        %v3144 = vadd.f32 %v3138, %v3142
        %v3145 = vadd.f32 %v3139, %v3143
        %s3146 = sld [smem:[#allocation18 + $0x281]]
        %v3147 = vstv %s3146
        %v3148 = vmul.f32 %v3147, %v3118
        %v3149 = vmul.f32 %v3147, %v3119
        %v3150 = vadd.f32 %v3144, %v3148
        %v3151 = vadd.f32 %v3145, %v3149
        %3152 = vmatprep.subr.mxu0 0.0
        %3153 = vmatpush1.msra.mxu0 0.0
        %3154 = vmatprep.subr.mxu0 0.0
        %3155 = vmatpush1.msra.mxu0 0.0
        %3156 = vmatprep.subr.mxu0 0.0
        %3157 = vmatpush1.msra.mxu0 0.0
        %3158 = vmatprep.subr.mxu0 0.0
        %3159 = vmatpush1.msra.mxu0 0.0
        %3160 = vmatprep.subr.mxu0 0.0
        %3161 = vmatpush1.msra.mxu0 0.0
        %3162 = vmatprep.subr.mxu0 0.0
        %3163 = vmatpush1.msra.mxu0 0.0
        %3164 = vmatprep.subr.mxu0 0.0
        %3165 = vmatpush1.msra.mxu0 0.0
        %3166 = vmatprep.subr.mxu0 0.0
        %3167 = vmatpush1.msra.mxu0 0.0
        %3168 = vmatprep.subr.mxu0 0.0
        %3169 = vmatpush1.msra.mxu0 0.0
        %3170 = vmatprep.subr.mxu0 0.0
        %3171 = vmatpush1.msra.mxu0 0.0
        %3172 = vmatprep.subr.mxu0 0.0
        %3173 = vmatpush1.msra.mxu0 0.0
        %3174 = vmatprep.subr.mxu0 0.0
        %3175 = vmatpush1.msra.mxu0 0.0
        %3176 = vmatprep.subr.mxu0 0.0
        %3177 = vmatpush1.msra.mxu0 0.0
        %3178 = vmatprep.subr.mxu0 0.0
        %3179 = vmatpush1.msra.mxu0 0.0
        %3180 = vmatprep.subr.mxu0 0.0
        %3181 = vmatpush1.msra.mxu0 %v3151
        %3182 = vmatprep.subr.mxu0 0.0
        %3183 = vmatpush1.msra.mxu0 %v3150
        %3184 = vmatprep.subr.mxu0 0.0
        %3185 = vmatpush2.msra.mxu0 0.0
        %3186 = vmatprep.subr.mxu0 0.0
        %3187 = vmatpush2.msra.mxu0 0.0
        %3188 = vmatprep.subr.mxu0 0.0
        %3189 = vmatpush2.msra.mxu0 0.0
        %3190 = vmatprep.subr.mxu0 0.0
        %3191 = vmatpush2.msra.mxu0 0.0
        %3192 = vmatprep.subr.mxu0 0.0
        %3193 = vmatpush2.msra.mxu0 0.0
        %3194 = vmatprep.subr.mxu0 0.0
        %3195 = vmatpush2.msra.mxu0 0.0
        %3196 = vmatprep.subr.mxu0 0.0
        %3197 = vmatpush2.msra.mxu0 0.0
        %3198 = vmatprep.subr.mxu0 0.0
        %3199 = vmatpush2.msra.mxu0 0.0
        %3200 = vmatprep.subr.mxu0 0.0
        %3201 = vmatpush2.msra.mxu0 0.0
        %3202 = vmatprep.subr.mxu0 0.0
        %3203 = vmatpush2.msra.mxu0 0.0
        %3204 = vmatprep.subr.mxu0 0.0
        %3205 = vmatpush2.msra.mxu0 0.0
        %3206 = vmatprep.subr.mxu0 0.0
        %3207 = vmatpush2.msra.mxu0 0.0
        %3208 = vmatprep.subr.mxu0 0.0
        %3209 = vmatpush2.msra.mxu0 0.0
        %3210 = vmatprep.subr.mxu0 0.0
        %3211 = vmatpush2.msra.mxu0 0.0
        %3212 = vmatprep.subr.mxu0 0.0
        %3213 = vmatpush2.msra.mxu0 0.0
        %3214 = vmatprep.subr.mxu0 0.0
        %3215 = vmatpush2.msra.mxu0 0.0
        %3216 = vmatprep.mubr.f32.mxu0 0.0
        %3217 = vmatmul.mubr.f32.gmra.mxu0 %v2852
        %v3218 = vpop.f32.mrf.mxu0
        %v3219 = vadd.f32 0.0, %v3218
        %v3220 = vpop.f32.mrf.mxu0
        %3221 = vdwg.mxu0
        %3222 = vmatprep.subr.mxu0 0.0
        %3223 = vmatpush1.msra.mxu0 0.0
        %3224 = vmatprep.subr.mxu0 0.0
        %3225 = vmatpush1.msra.mxu0 0.0
        %3226 = vmatprep.subr.mxu0 0.0
        %3227 = vmatpush1.msra.mxu0 0.0
        %3228 = vmatprep.subr.mxu0 0.0
        %3229 = vmatpush1.msra.mxu0 0.0
        %3230 = vmatprep.subr.mxu0 0.0
        %3231 = vmatpush1.msra.mxu0 0.0
        %3232 = vmatprep.subr.mxu0 0.0
        %3233 = vmatpush1.msra.mxu0 0.0
        %3234 = vmatprep.subr.mxu0 0.0
        %3235 = vmatpush1.msra.mxu0 0.0
        %3236 = vmatprep.subr.mxu0 0.0
        %3237 = vmatpush1.msra.mxu0 0.0
        %3238 = vmatprep.subr.mxu0 0.0
        %3239 = vmatpush1.msra.mxu0 0.0
        %3240 = vmatprep.subr.mxu0 0.0
        %3241 = vmatpush1.msra.mxu0 0.0
        %3242 = vmatprep.subr.mxu0 0.0
        %3243 = vmatpush1.msra.mxu0 0.0
        %3244 = vmatprep.subr.mxu0 0.0
        %3245 = vmatpush1.msra.mxu0 0.0
        %3246 = vmatprep.subr.mxu0 0.0
        %3247 = vmatpush1.msra.mxu0 0.0
        %3248 = vmatprep.subr.mxu0 0.0
        %3249 = vmatpush1.msra.mxu0 0.0
        %3250 = vmatprep.subr.mxu0 0.0
        %3251 = vmatpush1.msra.mxu0 %v3135
        %3252 = vmatprep.subr.mxu0 0.0
        %3253 = vmatpush1.msra.mxu0 %v3134
        %3254 = vmatprep.subr.mxu0 0.0
        %3255 = vmatpush2.msra.mxu0 0.0
        %3256 = vmatprep.subr.mxu0 0.0
        %3257 = vmatpush2.msra.mxu0 0.0
        %3258 = vmatprep.subr.mxu0 0.0
        %3259 = vmatpush2.msra.mxu0 0.0
        %3260 = vmatprep.subr.mxu0 0.0
        %3261 = vmatpush2.msra.mxu0 0.0
        %3262 = vmatprep.subr.mxu0 0.0
        %3263 = vmatpush2.msra.mxu0 0.0
        %3264 = vmatprep.subr.mxu0 0.0
        %3265 = vmatpush2.msra.mxu0 0.0
        %3266 = vmatprep.subr.mxu0 0.0
        %3267 = vmatpush2.msra.mxu0 0.0
        %3268 = vmatprep.subr.mxu0 0.0
        %3269 = vmatpush2.msra.mxu0 0.0
        %3270 = vmatprep.subr.mxu0 0.0
        %3271 = vmatpush2.msra.mxu0 0.0
        %3272 = vmatprep.subr.mxu0 0.0
        %3273 = vmatpush2.msra.mxu0 0.0
        %3274 = vmatprep.subr.mxu0 0.0
        %3275 = vmatpush2.msra.mxu0 0.0
        %3276 = vmatprep.subr.mxu0 0.0
        %3277 = vmatpush2.msra.mxu0 0.0
        %3278 = vmatprep.subr.mxu0 0.0
        %3279 = vmatpush2.msra.mxu0 0.0
        %3280 = vmatprep.subr.mxu0 0.0
        %3281 = vmatpush2.msra.mxu0 0.0
        %3282 = vmatprep.subr.mxu0 0.0
        %3283 = vmatpush2.msra.mxu0 0.0
        %3284 = vmatprep.subr.mxu0 0.0
        %3285 = vmatpush2.msra.mxu0 0.0
        %3286 = vmatprep.mubr.f32.mxu0 0.0
        %3287 = vmatmul.mubr.f32.gmra.mxu0 %v2925
        %v3288 = vpop.f32.mrf.mxu0
        %v3289 = vadd.f32 %v3219, %v3288
        %v3290 = vpop.f32.mrf.mxu0
        %3291 = vdwg.mxu0
        %s3292 = sld [smem:[#allocation18 + $0x301]]
        %v3293 = vstv %s3292
        %v3294 = vmul.f32 %v3293, %v3110
        %v3295 = vmul.f32 %v3293, %v3111
        %s3296 = sld [smem:[#allocation18 + $0x381]]
        %v3297 = vstv %s3296
        %v3298 = vmul.f32 %v3297, %v2547
        %v3299 = vmul.f32 %v3297, %v2548
        %v3300 = vadd.f32 %v3294, %v3298
        %v3301 = vadd.f32 %v3295, %v3299
        %s3302 = sld [smem:[#allocation18 + $0x401]]
        %v3303 = vstv %s3302
        %v3304 = vmul.f32 %v3303, %v3118
        %v3305 = vmul.f32 %v3303, %v3119
        %v3306 = vadd.f32 %v3300, %v3304
        %v3307 = vadd.f32 %v3301, %v3305
        %3308 = vmatprep.subr.mxu0 0.0
        %3309 = vmatpush1.msra.mxu0 0.0
        %3310 = vmatprep.subr.mxu0 0.0
        %3311 = vmatpush1.msra.mxu0 0.0
        %3312 = vmatprep.subr.mxu0 0.0
        %3313 = vmatpush1.msra.mxu0 0.0
        %3314 = vmatprep.subr.mxu0 0.0
        %3315 = vmatpush1.msra.mxu0 0.0
        %3316 = vmatprep.subr.mxu0 0.0
        %3317 = vmatpush1.msra.mxu0 0.0
        %3318 = vmatprep.subr.mxu0 0.0
        %3319 = vmatpush1.msra.mxu0 0.0
        %3320 = vmatprep.subr.mxu0 0.0
        %3321 = vmatpush1.msra.mxu0 0.0
        %3322 = vmatprep.subr.mxu0 0.0
        %3323 = vmatpush1.msra.mxu0 0.0
        %3324 = vmatprep.subr.mxu0 0.0
        %3325 = vmatpush1.msra.mxu0 0.0
        %3326 = vmatprep.subr.mxu0 0.0
        %3327 = vmatpush1.msra.mxu0 0.0
        %3328 = vmatprep.subr.mxu0 0.0
        %3329 = vmatpush1.msra.mxu0 0.0
        %3330 = vmatprep.subr.mxu0 0.0
        %3331 = vmatpush1.msra.mxu0 0.0
        %3332 = vmatprep.subr.mxu0 0.0
        %3333 = vmatpush1.msra.mxu0 0.0
        %3334 = vmatprep.subr.mxu0 0.0
        %3335 = vmatpush1.msra.mxu0 0.0
        %3336 = vmatprep.subr.mxu0 0.0
        %3337 = vmatpush1.msra.mxu0 %v3307
        %3338 = vmatprep.subr.mxu0 0.0
        %3339 = vmatpush1.msra.mxu0 %v3306
        %3340 = vmatprep.subr.mxu0 0.0
        %3341 = vmatpush2.msra.mxu0 0.0
        %3342 = vmatprep.subr.mxu0 0.0
        %3343 = vmatpush2.msra.mxu0 0.0
        %3344 = vmatprep.subr.mxu0 0.0
        %3345 = vmatpush2.msra.mxu0 0.0
        %3346 = vmatprep.subr.mxu0 0.0
        %3347 = vmatpush2.msra.mxu0 0.0
        %3348 = vmatprep.subr.mxu0 0.0
        %3349 = vmatpush2.msra.mxu0 0.0
        %3350 = vmatprep.subr.mxu0 0.0
        %3351 = vmatpush2.msra.mxu0 0.0
        %3352 = vmatprep.subr.mxu0 0.0
        %3353 = vmatpush2.msra.mxu0 0.0
        %3354 = vmatprep.subr.mxu0 0.0
        %3355 = vmatpush2.msra.mxu0 0.0
        %3356 = vmatprep.subr.mxu0 0.0
        %3357 = vmatpush2.msra.mxu0 0.0
        %3358 = vmatprep.subr.mxu0 0.0
        %3359 = vmatpush2.msra.mxu0 0.0
        %3360 = vmatprep.subr.mxu0 0.0
        %3361 = vmatpush2.msra.mxu0 0.0
        %3362 = vmatprep.subr.mxu0 0.0
        %3363 = vmatpush2.msra.mxu0 0.0
        %3364 = vmatprep.subr.mxu0 0.0
        %3365 = vmatpush2.msra.mxu0 0.0
        %3366 = vmatprep.subr.mxu0 0.0
        %3367 = vmatpush2.msra.mxu0 0.0
        %3368 = vmatprep.subr.mxu0 0.0
        %3369 = vmatpush2.msra.mxu0 0.0
        %3370 = vmatprep.subr.mxu0 0.0
        %3371 = vmatpush2.msra.mxu0 0.0
        %3372 = vmatprep.mubr.f32.mxu0 0.0
        %3373 = vmatmul.mubr.f32.gmra.mxu0 %v3014
        %v3374 = vpop.f32.mrf.mxu0
        %v3375 = vadd.f32 0.0, %v3374
        %v3376 = vpop.f32.mrf.mxu0
        %3377 = vdwg.mxu0
        %v3378 = vadd.f32 %v3289, %v3375
        %s3379 = sld [smem:[#allocation19 + $0x1]]
        %v3380 = vstv %s3379
        %v3381 = vadd.f32 %v3378, %v3380
        %3382 = vrot.lane.b32.xlu0 %v2587, 16
        %v3383 = vpop.permute.xlu0 %3382
        %v3384 = vsel %vm639, %v3383, %v2587
        %3385 = vrot.lane.b32.xlu0 %v2588, 16
        %v3386 = vpop.permute.xlu0 %3385
        %v3387 = vsel %vm639, %v3386, %v2588
        %3388 = vrot.lane.b32.xlu0 %v3384, 16
        %v3389 = vpop.permute.xlu0 %3388
        %3390 = vrot.lane.b32.xlu0 %v3387, 16
        %v3391 = vpop.permute.xlu0 %3390
        %v3392 = vsel %vm639, %v3389, %v2587
        %v3393 = vsel %vm639, %v3391, %v2588
        %3396 = vrot.lane.b32.xlu0 %v3392, 113
        %v3397 = vpop.permute.xlu0 %3396
        %3398 = vrot.lane.b32.xlu0 %v3393, 113
        %v3399 = vpop.permute.xlu0 %3398
        %v3402 = vsel %vm622, %v3397, 0.0
        %v3403 = vsel %vm622, %v3399, 0.0
        %3404 = vrot.lane.b32.xlu0 %v3392, 127
        %v3405 = vpop.permute.xlu0 %3404
        %3406 = vrot.lane.b32.xlu0 %v3393, 127
        %v3407 = vpop.permute.xlu0 %3406
        %v3410 = vsel %vm623, %v3405, 0.0
        %v3411 = vsel %vm623, %v3407, 0.0
        %s3412 = sld [smem:[#allocation18 + $0x2]]
        %v3413 = vstv %s3412
        %v3414 = vmul.f32 %v3413, %v3402
        %v3415 = vmul.f32 %v3413, %v3403
        %s3416 = sld [smem:[#allocation18 + $0x82]]
        %v3417 = vstv %s3416
        %v3418 = vmul.f32 %v3417, %v2587
        %v3419 = vmul.f32 %v3417, %v2588
        %v3420 = vadd.f32 %v3414, %v3418
        %v3421 = vadd.f32 %v3415, %v3419
        %s3422 = sld [smem:[#allocation18 + $0x102]]
        %v3423 = vstv %s3422
        %v3424 = vmul.f32 %v3423, %v3410
        %v3425 = vmul.f32 %v3423, %v3411
        %v3426 = vadd.f32 %v3420, %v3424
        %v3427 = vadd.f32 %v3421, %v3425
        %s3428 = sld [smem:[#allocation18 + $0x182]]
        %v3429 = vstv %s3428
        %v3430 = vmul.f32 %v3429, %v3402
        %v3431 = vmul.f32 %v3429, %v3403
        %s3432 = sld [smem:[#allocation18 + $0x202]]
        %v3433 = vstv %s3432
        %v3434 = vmul.f32 %v3433, %v2587
        %v3435 = vmul.f32 %v3433, %v2588
        %v3436 = vadd.f32 %v3430, %v3434
        %v3437 = vadd.f32 %v3431, %v3435
        %s3438 = sld [smem:[#allocation18 + $0x282]]
        %v3439 = vstv %s3438
        %v3440 = vmul.f32 %v3439, %v3410
        %v3441 = vmul.f32 %v3439, %v3411
        %v3442 = vadd.f32 %v3436, %v3440
        %v3443 = vadd.f32 %v3437, %v3441
        %3444 = vmatprep.subr.mxu0 0.0
        %3445 = vmatpush1.msra.mxu0 0.0
        %3446 = vmatprep.subr.mxu0 0.0
        %3447 = vmatpush1.msra.mxu0 0.0
        %3448 = vmatprep.subr.mxu0 0.0
        %3449 = vmatpush1.msra.mxu0 0.0
        %3450 = vmatprep.subr.mxu0 0.0
        %3451 = vmatpush1.msra.mxu0 0.0
        %3452 = vmatprep.subr.mxu0 0.0
        %3453 = vmatpush1.msra.mxu0 0.0
        %3454 = vmatprep.subr.mxu0 0.0
        %3455 = vmatpush1.msra.mxu0 0.0
        %3456 = vmatprep.subr.mxu0 0.0
        %3457 = vmatpush1.msra.mxu0 0.0
        %3458 = vmatprep.subr.mxu0 0.0
        %3459 = vmatpush1.msra.mxu0 0.0
        %3460 = vmatprep.subr.mxu0 0.0
        %3461 = vmatpush1.msra.mxu0 0.0
        %3462 = vmatprep.subr.mxu0 0.0
        %3463 = vmatpush1.msra.mxu0 0.0
        %3464 = vmatprep.subr.mxu0 0.0
        %3465 = vmatpush1.msra.mxu0 0.0
        %3466 = vmatprep.subr.mxu0 0.0
        %3467 = vmatpush1.msra.mxu0 0.0
        %3468 = vmatprep.subr.mxu0 0.0
        %3469 = vmatpush1.msra.mxu0 0.0
        %3470 = vmatprep.subr.mxu0 0.0
        %3471 = vmatpush1.msra.mxu0 0.0
        %3472 = vmatprep.subr.mxu0 0.0
        %3473 = vmatpush1.msra.mxu0 %v3443
        %3474 = vmatprep.subr.mxu0 0.0
        %3475 = vmatpush1.msra.mxu0 %v3442
        %3476 = vmatprep.subr.mxu0 0.0
        %3477 = vmatpush2.msra.mxu0 0.0
        %3478 = vmatprep.subr.mxu0 0.0
        %3479 = vmatpush2.msra.mxu0 0.0
        %3480 = vmatprep.subr.mxu0 0.0
        %3481 = vmatpush2.msra.mxu0 0.0
        %3482 = vmatprep.subr.mxu0 0.0
        %3483 = vmatpush2.msra.mxu0 0.0
        %3484 = vmatprep.subr.mxu0 0.0
        %3485 = vmatpush2.msra.mxu0 0.0
        %3486 = vmatprep.subr.mxu0 0.0
        %3487 = vmatpush2.msra.mxu0 0.0
        %3488 = vmatprep.subr.mxu0 0.0
        %3489 = vmatpush2.msra.mxu0 0.0
        %3490 = vmatprep.subr.mxu0 0.0
        %3491 = vmatpush2.msra.mxu0 0.0
        %3492 = vmatprep.subr.mxu0 0.0
        %3493 = vmatpush2.msra.mxu0 0.0
        %3494 = vmatprep.subr.mxu0 0.0
        %3495 = vmatpush2.msra.mxu0 0.0
        %3496 = vmatprep.subr.mxu0 0.0
        %3497 = vmatpush2.msra.mxu0 0.0
        %3498 = vmatprep.subr.mxu0 0.0
        %3499 = vmatpush2.msra.mxu0 0.0
        %3500 = vmatprep.subr.mxu0 0.0
        %3501 = vmatpush2.msra.mxu0 0.0
        %3502 = vmatprep.subr.mxu0 0.0
        %3503 = vmatpush2.msra.mxu0 0.0
        %3504 = vmatprep.subr.mxu0 0.0
        %3505 = vmatpush2.msra.mxu0 0.0
        %3506 = vmatprep.subr.mxu0 0.0
        %3507 = vmatpush2.msra.mxu0 0.0
        %3508 = vmatprep.mubr.f32.mxu0 0.0
        %3509 = vmatmul.mubr.f32.gmra.mxu0 %v2852
        %v3510 = vpop.f32.mrf.mxu0
        %v3511 = vadd.f32 0.0, %v3510
        %v3512 = vpop.f32.mrf.mxu0
        %3513 = vdwg.mxu0
        %3514 = vmatprep.subr.mxu0 0.0
        %3515 = vmatpush1.msra.mxu0 0.0
        %3516 = vmatprep.subr.mxu0 0.0
        %3517 = vmatpush1.msra.mxu0 0.0
        %3518 = vmatprep.subr.mxu0 0.0
        %3519 = vmatpush1.msra.mxu0 0.0
        %3520 = vmatprep.subr.mxu0 0.0
        %3521 = vmatpush1.msra.mxu0 0.0
        %3522 = vmatprep.subr.mxu0 0.0
        %3523 = vmatpush1.msra.mxu0 0.0
        %3524 = vmatprep.subr.mxu0 0.0
        %3525 = vmatpush1.msra.mxu0 0.0
        %3526 = vmatprep.subr.mxu0 0.0
        %3527 = vmatpush1.msra.mxu0 0.0
        %3528 = vmatprep.subr.mxu0 0.0
        %3529 = vmatpush1.msra.mxu0 0.0
        %3530 = vmatprep.subr.mxu0 0.0
        %3531 = vmatpush1.msra.mxu0 0.0
        %3532 = vmatprep.subr.mxu0 0.0
        %3533 = vmatpush1.msra.mxu0 0.0
        %3534 = vmatprep.subr.mxu0 0.0
        %3535 = vmatpush1.msra.mxu0 0.0
        %3536 = vmatprep.subr.mxu0 0.0
        %3537 = vmatpush1.msra.mxu0 0.0
        %3538 = vmatprep.subr.mxu0 0.0
        %3539 = vmatpush1.msra.mxu0 0.0
        %3540 = vmatprep.subr.mxu0 0.0
        %3541 = vmatpush1.msra.mxu0 0.0
        %3542 = vmatprep.subr.mxu0 0.0
        %3543 = vmatpush1.msra.mxu0 %v3427
        %3544 = vmatprep.subr.mxu0 0.0
        %3545 = vmatpush1.msra.mxu0 %v3426
        %3546 = vmatprep.subr.mxu0 0.0
        %3547 = vmatpush2.msra.mxu0 0.0
        %3548 = vmatprep.subr.mxu0 0.0
        %3549 = vmatpush2.msra.mxu0 0.0
        %3550 = vmatprep.subr.mxu0 0.0
        %3551 = vmatpush2.msra.mxu0 0.0
        %3552 = vmatprep.subr.mxu0 0.0
        %3553 = vmatpush2.msra.mxu0 0.0
        %3554 = vmatprep.subr.mxu0 0.0
        %3555 = vmatpush2.msra.mxu0 0.0
        %3556 = vmatprep.subr.mxu0 0.0
        %3557 = vmatpush2.msra.mxu0 0.0
        %3558 = vmatprep.subr.mxu0 0.0
        %3559 = vmatpush2.msra.mxu0 0.0
        %3560 = vmatprep.subr.mxu0 0.0
        %3561 = vmatpush2.msra.mxu0 0.0
        %3562 = vmatprep.subr.mxu0 0.0
        %3563 = vmatpush2.msra.mxu0 0.0
        %3564 = vmatprep.subr.mxu0 0.0
        %3565 = vmatpush2.msra.mxu0 0.0
        %3566 = vmatprep.subr.mxu0 0.0
        %3567 = vmatpush2.msra.mxu0 0.0
        %3568 = vmatprep.subr.mxu0 0.0
        %3569 = vmatpush2.msra.mxu0 0.0
        %3570 = vmatprep.subr.mxu0 0.0
        %3571 = vmatpush2.msra.mxu0 0.0
        %3572 = vmatprep.subr.mxu0 0.0
        %3573 = vmatpush2.msra.mxu0 0.0
        %3574 = vmatprep.subr.mxu0 0.0
        %3575 = vmatpush2.msra.mxu0 0.0
        %3576 = vmatprep.subr.mxu0 0.0
        %3577 = vmatpush2.msra.mxu0 0.0
        %3578 = vmatprep.mubr.f32.mxu0 0.0
        %3579 = vmatmul.mubr.f32.gmra.mxu0 %v2925
        %v3580 = vpop.f32.mrf.mxu0
        %v3581 = vadd.f32 %v3511, %v3580
        %v3582 = vpop.f32.mrf.mxu0
        %3583 = vdwg.mxu0
        %s3584 = sld [smem:[#allocation18 + $0x302]]
        %v3585 = vstv %s3584
        %v3586 = vmul.f32 %v3585, %v3402
        %v3587 = vmul.f32 %v3585, %v3403
        %s3588 = sld [smem:[#allocation18 + $0x382]]
        %v3589 = vstv %s3588
        %v3590 = vmul.f32 %v3589, %v2587
        %v3591 = vmul.f32 %v3589, %v2588
        %v3592 = vadd.f32 %v3586, %v3590
        %v3593 = vadd.f32 %v3587, %v3591
        %s3594 = sld [smem:[#allocation18 + $0x402]]
        %v3595 = vstv %s3594
        %v3596 = vmul.f32 %v3595, %v3410
        %v3597 = vmul.f32 %v3595, %v3411
        %v3598 = vadd.f32 %v3592, %v3596
        %v3599 = vadd.f32 %v3593, %v3597
        %3600 = vmatprep.subr.mxu0 0.0
        %3601 = vmatpush1.msra.mxu0 0.0
        %3602 = vmatprep.subr.mxu0 0.0
        %3603 = vmatpush1.msra.mxu0 0.0
        %3604 = vmatprep.subr.mxu0 0.0
        %3605 = vmatpush1.msra.mxu0 0.0
        %3606 = vmatprep.subr.mxu0 0.0
        %3607 = vmatpush1.msra.mxu0 0.0
        %3608 = vmatprep.subr.mxu0 0.0
        %3609 = vmatpush1.msra.mxu0 0.0
        %3610 = vmatprep.subr.mxu0 0.0
        %3611 = vmatpush1.msra.mxu0 0.0
        %3612 = vmatprep.subr.mxu0 0.0
        %3613 = vmatpush1.msra.mxu0 0.0
        %3614 = vmatprep.subr.mxu0 0.0
        %3615 = vmatpush1.msra.mxu0 0.0
        %3616 = vmatprep.subr.mxu0 0.0
        %3617 = vmatpush1.msra.mxu0 0.0
        %3618 = vmatprep.subr.mxu0 0.0
        %3619 = vmatpush1.msra.mxu0 0.0
        %3620 = vmatprep.subr.mxu0 0.0
        %3621 = vmatpush1.msra.mxu0 0.0
        %3622 = vmatprep.subr.mxu0 0.0
        %3623 = vmatpush1.msra.mxu0 0.0
        %3624 = vmatprep.subr.mxu0 0.0
        %3625 = vmatpush1.msra.mxu0 0.0
        %3626 = vmatprep.subr.mxu0 0.0
        %3627 = vmatpush1.msra.mxu0 0.0
        %3628 = vmatprep.subr.mxu0 0.0
        %3629 = vmatpush1.msra.mxu0 %v3599
        %3630 = vmatprep.subr.mxu0 0.0
        %3631 = vmatpush1.msra.mxu0 %v3598
        %3632 = vmatprep.subr.mxu0 0.0
        %3633 = vmatpush2.msra.mxu0 0.0
        %3634 = vmatprep.subr.mxu0 0.0
        %3635 = vmatpush2.msra.mxu0 0.0
        %3636 = vmatprep.subr.mxu0 0.0
        %3637 = vmatpush2.msra.mxu0 0.0
        %3638 = vmatprep.subr.mxu0 0.0
        %3639 = vmatpush2.msra.mxu0 0.0
        %3640 = vmatprep.subr.mxu0 0.0
        %3641 = vmatpush2.msra.mxu0 0.0
        %3642 = vmatprep.subr.mxu0 0.0
        %3643 = vmatpush2.msra.mxu0 0.0
        %3644 = vmatprep.subr.mxu0 0.0
        %3645 = vmatpush2.msra.mxu0 0.0
        %3646 = vmatprep.subr.mxu0 0.0
        %3647 = vmatpush2.msra.mxu0 0.0
        %3648 = vmatprep.subr.mxu0 0.0
        %3649 = vmatpush2.msra.mxu0 0.0
        %3650 = vmatprep.subr.mxu0 0.0
        %3651 = vmatpush2.msra.mxu0 0.0
        %3652 = vmatprep.subr.mxu0 0.0
        %3653 = vmatpush2.msra.mxu0 0.0
        %3654 = vmatprep.subr.mxu0 0.0
        %3655 = vmatpush2.msra.mxu0 0.0
        %3656 = vmatprep.subr.mxu0 0.0
        %3657 = vmatpush2.msra.mxu0 0.0
        %3658 = vmatprep.subr.mxu0 0.0
        %3659 = vmatpush2.msra.mxu0 0.0
        %3660 = vmatprep.subr.mxu0 0.0
        %3661 = vmatpush2.msra.mxu0 0.0
        %3662 = vmatprep.subr.mxu0 0.0
        %3663 = vmatpush2.msra.mxu0 0.0
        %3664 = vmatprep.mubr.f32.mxu0 0.0
        %3665 = vmatmul.mubr.f32.gmra.mxu0 %v3014
        %v3666 = vpop.f32.mrf.mxu0
        %v3667 = vadd.f32 0.0, %v3666
        %v3668 = vpop.f32.mrf.mxu0
        %3669 = vdwg.mxu0
        %v3670 = vadd.f32 %v3581, %v3667
        %s3671 = sld [smem:[#allocation19 + $0x2]]
        %v3672 = vstv %s3671
        %v3673 = vadd.f32 %v3670, %v3672
        %3674 = vrot.lane.b32.xlu0 %v2627, 16
        %v3675 = vpop.permute.xlu0 %3674
        %v3676 = vsel %vm639, %v3675, %v2627
        %3677 = vrot.lane.b32.xlu0 %v2628, 16
        %v3678 = vpop.permute.xlu0 %3677
        %v3679 = vsel %vm639, %v3678, %v2628
        %3680 = vrot.lane.b32.xlu0 %v3676, 16
        %v3681 = vpop.permute.xlu0 %3680
        %3682 = vrot.lane.b32.xlu0 %v3679, 16
        %v3683 = vpop.permute.xlu0 %3682
        %v3684 = vsel %vm639, %v3681, %v2627
        %v3685 = vsel %vm639, %v3683, %v2628
        %3688 = vrot.lane.b32.xlu0 %v3684, 113
        %v3689 = vpop.permute.xlu0 %3688
        %3690 = vrot.lane.b32.xlu0 %v3685, 113
        %v3691 = vpop.permute.xlu0 %3690
        %v3694 = vsel %vm622, %v3689, 0.0
        %v3695 = vsel %vm622, %v3691, 0.0
        %3696 = vrot.lane.b32.xlu0 %v3684, 127
        %v3697 = vpop.permute.xlu0 %3696
        %3698 = vrot.lane.b32.xlu0 %v3685, 127
        %v3699 = vpop.permute.xlu0 %3698
        %v3702 = vsel %vm623, %v3697, 0.0
        %v3703 = vsel %vm623, %v3699, 0.0
        %s3704 = sld [smem:[#allocation18 + $0x3]]
        %v3705 = vstv %s3704
        %v3706 = vmul.f32 %v3705, %v3694
        %v3707 = vmul.f32 %v3705, %v3695
        %s3708 = sld [smem:[#allocation18 + $0x83]]
        %v3709 = vstv %s3708
        %v3710 = vmul.f32 %v3709, %v2627
        %v3711 = vmul.f32 %v3709, %v2628
        %v3712 = vadd.f32 %v3706, %v3710
        %v3713 = vadd.f32 %v3707, %v3711
        %s3714 = sld [smem:[#allocation18 + $0x103]]
        %v3715 = vstv %s3714
        %v3716 = vmul.f32 %v3715, %v3702
        %v3717 = vmul.f32 %v3715, %v3703
        %v3718 = vadd.f32 %v3712, %v3716
        %v3719 = vadd.f32 %v3713, %v3717
        %s3720 = sld [smem:[#allocation18 + $0x183]]
        %v3721 = vstv %s3720
        %v3722 = vmul.f32 %v3721, %v3694
        %v3723 = vmul.f32 %v3721, %v3695
        %s3724 = sld [smem:[#allocation18 + $0x203]]
        %v3725 = vstv %s3724
        %v3726 = vmul.f32 %v3725, %v2627
        %v3727 = vmul.f32 %v3725, %v2628
        %v3728 = vadd.f32 %v3722, %v3726
        %v3729 = vadd.f32 %v3723, %v3727
        %s3730 = sld [smem:[#allocation18 + $0x283]]
        %v3731 = vstv %s3730
        %v3732 = vmul.f32 %v3731, %v3702
        %v3733 = vmul.f32 %v3731, %v3703
        %v3734 = vadd.f32 %v3728, %v3732
        %v3735 = vadd.f32 %v3729, %v3733
        %3736 = vmatprep.subr.mxu0 0.0
        %3737 = vmatpush1.msra.mxu0 0.0
        %3738 = vmatprep.subr.mxu0 0.0
        %3739 = vmatpush1.msra.mxu0 0.0
        %3740 = vmatprep.subr.mxu0 0.0
        %3741 = vmatpush1.msra.mxu0 0.0
        %3742 = vmatprep.subr.mxu0 0.0
        %3743 = vmatpush1.msra.mxu0 0.0
        %3744 = vmatprep.subr.mxu0 0.0
        %3745 = vmatpush1.msra.mxu0 0.0
        %3746 = vmatprep.subr.mxu0 0.0
        %3747 = vmatpush1.msra.mxu0 0.0
        %3748 = vmatprep.subr.mxu0 0.0
        %3749 = vmatpush1.msra.mxu0 0.0
        %3750 = vmatprep.subr.mxu0 0.0
        %3751 = vmatpush1.msra.mxu0 0.0
        %3752 = vmatprep.subr.mxu0 0.0
        %3753 = vmatpush1.msra.mxu0 0.0
        %3754 = vmatprep.subr.mxu0 0.0
        %3755 = vmatpush1.msra.mxu0 0.0
        %3756 = vmatprep.subr.mxu0 0.0
        %3757 = vmatpush1.msra.mxu0 0.0
        %3758 = vmatprep.subr.mxu0 0.0
        %3759 = vmatpush1.msra.mxu0 0.0
        %3760 = vmatprep.subr.mxu0 0.0
        %3761 = vmatpush1.msra.mxu0 0.0
        %3762 = vmatprep.subr.mxu0 0.0
        %3763 = vmatpush1.msra.mxu0 0.0
        %3764 = vmatprep.subr.mxu0 0.0
        %3765 = vmatpush1.msra.mxu0 %v3735
        %3766 = vmatprep.subr.mxu0 0.0
        %3767 = vmatpush1.msra.mxu0 %v3734
        %3768 = vmatprep.subr.mxu0 0.0
        %3769 = vmatpush2.msra.mxu0 0.0
        %3770 = vmatprep.subr.mxu0 0.0
        %3771 = vmatpush2.msra.mxu0 0.0
        %3772 = vmatprep.subr.mxu0 0.0
        %3773 = vmatpush2.msra.mxu0 0.0
        %3774 = vmatprep.subr.mxu0 0.0
        %3775 = vmatpush2.msra.mxu0 0.0
        %3776 = vmatprep.subr.mxu0 0.0
        %3777 = vmatpush2.msra.mxu0 0.0
        %3778 = vmatprep.subr.mxu0 0.0
        %3779 = vmatpush2.msra.mxu0 0.0
        %3780 = vmatprep.subr.mxu0 0.0
        %3781 = vmatpush2.msra.mxu0 0.0
        %3782 = vmatprep.subr.mxu0 0.0
        %3783 = vmatpush2.msra.mxu0 0.0
        %3784 = vmatprep.subr.mxu0 0.0
        %3785 = vmatpush2.msra.mxu0 0.0
        %3786 = vmatprep.subr.mxu0 0.0
        %3787 = vmatpush2.msra.mxu0 0.0
        %3788 = vmatprep.subr.mxu0 0.0
        %3789 = vmatpush2.msra.mxu0 0.0
        %3790 = vmatprep.subr.mxu0 0.0
        %3791 = vmatpush2.msra.mxu0 0.0
        %3792 = vmatprep.subr.mxu0 0.0
        %3793 = vmatpush2.msra.mxu0 0.0
        %3794 = vmatprep.subr.mxu0 0.0
        %3795 = vmatpush2.msra.mxu0 0.0
        %3796 = vmatprep.subr.mxu0 0.0
        %3797 = vmatpush2.msra.mxu0 0.0
        %3798 = vmatprep.subr.mxu0 0.0
        %3799 = vmatpush2.msra.mxu0 0.0
        %3800 = vmatprep.mubr.f32.mxu0 0.0
        %3801 = vmatmul.mubr.f32.gmra.mxu0 %v2852
        %v3802 = vpop.f32.mrf.mxu0
        %v3803 = vadd.f32 0.0, %v3802
        %v3804 = vpop.f32.mrf.mxu0
        %3805 = vdwg.mxu0
        %3806 = vmatprep.subr.mxu0 0.0
        %3807 = vmatpush1.msra.mxu0 0.0
        %3808 = vmatprep.subr.mxu0 0.0
        %3809 = vmatpush1.msra.mxu0 0.0
        %3810 = vmatprep.subr.mxu0 0.0
        %3811 = vmatpush1.msra.mxu0 0.0
        %3812 = vmatprep.subr.mxu0 0.0
        %3813 = vmatpush1.msra.mxu0 0.0
        %3814 = vmatprep.subr.mxu0 0.0
        %3815 = vmatpush1.msra.mxu0 0.0
        %3816 = vmatprep.subr.mxu0 0.0
        %3817 = vmatpush1.msra.mxu0 0.0
        %3818 = vmatprep.subr.mxu0 0.0
        %3819 = vmatpush1.msra.mxu0 0.0
        %3820 = vmatprep.subr.mxu0 0.0
        %3821 = vmatpush1.msra.mxu0 0.0
        %3822 = vmatprep.subr.mxu0 0.0
        %3823 = vmatpush1.msra.mxu0 0.0
        %3824 = vmatprep.subr.mxu0 0.0
        %3825 = vmatpush1.msra.mxu0 0.0
        %3826 = vmatprep.subr.mxu0 0.0
        %3827 = vmatpush1.msra.mxu0 0.0
        %3828 = vmatprep.subr.mxu0 0.0
        %3829 = vmatpush1.msra.mxu0 0.0
        %3830 = vmatprep.subr.mxu0 0.0
        %3831 = vmatpush1.msra.mxu0 0.0
        %3832 = vmatprep.subr.mxu0 0.0
        %3833 = vmatpush1.msra.mxu0 0.0
        %3834 = vmatprep.subr.mxu0 0.0
        %3835 = vmatpush1.msra.mxu0 %v3719
        %3836 = vmatprep.subr.mxu0 0.0
        %3837 = vmatpush1.msra.mxu0 %v3718
        %3838 = vmatprep.subr.mxu0 0.0
        %3839 = vmatpush2.msra.mxu0 0.0
        %3840 = vmatprep.subr.mxu0 0.0
        %3841 = vmatpush2.msra.mxu0 0.0
        %3842 = vmatprep.subr.mxu0 0.0
        %3843 = vmatpush2.msra.mxu0 0.0
        %3844 = vmatprep.subr.mxu0 0.0
        %3845 = vmatpush2.msra.mxu0 0.0
        %3846 = vmatprep.subr.mxu0 0.0
        %3847 = vmatpush2.msra.mxu0 0.0
        %3848 = vmatprep.subr.mxu0 0.0
        %3849 = vmatpush2.msra.mxu0 0.0
        %3850 = vmatprep.subr.mxu0 0.0
        %3851 = vmatpush2.msra.mxu0 0.0
        %3852 = vmatprep.subr.mxu0 0.0
        %3853 = vmatpush2.msra.mxu0 0.0
        %3854 = vmatprep.subr.mxu0 0.0
        %3855 = vmatpush2.msra.mxu0 0.0
        %3856 = vmatprep.subr.mxu0 0.0
        %3857 = vmatpush2.msra.mxu0 0.0
        %3858 = vmatprep.subr.mxu0 0.0
        %3859 = vmatpush2.msra.mxu0 0.0
        %3860 = vmatprep.subr.mxu0 0.0
        %3861 = vmatpush2.msra.mxu0 0.0
        %3862 = vmatprep.subr.mxu0 0.0
        %3863 = vmatpush2.msra.mxu0 0.0
        %3864 = vmatprep.subr.mxu0 0.0
        %3865 = vmatpush2.msra.mxu0 0.0
        %3866 = vmatprep.subr.mxu0 0.0
        %3867 = vmatpush2.msra.mxu0 0.0
        %3868 = vmatprep.subr.mxu0 0.0
        %3869 = vmatpush2.msra.mxu0 0.0
        %3870 = vmatprep.mubr.f32.mxu0 0.0
        %3871 = vmatmul.mubr.f32.gmra.mxu0 %v2925
        %v3872 = vpop.f32.mrf.mxu0
        %v3873 = vadd.f32 %v3803, %v3872
        %v3874 = vpop.f32.mrf.mxu0
        %3875 = vdwg.mxu0
        %s3876 = sld [smem:[#allocation18 + $0x303]]
        %v3877 = vstv %s3876
        %v3878 = vmul.f32 %v3877, %v3694
        %v3879 = vmul.f32 %v3877, %v3695
        %s3880 = sld [smem:[#allocation18 + $0x383]]
        %v3881 = vstv %s3880
        %v3882 = vmul.f32 %v3881, %v2627
        %v3883 = vmul.f32 %v3881, %v2628
        %v3884 = vadd.f32 %v3878, %v3882
        %v3885 = vadd.f32 %v3879, %v3883
        %s3886 = sld [smem:[#allocation18 + $0x403]]
        %v3887 = vstv %s3886
        %v3888 = vmul.f32 %v3887, %v3702
        %v3889 = vmul.f32 %v3887, %v3703
        %v3890 = vadd.f32 %v3884, %v3888
        %v3891 = vadd.f32 %v3885, %v3889
        %3892 = vmatprep.subr.mxu0 0.0
        %3893 = vmatpush1.msra.mxu0 0.0
        %3894 = vmatprep.subr.mxu0 0.0
        %3895 = vmatpush1.msra.mxu0 0.0
        %3896 = vmatprep.subr.mxu0 0.0
        %3897 = vmatpush1.msra.mxu0 0.0
        %3898 = vmatprep.subr.mxu0 0.0
        %3899 = vmatpush1.msra.mxu0 0.0
        %3900 = vmatprep.subr.mxu0 0.0
        %3901 = vmatpush1.msra.mxu0 0.0
        %3902 = vmatprep.subr.mxu0 0.0
        %3903 = vmatpush1.msra.mxu0 0.0
        %3904 = vmatprep.subr.mxu0 0.0
        %3905 = vmatpush1.msra.mxu0 0.0
        %3906 = vmatprep.subr.mxu0 0.0
        %3907 = vmatpush1.msra.mxu0 0.0
        %3908 = vmatprep.subr.mxu0 0.0
        %3909 = vmatpush1.msra.mxu0 0.0
        %3910 = vmatprep.subr.mxu0 0.0
        %3911 = vmatpush1.msra.mxu0 0.0
        %3912 = vmatprep.subr.mxu0 0.0
        %3913 = vmatpush1.msra.mxu0 0.0
        %3914 = vmatprep.subr.mxu0 0.0
        %3915 = vmatpush1.msra.mxu0 0.0
        %3916 = vmatprep.subr.mxu0 0.0
        %3917 = vmatpush1.msra.mxu0 0.0
        %3918 = vmatprep.subr.mxu0 0.0
        %3919 = vmatpush1.msra.mxu0 0.0
        %3920 = vmatprep.subr.mxu0 0.0
        %3921 = vmatpush1.msra.mxu0 %v3891
        %3922 = vmatprep.subr.mxu0 0.0
        %3923 = vmatpush1.msra.mxu0 %v3890
        %3924 = vmatprep.subr.mxu0 0.0
        %3925 = vmatpush2.msra.mxu0 0.0
        %3926 = vmatprep.subr.mxu0 0.0
        %3927 = vmatpush2.msra.mxu0 0.0
        %3928 = vmatprep.subr.mxu0 0.0
        %3929 = vmatpush2.msra.mxu0 0.0
        %3930 = vmatprep.subr.mxu0 0.0
        %3931 = vmatpush2.msra.mxu0 0.0
        %3932 = vmatprep.subr.mxu0 0.0
        %3933 = vmatpush2.msra.mxu0 0.0
        %3934 = vmatprep.subr.mxu0 0.0
        %3935 = vmatpush2.msra.mxu0 0.0
        %3936 = vmatprep.subr.mxu0 0.0
        %3937 = vmatpush2.msra.mxu0 0.0
        %3938 = vmatprep.subr.mxu0 0.0
        %3939 = vmatpush2.msra.mxu0 0.0
        %3940 = vmatprep.subr.mxu0 0.0
        %3941 = vmatpush2.msra.mxu0 0.0
        %3942 = vmatprep.subr.mxu0 0.0
        %3943 = vmatpush2.msra.mxu0 0.0
        %3944 = vmatprep.subr.mxu0 0.0
        %3945 = vmatpush2.msra.mxu0 0.0
        %3946 = vmatprep.subr.mxu0 0.0
        %3947 = vmatpush2.msra.mxu0 0.0
        %3948 = vmatprep.subr.mxu0 0.0
        %3949 = vmatpush2.msra.mxu0 0.0
        %3950 = vmatprep.subr.mxu0 0.0
        %3951 = vmatpush2.msra.mxu0 0.0
        %3952 = vmatprep.subr.mxu0 0.0
        %3953 = vmatpush2.msra.mxu0 0.0
        %3954 = vmatprep.subr.mxu0 0.0
        %3955 = vmatpush2.msra.mxu0 0.0
        %3956 = vmatprep.mubr.f32.mxu0 0.0
        %3957 = vmatmul.mubr.f32.gmra.mxu0 %v3014
        %v3958 = vpop.f32.mrf.mxu0
        %v3959 = vadd.f32 0.0, %v3958
        %v3960 = vpop.f32.mrf.mxu0
        %3961 = vdwg.mxu0
        %v3962 = vadd.f32 %v3873, %v3959
        %s3963 = sld [smem:[#allocation19 + $0x3]]
        %v3964 = vstv %s3963
        %v3965 = vadd.f32 %v3962, %v3964
        %3966 = vrot.lane.b32.xlu0 %v2667, 16
        %v3967 = vpop.permute.xlu0 %3966
        %v3968 = vsel %vm639, %v3967, %v2667
        %3969 = vrot.lane.b32.xlu0 %v2668, 16
        %v3970 = vpop.permute.xlu0 %3969
        %v3971 = vsel %vm639, %v3970, %v2668
        %3972 = vrot.lane.b32.xlu0 %v3968, 16
        %v3973 = vpop.permute.xlu0 %3972
        %3974 = vrot.lane.b32.xlu0 %v3971, 16
        %v3975 = vpop.permute.xlu0 %3974
        %v3976 = vsel %vm639, %v3973, %v2667
        %v3977 = vsel %vm639, %v3975, %v2668
        %3980 = vrot.lane.b32.xlu0 %v3976, 113
        %v3981 = vpop.permute.xlu0 %3980
        %3982 = vrot.lane.b32.xlu0 %v3977, 113
        %v3983 = vpop.permute.xlu0 %3982
        %v3986 = vsel %vm622, %v3981, 0.0
        %v3987 = vsel %vm622, %v3983, 0.0
        %3988 = vrot.lane.b32.xlu0 %v3976, 127
        %v3989 = vpop.permute.xlu0 %3988
        %3990 = vrot.lane.b32.xlu0 %v3977, 127
        %v3991 = vpop.permute.xlu0 %3990
        %v3994 = vsel %vm623, %v3989, 0.0
        %v3995 = vsel %vm623, %v3991, 0.0
        %s3996 = sld [smem:[#allocation18 + $0x4]]
        %v3997 = vstv %s3996
        %v3998 = vmul.f32 %v3997, %v3986
        %v3999 = vmul.f32 %v3997, %v3987
        %s4000 = sld [smem:[#allocation18 + $0x84]]
        %v4001 = vstv %s4000
        %v4002 = vmul.f32 %v4001, %v2667
        %v4003 = vmul.f32 %v4001, %v2668
        %v4004 = vadd.f32 %v3998, %v4002
        %v4005 = vadd.f32 %v3999, %v4003
        %s4006 = sld [smem:[#allocation18 + $0x104]]
        %v4007 = vstv %s4006
        %v4008 = vmul.f32 %v4007, %v3994
        %v4009 = vmul.f32 %v4007, %v3995
        %v4010 = vadd.f32 %v4004, %v4008
        %v4011 = vadd.f32 %v4005, %v4009
        %s4012 = sld [smem:[#allocation18 + $0x184]]
        %v4013 = vstv %s4012
        %v4014 = vmul.f32 %v4013, %v3986
        %v4015 = vmul.f32 %v4013, %v3987
        %s4016 = sld [smem:[#allocation18 + $0x204]]
        %v4017 = vstv %s4016
        %v4018 = vmul.f32 %v4017, %v2667
        %v4019 = vmul.f32 %v4017, %v2668
        %v4020 = vadd.f32 %v4014, %v4018
        %v4021 = vadd.f32 %v4015, %v4019
        %s4022 = sld [smem:[#allocation18 + $0x284]]
        %v4023 = vstv %s4022
        %v4024 = vmul.f32 %v4023, %v3994
        %v4025 = vmul.f32 %v4023, %v3995
        %v4026 = vadd.f32 %v4020, %v4024
        %v4027 = vadd.f32 %v4021, %v4025
        %4028 = vmatprep.subr.mxu0 0.0
        %4029 = vmatpush1.msra.mxu0 0.0
        %4030 = vmatprep.subr.mxu0 0.0
        %4031 = vmatpush1.msra.mxu0 0.0
        %4032 = vmatprep.subr.mxu0 0.0
        %4033 = vmatpush1.msra.mxu0 0.0
        %4034 = vmatprep.subr.mxu0 0.0
        %4035 = vmatpush1.msra.mxu0 0.0
        %4036 = vmatprep.subr.mxu0 0.0
        %4037 = vmatpush1.msra.mxu0 0.0
        %4038 = vmatprep.subr.mxu0 0.0
        %4039 = vmatpush1.msra.mxu0 0.0
        %4040 = vmatprep.subr.mxu0 0.0
        %4041 = vmatpush1.msra.mxu0 0.0
        %4042 = vmatprep.subr.mxu0 0.0
        %4043 = vmatpush1.msra.mxu0 0.0
        %4044 = vmatprep.subr.mxu0 0.0
        %4045 = vmatpush1.msra.mxu0 0.0
        %4046 = vmatprep.subr.mxu0 0.0
        %4047 = vmatpush1.msra.mxu0 0.0
        %4048 = vmatprep.subr.mxu0 0.0
        %4049 = vmatpush1.msra.mxu0 0.0
        %4050 = vmatprep.subr.mxu0 0.0
        %4051 = vmatpush1.msra.mxu0 0.0
        %4052 = vmatprep.subr.mxu0 0.0
        %4053 = vmatpush1.msra.mxu0 0.0
        %4054 = vmatprep.subr.mxu0 0.0
        %4055 = vmatpush1.msra.mxu0 0.0
        %4056 = vmatprep.subr.mxu0 0.0
        %4057 = vmatpush1.msra.mxu0 %v4027
        %4058 = vmatprep.subr.mxu0 0.0
        %4059 = vmatpush1.msra.mxu0 %v4026
        %4060 = vmatprep.subr.mxu0 0.0
        %4061 = vmatpush2.msra.mxu0 0.0
        %4062 = vmatprep.subr.mxu0 0.0
        %4063 = vmatpush2.msra.mxu0 0.0
        %4064 = vmatprep.subr.mxu0 0.0
        %4065 = vmatpush2.msra.mxu0 0.0
        %4066 = vmatprep.subr.mxu0 0.0
        %4067 = vmatpush2.msra.mxu0 0.0
        %4068 = vmatprep.subr.mxu0 0.0
        %4069 = vmatpush2.msra.mxu0 0.0
        %4070 = vmatprep.subr.mxu0 0.0
        %4071 = vmatpush2.msra.mxu0 0.0
        %4072 = vmatprep.subr.mxu0 0.0
        %4073 = vmatpush2.msra.mxu0 0.0
        %4074 = vmatprep.subr.mxu0 0.0
        %4075 = vmatpush2.msra.mxu0 0.0
        %4076 = vmatprep.subr.mxu0 0.0
        %4077 = vmatpush2.msra.mxu0 0.0
        %4078 = vmatprep.subr.mxu0 0.0
        %4079 = vmatpush2.msra.mxu0 0.0
        %4080 = vmatprep.subr.mxu0 0.0
        %4081 = vmatpush2.msra.mxu0 0.0
        %4082 = vmatprep.subr.mxu0 0.0
        %4083 = vmatpush2.msra.mxu0 0.0
        %4084 = vmatprep.subr.mxu0 0.0
        %4085 = vmatpush2.msra.mxu0 0.0
        %4086 = vmatprep.subr.mxu0 0.0
        %4087 = vmatpush2.msra.mxu0 0.0
        %4088 = vmatprep.subr.mxu0 0.0
        %4089 = vmatpush2.msra.mxu0 0.0
        %4090 = vmatprep.subr.mxu0 0.0
        %4091 = vmatpush2.msra.mxu0 0.0
        %4092 = vmatprep.mubr.f32.mxu0 0.0
        %4093 = vmatmul.mubr.f32.gmra.mxu0 %v2852
        %v4094 = vpop.f32.mrf.mxu0
        %v4095 = vadd.f32 0.0, %v4094
        %v4096 = vpop.f32.mrf.mxu0
        %4097 = vdwg.mxu0
        %4098 = vmatprep.subr.mxu0 0.0
        %4099 = vmatpush1.msra.mxu0 0.0
        %4100 = vmatprep.subr.mxu0 0.0
        %4101 = vmatpush1.msra.mxu0 0.0
        %4102 = vmatprep.subr.mxu0 0.0
        %4103 = vmatpush1.msra.mxu0 0.0
        %4104 = vmatprep.subr.mxu0 0.0
        %4105 = vmatpush1.msra.mxu0 0.0
        %4106 = vmatprep.subr.mxu0 0.0
        %4107 = vmatpush1.msra.mxu0 0.0
        %4108 = vmatprep.subr.mxu0 0.0
        %4109 = vmatpush1.msra.mxu0 0.0
        %4110 = vmatprep.subr.mxu0 0.0
        %4111 = vmatpush1.msra.mxu0 0.0
        %4112 = vmatprep.subr.mxu0 0.0
        %4113 = vmatpush1.msra.mxu0 0.0
        %4114 = vmatprep.subr.mxu0 0.0
        %4115 = vmatpush1.msra.mxu0 0.0
        %4116 = vmatprep.subr.mxu0 0.0
        %4117 = vmatpush1.msra.mxu0 0.0
        %4118 = vmatprep.subr.mxu0 0.0
        %4119 = vmatpush1.msra.mxu0 0.0
        %4120 = vmatprep.subr.mxu0 0.0
        %4121 = vmatpush1.msra.mxu0 0.0
        %4122 = vmatprep.subr.mxu0 0.0
        %4123 = vmatpush1.msra.mxu0 0.0
        %4124 = vmatprep.subr.mxu0 0.0
        %4125 = vmatpush1.msra.mxu0 0.0
        %4126 = vmatprep.subr.mxu0 0.0
        %4127 = vmatpush1.msra.mxu0 %v4011
        %4128 = vmatprep.subr.mxu0 0.0
        %4129 = vmatpush1.msra.mxu0 %v4010
        %4130 = vmatprep.subr.mxu0 0.0
        %4131 = vmatpush2.msra.mxu0 0.0
        %4132 = vmatprep.subr.mxu0 0.0
        %4133 = vmatpush2.msra.mxu0 0.0
        %4134 = vmatprep.subr.mxu0 0.0
        %4135 = vmatpush2.msra.mxu0 0.0
        %4136 = vmatprep.subr.mxu0 0.0
        %4137 = vmatpush2.msra.mxu0 0.0
        %4138 = vmatprep.subr.mxu0 0.0
        %4139 = vmatpush2.msra.mxu0 0.0
        %4140 = vmatprep.subr.mxu0 0.0
        %4141 = vmatpush2.msra.mxu0 0.0
        %4142 = vmatprep.subr.mxu0 0.0
        %4143 = vmatpush2.msra.mxu0 0.0
        %4144 = vmatprep.subr.mxu0 0.0
        %4145 = vmatpush2.msra.mxu0 0.0
        %4146 = vmatprep.subr.mxu0 0.0
        %4147 = vmatpush2.msra.mxu0 0.0
        %4148 = vmatprep.subr.mxu0 0.0
        %4149 = vmatpush2.msra.mxu0 0.0
        %4150 = vmatprep.subr.mxu0 0.0
        %4151 = vmatpush2.msra.mxu0 0.0
        %4152 = vmatprep.subr.mxu0 0.0
        %4153 = vmatpush2.msra.mxu0 0.0
        %4154 = vmatprep.subr.mxu0 0.0
        %4155 = vmatpush2.msra.mxu0 0.0
        %4156 = vmatprep.subr.mxu0 0.0
        %4157 = vmatpush2.msra.mxu0 0.0
        %4158 = vmatprep.subr.mxu0 0.0
        %4159 = vmatpush2.msra.mxu0 0.0
        %4160 = vmatprep.subr.mxu0 0.0
        %4161 = vmatpush2.msra.mxu0 0.0
        %4162 = vmatprep.mubr.f32.mxu0 0.0
        %4163 = vmatmul.mubr.f32.gmra.mxu0 %v2925
        %v4164 = vpop.f32.mrf.mxu0
        %v4165 = vadd.f32 %v4095, %v4164
        %v4166 = vpop.f32.mrf.mxu0
        %4167 = vdwg.mxu0
        %s4168 = sld [smem:[#allocation18 + $0x304]]
        %v4169 = vstv %s4168
        %v4170 = vmul.f32 %v4169, %v3986
        %v4171 = vmul.f32 %v4169, %v3987
        %s4172 = sld [smem:[#allocation18 + $0x384]]
        %v4173 = vstv %s4172
        %v4174 = vmul.f32 %v4173, %v2667
        %v4175 = vmul.f32 %v4173, %v2668
        %v4176 = vadd.f32 %v4170, %v4174
        %v4177 = vadd.f32 %v4171, %v4175
        %s4178 = sld [smem:[#allocation18 + $0x404]]
        %v4179 = vstv %s4178
        %v4180 = vmul.f32 %v4179, %v3994
        %v4181 = vmul.f32 %v4179, %v3995
        %v4182 = vadd.f32 %v4176, %v4180
        %v4183 = vadd.f32 %v4177, %v4181
        %4184 = vmatprep.subr.mxu0 0.0
        %4185 = vmatpush1.msra.mxu0 0.0
        %4186 = vmatprep.subr.mxu0 0.0
        %4187 = vmatpush1.msra.mxu0 0.0
        %4188 = vmatprep.subr.mxu0 0.0
        %4189 = vmatpush1.msra.mxu0 0.0
        %4190 = vmatprep.subr.mxu0 0.0
        %4191 = vmatpush1.msra.mxu0 0.0
        %4192 = vmatprep.subr.mxu0 0.0
        %4193 = vmatpush1.msra.mxu0 0.0
        %4194 = vmatprep.subr.mxu0 0.0
        %4195 = vmatpush1.msra.mxu0 0.0
        %4196 = vmatprep.subr.mxu0 0.0
        %4197 = vmatpush1.msra.mxu0 0.0
        %4198 = vmatprep.subr.mxu0 0.0
        %4199 = vmatpush1.msra.mxu0 0.0
        %4200 = vmatprep.subr.mxu0 0.0
        %4201 = vmatpush1.msra.mxu0 0.0
        %4202 = vmatprep.subr.mxu0 0.0
        %4203 = vmatpush1.msra.mxu0 0.0
        %4204 = vmatprep.subr.mxu0 0.0
        %4205 = vmatpush1.msra.mxu0 0.0
        %4206 = vmatprep.subr.mxu0 0.0
        %4207 = vmatpush1.msra.mxu0 0.0
        %4208 = vmatprep.subr.mxu0 0.0
        %4209 = vmatpush1.msra.mxu0 0.0
        %4210 = vmatprep.subr.mxu0 0.0
        %4211 = vmatpush1.msra.mxu0 0.0
        %4212 = vmatprep.subr.mxu0 0.0
        %4213 = vmatpush1.msra.mxu0 %v4183
        %4214 = vmatprep.subr.mxu0 0.0
        %4215 = vmatpush1.msra.mxu0 %v4182
        %4216 = vmatprep.subr.mxu0 0.0
        %4217 = vmatpush2.msra.mxu0 0.0
        %4218 = vmatprep.subr.mxu0 0.0
        %4219 = vmatpush2.msra.mxu0 0.0
        %4220 = vmatprep.subr.mxu0 0.0
        %4221 = vmatpush2.msra.mxu0 0.0
        %4222 = vmatprep.subr.mxu0 0.0
        %4223 = vmatpush2.msra.mxu0 0.0
        %4224 = vmatprep.subr.mxu0 0.0
        %4225 = vmatpush2.msra.mxu0 0.0
        %4226 = vmatprep.subr.mxu0 0.0
        %4227 = vmatpush2.msra.mxu0 0.0
        %4228 = vmatprep.subr.mxu0 0.0
        %4229 = vmatpush2.msra.mxu0 0.0
        %4230 = vmatprep.subr.mxu0 0.0
        %4231 = vmatpush2.msra.mxu0 0.0
        %4232 = vmatprep.subr.mxu0 0.0
        %4233 = vmatpush2.msra.mxu0 0.0
        %4234 = vmatprep.subr.mxu0 0.0
        %4235 = vmatpush2.msra.mxu0 0.0
        %4236 = vmatprep.subr.mxu0 0.0
        %4237 = vmatpush2.msra.mxu0 0.0
        %4238 = vmatprep.subr.mxu0 0.0
        %4239 = vmatpush2.msra.mxu0 0.0
        %4240 = vmatprep.subr.mxu0 0.0
        %4241 = vmatpush2.msra.mxu0 0.0
        %4242 = vmatprep.subr.mxu0 0.0
        %4243 = vmatpush2.msra.mxu0 0.0
        %4244 = vmatprep.subr.mxu0 0.0
        %4245 = vmatpush2.msra.mxu0 0.0
        %4246 = vmatprep.subr.mxu0 0.0
        %4247 = vmatpush2.msra.mxu0 0.0
        %4248 = vmatprep.mubr.f32.mxu0 0.0
        %4249 = vmatmul.mubr.f32.gmra.mxu0 %v3014
        %v4250 = vpop.f32.mrf.mxu0
        %v4251 = vadd.f32 0.0, %v4250
        %v4252 = vpop.f32.mrf.mxu0
        %4253 = vdwg.mxu0
        %v4254 = vadd.f32 %v4165, %v4251
        %s4255 = sld [smem:[#allocation19 + $0x4]]
        %v4256 = vstv %s4255
        %v4257 = vadd.f32 %v4254, %v4256
        %4258 = vrot.lane.b32.xlu0 %v2707, 16
        %v4259 = vpop.permute.xlu0 %4258
        %v4260 = vsel %vm639, %v4259, %v2707
        %4261 = vrot.lane.b32.xlu0 %v2708, 16
        %v4262 = vpop.permute.xlu0 %4261
        %v4263 = vsel %vm639, %v4262, %v2708
        %4264 = vrot.lane.b32.xlu0 %v4260, 16
        %v4265 = vpop.permute.xlu0 %4264
        %4266 = vrot.lane.b32.xlu0 %v4263, 16
        %v4267 = vpop.permute.xlu0 %4266
        %v4268 = vsel %vm639, %v4265, %v2707
        %v4269 = vsel %vm639, %v4267, %v2708
        %4272 = vrot.lane.b32.xlu0 %v4268, 113
        %v4273 = vpop.permute.xlu0 %4272
        %4274 = vrot.lane.b32.xlu0 %v4269, 113
        %v4275 = vpop.permute.xlu0 %4274
        %v4278 = vsel %vm622, %v4273, 0.0
        %v4279 = vsel %vm622, %v4275, 0.0
        %4280 = vrot.lane.b32.xlu0 %v4268, 127
        %v4281 = vpop.permute.xlu0 %4280
        %4282 = vrot.lane.b32.xlu0 %v4269, 127
        %v4283 = vpop.permute.xlu0 %4282
        %v4286 = vsel %vm623, %v4281, 0.0
        %v4287 = vsel %vm623, %v4283, 0.0
        %s4288 = sld [smem:[#allocation18 + $0x5]]
        %v4289 = vstv %s4288
        %v4290 = vmul.f32 %v4289, %v4278
        %v4291 = vmul.f32 %v4289, %v4279
        %s4292 = sld [smem:[#allocation18 + $0x85]]
        %v4293 = vstv %s4292
        %v4294 = vmul.f32 %v4293, %v2707
        %v4295 = vmul.f32 %v4293, %v2708
        %v4296 = vadd.f32 %v4290, %v4294
        %v4297 = vadd.f32 %v4291, %v4295
        %s4298 = sld [smem:[#allocation18 + $0x105]]
        %v4299 = vstv %s4298
        %v4300 = vmul.f32 %v4299, %v4286
        %v4301 = vmul.f32 %v4299, %v4287
        %v4302 = vadd.f32 %v4296, %v4300
        %v4303 = vadd.f32 %v4297, %v4301
        %s4304 = sld [smem:[#allocation18 + $0x185]]
        %v4305 = vstv %s4304
        %v4306 = vmul.f32 %v4305, %v4278
        %v4307 = vmul.f32 %v4305, %v4279
        %s4308 = sld [smem:[#allocation18 + $0x205]]
        %v4309 = vstv %s4308
        %v4310 = vmul.f32 %v4309, %v2707
        %v4311 = vmul.f32 %v4309, %v2708
        %v4312 = vadd.f32 %v4306, %v4310
        %v4313 = vadd.f32 %v4307, %v4311
        %s4314 = sld [smem:[#allocation18 + $0x285]]
        %v4315 = vstv %s4314
        %v4316 = vmul.f32 %v4315, %v4286
        %v4317 = vmul.f32 %v4315, %v4287
        %v4318 = vadd.f32 %v4312, %v4316
        %v4319 = vadd.f32 %v4313, %v4317
        %4320 = vmatprep.subr.mxu0 0.0
        %4321 = vmatpush1.msra.mxu0 0.0
        %4322 = vmatprep.subr.mxu0 0.0
        %4323 = vmatpush1.msra.mxu0 0.0
        %4324 = vmatprep.subr.mxu0 0.0
        %4325 = vmatpush1.msra.mxu0 0.0
        %4326 = vmatprep.subr.mxu0 0.0
        %4327 = vmatpush1.msra.mxu0 0.0
        %4328 = vmatprep.subr.mxu0 0.0
        %4329 = vmatpush1.msra.mxu0 0.0
        %4330 = vmatprep.subr.mxu0 0.0
        %4331 = vmatpush1.msra.mxu0 0.0
        %4332 = vmatprep.subr.mxu0 0.0
        %4333 = vmatpush1.msra.mxu0 0.0
        %4334 = vmatprep.subr.mxu0 0.0
        %4335 = vmatpush1.msra.mxu0 0.0
        %4336 = vmatprep.subr.mxu0 0.0
        %4337 = vmatpush1.msra.mxu0 0.0
        %4338 = vmatprep.subr.mxu0 0.0
        %4339 = vmatpush1.msra.mxu0 0.0
        %4340 = vmatprep.subr.mxu0 0.0
        %4341 = vmatpush1.msra.mxu0 0.0
        %4342 = vmatprep.subr.mxu0 0.0
        %4343 = vmatpush1.msra.mxu0 0.0
        %4344 = vmatprep.subr.mxu0 0.0
        %4345 = vmatpush1.msra.mxu0 0.0
        %4346 = vmatprep.subr.mxu0 0.0
        %4347 = vmatpush1.msra.mxu0 0.0
        %4348 = vmatprep.subr.mxu0 0.0
        %4349 = vmatpush1.msra.mxu0 %v4319
        %4350 = vmatprep.subr.mxu0 0.0
        %4351 = vmatpush1.msra.mxu0 %v4318
        %4352 = vmatprep.subr.mxu0 0.0
        %4353 = vmatpush2.msra.mxu0 0.0
        %4354 = vmatprep.subr.mxu0 0.0
        %4355 = vmatpush2.msra.mxu0 0.0
        %4356 = vmatprep.subr.mxu0 0.0
        %4357 = vmatpush2.msra.mxu0 0.0
        %4358 = vmatprep.subr.mxu0 0.0
        %4359 = vmatpush2.msra.mxu0 0.0
        %4360 = vmatprep.subr.mxu0 0.0
        %4361 = vmatpush2.msra.mxu0 0.0
        %4362 = vmatprep.subr.mxu0 0.0
        %4363 = vmatpush2.msra.mxu0 0.0
        %4364 = vmatprep.subr.mxu0 0.0
        %4365 = vmatpush2.msra.mxu0 0.0
        %4366 = vmatprep.subr.mxu0 0.0
        %4367 = vmatpush2.msra.mxu0 0.0
        %4368 = vmatprep.subr.mxu0 0.0
        %4369 = vmatpush2.msra.mxu0 0.0
        %4370 = vmatprep.subr.mxu0 0.0
        %4371 = vmatpush2.msra.mxu0 0.0
        %4372 = vmatprep.subr.mxu0 0.0
        %4373 = vmatpush2.msra.mxu0 0.0
        %4374 = vmatprep.subr.mxu0 0.0
        %4375 = vmatpush2.msra.mxu0 0.0
        %4376 = vmatprep.subr.mxu0 0.0
        %4377 = vmatpush2.msra.mxu0 0.0
        %4378 = vmatprep.subr.mxu0 0.0
        %4379 = vmatpush2.msra.mxu0 0.0
        %4380 = vmatprep.subr.mxu0 0.0
        %4381 = vmatpush2.msra.mxu0 0.0
        %4382 = vmatprep.subr.mxu0 0.0
        %4383 = vmatpush2.msra.mxu0 0.0
        %4384 = vmatprep.mubr.f32.mxu0 0.0
        %4385 = vmatmul.mubr.f32.gmra.mxu0 %v2852
        %v4386 = vpop.f32.mrf.mxu0
        %v4387 = vadd.f32 0.0, %v4386
        %v4388 = vpop.f32.mrf.mxu0
        %4389 = vdwg.mxu0
        %4390 = vmatprep.subr.mxu0 0.0
        %4391 = vmatpush1.msra.mxu0 0.0
        %4392 = vmatprep.subr.mxu0 0.0
        %4393 = vmatpush1.msra.mxu0 0.0
        %4394 = vmatprep.subr.mxu0 0.0
        %4395 = vmatpush1.msra.mxu0 0.0
        %4396 = vmatprep.subr.mxu0 0.0
        %4397 = vmatpush1.msra.mxu0 0.0
        %4398 = vmatprep.subr.mxu0 0.0
        %4399 = vmatpush1.msra.mxu0 0.0
        %4400 = vmatprep.subr.mxu0 0.0
        %4401 = vmatpush1.msra.mxu0 0.0
        %4402 = vmatprep.subr.mxu0 0.0
        %4403 = vmatpush1.msra.mxu0 0.0
        %4404 = vmatprep.subr.mxu0 0.0
        %4405 = vmatpush1.msra.mxu0 0.0
        %4406 = vmatprep.subr.mxu0 0.0
        %4407 = vmatpush1.msra.mxu0 0.0
        %4408 = vmatprep.subr.mxu0 0.0
        %4409 = vmatpush1.msra.mxu0 0.0
        %4410 = vmatprep.subr.mxu0 0.0
        %4411 = vmatpush1.msra.mxu0 0.0
        %4412 = vmatprep.subr.mxu0 0.0
        %4413 = vmatpush1.msra.mxu0 0.0
        %4414 = vmatprep.subr.mxu0 0.0
        %4415 = vmatpush1.msra.mxu0 0.0
        %4416 = vmatprep.subr.mxu0 0.0
        %4417 = vmatpush1.msra.mxu0 0.0
        %4418 = vmatprep.subr.mxu0 0.0
        %4419 = vmatpush1.msra.mxu0 %v4303
        %4420 = vmatprep.subr.mxu0 0.0
        %4421 = vmatpush1.msra.mxu0 %v4302
        %4422 = vmatprep.subr.mxu0 0.0
        %4423 = vmatpush2.msra.mxu0 0.0
        %4424 = vmatprep.subr.mxu0 0.0
        %4425 = vmatpush2.msra.mxu0 0.0
        %4426 = vmatprep.subr.mxu0 0.0
        %4427 = vmatpush2.msra.mxu0 0.0
        %4428 = vmatprep.subr.mxu0 0.0
        %4429 = vmatpush2.msra.mxu0 0.0
        %4430 = vmatprep.subr.mxu0 0.0
        %4431 = vmatpush2.msra.mxu0 0.0
        %4432 = vmatprep.subr.mxu0 0.0
        %4433 = vmatpush2.msra.mxu0 0.0
        %4434 = vmatprep.subr.mxu0 0.0
        %4435 = vmatpush2.msra.mxu0 0.0
        %4436 = vmatprep.subr.mxu0 0.0
        %4437 = vmatpush2.msra.mxu0 0.0
        %4438 = vmatprep.subr.mxu0 0.0
        %4439 = vmatpush2.msra.mxu0 0.0
        %4440 = vmatprep.subr.mxu0 0.0
        %4441 = vmatpush2.msra.mxu0 0.0
        %4442 = vmatprep.subr.mxu0 0.0
        %4443 = vmatpush2.msra.mxu0 0.0
        %4444 = vmatprep.subr.mxu0 0.0
        %4445 = vmatpush2.msra.mxu0 0.0
        %4446 = vmatprep.subr.mxu0 0.0
        %4447 = vmatpush2.msra.mxu0 0.0
        %4448 = vmatprep.subr.mxu0 0.0
        %4449 = vmatpush2.msra.mxu0 0.0
        %4450 = vmatprep.subr.mxu0 0.0
        %4451 = vmatpush2.msra.mxu0 0.0
        %4452 = vmatprep.subr.mxu0 0.0
        %4453 = vmatpush2.msra.mxu0 0.0
        %4454 = vmatprep.mubr.f32.mxu0 0.0
        %4455 = vmatmul.mubr.f32.gmra.mxu0 %v2925
        %v4456 = vpop.f32.mrf.mxu0
        %v4457 = vadd.f32 %v4387, %v4456
        %v4458 = vpop.f32.mrf.mxu0
        %4459 = vdwg.mxu0
        %s4460 = sld [smem:[#allocation18 + $0x305]]
        %v4461 = vstv %s4460
        %v4462 = vmul.f32 %v4461, %v4278
        %v4463 = vmul.f32 %v4461, %v4279
        %s4464 = sld [smem:[#allocation18 + $0x385]]
        %v4465 = vstv %s4464
        %v4466 = vmul.f32 %v4465, %v2707
        %v4467 = vmul.f32 %v4465, %v2708
        %v4468 = vadd.f32 %v4462, %v4466
        %v4469 = vadd.f32 %v4463, %v4467
        %s4470 = sld [smem:[#allocation18 + $0x405]]
        %v4471 = vstv %s4470
        %v4472 = vmul.f32 %v4471, %v4286
        %v4473 = vmul.f32 %v4471, %v4287
        %v4474 = vadd.f32 %v4468, %v4472
        %v4475 = vadd.f32 %v4469, %v4473
        %4476 = vmatprep.subr.mxu0 0.0
        %4477 = vmatpush1.msra.mxu0 0.0
        %4478 = vmatprep.subr.mxu0 0.0
        %4479 = vmatpush1.msra.mxu0 0.0
        %4480 = vmatprep.subr.mxu0 0.0
        %4481 = vmatpush1.msra.mxu0 0.0
        %4482 = vmatprep.subr.mxu0 0.0
        %4483 = vmatpush1.msra.mxu0 0.0
        %4484 = vmatprep.subr.mxu0 0.0
        %4485 = vmatpush1.msra.mxu0 0.0
        %4486 = vmatprep.subr.mxu0 0.0
        %4487 = vmatpush1.msra.mxu0 0.0
        %4488 = vmatprep.subr.mxu0 0.0
        %4489 = vmatpush1.msra.mxu0 0.0
        %4490 = vmatprep.subr.mxu0 0.0
        %4491 = vmatpush1.msra.mxu0 0.0
        %4492 = vmatprep.subr.mxu0 0.0
        %4493 = vmatpush1.msra.mxu0 0.0
        %4494 = vmatprep.subr.mxu0 0.0
        %4495 = vmatpush1.msra.mxu0 0.0
        %4496 = vmatprep.subr.mxu0 0.0
        %4497 = vmatpush1.msra.mxu0 0.0
        %4498 = vmatprep.subr.mxu0 0.0
        %4499 = vmatpush1.msra.mxu0 0.0
        %4500 = vmatprep.subr.mxu0 0.0
        %4501 = vmatpush1.msra.mxu0 0.0
        %4502 = vmatprep.subr.mxu0 0.0
        %4503 = vmatpush1.msra.mxu0 0.0
        %4504 = vmatprep.subr.mxu0 0.0
        %4505 = vmatpush1.msra.mxu0 %v4475
        %4506 = vmatprep.subr.mxu0 0.0
        %4507 = vmatpush1.msra.mxu0 %v4474
        %4508 = vmatprep.subr.mxu0 0.0
        %4509 = vmatpush2.msra.mxu0 0.0
        %4510 = vmatprep.subr.mxu0 0.0
        %4511 = vmatpush2.msra.mxu0 0.0
        %4512 = vmatprep.subr.mxu0 0.0
        %4513 = vmatpush2.msra.mxu0 0.0
        %4514 = vmatprep.subr.mxu0 0.0
        %4515 = vmatpush2.msra.mxu0 0.0
        %4516 = vmatprep.subr.mxu0 0.0
        %4517 = vmatpush2.msra.mxu0 0.0
        %4518 = vmatprep.subr.mxu0 0.0
        %4519 = vmatpush2.msra.mxu0 0.0
        %4520 = vmatprep.subr.mxu0 0.0
        %4521 = vmatpush2.msra.mxu0 0.0
        %4522 = vmatprep.subr.mxu0 0.0
        %4523 = vmatpush2.msra.mxu0 0.0
        %4524 = vmatprep.subr.mxu0 0.0
        %4525 = vmatpush2.msra.mxu0 0.0
        %4526 = vmatprep.subr.mxu0 0.0
        %4527 = vmatpush2.msra.mxu0 0.0
        %4528 = vmatprep.subr.mxu0 0.0
        %4529 = vmatpush2.msra.mxu0 0.0
        %4530 = vmatprep.subr.mxu0 0.0
        %4531 = vmatpush2.msra.mxu0 0.0
        %4532 = vmatprep.subr.mxu0 0.0
        %4533 = vmatpush2.msra.mxu0 0.0
        %4534 = vmatprep.subr.mxu0 0.0
        %4535 = vmatpush2.msra.mxu0 0.0
        %4536 = vmatprep.subr.mxu0 0.0
        %4537 = vmatpush2.msra.mxu0 0.0
        %4538 = vmatprep.subr.mxu0 0.0
        %4539 = vmatpush2.msra.mxu0 0.0
        %4540 = vmatprep.mubr.f32.mxu0 0.0
        %4541 = vmatmul.mubr.f32.gmra.mxu0 %v3014
        %v4542 = vpop.f32.mrf.mxu0
        %v4543 = vadd.f32 0.0, %v4542
        %v4544 = vpop.f32.mrf.mxu0
        %4545 = vdwg.mxu0
        %v4546 = vadd.f32 %v4457, %v4543
        %s4547 = sld [smem:[#allocation19 + $0x5]]
        %v4548 = vstv %s4547
        %v4549 = vadd.f32 %v4546, %v4548
        %4550 = vrot.lane.b32.xlu0 %v2747, 16
        %v4551 = vpop.permute.xlu0 %4550
        %v4552 = vsel %vm639, %v4551, %v2747
        %4553 = vrot.lane.b32.xlu0 %v2748, 16
        %v4554 = vpop.permute.xlu0 %4553
        %v4555 = vsel %vm639, %v4554, %v2748
        %4556 = vrot.lane.b32.xlu0 %v4552, 16
        %v4557 = vpop.permute.xlu0 %4556
        %4558 = vrot.lane.b32.xlu0 %v4555, 16
        %v4559 = vpop.permute.xlu0 %4558
        %v4560 = vsel %vm639, %v4557, %v2747
        %v4561 = vsel %vm639, %v4559, %v2748
        %4564 = vrot.lane.b32.xlu0 %v4560, 113
        %v4565 = vpop.permute.xlu0 %4564
        %4566 = vrot.lane.b32.xlu0 %v4561, 113
        %v4567 = vpop.permute.xlu0 %4566
        %v4570 = vsel %vm622, %v4565, 0.0
        %v4571 = vsel %vm622, %v4567, 0.0
        %4572 = vrot.lane.b32.xlu0 %v4560, 127
        %v4573 = vpop.permute.xlu0 %4572
        %4574 = vrot.lane.b32.xlu0 %v4561, 127
        %v4575 = vpop.permute.xlu0 %4574
        %v4578 = vsel %vm623, %v4573, 0.0
        %v4579 = vsel %vm623, %v4575, 0.0
        %s4580 = sld [smem:[#allocation18 + $0x6]]
        %v4581 = vstv %s4580
        %v4582 = vmul.f32 %v4581, %v4570
        %v4583 = vmul.f32 %v4581, %v4571
        %s4584 = sld [smem:[#allocation18 + $0x86]]
        %v4585 = vstv %s4584
        %v4586 = vmul.f32 %v4585, %v2747
        %v4587 = vmul.f32 %v4585, %v2748
        %v4588 = vadd.f32 %v4582, %v4586
        %v4589 = vadd.f32 %v4583, %v4587
        %s4590 = sld [smem:[#allocation18 + $0x106]]
        %v4591 = vstv %s4590
        %v4592 = vmul.f32 %v4591, %v4578
        %v4593 = vmul.f32 %v4591, %v4579
        %v4594 = vadd.f32 %v4588, %v4592
        %v4595 = vadd.f32 %v4589, %v4593
        %s4596 = sld [smem:[#allocation18 + $0x186]]
        %v4597 = vstv %s4596
        %v4598 = vmul.f32 %v4597, %v4570
        %v4599 = vmul.f32 %v4597, %v4571
        %s4600 = sld [smem:[#allocation18 + $0x206]]
        %v4601 = vstv %s4600
        %v4602 = vmul.f32 %v4601, %v2747
        %v4603 = vmul.f32 %v4601, %v2748
        %v4604 = vadd.f32 %v4598, %v4602
        %v4605 = vadd.f32 %v4599, %v4603
        %s4606 = sld [smem:[#allocation18 + $0x286]]
        %v4607 = vstv %s4606
        %v4608 = vmul.f32 %v4607, %v4578
        %v4609 = vmul.f32 %v4607, %v4579
        %v4610 = vadd.f32 %v4604, %v4608
        %v4611 = vadd.f32 %v4605, %v4609
        %4612 = vmatprep.subr.mxu0 0.0
        %4613 = vmatpush1.msra.mxu0 0.0
        %4614 = vmatprep.subr.mxu0 0.0
        %4615 = vmatpush1.msra.mxu0 0.0
        %4616 = vmatprep.subr.mxu0 0.0
        %4617 = vmatpush1.msra.mxu0 0.0
        %4618 = vmatprep.subr.mxu0 0.0
        %4619 = vmatpush1.msra.mxu0 0.0
        %4620 = vmatprep.subr.mxu0 0.0
        %4621 = vmatpush1.msra.mxu0 0.0
        %4622 = vmatprep.subr.mxu0 0.0
        %4623 = vmatpush1.msra.mxu0 0.0
        %4624 = vmatprep.subr.mxu0 0.0
        %4625 = vmatpush1.msra.mxu0 0.0
        %4626 = vmatprep.subr.mxu0 0.0
        %4627 = vmatpush1.msra.mxu0 0.0
        %4628 = vmatprep.subr.mxu0 0.0
        %4629 = vmatpush1.msra.mxu0 0.0
        %4630 = vmatprep.subr.mxu0 0.0
        %4631 = vmatpush1.msra.mxu0 0.0
        %4632 = vmatprep.subr.mxu0 0.0
        %4633 = vmatpush1.msra.mxu0 0.0
        %4634 = vmatprep.subr.mxu0 0.0
        %4635 = vmatpush1.msra.mxu0 0.0
        %4636 = vmatprep.subr.mxu0 0.0
        %4637 = vmatpush1.msra.mxu0 0.0
        %4638 = vmatprep.subr.mxu0 0.0
        %4639 = vmatpush1.msra.mxu0 0.0
        %4640 = vmatprep.subr.mxu0 0.0
        %4641 = vmatpush1.msra.mxu0 %v4611
        %4642 = vmatprep.subr.mxu0 0.0
        %4643 = vmatpush1.msra.mxu0 %v4610
        %4644 = vmatprep.subr.mxu0 0.0
        %4645 = vmatpush2.msra.mxu0 0.0
        %4646 = vmatprep.subr.mxu0 0.0
        %4647 = vmatpush2.msra.mxu0 0.0
        %4648 = vmatprep.subr.mxu0 0.0
        %4649 = vmatpush2.msra.mxu0 0.0
        %4650 = vmatprep.subr.mxu0 0.0
        %4651 = vmatpush2.msra.mxu0 0.0
        %4652 = vmatprep.subr.mxu0 0.0
        %4653 = vmatpush2.msra.mxu0 0.0
        %4654 = vmatprep.subr.mxu0 0.0
        %4655 = vmatpush2.msra.mxu0 0.0
        %4656 = vmatprep.subr.mxu0 0.0
        %4657 = vmatpush2.msra.mxu0 0.0
        %4658 = vmatprep.subr.mxu0 0.0
        %4659 = vmatpush2.msra.mxu0 0.0
        %4660 = vmatprep.subr.mxu0 0.0
        %4661 = vmatpush2.msra.mxu0 0.0
        %4662 = vmatprep.subr.mxu0 0.0
        %4663 = vmatpush2.msra.mxu0 0.0
        %4664 = vmatprep.subr.mxu0 0.0
        %4665 = vmatpush2.msra.mxu0 0.0
        %4666 = vmatprep.subr.mxu0 0.0
        %4667 = vmatpush2.msra.mxu0 0.0
        %4668 = vmatprep.subr.mxu0 0.0
        %4669 = vmatpush2.msra.mxu0 0.0
        %4670 = vmatprep.subr.mxu0 0.0
        %4671 = vmatpush2.msra.mxu0 0.0
        %4672 = vmatprep.subr.mxu0 0.0
        %4673 = vmatpush2.msra.mxu0 0.0
        %4674 = vmatprep.subr.mxu0 0.0
        %4675 = vmatpush2.msra.mxu0 0.0
        %4676 = vmatprep.mubr.f32.mxu0 0.0
        %4677 = vmatmul.mubr.f32.gmra.mxu0 %v2852
        %v4678 = vpop.f32.mrf.mxu0
        %v4679 = vadd.f32 0.0, %v4678
        %v4680 = vpop.f32.mrf.mxu0
        %4681 = vdwg.mxu0
        %4682 = vmatprep.subr.mxu0 0.0
        %4683 = vmatpush1.msra.mxu0 0.0
        %4684 = vmatprep.subr.mxu0 0.0
        %4685 = vmatpush1.msra.mxu0 0.0
        %4686 = vmatprep.subr.mxu0 0.0
        %4687 = vmatpush1.msra.mxu0 0.0
        %4688 = vmatprep.subr.mxu0 0.0
        %4689 = vmatpush1.msra.mxu0 0.0
        %4690 = vmatprep.subr.mxu0 0.0
        %4691 = vmatpush1.msra.mxu0 0.0
        %4692 = vmatprep.subr.mxu0 0.0
        %4693 = vmatpush1.msra.mxu0 0.0
        %4694 = vmatprep.subr.mxu0 0.0
        %4695 = vmatpush1.msra.mxu0 0.0
        %4696 = vmatprep.subr.mxu0 0.0
        %4697 = vmatpush1.msra.mxu0 0.0
        %4698 = vmatprep.subr.mxu0 0.0
        %4699 = vmatpush1.msra.mxu0 0.0
        %4700 = vmatprep.subr.mxu0 0.0
        %4701 = vmatpush1.msra.mxu0 0.0
        %4702 = vmatprep.subr.mxu0 0.0
        %4703 = vmatpush1.msra.mxu0 0.0
        %4704 = vmatprep.subr.mxu0 0.0
        %4705 = vmatpush1.msra.mxu0 0.0
        %4706 = vmatprep.subr.mxu0 0.0
        %4707 = vmatpush1.msra.mxu0 0.0
        %4708 = vmatprep.subr.mxu0 0.0
        %4709 = vmatpush1.msra.mxu0 0.0
        %4710 = vmatprep.subr.mxu0 0.0
        %4711 = vmatpush1.msra.mxu0 %v4595
        %4712 = vmatprep.subr.mxu0 0.0
        %4713 = vmatpush1.msra.mxu0 %v4594
        %4714 = vmatprep.subr.mxu0 0.0
        %4715 = vmatpush2.msra.mxu0 0.0
        %4716 = vmatprep.subr.mxu0 0.0
        %4717 = vmatpush2.msra.mxu0 0.0
        %4718 = vmatprep.subr.mxu0 0.0
        %4719 = vmatpush2.msra.mxu0 0.0
        %4720 = vmatprep.subr.mxu0 0.0
        %4721 = vmatpush2.msra.mxu0 0.0
        %4722 = vmatprep.subr.mxu0 0.0
        %4723 = vmatpush2.msra.mxu0 0.0
        %4724 = vmatprep.subr.mxu0 0.0
        %4725 = vmatpush2.msra.mxu0 0.0
        %4726 = vmatprep.subr.mxu0 0.0
        %4727 = vmatpush2.msra.mxu0 0.0
        %4728 = vmatprep.subr.mxu0 0.0
        %4729 = vmatpush2.msra.mxu0 0.0
        %4730 = vmatprep.subr.mxu0 0.0
        %4731 = vmatpush2.msra.mxu0 0.0
        %4732 = vmatprep.subr.mxu0 0.0
        %4733 = vmatpush2.msra.mxu0 0.0
        %4734 = vmatprep.subr.mxu0 0.0
        %4735 = vmatpush2.msra.mxu0 0.0
        %4736 = vmatprep.subr.mxu0 0.0
        %4737 = vmatpush2.msra.mxu0 0.0
        %4738 = vmatprep.subr.mxu0 0.0
        %4739 = vmatpush2.msra.mxu0 0.0
        %4740 = vmatprep.subr.mxu0 0.0
        %4741 = vmatpush2.msra.mxu0 0.0
        %4742 = vmatprep.subr.mxu0 0.0
        %4743 = vmatpush2.msra.mxu0 0.0
        %4744 = vmatprep.subr.mxu0 0.0
        %4745 = vmatpush2.msra.mxu0 0.0
        %4746 = vmatprep.mubr.f32.mxu0 0.0
        %4747 = vmatmul.mubr.f32.gmra.mxu0 %v2925
        %v4748 = vpop.f32.mrf.mxu0
        %v4749 = vadd.f32 %v4679, %v4748
        %v4750 = vpop.f32.mrf.mxu0
        %4751 = vdwg.mxu0
        %s4752 = sld [smem:[#allocation18 + $0x306]]
        %v4753 = vstv %s4752
        %v4754 = vmul.f32 %v4753, %v4570
        %v4755 = vmul.f32 %v4753, %v4571
        %s4756 = sld [smem:[#allocation18 + $0x386]]
        %v4757 = vstv %s4756
        %v4758 = vmul.f32 %v4757, %v2747
        %v4759 = vmul.f32 %v4757, %v2748
        %v4760 = vadd.f32 %v4754, %v4758
        %v4761 = vadd.f32 %v4755, %v4759
        %s4762 = sld [smem:[#allocation18 + $0x406]]
        %v4763 = vstv %s4762
        %v4764 = vmul.f32 %v4763, %v4578
        %v4765 = vmul.f32 %v4763, %v4579
        %v4766 = vadd.f32 %v4760, %v4764
        %v4767 = vadd.f32 %v4761, %v4765
        %4768 = vmatprep.subr.mxu0 0.0
        %4769 = vmatpush1.msra.mxu0 0.0
        %4770 = vmatprep.subr.mxu0 0.0
        %4771 = vmatpush1.msra.mxu0 0.0
        %4772 = vmatprep.subr.mxu0 0.0
        %4773 = vmatpush1.msra.mxu0 0.0
        %4774 = vmatprep.subr.mxu0 0.0
        %4775 = vmatpush1.msra.mxu0 0.0
        %4776 = vmatprep.subr.mxu0 0.0
        %4777 = vmatpush1.msra.mxu0 0.0
        %4778 = vmatprep.subr.mxu0 0.0
        %4779 = vmatpush1.msra.mxu0 0.0
        %4780 = vmatprep.subr.mxu0 0.0
        %4781 = vmatpush1.msra.mxu0 0.0
        %4782 = vmatprep.subr.mxu0 0.0
        %4783 = vmatpush1.msra.mxu0 0.0
        %4784 = vmatprep.subr.mxu0 0.0
        %4785 = vmatpush1.msra.mxu0 0.0
        %4786 = vmatprep.subr.mxu0 0.0
        %4787 = vmatpush1.msra.mxu0 0.0
        %4788 = vmatprep.subr.mxu0 0.0
        %4789 = vmatpush1.msra.mxu0 0.0
        %4790 = vmatprep.subr.mxu0 0.0
        %4791 = vmatpush1.msra.mxu0 0.0
        %4792 = vmatprep.subr.mxu0 0.0
        %4793 = vmatpush1.msra.mxu0 0.0
        %4794 = vmatprep.subr.mxu0 0.0
        %4795 = vmatpush1.msra.mxu0 0.0
        %4796 = vmatprep.subr.mxu0 0.0
        %4797 = vmatpush1.msra.mxu0 %v4767
        %4798 = vmatprep.subr.mxu0 0.0
        %4799 = vmatpush1.msra.mxu0 %v4766
        %4800 = vmatprep.subr.mxu0 0.0
        %4801 = vmatpush2.msra.mxu0 0.0
        %4802 = vmatprep.subr.mxu0 0.0
        %4803 = vmatpush2.msra.mxu0 0.0
        %4804 = vmatprep.subr.mxu0 0.0
        %4805 = vmatpush2.msra.mxu0 0.0
        %4806 = vmatprep.subr.mxu0 0.0
        %4807 = vmatpush2.msra.mxu0 0.0
        %4808 = vmatprep.subr.mxu0 0.0
        %4809 = vmatpush2.msra.mxu0 0.0
        %4810 = vmatprep.subr.mxu0 0.0
        %4811 = vmatpush2.msra.mxu0 0.0
        %4812 = vmatprep.subr.mxu0 0.0
        %4813 = vmatpush2.msra.mxu0 0.0
        %4814 = vmatprep.subr.mxu0 0.0
        %4815 = vmatpush2.msra.mxu0 0.0
        %4816 = vmatprep.subr.mxu0 0.0
        %4817 = vmatpush2.msra.mxu0 0.0
        %4818 = vmatprep.subr.mxu0 0.0
        %4819 = vmatpush2.msra.mxu0 0.0
        %4820 = vmatprep.subr.mxu0 0.0
        %4821 = vmatpush2.msra.mxu0 0.0
        %4822 = vmatprep.subr.mxu0 0.0
        %4823 = vmatpush2.msra.mxu0 0.0
        %4824 = vmatprep.subr.mxu0 0.0
        %4825 = vmatpush2.msra.mxu0 0.0
        %4826 = vmatprep.subr.mxu0 0.0
        %4827 = vmatpush2.msra.mxu0 0.0
        %4828 = vmatprep.subr.mxu0 0.0
        %4829 = vmatpush2.msra.mxu0 0.0
        %4830 = vmatprep.subr.mxu0 0.0
        %4831 = vmatpush2.msra.mxu0 0.0
        %4832 = vmatprep.mubr.f32.mxu0 0.0
        %4833 = vmatmul.mubr.f32.gmra.mxu0 %v3014
        %v4834 = vpop.f32.mrf.mxu0
        %v4835 = vadd.f32 0.0, %v4834
        %v4836 = vpop.f32.mrf.mxu0
        %4837 = vdwg.mxu0
        %v4838 = vadd.f32 %v4749, %v4835
        %s4839 = sld [smem:[#allocation19 + $0x6]]
        %v4840 = vstv %s4839
        %v4841 = vadd.f32 %v4838, %v4840
        %4842 = vrot.lane.b32.xlu0 %v2787, 16
        %v4843 = vpop.permute.xlu0 %4842
        %v4844 = vsel %vm639, %v4843, %v2787
        %4845 = vrot.lane.b32.xlu0 %v2788, 16
        %v4846 = vpop.permute.xlu0 %4845
        %v4847 = vsel %vm639, %v4846, %v2788
        %4848 = vrot.lane.b32.xlu0 %v4844, 16
        %v4849 = vpop.permute.xlu0 %4848
        %4850 = vrot.lane.b32.xlu0 %v4847, 16
        %v4851 = vpop.permute.xlu0 %4850
        %v4852 = vsel %vm639, %v4849, %v2787
        %v4853 = vsel %vm639, %v4851, %v2788
        %4856 = vrot.lane.b32.xlu0 %v4852, 113
        %v4857 = vpop.permute.xlu0 %4856
        %4858 = vrot.lane.b32.xlu0 %v4853, 113
        %v4859 = vpop.permute.xlu0 %4858
        %v4862 = vsel %vm622, %v4857, 0.0
        %v4863 = vsel %vm622, %v4859, 0.0
        %4864 = vrot.lane.b32.xlu0 %v4852, 127
        %v4865 = vpop.permute.xlu0 %4864
        %4866 = vrot.lane.b32.xlu0 %v4853, 127
        %v4867 = vpop.permute.xlu0 %4866
        %v4870 = vsel %vm623, %v4865, 0.0
        %v4871 = vsel %vm623, %v4867, 0.0
        %s4872 = sld [smem:[#allocation18 + $0x7]]
        %v4873 = vstv %s4872
        %v4874 = vmul.f32 %v4873, %v4862
        %v4875 = vmul.f32 %v4873, %v4863
        %s4876 = sld [smem:[#allocation18 + $0x87]]
        %v4877 = vstv %s4876
        %v4878 = vmul.f32 %v4877, %v2787
        %v4879 = vmul.f32 %v4877, %v2788
        %v4880 = vadd.f32 %v4874, %v4878
        %v4881 = vadd.f32 %v4875, %v4879
        %s4882 = sld [smem:[#allocation18 + $0x107]]
        %v4883 = vstv %s4882
        %v4884 = vmul.f32 %v4883, %v4870
        %v4885 = vmul.f32 %v4883, %v4871
        %v4886 = vadd.f32 %v4880, %v4884
        %v4887 = vadd.f32 %v4881, %v4885
        %s4888 = sld [smem:[#allocation18 + $0x187]]
        %v4889 = vstv %s4888
        %v4890 = vmul.f32 %v4889, %v4862
        %v4891 = vmul.f32 %v4889, %v4863
        %s4892 = sld [smem:[#allocation18 + $0x207]]
        %v4893 = vstv %s4892
        %v4894 = vmul.f32 %v4893, %v2787
        %v4895 = vmul.f32 %v4893, %v2788
        %v4896 = vadd.f32 %v4890, %v4894
        %v4897 = vadd.f32 %v4891, %v4895
        %s4898 = sld [smem:[#allocation18 + $0x287]]
        %v4899 = vstv %s4898
        %v4900 = vmul.f32 %v4899, %v4870
        %v4901 = vmul.f32 %v4899, %v4871
        %v4902 = vadd.f32 %v4896, %v4900
        %v4903 = vadd.f32 %v4897, %v4901
        %4904 = vmatprep.subr.mxu0 0.0
        %4905 = vmatpush1.msra.mxu0 0.0
        %4906 = vmatprep.subr.mxu0 0.0
        %4907 = vmatpush1.msra.mxu0 0.0
        %4908 = vmatprep.subr.mxu0 0.0
        %4909 = vmatpush1.msra.mxu0 0.0
        %4910 = vmatprep.subr.mxu0 0.0
        %4911 = vmatpush1.msra.mxu0 0.0
        %4912 = vmatprep.subr.mxu0 0.0
        %4913 = vmatpush1.msra.mxu0 0.0
        %4914 = vmatprep.subr.mxu0 0.0
        %4915 = vmatpush1.msra.mxu0 0.0
        %4916 = vmatprep.subr.mxu0 0.0
        %4917 = vmatpush1.msra.mxu0 0.0
        %4918 = vmatprep.subr.mxu0 0.0
        %4919 = vmatpush1.msra.mxu0 0.0
        %4920 = vmatprep.subr.mxu0 0.0
        %4921 = vmatpush1.msra.mxu0 0.0
        %4922 = vmatprep.subr.mxu0 0.0
        %4923 = vmatpush1.msra.mxu0 0.0
        %4924 = vmatprep.subr.mxu0 0.0
        %4925 = vmatpush1.msra.mxu0 0.0
        %4926 = vmatprep.subr.mxu0 0.0
        %4927 = vmatpush1.msra.mxu0 0.0
        %4928 = vmatprep.subr.mxu0 0.0
        %4929 = vmatpush1.msra.mxu0 0.0
        %4930 = vmatprep.subr.mxu0 0.0
        %4931 = vmatpush1.msra.mxu0 0.0
        %4932 = vmatprep.subr.mxu0 0.0
        %4933 = vmatpush1.msra.mxu0 %v4903
        %4934 = vmatprep.subr.mxu0 0.0
        %4935 = vmatpush1.msra.mxu0 %v4902
        %4936 = vmatprep.subr.mxu0 0.0
        %4937 = vmatpush2.msra.mxu0 0.0
        %4938 = vmatprep.subr.mxu0 0.0
        %4939 = vmatpush2.msra.mxu0 0.0
        %4940 = vmatprep.subr.mxu0 0.0
        %4941 = vmatpush2.msra.mxu0 0.0
        %4942 = vmatprep.subr.mxu0 0.0
        %4943 = vmatpush2.msra.mxu0 0.0
        %4944 = vmatprep.subr.mxu0 0.0
        %4945 = vmatpush2.msra.mxu0 0.0
        %4946 = vmatprep.subr.mxu0 0.0
        %4947 = vmatpush2.msra.mxu0 0.0
        %4948 = vmatprep.subr.mxu0 0.0
        %4949 = vmatpush2.msra.mxu0 0.0
        %4950 = vmatprep.subr.mxu0 0.0
        %4951 = vmatpush2.msra.mxu0 0.0
        %4952 = vmatprep.subr.mxu0 0.0
        %4953 = vmatpush2.msra.mxu0 0.0
        %4954 = vmatprep.subr.mxu0 0.0
        %4955 = vmatpush2.msra.mxu0 0.0
        %4956 = vmatprep.subr.mxu0 0.0
        %4957 = vmatpush2.msra.mxu0 0.0
        %4958 = vmatprep.subr.mxu0 0.0
        %4959 = vmatpush2.msra.mxu0 0.0
        %4960 = vmatprep.subr.mxu0 0.0
        %4961 = vmatpush2.msra.mxu0 0.0
        %4962 = vmatprep.subr.mxu0 0.0
        %4963 = vmatpush2.msra.mxu0 0.0
        %4964 = vmatprep.subr.mxu0 0.0
        %4965 = vmatpush2.msra.mxu0 0.0
        %4966 = vmatprep.subr.mxu0 0.0
        %4967 = vmatpush2.msra.mxu0 0.0
        %4968 = vmatprep.mubr.f32.mxu0 0.0
        %4969 = vmatmul.mubr.f32.gmra.mxu0 %v2852
        %v4970 = vpop.f32.mrf.mxu0
        %v4971 = vadd.f32 0.0, %v4970
        %v4972 = vpop.f32.mrf.mxu0
        %4973 = vdwg.mxu0
        %4974 = vmatprep.subr.mxu0 0.0
        %4975 = vmatpush1.msra.mxu0 0.0
        %4976 = vmatprep.subr.mxu0 0.0
        %4977 = vmatpush1.msra.mxu0 0.0
        %4978 = vmatprep.subr.mxu0 0.0
        %4979 = vmatpush1.msra.mxu0 0.0
        %4980 = vmatprep.subr.mxu0 0.0
        %4981 = vmatpush1.msra.mxu0 0.0
        %4982 = vmatprep.subr.mxu0 0.0
        %4983 = vmatpush1.msra.mxu0 0.0
        %4984 = vmatprep.subr.mxu0 0.0
        %4985 = vmatpush1.msra.mxu0 0.0
        %4986 = vmatprep.subr.mxu0 0.0
        %4987 = vmatpush1.msra.mxu0 0.0
        %4988 = vmatprep.subr.mxu0 0.0
        %4989 = vmatpush1.msra.mxu0 0.0
        %4990 = vmatprep.subr.mxu0 0.0
        %4991 = vmatpush1.msra.mxu0 0.0
        %4992 = vmatprep.subr.mxu0 0.0
        %4993 = vmatpush1.msra.mxu0 0.0
        %4994 = vmatprep.subr.mxu0 0.0
        %4995 = vmatpush1.msra.mxu0 0.0
        %4996 = vmatprep.subr.mxu0 0.0
        %4997 = vmatpush1.msra.mxu0 0.0
        %4998 = vmatprep.subr.mxu0 0.0
        %4999 = vmatpush1.msra.mxu0 0.0
        %5000 = vmatprep.subr.mxu0 0.0
        %5001 = vmatpush1.msra.mxu0 0.0
        %5002 = vmatprep.subr.mxu0 0.0
        %5003 = vmatpush1.msra.mxu0 %v4887
        %5004 = vmatprep.subr.mxu0 0.0
        %5005 = vmatpush1.msra.mxu0 %v4886
        %5006 = vmatprep.subr.mxu0 0.0
        %5007 = vmatpush2.msra.mxu0 0.0
        %5008 = vmatprep.subr.mxu0 0.0
        %5009 = vmatpush2.msra.mxu0 0.0
        %5010 = vmatprep.subr.mxu0 0.0
        %5011 = vmatpush2.msra.mxu0 0.0
        %5012 = vmatprep.subr.mxu0 0.0
        %5013 = vmatpush2.msra.mxu0 0.0
        %5014 = vmatprep.subr.mxu0 0.0
        %5015 = vmatpush2.msra.mxu0 0.0
        %5016 = vmatprep.subr.mxu0 0.0
        %5017 = vmatpush2.msra.mxu0 0.0
        %5018 = vmatprep.subr.mxu0 0.0
        %5019 = vmatpush2.msra.mxu0 0.0
        %5020 = vmatprep.subr.mxu0 0.0
        %5021 = vmatpush2.msra.mxu0 0.0
        %5022 = vmatprep.subr.mxu0 0.0
        %5023 = vmatpush2.msra.mxu0 0.0
        %5024 = vmatprep.subr.mxu0 0.0
        %5025 = vmatpush2.msra.mxu0 0.0
        %5026 = vmatprep.subr.mxu0 0.0
        %5027 = vmatpush2.msra.mxu0 0.0
        %5028 = vmatprep.subr.mxu0 0.0
        %5029 = vmatpush2.msra.mxu0 0.0
        %5030 = vmatprep.subr.mxu0 0.0
        %5031 = vmatpush2.msra.mxu0 0.0
        %5032 = vmatprep.subr.mxu0 0.0
        %5033 = vmatpush2.msra.mxu0 0.0
        %5034 = vmatprep.subr.mxu0 0.0
        %5035 = vmatpush2.msra.mxu0 0.0
        %5036 = vmatprep.subr.mxu0 0.0
        %5037 = vmatpush2.msra.mxu0 0.0
        %5038 = vmatprep.mubr.f32.mxu0 0.0
        %5039 = vmatmul.mubr.f32.gmra.mxu0 %v2925
        %v5040 = vpop.f32.mrf.mxu0
        %v5041 = vadd.f32 %v4971, %v5040
        %v5042 = vpop.f32.mrf.mxu0
        %5043 = vdwg.mxu0
        %s5044 = sld [smem:[#allocation18 + $0x307]]
        %v5045 = vstv %s5044
        %v5046 = vmul.f32 %v5045, %v4862
        %v5047 = vmul.f32 %v5045, %v4863
        %s5048 = sld [smem:[#allocation18 + $0x387]]
        %v5049 = vstv %s5048
        %v5050 = vmul.f32 %v5049, %v2787
        %v5051 = vmul.f32 %v5049, %v2788
        %v5052 = vadd.f32 %v5046, %v5050
        %v5053 = vadd.f32 %v5047, %v5051
        %s5054 = sld [smem:[#allocation18 + $0x407]]
        %v5055 = vstv %s5054
        %v5056 = vmul.f32 %v5055, %v4870
        %v5057 = vmul.f32 %v5055, %v4871
        %v5058 = vadd.f32 %v5052, %v5056
        %v5059 = vadd.f32 %v5053, %v5057
        %5060 = vmatprep.subr.mxu0 0.0
        %5061 = vmatpush1.msra.mxu0 0.0
        %5062 = vmatprep.subr.mxu0 0.0
        %5063 = vmatpush1.msra.mxu0 0.0
        %5064 = vmatprep.subr.mxu0 0.0
        %5065 = vmatpush1.msra.mxu0 0.0
        %5066 = vmatprep.subr.mxu0 0.0
        %5067 = vmatpush1.msra.mxu0 0.0
        %5068 = vmatprep.subr.mxu0 0.0
        %5069 = vmatpush1.msra.mxu0 0.0
        %5070 = vmatprep.subr.mxu0 0.0
        %5071 = vmatpush1.msra.mxu0 0.0
        %5072 = vmatprep.subr.mxu0 0.0
        %5073 = vmatpush1.msra.mxu0 0.0
        %5074 = vmatprep.subr.mxu0 0.0
        %5075 = vmatpush1.msra.mxu0 0.0
        %5076 = vmatprep.subr.mxu0 0.0
        %5077 = vmatpush1.msra.mxu0 0.0
        %5078 = vmatprep.subr.mxu0 0.0
        %5079 = vmatpush1.msra.mxu0 0.0
        %5080 = vmatprep.subr.mxu0 0.0
        %5081 = vmatpush1.msra.mxu0 0.0
        %5082 = vmatprep.subr.mxu0 0.0
        %5083 = vmatpush1.msra.mxu0 0.0
        %5084 = vmatprep.subr.mxu0 0.0
        %5085 = vmatpush1.msra.mxu0 0.0
        %5086 = vmatprep.subr.mxu0 0.0
        %5087 = vmatpush1.msra.mxu0 0.0
        %5088 = vmatprep.subr.mxu0 0.0
        %5089 = vmatpush1.msra.mxu0 %v5059
        %5090 = vmatprep.subr.mxu0 0.0
        %5091 = vmatpush1.msra.mxu0 %v5058
        %5092 = vmatprep.subr.mxu0 0.0
        %5093 = vmatpush2.msra.mxu0 0.0
        %5094 = vmatprep.subr.mxu0 0.0
        %5095 = vmatpush2.msra.mxu0 0.0
        %5096 = vmatprep.subr.mxu0 0.0
        %5097 = vmatpush2.msra.mxu0 0.0
        %5098 = vmatprep.subr.mxu0 0.0
        %5099 = vmatpush2.msra.mxu0 0.0
        %5100 = vmatprep.subr.mxu0 0.0
        %5101 = vmatpush2.msra.mxu0 0.0
        %5102 = vmatprep.subr.mxu0 0.0
        %5103 = vmatpush2.msra.mxu0 0.0
        %5104 = vmatprep.subr.mxu0 0.0
        %5105 = vmatpush2.msra.mxu0 0.0
        %5106 = vmatprep.subr.mxu0 0.0
        %5107 = vmatpush2.msra.mxu0 0.0
        %5108 = vmatprep.subr.mxu0 0.0
        %5109 = vmatpush2.msra.mxu0 0.0
        %5110 = vmatprep.subr.mxu0 0.0
        %5111 = vmatpush2.msra.mxu0 0.0
        %5112 = vmatprep.subr.mxu0 0.0
        %5113 = vmatpush2.msra.mxu0 0.0
        %5114 = vmatprep.subr.mxu0 0.0
        %5115 = vmatpush2.msra.mxu0 0.0
        %5116 = vmatprep.subr.mxu0 0.0
        %5117 = vmatpush2.msra.mxu0 0.0
        %5118 = vmatprep.subr.mxu0 0.0
        %5119 = vmatpush2.msra.mxu0 0.0
        %5120 = vmatprep.subr.mxu0 0.0
        %5121 = vmatpush2.msra.mxu0 0.0
        %5122 = vmatprep.subr.mxu0 0.0
        %5123 = vmatpush2.msra.mxu0 0.0
        %5124 = vmatprep.mubr.f32.mxu0 0.0
        %5125 = vmatmul.mubr.f32.gmra.mxu0 %v3014
        %v5126 = vpop.f32.mrf.mxu0
        %v5127 = vadd.f32 0.0, %v5126
        %v5128 = vpop.f32.mrf.mxu0
        %5129 = vdwg.mxu0
        %v5130 = vadd.f32 %v5041, %v5127
        %s5131 = sld [smem:[#allocation19 + $0x7]]
        %v5132 = vstv %s5131
        %v5133 = vadd.f32 %v5130, %v5132
        %s5134 = sld [smem:[#allocation22]]
        %s5135 = sld [smem:[#allocation21]]
        %v5136 = vstv %s5135
        %v5137 = vmul.f32 %v5136, %v3089
        %v5138 = vstv %s5134
        %v5139 = vadd.f32 %v5138, %v5137
        %s5140 = sld [smem:[#allocation21 + $0x80]]
        %v5141 = vstv %s5140
        %v5142 = vmul.f32 %v5141, %v3381
        %v5143 = vadd.f32 %v5139, %v5142
        %s5144 = sld [smem:[#allocation21 + $0x100]]
        %v5145 = vstv %s5144
        %v5146 = vmul.f32 %v5145, %v3673
        %v5147 = vadd.f32 %v5143, %v5146
        %s5148 = sld [smem:[#allocation21 + $0x180]]
        %v5149 = vstv %s5148
        %v5150 = vmul.f32 %v5149, %v3965
        %v5151 = vadd.f32 %v5147, %v5150
        %s5152 = sld [smem:[#allocation21 + $0x200]]
        %v5153 = vstv %s5152
        %v5154 = vmul.f32 %v5153, %v4257
        %v5155 = vadd.f32 %v5151, %v5154
        %s5156 = sld [smem:[#allocation21 + $0x280]]
        %v5157 = vstv %s5156
        %v5158 = vmul.f32 %v5157, %v4549
        %v5159 = vadd.f32 %v5155, %v5158
        %s5160 = sld [smem:[#allocation21 + $0x300]]
        %v5161 = vstv %s5160
        %v5162 = vmul.f32 %v5161, %v4841
        %v5163 = vadd.f32 %v5159, %v5162
        %s5164 = sld [smem:[#allocation21 + $0x380]]
        %v5165 = vstv %s5164
        %v5166 = vmul.f32 %v5165, %v5133
        %v5167 = vadd.f32 %v5163, %v5166
        %s5168 = sld [smem:[#allocation22 + $0x1]]
        %s5169 = sld [smem:[#allocation21 + $0x1]]
        %v5170 = vstv %s5169
        %v5171 = vmul.f32 %v5170, %v3089
        %v5172 = vstv %s5168
        %v5173 = vadd.f32 %v5172, %v5171
        %s5174 = sld [smem:[#allocation21 + $0x81]]
        %v5175 = vstv %s5174
        %v5176 = vmul.f32 %v5175, %v3381
        %v5177 = vadd.f32 %v5173, %v5176
        %s5178 = sld [smem:[#allocation21 + $0x101]]
        %v5179 = vstv %s5178
        %v5180 = vmul.f32 %v5179, %v3673
        %v5181 = vadd.f32 %v5177, %v5180
        %s5182 = sld [smem:[#allocation21 + $0x181]]
        %v5183 = vstv %s5182
        %v5184 = vmul.f32 %v5183, %v3965
        %v5185 = vadd.f32 %v5181, %v5184
        %s5186 = sld [smem:[#allocation21 + $0x201]]
        %v5187 = vstv %s5186
        %v5188 = vmul.f32 %v5187, %v4257
        %v5189 = vadd.f32 %v5185, %v5188
        %s5190 = sld [smem:[#allocation21 + $0x281]]
        %v5191 = vstv %s5190
        %v5192 = vmul.f32 %v5191, %v4549
        %v5193 = vadd.f32 %v5189, %v5192
        %s5194 = sld [smem:[#allocation21 + $0x301]]
        %v5195 = vstv %s5194
        %v5196 = vmul.f32 %v5195, %v4841
        %v5197 = vadd.f32 %v5193, %v5196
        %s5198 = sld [smem:[#allocation21 + $0x381]]
        %v5199 = vstv %s5198
        %v5200 = vmul.f32 %v5199, %v5133
        %v5201 = vadd.f32 %v5197, %v5200
        %s5202 = sld [smem:[#allocation22 + $0x2]]
        %s5203 = sld [smem:[#allocation21 + $0x2]]
        %v5204 = vstv %s5203
        %v5205 = vmul.f32 %v5204, %v3089
        %v5206 = vstv %s5202
        %v5207 = vadd.f32 %v5206, %v5205
        %s5208 = sld [smem:[#allocation21 + $0x82]]
        %v5209 = vstv %s5208
        %v5210 = vmul.f32 %v5209, %v3381
        %v5211 = vadd.f32 %v5207, %v5210
        %s5212 = sld [smem:[#allocation21 + $0x102]]
        %v5213 = vstv %s5212
        %v5214 = vmul.f32 %v5213, %v3673
        %v5215 = vadd.f32 %v5211, %v5214
        %s5216 = sld [smem:[#allocation21 + $0x182]]
        %v5217 = vstv %s5216
        %v5218 = vmul.f32 %v5217, %v3965
        %v5219 = vadd.f32 %v5215, %v5218
        %s5220 = sld [smem:[#allocation21 + $0x202]]
        %v5221 = vstv %s5220
        %v5222 = vmul.f32 %v5221, %v4257
        %v5223 = vadd.f32 %v5219, %v5222
        %s5224 = sld [smem:[#allocation21 + $0x282]]
        %v5225 = vstv %s5224
        %v5226 = vmul.f32 %v5225, %v4549
        %v5227 = vadd.f32 %v5223, %v5226
        %s5228 = sld [smem:[#allocation21 + $0x302]]
        %v5229 = vstv %s5228
        %v5230 = vmul.f32 %v5229, %v4841
        %v5231 = vadd.f32 %v5227, %v5230
        %s5232 = sld [smem:[#allocation21 + $0x382]]
        %v5233 = vstv %s5232
        %v5234 = vmul.f32 %v5233, %v5133
        %v5235 = vadd.f32 %v5231, %v5234
        %s5236 = sld [smem:[#allocation22 + $0x3]]
        %s5237 = sld [smem:[#allocation21 + $0x3]]
        %v5238 = vstv %s5237
        %v5239 = vmul.f32 %v5238, %v3089
        %v5240 = vstv %s5236
        %v5241 = vadd.f32 %v5240, %v5239
        %s5242 = sld [smem:[#allocation21 + $0x83]]
        %v5243 = vstv %s5242
        %v5244 = vmul.f32 %v5243, %v3381
        %v5245 = vadd.f32 %v5241, %v5244
        %s5246 = sld [smem:[#allocation21 + $0x103]]
        %v5247 = vstv %s5246
        %v5248 = vmul.f32 %v5247, %v3673
        %v5249 = vadd.f32 %v5245, %v5248
        %s5250 = sld [smem:[#allocation21 + $0x183]]
        %v5251 = vstv %s5250
        %v5252 = vmul.f32 %v5251, %v3965
        %v5253 = vadd.f32 %v5249, %v5252
        %s5254 = sld [smem:[#allocation21 + $0x203]]
        %v5255 = vstv %s5254
        %v5256 = vmul.f32 %v5255, %v4257
        %v5257 = vadd.f32 %v5253, %v5256
        %s5258 = sld [smem:[#allocation21 + $0x283]]
        %v5259 = vstv %s5258
        %v5260 = vmul.f32 %v5259, %v4549
        %v5261 = vadd.f32 %v5257, %v5260
        %s5262 = sld [smem:[#allocation21 + $0x303]]
        %v5263 = vstv %s5262
        %v5264 = vmul.f32 %v5263, %v4841
        %v5265 = vadd.f32 %v5261, %v5264
        %s5266 = sld [smem:[#allocation21 + $0x383]]
        %v5267 = vstv %s5266
        %v5268 = vmul.f32 %v5267, %v5133
        %v5269 = vadd.f32 %v5265, %v5268
        %s5270 = sld [smem:[#allocation22 + $0x4]]
        %s5271 = sld [smem:[#allocation21 + $0x4]]
        %v5272 = vstv %s5271
        %v5273 = vmul.f32 %v5272, %v3089
        %v5274 = vstv %s5270
        %v5275 = vadd.f32 %v5274, %v5273
        %s5276 = sld [smem:[#allocation21 + $0x84]]
        %v5277 = vstv %s5276
        %v5278 = vmul.f32 %v5277, %v3381
        %v5279 = vadd.f32 %v5275, %v5278
        %s5280 = sld [smem:[#allocation21 + $0x104]]
        %v5281 = vstv %s5280
        %v5282 = vmul.f32 %v5281, %v3673
        %v5283 = vadd.f32 %v5279, %v5282
        %s5284 = sld [smem:[#allocation21 + $0x184]]
        %v5285 = vstv %s5284
        %v5286 = vmul.f32 %v5285, %v3965
        %v5287 = vadd.f32 %v5283, %v5286
        %s5288 = sld [smem:[#allocation21 + $0x204]]
        %v5289 = vstv %s5288
        %v5290 = vmul.f32 %v5289, %v4257
        %v5291 = vadd.f32 %v5287, %v5290
        %s5292 = sld [smem:[#allocation21 + $0x284]]
        %v5293 = vstv %s5292
        %v5294 = vmul.f32 %v5293, %v4549
        %v5295 = vadd.f32 %v5291, %v5294
        %s5296 = sld [smem:[#allocation21 + $0x304]]
        %v5297 = vstv %s5296
        %v5298 = vmul.f32 %v5297, %v4841
        %v5299 = vadd.f32 %v5295, %v5298
        %s5300 = sld [smem:[#allocation21 + $0x384]]
        %v5301 = vstv %s5300
        %v5302 = vmul.f32 %v5301, %v5133
        %v5303 = vadd.f32 %v5299, %v5302
        %s5304 = sld [smem:[#allocation22 + $0x5]]
        %s5305 = sld [smem:[#allocation21 + $0x5]]
        %v5306 = vstv %s5305
        %v5307 = vmul.f32 %v5306, %v3089
        %v5308 = vstv %s5304
        %v5309 = vadd.f32 %v5308, %v5307
        %s5310 = sld [smem:[#allocation21 + $0x85]]
        %v5311 = vstv %s5310
        %v5312 = vmul.f32 %v5311, %v3381
        %v5313 = vadd.f32 %v5309, %v5312
        %s5314 = sld [smem:[#allocation21 + $0x105]]
        %v5315 = vstv %s5314
        %v5316 = vmul.f32 %v5315, %v3673
        %v5317 = vadd.f32 %v5313, %v5316
        %s5318 = sld [smem:[#allocation21 + $0x185]]
        %v5319 = vstv %s5318
        %v5320 = vmul.f32 %v5319, %v3965
        %v5321 = vadd.f32 %v5317, %v5320
        %s5322 = sld [smem:[#allocation21 + $0x205]]
        %v5323 = vstv %s5322
        %v5324 = vmul.f32 %v5323, %v4257
        %v5325 = vadd.f32 %v5321, %v5324
        %s5326 = sld [smem:[#allocation21 + $0x285]]
        %v5327 = vstv %s5326
        %v5328 = vmul.f32 %v5327, %v4549
        %v5329 = vadd.f32 %v5325, %v5328
        %s5330 = sld [smem:[#allocation21 + $0x305]]
        %v5331 = vstv %s5330
        %v5332 = vmul.f32 %v5331, %v4841
        %v5333 = vadd.f32 %v5329, %v5332
        %s5334 = sld [smem:[#allocation21 + $0x385]]
        %v5335 = vstv %s5334
        %v5336 = vmul.f32 %v5335, %v5133
        %v5337 = vadd.f32 %v5333, %v5336
        %s5338 = sld [smem:[#allocation22 + $0x6]]
        %s5339 = sld [smem:[#allocation21 + $0x6]]
        %v5340 = vstv %s5339
        %v5341 = vmul.f32 %v5340, %v3089
        %v5342 = vstv %s5338
        %v5343 = vadd.f32 %v5342, %v5341
        %s5344 = sld [smem:[#allocation21 + $0x86]]
        %v5345 = vstv %s5344
        %v5346 = vmul.f32 %v5345, %v3381
        %v5347 = vadd.f32 %v5343, %v5346
        %s5348 = sld [smem:[#allocation21 + $0x106]]
        %v5349 = vstv %s5348
        %v5350 = vmul.f32 %v5349, %v3673
        %v5351 = vadd.f32 %v5347, %v5350
        %s5352 = sld [smem:[#allocation21 + $0x186]]
        %v5353 = vstv %s5352
        %v5354 = vmul.f32 %v5353, %v3965
        %v5355 = vadd.f32 %v5351, %v5354
        %s5356 = sld [smem:[#allocation21 + $0x206]]
        %v5357 = vstv %s5356
        %v5358 = vmul.f32 %v5357, %v4257
        %v5359 = vadd.f32 %v5355, %v5358
        %s5360 = sld [smem:[#allocation21 + $0x286]]
        %v5361 = vstv %s5360
        %v5362 = vmul.f32 %v5361, %v4549
        %v5363 = vadd.f32 %v5359, %v5362
        %s5364 = sld [smem:[#allocation21 + $0x306]]
        %v5365 = vstv %s5364
        %v5366 = vmul.f32 %v5365, %v4841
        %v5367 = vadd.f32 %v5363, %v5366
        %s5368 = sld [smem:[#allocation21 + $0x386]]
        %v5369 = vstv %s5368
        %v5370 = vmul.f32 %v5369, %v5133
        %v5371 = vadd.f32 %v5367, %v5370
        %s5372 = sld [smem:[#allocation22 + $0x7]]
        %s5373 = sld [smem:[#allocation21 + $0x7]]
        %v5374 = vstv %s5373
        %v5375 = vmul.f32 %v5374, %v3089
        %v5376 = vstv %s5372
        %v5377 = vadd.f32 %v5376, %v5375
        %s5378 = sld [smem:[#allocation21 + $0x87]]
        %v5379 = vstv %s5378
        %v5380 = vmul.f32 %v5379, %v3381
        %v5381 = vadd.f32 %v5377, %v5380
        %s5382 = sld [smem:[#allocation21 + $0x107]]
        %v5383 = vstv %s5382
        %v5384 = vmul.f32 %v5383, %v3673
        %v5385 = vadd.f32 %v5381, %v5384
        %s5386 = sld [smem:[#allocation21 + $0x187]]
        %v5387 = vstv %s5386
        %v5388 = vmul.f32 %v5387, %v3965
        %v5389 = vadd.f32 %v5385, %v5388
        %s5390 = sld [smem:[#allocation21 + $0x207]]
        %v5391 = vstv %s5390
        %v5392 = vmul.f32 %v5391, %v4257
        %v5393 = vadd.f32 %v5389, %v5392
        %s5394 = sld [smem:[#allocation21 + $0x287]]
        %v5395 = vstv %s5394
        %v5396 = vmul.f32 %v5395, %v4549
        %v5397 = vadd.f32 %v5393, %v5396
        %s5398 = sld [smem:[#allocation21 + $0x307]]
        %v5399 = vstv %s5398
        %v5400 = vmul.f32 %v5399, %v4841
        %v5401 = vadd.f32 %v5397, %v5400
        %s5402 = sld [smem:[#allocation21 + $0x387]]
        %v5403 = vstv %s5402
        %v5404 = vmul.f32 %v5403, %v5133
        %v5405 = vadd.f32 %v5401, %v5404
        %5406 = vst.msk [vmem:[%s616] sm:$0xff] %vm2467, %v5167
        %s5407 = scalar_lea.vmem %s616, 8 [#allocation24]
        %5408 = vst.msk [vmem:[%s5407] sm:$0xff] %vm2467, %v5201
        %s5409 = scalar_lea.vmem %s616, 16 [#allocation24]
        %5410 = vst.msk [vmem:[%s5409] sm:$0xff] %vm2467, %v5235
        %s5411 = scalar_lea.vmem %s616, 24 [#allocation24]
        %5412 = vst.msk [vmem:[%s5411] sm:$0xff] %vm2467, %v5269
        %s5413 = scalar_lea.vmem %s616, 32 [#allocation24]
        %5414 = vst.msk [vmem:[%s5413] sm:$0xff] %vm2467, %v5303
        %s5415 = scalar_lea.vmem %s616, 40 [#allocation24]
        %5416 = vst.msk [vmem:[%s5415] sm:$0xff] %vm2467, %v5337
        %s5417 = scalar_lea.vmem %s616, 48 [#allocation24]
        %5418 = vst.msk [vmem:[%s5417] sm:$0xff] %vm2467, %v5371
        %s5419 = scalar_lea.vmem %s616, 56 [#allocation24]
        %5420 = vst.msk [vmem:[%s5419] sm:$0xff] %vm2467, %v5405
        %s5421 = sand.u32 %s323, 1
        %s5422 = scalar_lea.sflag [#allocation4], %s5421
        %s5423 = sand.u32 %s323, 1
        %s5424 = smul.addr %s5423, 64
        %s5425 = scalar_lea.vmem [#allocation24], %s5424
        // Predicated region
        $region125: #{dsc_block_forward.1} parent=71 // pred_check
          %p5426 = pneg %p333
        $region126: #{dsc_block_forward.1} parent=71 // pred_check_branch
          %5428 = sbr.rel (%p5426) target = $region128
        $region127: #{dsc_block_forward.1} parent=71 // pred_region
          %s5430 = ssub.s32 1024, 1024
          %5431 = vsyncadd %s5422, %s5430
          %s5432 = smul.addr %s37, 8
          %s5433 = smul.addr %s5432, 128
          %s5434 = scalar_lea.hbm %s13, %s5433
          %s5435 = sshll.u32 %s5425, 4
          %s5436 = int_to_ptr.vmem [resolvable:$true] %s5435
          %5441 = dma.vmem_to_hbm [thread:$0]  %s5436, 1024, %s5434, %s5422, 128, 128, 8
        $region128: #{dsc_block_forward.1} parent=71 // pred_fallthru
          _
      $region72: #{dsc_block_forward.1} parent=5 // pred_fallthru
        _
      %p5442 = scmp.le.s32.totalorder 2, %s32
      // Predicated region
      $region129: #{dsc_block_forward.1} parent=5 // pred_check
        %p5443 = pneg %p5442
      $region130: #{dsc_block_forward.1} parent=5 // pred_check_branch
        %5445 = sbr.rel (%p5443) target = $region132
      $region131: #{dsc_block_forward.1} parent=5 // pred_region
        %s5446 = ssub.s32 %s32, 2
        // Predicated region
        $region133: #{dsc_block_forward.1} parent=131 // pred_check
          %p5447 = pneg %p339
        $region134: #{dsc_block_forward.1} parent=131 // pred_check_branch
          %5449 = sbr.rel (%p5447) target = $region136
        $region135: #{dsc_block_forward.1} parent=131 // pred_region
          %s5450 = sand.u32 %s324, 1
          %s5451 = scalar_lea.sflag [#allocation4], %s5450
          %s5452 = sand.u32 %s324, 1
          %s5453 = smul.addr %s5452, 64
          %s5454 = scalar_lea.vmem [#allocation24], %s5453
          %5455 = dma.done %s5451, 1024
        $region136: #{dsc_block_forward.1} parent=131 // pred_fallthru
          _
      $region132: #{dsc_block_forward.1} parent=5 // pred_fallthru
        _
    $region6: #{dsc_block_forward.1} parent=1 // loop_footer
      %s36 = sadd.s32 1, %s32
    $region7: #{dsc_block_forward.1} parent=1 // loop_footer_branch
      %31 = sbr.rel target = $region3
    $region8: #{dsc_block_forward.1} parent=1 // loop_exit
      _
    %5456 = vsyncpa [#allocation3], 1
    %s5457 = scalar_lea.sflag [#allocation3], 1
    %5458 = vsyncpa %s5457, 1
    %5459 = vsyncpa [#allocation4], 1
    %s5460 = scalar_lea.sflag [#allocation4], 1
    %5461 = vsyncpa %s5460, 1
    %5462 = vsyncpa [#allocation5], 1
    %s5463 = scalar_lea.sflag [#allocation5], 1
    %5464 = vsyncpa %s5463, 1
    %5465 = vsyncpa [#allocation8], 1
    %5466 = vsyncpa [#allocation11], 1
    %5467 = vsyncpa [#allocation14], 1
    %5468 = vsyncpa [#allocation17], 1
    %5469 = vsyncpa [#allocation20], 1
    %5470 = vsyncpa [#allocation23], 1

</llo_original>
